<compile_context>
chip_gen: v7x
topology: tpu7x:2x2x1
jax: 0.10.0
libtpu: 0.0.40
codegen_flags: <defaults>
</compile_context>

<pallas_src>
import functools

import jax
import jax.numpy as jnp
from jax.experimental import pallas as pl
from jax.experimental.pallas import tpu as pltpu

LEAKY_SLOPE = 0.2
_W_ALIGN = 16   # left zero margin inside the padded VMEM scratch; keeps the
                # interior store sublane-tile aligned for f32 and bf16.


# ----------------------------- in-kernel helpers -----------------------------

def _pad_into(pad_ref, x, pad_h, H, W):
    """Zero the padded scratch and place x at (pad_h, _W_ALIGN, 0).

    The left/right W margins and top/bottom H margins stay zero and provide
    the conv zero-padding; the W offset of _W_ALIGN keeps the store aligned.
    """
    pad_ref[...] = jnp.zeros_like(pad_ref)
    pad_ref[pad_h:pad_h + H, _W_ALIGN:_W_ALIGN + W, :] = x


def _s1_taps(pad_ref, H, W, kh, kw, pad):
    """Yield the kh*kw stride-1 tap patches, each as a (H*W, C) bf16 value."""
    C = pad_ref.shape[-1]
    for dy in range(kh):
        for dx in range(kw):
            c0 = _W_ALIGN - pad + dx
            yield pad_ref[dy:dy + H, c0:c0 + W, :].reshape(H * W, C)


def _conv_matmul(taps, w_ref, cols_ref, cin, rows, cout):
    """sum_t taps[t] @ W[t*cin:(t+1)*cin]  (taps ordered dy-major, dx-minor).

    If cols_ref is given, pack the taps along the contraction axis (im2col) so
    the whole conv is a single big-K MXU matmul.  Otherwise accumulate per-tap
    dots in f32 (used only for the tiny Cin=3 RGB layer).
    """
    if cols_ref is not None:
        for t, patch in enumerate(taps):
            cols_ref[:, t * cin:(t + 1) * cin] = patch
        return jnp.dot(cols_ref[...], w_ref[...],
                       preferred_element_type=jnp.float32)
    acc = jnp.zeros((rows, cout), jnp.float32)
    for t, patch in enumerate(taps):
        acc = acc + jnp.dot(patch, w_ref[t * cin:(t + 1) * cin, :],
                            preferred_element_type=jnp.float32)
    return acc


# ------------------------------ kernel builders -------------------------------

def _make_conv_s1_kernel(H, W, cin, cout, kh, kw, pad, leaky, use_im2col):
    """Plain stride-1 conv (+ bias, optional LeakyReLU).  Used for conv_alone."""

    def kernel(x_ref, w_ref, b_ref, o_ref, pad_ref, *cols):
        cols_ref = cols[0] if use_im2col else None
        _pad_into(pad_ref, x_ref[...], pad, H, W)
        acc = _conv_matmul(_s1_taps(pad_ref, H, W, kh, kw, pad),
                           w_ref, cols_ref, cin, H * W, cout)
        acc = acc + b_ref[...]
        if leaky:
            acc = jnp.where(acc >= 0, acc, LEAKY_SLOPE * acc)
        o_ref[...] = acc.reshape(H, W, cout).astype(o_ref.dtype)

    return kernel


def _make_block_kernel(H, W, C):
    """Fused BasicBlock: convbn+LeakyReLU, convbn, residual add (no post-act)."""

    def kernel(x_ref, w1_ref, b1_ref, w2_ref, b2_ref, o_ref, pad_ref, cols_ref):
        x = x_ref[...]                                          # (H, W, C) bf16
        # ---- conv1 (BN folded) + LeakyReLU(0.2); intermediate stays in VMEM --
        _pad_into(pad_ref, x, 1, H, W)
        a = _conv_matmul(_s1_taps(pad_ref, H, W, 3, 3, 1),
                         w1_ref, cols_ref, C, H * W, C)
        a = a + b1_ref[...]
        a = jnp.where(a >= 0, a, LEAKY_SLOPE * a)
        # ---- conv2 (BN folded); reuse the padded / im2col scratches ----------
        _pad_into(pad_ref, a.reshape(H, W, C).astype(pad_ref.dtype), 1, H, W)
        a = _conv_matmul(_s1_taps(pad_ref, H, W, 3, 3, 1),
                         w2_ref, cols_ref, C, H * W, C)
        a = a + b2_ref[...]
        # ---- residual add (reference module applies no activation here) ------
        out = a.reshape(H, W, C) + x.astype(jnp.float32)
        o_ref[...] = out.astype(o_ref.dtype)

    return kernel


def _make_downsample_kernel(H, W, cin, cout, use_im2col):
    """5x5, stride-2, pad-2 conv + bias.

    The W stride is handled by the two input parity phases (xe = x[:, ::2],
    xo = x[:, 1::2], split in the wrapper); the H stride by selecting even
    rows of each dy-slab in-kernel.  Only the strided outputs are computed.
    """
    kh = kw = 5
    Ho, Wo = H // 2, W // 2
    Wq = _W_ALIGN + Wo + 1           # scratch W extent of each parity image

    def kernel(xe_ref, xo_ref, w_ref, b_ref, o_ref, pe_ref, po_ref, *cols):
        cols_ref = cols[0] if use_im2col else None
        _pad_into(pe_ref, xe_ref[...], 2, H, Wo)
        _pad_into(po_ref, xo_ref[...], 2, H, Wo)
        pads = (pe_ref, po_ref)

        def taps():
            for dy in range(kh):
                # rows dy, dy+2, ..., dy+2*(Ho-1) of each parity image
                slab_e = pads[0][dy:dy + 2 * Ho, :, :].reshape(
                    Ho, 2, Wq, cin)[:, 0]
                slab_o = pads[1][dy:dy + 2 * Ho, :, :].reshape(
                    Ho, 2, Wq, cin)[:, 0]
                slabs = (slab_e, slab_o)
                for dx in range(kw):
                    q, b = dx % 2, dx // 2
                    c0 = _W_ALIGN - 1 + b
                    yield slabs[q][:, c0:c0 + Wo, :].reshape(Ho * Wo, cin)

        acc = _conv_matmul(taps(), w_ref, cols_ref, cin, Ho * Wo, cout)
        acc = acc + b_ref[...]
        o_ref[...] = acc.reshape(Ho, Wo, cout).astype(o_ref.dtype)

    return kernel


# ------------------------------ pallas wrappers -------------------------------

def conv_s1_pallas(x, w_flat, b, *, kh, kw, pad, leaky=False,
                   out_dtype=jnp.bfloat16):
    N, H, W, cin = x.shape
    cout = w_flat.shape[1]
    assert kh == 2 * pad + 1 and kw == 2 * pad + 1
    use_im2col = (cin % 8 == 0)
    scratch = [pltpu.VMEM((H + 2 * pad, _W_ALIGN + W + pad, cin), jnp.bfloat16)]
    if use_im2col:
        scratch.append(pltpu.VMEM((H * W, kh * kw * cin), jnp.bfloat16))
    kernel = _make_conv_s1_kernel(H, W, cin, cout, kh, kw, pad, leaky,
                                  use_im2col)
    return pl.pallas_call(
        kernel,
        out_shape=jax.ShapeDtypeStruct((N, H, W, cout), out_dtype),
        grid=(N,),
        in_specs=[
            pl.BlockSpec((None, H, W, cin), lambda n: (n, 0, 0, 0)),
            pl.BlockSpec((kh * kw * cin, cout), lambda n: (0, 0)),
            pl.BlockSpec((1, cout), lambda n: (0, 0)),
        ],
        out_specs=pl.BlockSpec((None, H, W, cout), lambda n: (n, 0, 0, 0)),
        scratch_shapes=scratch,
        compiler_params=pltpu.CompilerParams(dimension_semantics=("parallel",)),
    )(x, w_flat, b.reshape(1, cout))


def downsample_conv_pallas(x, w_flat, b, *, out_dtype=jnp.bfloat16):
    N, H, W, cin = x.shape
    cout = w_flat.shape[1]
    assert H % 2 == 0 and W % 2 == 0, "stride-2 path assumes even H, W"
    Ho, Wo = H // 2, W // 2
    # W-parity split of the *input* (cheap XLA slice): turns the W stride of 2
    # into two stride-1 phases so the kernel never computes discarded outputs.
    x_even = x[:, :, 0::2, :]
    x_odd = x[:, :, 1::2, :]
    use_im2col = (cin % 8 == 0)
    scratch = [pltpu.VMEM((H + 4, _W_ALIGN + Wo + 1, cin), jnp.bfloat16),
               pltpu.VMEM((H + 4, _W_ALIGN + Wo + 1, cin), jnp.bfloat16)]
    if use_im2col:
        scratch.append(pltpu.VMEM((Ho * Wo, 25 * cin), jnp.bfloat16))
    kernel = _make_downsample_kernel(H, W, cin, cout, use_im2col)
    return pl.pallas_call(
        kernel,
        out_shape=jax.ShapeDtypeStruct((N, Ho, Wo, cout), out_dtype),
        grid=(N,),
        in_specs=[
            pl.BlockSpec((None, H, Wo, cin), lambda n: (n, 0, 0, 0)),
            pl.BlockSpec((None, H, Wo, cin), lambda n: (n, 0, 0, 0)),
            pl.BlockSpec((25 * cin, cout), lambda n: (0, 0)),
            pl.BlockSpec((1, cout), lambda n: (0, 0)),
        ],
        out_specs=pl.BlockSpec((None, Ho, Wo, cout), lambda n: (n, 0, 0, 0)),
        scratch_shapes=scratch,
        compiler_params=pltpu.CompilerParams(dimension_semantics=("parallel",)),
    )(x_even, x_odd, w_flat, b.reshape(1, cout))


def basic_block_pallas(x, w1, b1, w2, b2):
    N, H, W, C = x.shape
    kernel = _make_block_kernel(H, W, C)
    return pl.pallas_call(
        kernel,
        out_shape=jax.ShapeDtypeStruct((N, H, W, C), x.dtype),
        grid=(N,),
        in_specs=[
            pl.BlockSpec((None, H, W, C), lambda n: (n, 0, 0, 0)),
            pl.BlockSpec((9 * C, C), lambda n: (0, 0)),
            pl.BlockSpec((1, C), lambda n: (0, 0)),
            pl.BlockSpec((9 * C, C), lambda n: (0, 0)),
            pl.BlockSpec((1, C), lambda n: (0, 0)),
        ],
        out_specs=pl.BlockSpec((None, H, W, C), lambda n: (n, 0, 0, 0)),
        scratch_shapes=[
            pltpu.VMEM((H + 2, _W_ALIGN + W + 1, C), jnp.bfloat16),
            pltpu.VMEM((H * W, 9 * C), jnp.bfloat16),
        ],
        compiler_params=pltpu.CompilerParams(dimension_semantics=("parallel",)),
    )(x, w1, b1.reshape(1, C), w2, b2.reshape(1, C))


# --------------------------- parameter construction ---------------------------

def _conv_init(key, kh, kw, cin, cout, fold_bn=False):
    k_w, k_b, k_g, k_be = jax.random.split(key, 4)
    fan_in = float(kh * kw * cin)
    w = jax.random.normal(k_w, (kh, kw, cin, cout), jnp.float32) / (fan_in ** 0.5)
    b = 0.01 * jax.random.normal(k_b, (cout,), jnp.float32)
    if fold_bn:
        # BatchNorm2d folded in eval mode (running_mean=0, running_var=1).
        gamma = 1.0 + 0.05 * jax.random.normal(k_g, (cout,), jnp.float32)
        beta = 0.05 * jax.random.normal(k_be, (cout,), jnp.float32)
        scale = gamma / jnp.sqrt(1.0 + 1e-5)
        w = w * scale[None, None, None, :]
        b = b * scale + beta
    # Flatten HWIO -> (kh*kw*cin, cout) to match the im2col column order.
    w_flat = w.reshape(kh * kw * cin, cout).astype(jnp.bfloat16)
    return w_flat, b  # bias stays f32


def init_feature_extractor_params(key, k):
    params = {"down": [], "blocks": []}
    cin = 3
    for _ in range(k):                              # k downsample convs (5x5, s2, p2)
        key, sub = jax.random.split(key)
        params["down"].append(_conv_init(sub, 5, 5, cin, 32))
        cin = 32
    for _ in range(6):                              # 6 BasicBlocks (convbn x2)
        block = []
        for _ in range(2):
            key, sub = jax.random.split(key)
            block.append(_conv_init(sub, 3, 3, 32, 32, fold_bn=True))
        params["blocks"].append(tuple(block))
    key, sub = jax.random.split(key)
    params["conv_alone"] = _conv_init(sub, 3, 3, 32, 32)
    return params


# -------------------------------- forward pass --------------------------------

def feature_extractor_forward(params, rgb_nchw, k):
    # NCHW -> NHWC, bf16 activations (f32 accumulation inside the kernels).
    x = jnp.transpose(rgb_nchw, (0, 2, 3, 1)).astype(jnp.bfloat16)
    for i in range(k):
        w, b = params["down"][i]
        x = downsample_conv_pallas(x, w, b)
    for (w1, b1), (w2, b2) in params["blocks"]:
        x = basic_block_pallas(x, w1, b1, w2, b2)
    w, b = params["conv_alone"]
    x = conv_s1_pallas(x, w, b, kh=3, kw=3, pad=1, out_dtype=jnp.float32)
    return jnp.transpose(x, (0, 3, 1, 2))           # NHWC -> NCHW, f32


# ------------------------------------ main -------------------------------------

if __name__ == "__main__":
    K = 1                                            # number of downsample stages
    key = jax.random.PRNGKey(0)
    p_key, x_key = jax.random.split(key)

    params = init_feature_extractor_params(p_key, K)
    rgb_img = jax.random.normal(x_key, (2, 3, 16, 16), jnp.float32)   # NCHW

    fwd = jax.jit(functools.partial(feature_extractor_forward, k=K))
    y = jax.block_until_ready(fwd(params, rgb_img))

    expected_shape = (2, 32, 16 // (2 ** K), 16 // (2 ** K))
    assert y.shape == expected_shape, (y.shape, expected_shape)
    assert bool(jnp.all(jnp.isfinite(y)))
    print("KERNEL_OK")
</pallas_src>

<mosaic_0001>
module attributes {stable_mosaic.version = 11 : i64} {
  func.func @kernel(%arg0: i32, %arg1: memref<1x16x8x3xbf16, #tpu.memory_space<vmem>>, %arg2: memref<1x16x8x3xbf16, #tpu.memory_space<vmem>>, %arg3: memref<75x32xbf16, #tpu.memory_space<vmem>>, %arg4: memref<1x32xf32, #tpu.memory_space<vmem>>, %arg5: memref<1x8x8x32xbf16, #tpu.memory_space<vmem>>, %arg6: memref<20x25x3xbf16, #tpu.memory_space<vmem>>, %arg7: memref<20x25x3xbf16, #tpu.memory_space<vmem>>) attributes {dimension_semantics = [#tpu.dimension_semantics<parallel>], iteration_bounds = array<i64: 2>, scalar_prefetch = 0 : i64, scratch_operands = 2 : i64, tpu.core_type = #tpu.core_type<tc>, window_params = [{transform_indices = @transform_0, window_bounds = array<i64: 1, 16, 8, 3>}, {transform_indices = @transform_1, window_bounds = array<i64: 1, 16, 8, 3>}, {pipeline_mode = #tpu.pipeline_mode<synchronous>, transform_indices = @transform_2, window_bounds = array<i64: 75, 32>}, {pipeline_mode = #tpu.pipeline_mode<synchronous>, transform_indices = @transform_3, window_bounds = array<i64: 1, 32>}, {transform_indices = @transform_4, window_bounds = array<i64: 1, 8, 8, 32>}]} {
    %c0 = arith.constant 0 : index
    %c0_0 = arith.constant 0 : index
    %c0_1 = arith.constant 0 : index
    %c0_2 = arith.constant 0 : index
    %0 = vector.load %arg1[%c0, %c0_0, %c0_1, %c0_2] : memref<1x16x8x3xbf16, #tpu.memory_space<vmem>>, vector<1x16x8x3xbf16>
    %1 = vector.shape_cast %0 : vector<1x16x8x3xbf16> to vector<16x8x3xbf16>
    %cst = arith.constant 0.000000e+00 : bf16
    %2 = vector.broadcast %cst : bf16 to vector<20x25x3xbf16>
    %c0_3 = arith.constant 0 : index
    %c0_4 = arith.constant 0 : index
    %c0_5 = arith.constant 0 : index
    %3 = vector.load %arg6[%c0_3, %c0_4, %c0_5] : memref<20x25x3xbf16, #tpu.memory_space<vmem>>, vector<20x25x3xbf16>
    tpu.vector_store %arg6[%c0_3, %c0_4, %c0_5], %2 {strides = array<i32>} : memref<20x25x3xbf16, #tpu.memory_space<vmem>>, vector<20x25x3xbf16>,
    %c2 = arith.constant 2 : index
    %c16 = arith.constant 16 : index
    %c0_6 = arith.constant 0 : index
    %4 = vector.load %arg6[%c2, %c16, %c0_6] : memref<20x25x3xbf16, #tpu.memory_space<vmem>>, vector<16x8x3xbf16>
    tpu.vector_store %arg6[%c2, %c16, %c0_6], %1 {strides = array<i32>} : memref<20x25x3xbf16, #tpu.memory_space<vmem>>, vector<16x8x3xbf16>,
    %c0_7 = arith.constant 0 : index
    %c0_8 = arith.constant 0 : index
    %c0_9 = arith.constant 0 : index
    %c0_10 = arith.constant 0 : index
    %5 = vector.load %arg2[%c0_7, %c0_8, %c0_9, %c0_10] : memref<1x16x8x3xbf16, #tpu.memory_space<vmem>>, vector<1x16x8x3xbf16>
    %6 = vector.shape_cast %5 : vector<1x16x8x3xbf16> to vector<16x8x3xbf16>
    %cst_11 = arith.constant 0.000000e+00 : bf16
    %7 = vector.broadcast %cst_11 : bf16 to vector<20x25x3xbf16>
    %c0_12 = arith.constant 0 : index
    %c0_13 = arith.constant 0 : index
    %c0_14 = arith.constant 0 : index
    %8 = vector.load %arg7[%c0_12, %c0_13, %c0_14] : memref<20x25x3xbf16, #tpu.memory_space<vmem>>, vector<20x25x3xbf16>
    tpu.vector_store %arg7[%c0_12, %c0_13, %c0_14], %7 {strides = array<i32>} : memref<20x25x3xbf16, #tpu.memory_space<vmem>>, vector<20x25x3xbf16>,
    %c2_15 = arith.constant 2 : index
    %c16_16 = arith.constant 16 : index
    %c0_17 = arith.constant 0 : index
    %9 = vector.load %arg7[%c2_15, %c16_16, %c0_17] : memref<20x25x3xbf16, #tpu.memory_space<vmem>>, vector<16x8x3xbf16>
    tpu.vector_store %arg7[%c2_15, %c16_16, %c0_17], %6 {strides = array<i32>} : memref<20x25x3xbf16, #tpu.memory_space<vmem>>, vector<16x8x3xbf16>,
    %cst_18 = arith.constant 0.000000e+00 : f32
    %10 = vector.broadcast %cst_18 : f32 to vector<64x32xf32>
    %c0_19 = arith.constant 0 : index
    %c0_20 = arith.constant 0 : index
    %c0_21 = arith.constant 0 : index
    %11 = vector.load %arg6[%c0_19, %c0_20, %c0_21] : memref<20x25x3xbf16, #tpu.memory_space<vmem>>, vector<16x25x3xbf16>
    %12 = vector.shape_cast %11 : vector<16x25x3xbf16> to vector<8x2x25x3xbf16>
    %13 = vector.extract_strided_slice %12 {offsets = [0, 0, 0, 0], sizes = [8, 1, 25, 3], strides = [1, 1, 1, 1]} : vector<8x2x25x3xbf16> to vector<8x1x25x3xbf16>
    %14 = vector.shape_cast %13 : vector<8x1x25x3xbf16> to vector<8x25x3xbf16>
    %c0_22 = arith.constant 0 : index
    %c0_23 = arith.constant 0 : index
    %c0_24 = arith.constant 0 : index
    %15 = vector.load %arg7[%c0_22, %c0_23, %c0_24] : memref<20x25x3xbf16, #tpu.memory_space<vmem>>, vector<16x25x3xbf16>
    %16 = vector.shape_cast %15 : vector<16x25x3xbf16> to vector<8x2x25x3xbf16>
    %17 = vector.extract_strided_slice %16 {offsets = [0, 0, 0, 0], sizes = [8, 1, 25, 3], strides = [1, 1, 1, 1]} : vector<8x2x25x3xbf16> to vector<8x1x25x3xbf16>
    %18 = vector.shape_cast %17 : vector<8x1x25x3xbf16> to vector<8x25x3xbf16>
    %19 = vector.extract_strided_slice %14 {offsets = [0, 15, 0], sizes = [8, 8, 3], strides = [1, 1, 1]} : vector<8x25x3xbf16> to vector<8x8x3xbf16>
    %20 = vector.shape_cast %19 : vector<8x8x3xbf16> to vector<64x3xbf16>
    %c0_25 = arith.constant 0 : index
    %c0_26 = arith.constant 0 : index
    %21 = vector.load %arg3[%c0_25, %c0_26] : memref<75x32xbf16, #tpu.memory_space<vmem>>, vector<3x32xbf16>
    %cst_27 = arith.constant dense<0.000000e+00> : vector<64x32xf32>
    %22 = tpu.matmul %20, %21, %cst_27 {dimension_numbers = #tpu.dot_dimension_numbers<[1], [0], [0], [1], [0, 0, 1, 1], [], []>} : vector<64x3xbf16>, vector<3x32xbf16>, vector<64x32xf32> -> vector<64x32xf32>
    %23 = arith.addf %10, %22 : vector<64x32xf32>
    %24 = vector.extract_strided_slice %18 {offsets = [0, 15, 0], sizes = [8, 8, 3], strides = [1, 1, 1]} : vector<8x25x3xbf16> to vector<8x8x3xbf16>
    %25 = vector.shape_cast %24 : vector<8x8x3xbf16> to vector<64x3xbf16>
    %c3 = arith.constant 3 : index
    %c0_28 = arith.constant 0 : index
    %26 = vector.load %arg3[%c3, %c0_28] : memref<75x32xbf16, #tpu.memory_space<vmem>>, vector<3x32xbf16>
    %cst_29 = arith.constant dense<0.000000e+00> : vector<64x32xf32>
    %27 = tpu.matmul %25, %26, %cst_29 {dimension_numbers = #tpu.dot_dimension_numbers<[1], [0], [0], [1], [0, 0, 1, 1], [], []>} : vector<64x3xbf16>, vector<3x32xbf16>, vector<64x32xf32> -> vector<64x32xf32>
    %28 = arith.addf %23, %27 : vector<64x32xf32>
    %29 = vector.extract_strided_slice %14 {offsets = [0, 16, 0], sizes = [8, 8, 3], strides = [1, 1, 1]} : vector<8x25x3xbf16> to vector<8x8x3xbf16>
    %30 = vector.shape_cast %29 : vector<8x8x3xbf16> to vector<64x3xbf16>
    %c6 = arith.constant 6 : index
    %c0_30 = arith.constant 0 : index
    %31 = vector.load %arg3[%c6, %c0_30] : memref<75x32xbf16, #tpu.memory_space<vmem>>, vector<3x32xbf16>
    %cst_31 = arith.constant dense<0.000000e+00> : vector<64x32xf32>
    %32 = tpu.matmul %30, %31, %cst_31 {dimension_numbers = #tpu.dot_dimension_numbers<[1], [0], [0], [1], [0, 0, 1, 1], [], []>} : vector<64x3xbf16>, vector<3x32xbf16>, vector<64x32xf32> -> vector<64x32xf32>
    %33 = arith.addf %28, %32 : vector<64x32xf32>
    %34 = vector.extract_strided_slice %18 {offsets = [0, 16, 0], sizes = [8, 8, 3], strides = [1, 1, 1]} : vector<8x25x3xbf16> to vector<8x8x3xbf16>
    %35 = vector.shape_cast %34 : vector<8x8x3xbf16> to vector<64x3xbf16>
    %c9 = arith.constant 9 : index
    %c0_32 = arith.constant 0 : index
    %36 = vector.load %arg3[%c9, %c0_32] : memref<75x32xbf16, #tpu.memory_space<vmem>>, vector<3x32xbf16>
    %cst_33 = arith.constant dense<0.000000e+00> : vector<64x32xf32>
    %37 = tpu.matmul %35, %36, %cst_33 {dimension_numbers = #tpu.dot_dimension_numbers<[1], [0], [0], [1], [0, 0, 1, 1], [], []>} : vector<64x3xbf16>, vector<3x32xbf16>, vector<64x32xf32> -> vector<64x32xf32>
    %38 = arith.addf %33, %37 : vector<64x32xf32>
    %39 = vector.extract_strided_slice %14 {offsets = [0, 17, 0], sizes = [8, 8, 3], strides = [1, 1, 1]} : vector<8x25x3xbf16> to vector<8x8x3xbf16>
    %40 = vector.shape_cast %39 : vector<8x8x3xbf16> to vector<64x3xbf16>
    %c12 = arith.constant 12 : index
    %c0_34 = arith.constant 0 : index
    %41 = vector.load %arg3[%c12, %c0_34] : memref<75x32xbf16, #tpu.memory_space<vmem>>, vector<3x32xbf16>
    %cst_35 = arith.constant dense<0.000000e+00> : vector<64x32xf32>
    %42 = tpu.matmul %40, %41, %cst_35 {dimension_numbers = #tpu.dot_dimension_numbers<[1], [0], [0], [1], [0, 0, 1, 1], [], []>} : vector<64x3xbf16>, vector<3x32xbf16>, vector<64x32xf32> -> vector<64x32xf32>
    %43 = arith.addf %38, %42 : vector<64x32xf32>
    %c1 = arith.constant 1 : index
    %c0_36 = arith.constant 0 : index
    %c0_37 = arith.constant 0 : index
    %44 = vector.load %arg6[%c1, %c0_36, %c0_37] : memref<20x25x3xbf16, #tpu.memory_space<vmem>>, vector<16x25x3xbf16>
    %45 = vector.shape_cast %44 : vector<16x25x3xbf16> to vector<8x2x25x3xbf16>
    %46 = vector.extract_strided_slice %45 {offsets = [0, 0, 0, 0], sizes = [8, 1, 25, 3], strides = [1, 1, 1, 1]} : vector<8x2x25x3xbf16> to vector<8x1x25x3xbf16>
    %47 = vector.shape_cast %46 : vector<8x1x25x3xbf16> to vector<8x25x3xbf16>
    %c1_38 = arith.constant 1 : index
    %c0_39 = arith.constant 0 : index
    %c0_40 = arith.constant 0 : index
    %48 = vector.load %arg7[%c1_38, %c0_39, %c0_40] : memref<20x25x3xbf16, #tpu.memory_space<vmem>>, vector<16x25x3xbf16>
    %49 = vector.shape_cast %48 : vector<16x25x3xbf16> to vector<8x2x25x3xbf16>
    %50 = vector.extract_strided_slice %49 {offsets = [0, 0, 0, 0], sizes = [8, 1, 25, 3], strides = [1, 1, 1, 1]} : vector<8x2x25x3xbf16> to vector<8x1x25x3xbf16>
    %51 = vector.shape_cast %50 : vector<8x1x25x3xbf16> to vector<8x25x3xbf16>
    %52 = vector.extract_strided_slice %47 {offsets = [0, 15, 0], sizes = [8, 8, 3], strides = [1, 1, 1]} : vector<8x25x3xbf16> to vector<8x8x3xbf16>
    %53 = vector.shape_cast %52 : vector<8x8x3xbf16> to vector<64x3xbf16>
    %c15 = arith.constant 15 : index
    %c0_41 = arith.constant 0 : index
    %54 = vector.load %arg3[%c15, %c0_41] : memref<75x32xbf16, #tpu.memory_space<vmem>>, vector<3x32xbf16>
    %cst_42 = arith.constant dense<0.000000e+00> : vector<64x32xf32>
    %55 = tpu.matmul %53, %54, %cst_42 {dimension_numbers = #tpu.dot_dimension_numbers<[1], [0], [0], [1], [0, 0, 1, 1], [], []>} : vector<64x3xbf16>, vector<3x32xbf16>, vector<64x32xf32> -> vector<64x32xf32>
    %56 = arith.addf %43, %55 : vector<64x32xf32>
    %57 = vector.extract_strided_slice %51 {offsets = [0, 15, 0], sizes = [8, 8, 3], strides = [1, 1, 1]} : vector<8x25x3xbf16> to vector<8x8x3xbf16>
    %58 = vector.shape_cast %57 : vector<8x8x3xbf16> to vector<64x3xbf16>
    %c18 = arith.constant 18 : index
    %c0_43 = arith.constant 0 : index
    %59 = vector.load %arg3[%c18, %c0_43] : memref<75x32xbf16, #tpu.memory_space<vmem>>, vector<3x32xbf16>
    %cst_44 = arith.constant dense<0.000000e+00> : vector<64x32xf32>
    %60 = tpu.matmul %58, %59, %cst_44 {dimension_numbers = #tpu.dot_dimension_numbers<[1], [0], [0], [1], [0, 0, 1, 1], [], []>} : vector<64x3xbf16>, vector<3x32xbf16>, vector<64x32xf32> -> vector<64x32xf32>
    %61 = arith.addf %56, %60 : vector<64x32xf32>
    %62 = vector.extract_strided_slice %47 {offsets = [0, 16, 0], sizes = [8, 8, 3], strides = [1, 1, 1]} : vector<8x25x3xbf16> to vector<8x8x3xbf16>
    %63 = vector.shape_cast %62 : vector<8x8x3xbf16> to vector<64x3xbf16>
    %c21 = arith.constant 21 : index
    %c0_45 = arith.constant 0 : index
    %64 = vector.load %arg3[%c21, %c0_45] : memref<75x32xbf16, #tpu.memory_space<vmem>>, vector<3x32xbf16>
    %cst_46 = arith.constant dense<0.000000e+00> : vector<64x32xf32>
    %65 = tpu.matmul %63, %64, %cst_46 {dimension_numbers = #tpu.dot_dimension_numbers<[1], [0], [0], [1], [0, 0, 1, 1], [], []>} : vector<64x3xbf16>, vector<3x32xbf16>, vector<64x32xf32> -> vector<64x32xf32>
    %66 = arith.addf %61, %65 : vector<64x32xf32>
    %67 = vector.extract_strided_slice %51 {offsets = [0, 16, 0], sizes = [8, 8, 3], strides = [1, 1, 1]} : vector<8x25x3xbf16> to vector<8x8x3xbf16>
    %68 = vector.shape_cast %67 : vector<8x8x3xbf16> to vector<64x3xbf16>
    %c24 = arith.constant 24 : index
    %c0_47 = arith.constant 0 : index
    %69 = vector.load %arg3[%c24, %c0_47] : memref<75x32xbf16, #tpu.memory_space<vmem>>, vector<3x32xbf16>
    %cst_48 = arith.constant dense<0.000000e+00> : vector<64x32xf32>
    %70 = tpu.matmul %68, %69, %cst_48 {dimension_numbers = #tpu.dot_dimension_numbers<[1], [0], [0], [1], [0, 0, 1, 1], [], []>} : vector<64x3xbf16>, vector<3x32xbf16>, vector<64x32xf32> -> vector<64x32xf32>
    %71 = arith.addf %66, %70 : vector<64x32xf32>
    %72 = vector.extract_strided_slice %47 {offsets = [0, 17, 0], sizes = [8, 8, 3], strides = [1, 1, 1]} : vector<8x25x3xbf16> to vector<8x8x3xbf16>
    %73 = vector.shape_cast %72 : vector<8x8x3xbf16> to vector<64x3xbf16>
    %c27 = arith.constant 27 : index
    %c0_49 = arith.constant 0 : index
    %74 = vector.load %arg3[%c27, %c0_49] : memref<75x32xbf16, #tpu.memory_space<vmem>>, vector<3x32xbf16>
    %cst_50 = arith.constant dense<0.000000e+00> : vector<64x32xf32>
    %75 = tpu.matmul %73, %74, %cst_50 {dimension_numbers = #tpu.dot_dimension_numbers<[1], [0], [0], [1], [0, 0, 1, 1], [], []>} : vector<64x3xbf16>, vector<3x32xbf16>, vector<64x32xf32> -> vector<64x32xf32>
    %76 = arith.addf %71, %75 : vector<64x32xf32>
    %c2_51 = arith.constant 2 : index
    %c0_52 = arith.constant 0 : index
    %c0_53 = arith.constant 0 : index
    %77 = vector.load %arg6[%c2_51, %c0_52, %c0_53] : memref<20x25x3xbf16, #tpu.memory_space<vmem>>, vector<16x25x3xbf16>
    %78 = vector.shape_cast %77 : vector<16x25x3xbf16> to vector<8x2x25x3xbf16>
    %79 = vector.extract_strided_slice %78 {offsets = [0, 0, 0, 0], sizes = [8, 1, 25, 3], strides = [1, 1, 1, 1]} : vector<8x2x25x3xbf16> to vector<8x1x25x3xbf16>
    %80 = vector.shape_cast %79 : vector<8x1x25x3xbf16> to vector<8x25x3xbf16>
    %c2_54 = arith.constant 2 : index
    %c0_55 = arith.constant 0 : index
    %c0_56 = arith.constant 0 : index
    %81 = vector.load %arg7[%c2_54, %c0_55, %c0_56] : memref<20x25x3xbf16, #tpu.memory_space<vmem>>, vector<16x25x3xbf16>
    %82 = vector.shape_cast %81 : vector<16x25x3xbf16> to vector<8x2x25x3xbf16>
    %83 = vector.extract_strided_slice %82 {offsets = [0, 0, 0, 0], sizes = [8, 1, 25, 3], strides = [1, 1, 1, 1]} : vector<8x2x25x3xbf16> to vector<8x1x25x3xbf16>
    %84 = vector.shape_cast %83 : vector<8x1x25x3xbf16> to vector<8x25x3xbf16>
    %85 = vector.extract_strided_slice %80 {offsets = [0, 15, 0], sizes = [8, 8, 3], strides = [1, 1, 1]} : vector<8x25x3xbf16> to vector<8x8x3xbf16>
    %86 = vector.shape_cast %85 : vector<8x8x3xbf16> to vector<64x3xbf16>
    %c30 = arith.constant 30 : index
    %c0_57 = arith.constant 0 : index
    %87 = vector.load %arg3[%c30, %c0_57] : memref<75x32xbf16, #tpu.memory_space<vmem>>, vector<3x32xbf16>
    %cst_58 = arith.constant dense<0.000000e+00> : vector<64x32xf32>
    %88 = tpu.matmul %86, %87, %cst_58 {dimension_numbers = #tpu.dot_dimension_numbers<[1], [0], [0], [1], [0, 0, 1, 1], [], []>} : vector<64x3xbf16>, vector<3x32xbf16>, vector<64x32xf32> -> vector<64x32xf32>
    %89 = arith.addf %76, %88 : vector<64x32xf32>
    %90 = vector.extract_strided_slice %84 {offsets = [0, 15, 0], sizes = [8, 8, 3], strides = [1, 1, 1]} : vector<8x25x3xbf16> to vector<8x8x3xbf16>
    %91 = vector.shape_cast %90 : vector<8x8x3xbf16> to vector<64x3xbf16>
    %c33 = arith.constant 33 : index
    %c0_59 = arith.constant 0 : index
    %92 = vector.load %arg3[%c33, %c0_59] : memref<75x32xbf16, #tpu.memory_space<vmem>>, vector<3x32xbf16>
    %cst_60 = arith.constant dense<0.000000e+00> : vector<64x32xf32>
    %93 = tpu.matmul %91, %92, %cst_60 {dimension_numbers = #tpu.dot_dimension_numbers<[1], [0], [0], [1], [0, 0, 1, 1], [], []>} : vector<64x3xbf16>, vector<3x32xbf16>, vector<64x32xf32> -> vector<64x32xf32>
    %94 = arith.addf %89, %93 : vector<64x32xf32>
    %95 = vector.extract_strided_slice %80 {offsets = [0, 16, 0], sizes = [8, 8, 3], strides = [1, 1, 1]} : vector<8x25x3xbf16> to vector<8x8x3xbf16>
    %96 = vector.shape_cast %95 : vector<8x8x3xbf16> to vector<64x3xbf16>
    %c36 = arith.constant 36 : index
    %c0_61 = arith.constant 0 : index
    %97 = vector.load %arg3[%c36, %c0_61] : memref<75x32xbf16, #tpu.memory_space<vmem>>, vector<3x32xbf16>
    %cst_62 = arith.constant dense<0.000000e+00> : vector<64x32xf32>
    %98 = tpu.matmul %96, %97, %cst_62 {dimension_numbers = #tpu.dot_dimension_numbers<[1], [0], [0], [1], [0, 0, 1, 1], [], []>} : vector<64x3xbf16>, vector<3x32xbf16>, vector<64x32xf32> -> vector<64x32xf32>
    %99 = arith.addf %94, %98 : vector<64x32xf32>
    %100 = vector.extract_strided_slice %84 {offsets = [0, 16, 0], sizes = [8, 8, 3], strides = [1, 1, 1]} : vector<8x25x3xbf16> to vector<8x8x3xbf16>
    %101 = vector.shape_cast %100 : vector<8x8x3xbf16> to vector<64x3xbf16>
    %c39 = arith.constant 39 : index
    %c0_63 = arith.constant 0 : index
    %102 = vector.load %arg3[%c39, %c0_63] : memref<75x32xbf16, #tpu.memory_space<vmem>>, vector<3x32xbf16>
    %cst_64 = arith.constant dense<0.000000e+00> : vector<64x32xf32>
    %103 = tpu.matmul %101, %102, %cst_64 {dimension_numbers = #tpu.dot_dimension_numbers<[1], [0], [0], [1], [0, 0, 1, 1], [], []>} : vector<64x3xbf16>, vector<3x32xbf16>, vector<64x32xf32> -> vector<64x32xf32>
    %104 = arith.addf %99, %103 : vector<64x32xf32>
    %105 = vector.extract_strided_slice %80 {offsets = [0, 17, 0], sizes = [8, 8, 3], strides = [1, 1, 1]} : vector<8x25x3xbf16> to vector<8x8x3xbf16>
    %106 = vector.shape_cast %105 : vector<8x8x3xbf16> to vector<64x3xbf16>
    %c42 = arith.constant 42 : index
    %c0_65 = arith.constant 0 : index
    %107 = vector.load %arg3[%c42, %c0_65] : memref<75x32xbf16, #tpu.memory_space<vmem>>, vector<3x32xbf16>
    %cst_66 = arith.constant dense<0.000000e+00> : vector<64x32xf32>
    %108 = tpu.matmul %106, %107, %cst_66 {dimension_numbers = #tpu.dot_dimension_numbers<[1], [0], [0], [1], [0, 0, 1, 1], [], []>} : vector<64x3xbf16>, vector<3x32xbf16>, vector<64x32xf32> -> vector<64x32xf32>
    %109 = arith.addf %104, %108 : vector<64x32xf32>
    %c3_67 = arith.constant 3 : index
    %c0_68 = arith.constant 0 : index
    %c0_69 = arith.constant 0 : index
    %110 = vector.load %arg6[%c3_67, %c0_68, %c0_69] : memref<20x25x3xbf16, #tpu.memory_space<vmem>>, vector<16x25x3xbf16>
    %111 = vector.shape_cast %110 : vector<16x25x3xbf16> to vector<8x2x25x3xbf16>
    %112 = vector.extract_strided_slice %111 {offsets = [0, 0, 0, 0], sizes = [8, 1, 25, 3], strides = [1, 1, 1, 1]} : vector<8x2x25x3xbf16> to vector<8x1x25x3xbf16>
    %113 = vector.shape_cast %112 : vector<8x1x25x3xbf16> to vector<8x25x3xbf16>
    %c3_70 = arith.constant 3 : index
    %c0_71 = arith.constant 0 : index
    %c0_72 = arith.constant 0 : index
    %114 = vector.load %arg7[%c3_70, %c0_71, %c0_72] : memref<20x25x3xbf16, #tpu.memory_space<vmem>>, vector<16x25x3xbf16>
    %115 = vector.shape_cast %114 : vector<16x25x3xbf16> to vector<8x2x25x3xbf16>
    %116 = vector.extract_strided_slice %115 {offsets = [0, 0, 0, 0], sizes = [8, 1, 25, 3], strides = [1, 1, 1, 1]} : vector<8x2x25x3xbf16> to vector<8x1x25x3xbf16>
    %117 = vector.shape_cast %116 : vector<8x1x25x3xbf16> to vector<8x25x3xbf16>
    %118 = vector.extract_strided_slice %113 {offsets = [0, 15, 0], sizes = [8, 8, 3], strides = [1, 1, 1]} : vector<8x25x3xbf16> to vector<8x8x3xbf16>
    %119 = vector.shape_cast %118 : vector<8x8x3xbf16> to vector<64x3xbf16>
    %c45 = arith.constant 45 : index
    %c0_73 = arith.constant 0 : index
    %120 = vector.load %arg3[%c45, %c0_73] : memref<75x32xbf16, #tpu.memory_space<vmem>>, vector<3x32xbf16>
    %cst_74 = arith.constant dense<0.000000e+00> : vector<64x32xf32>
    %121 = tpu.matmul %119, %120, %cst_74 {dimension_numbers = #tpu.dot_dimension_numbers<[1], [0], [0], [1], [0, 0, 1, 1], [], []>} : vector<64x3xbf16>, vector<3x32xbf16>, vector<64x32xf32> -> vector<64x32xf32>
    %122 = arith.addf %109, %121 : vector<64x32xf32>
    %123 = vector.extract_strided_slice %117 {offsets = [0, 15, 0], sizes = [8, 8, 3], strides = [1, 1, 1]} : vector<8x25x3xbf16> to vector<8x8x3xbf16>
    %124 = vector.shape_cast %123 : vector<8x8x3xbf16> to vector<64x3xbf16>
    %c48 = arith.constant 48 : index
    %c0_75 = arith.constant 0 : index
    %125 = vector.load %arg3[%c48, %c0_75] : memref<75x32xbf16, #tpu.memory_space<vmem>>, vector<3x32xbf16>
    %cst_76 = arith.constant dense<0.000000e+00> : vector<64x32xf32>
    %126 = tpu.matmul %124, %125, %cst_76 {dimension_numbers = #tpu.dot_dimension_numbers<[1], [0], [0], [1], [0, 0, 1, 1], [], []>} : vector<64x3xbf16>, vector<3x32xbf16>, vector<64x32xf32> -> vector<64x32xf32>
    %127 = arith.addf %122, %126 : vector<64x32xf32>
    %128 = vector.extract_strided_slice %113 {offsets = [0, 16, 0], sizes = [8, 8, 3], strides = [1, 1, 1]} : vector<8x25x3xbf16> to vector<8x8x3xbf16>
    %129 = vector.shape_cast %128 : vector<8x8x3xbf16> to vector<64x3xbf16>
    %c51 = arith.constant 51 : index
    %c0_77 = arith.constant 0 : index
    %130 = vector.load %arg3[%c51, %c0_77] : memref<75x32xbf16, #tpu.memory_space<vmem>>, vector<3x32xbf16>
    %cst_78 = arith.constant dense<0.000000e+00> : vector<64x32xf32>
    %131 = tpu.matmul %129, %130, %cst_78 {dimension_numbers = #tpu.dot_dimension_numbers<[1], [0], [0], [1], [0, 0, 1, 1], [], []>} : vector<64x3xbf16>, vector<3x32xbf16>, vector<64x32xf32> -> vector<64x32xf32>
    %132 = arith.addf %127, %131 : vector<64x32xf32>
    %133 = vector.extract_strided_slice %117 {offsets = [0, 16, 0], sizes = [8, 8, 3], strides = [1, 1, 1]} : vector<8x25x3xbf16> to vector<8x8x3xbf16>
    %134 = vector.shape_cast %133 : vector<8x8x3xbf16> to vector<64x3xbf16>
    %c54 = arith.constant 54 : index
    %c0_79 = arith.constant 0 : index
    %135 = vector.load %arg3[%c54, %c0_79] : memref<75x32xbf16, #tpu.memory_space<vmem>>, vector<3x32xbf16>
    %cst_80 = arith.constant dense<0.000000e+00> : vector<64x32xf32>
    %136 = tpu.matmul %134, %135, %cst_80 {dimension_numbers = #tpu.dot_dimension_numbers<[1], [0], [0], [1], [0, 0, 1, 1], [], []>} : vector<64x3xbf16>, vector<3x32xbf16>, vector<64x32xf32> -> vector<64x32xf32>
    %137 = arith.addf %132, %136 : vector<64x32xf32>
    %138 = vector.extract_strided_slice %113 {offsets = [0, 17, 0], sizes = [8, 8, 3], strides = [1, 1, 1]} : vector<8x25x3xbf16> to vector<8x8x3xbf16>
    %139 = vector.shape_cast %138 : vector<8x8x3xbf16> to vector<64x3xbf16>
    %c57 = arith.constant 57 : index
    %c0_81 = arith.constant 0 : index
    %140 = vector.load %arg3[%c57, %c0_81] : memref<75x32xbf16, #tpu.memory_space<vmem>>, vector<3x32xbf16>
    %cst_82 = arith.constant dense<0.000000e+00> : vector<64x32xf32>
    %141 = tpu.matmul %139, %140, %cst_82 {dimension_numbers = #tpu.dot_dimension_numbers<[1], [0], [0], [1], [0, 0, 1, 1], [], []>} : vector<64x3xbf16>, vector<3x32xbf16>, vector<64x32xf32> -> vector<64x32xf32>
    %142 = arith.addf %137, %141 : vector<64x32xf32>
    %c4 = arith.constant 4 : index
    %c0_83 = arith.constant 0 : index
    %c0_84 = arith.constant 0 : index
    %143 = vector.load %arg6[%c4, %c0_83, %c0_84] : memref<20x25x3xbf16, #tpu.memory_space<vmem>>, vector<16x25x3xbf16>
    %144 = vector.shape_cast %143 : vector<16x25x3xbf16> to vector<8x2x25x3xbf16>
    %145 = vector.extract_strided_slice %144 {offsets = [0, 0, 0, 0], sizes = [8, 1, 25, 3], strides = [1, 1, 1, 1]} : vector<8x2x25x3xbf16> to vector<8x1x25x3xbf16>
    %146 = vector.shape_cast %145 : vector<8x1x25x3xbf16> to vector<8x25x3xbf16>
    %c4_85 = arith.constant 4 : index
    %c0_86 = arith.constant 0 : index
    %c0_87 = arith.constant 0 : index
    %147 = vector.load %arg7[%c4_85, %c0_86, %c0_87] : memref<20x25x3xbf16, #tpu.memory_space<vmem>>, vector<16x25x3xbf16>
    %148 = vector.shape_cast %147 : vector<16x25x3xbf16> to vector<8x2x25x3xbf16>
    %149 = vector.extract_strided_slice %148 {offsets = [0, 0, 0, 0], sizes = [8, 1, 25, 3], strides = [1, 1, 1, 1]} : vector<8x2x25x3xbf16> to vector<8x1x25x3xbf16>
    %150 = vector.shape_cast %149 : vector<8x1x25x3xbf16> to vector<8x25x3xbf16>
    %151 = vector.extract_strided_slice %146 {offsets = [0, 15, 0], sizes = [8, 8, 3], strides = [1, 1, 1]} : vector<8x25x3xbf16> to vector<8x8x3xbf16>
    %152 = vector.shape_cast %151 : vector<8x8x3xbf16> to vector<64x3xbf16>
    %c60 = arith.constant 60 : index
    %c0_88 = arith.constant 0 : index
    %153 = vector.load %arg3[%c60, %c0_88] : memref<75x32xbf16, #tpu.memory_space<vmem>>, vector<3x32xbf16>
    %cst_89 = arith.constant dense<0.000000e+00> : vector<64x32xf32>
    %154 = tpu.matmul %152, %153, %cst_89 {dimension_numbers = #tpu.dot_dimension_numbers<[1], [0], [0], [1], [0, 0, 1, 1], [], []>} : vector<64x3xbf16>, vector<3x32xbf16>, vector<64x32xf32> -> vector<64x32xf32>
    %155 = arith.addf %142, %154 : vector<64x32xf32>
    %156 = vector.extract_strided_slice %150 {offsets = [0, 15, 0], sizes = [8, 8, 3], strides = [1, 1, 1]} : vector<8x25x3xbf16> to vector<8x8x3xbf16>
    %157 = vector.shape_cast %156 : vector<8x8x3xbf16> to vector<64x3xbf16>
    %c63 = arith.constant 63 : index
    %c0_90 = arith.constant 0 : index
    %158 = vector.load %arg3[%c63, %c0_90] : memref<75x32xbf16, #tpu.memory_space<vmem>>, vector<3x32xbf16>
    %cst_91 = arith.constant dense<0.000000e+00> : vector<64x32xf32>
    %159 = tpu.matmul %157, %158, %cst_91 {dimension_numbers = #tpu.dot_dimension_numbers<[1], [0], [0], [1], [0, 0, 1, 1], [], []>} : vector<64x3xbf16>, vector<3x32xbf16>, vector<64x32xf32> -> vector<64x32xf32>
    %160 = arith.addf %155, %159 : vector<64x32xf32>
    %161 = vector.extract_strided_slice %146 {offsets = [0, 16, 0], sizes = [8, 8, 3], strides = [1, 1, 1]} : vector<8x25x3xbf16> to vector<8x8x3xbf16>
    %162 = vector.shape_cast %161 : vector<8x8x3xbf16> to vector<64x3xbf16>
    %c66 = arith.constant 66 : index
    %c0_92 = arith.constant 0 : index
    %163 = vector.load %arg3[%c66, %c0_92] : memref<75x32xbf16, #tpu.memory_space<vmem>>, vector<3x32xbf16>
    %cst_93 = arith.constant dense<0.000000e+00> : vector<64x32xf32>
    %164 = tpu.matmul %162, %163, %cst_93 {dimension_numbers = #tpu.dot_dimension_numbers<[1], [0], [0], [1], [0, 0, 1, 1], [], []>} : vector<64x3xbf16>, vector<3x32xbf16>, vector<64x32xf32> -> vector<64x32xf32>
    %165 = arith.addf %160, %164 : vector<64x32xf32>
    %166 = vector.extract_strided_slice %150 {offsets = [0, 16, 0], sizes = [8, 8, 3], strides = [1, 1, 1]} : vector<8x25x3xbf16> to vector<8x8x3xbf16>
    %167 = vector.shape_cast %166 : vector<8x8x3xbf16> to vector<64x3xbf16>
    %c69 = arith.constant 69 : index
    %c0_94 = arith.constant 0 : index
    %168 = vector.load %arg3[%c69, %c0_94] : memref<75x32xbf16, #tpu.memory_space<vmem>>, vector<3x32xbf16>
    %cst_95 = arith.constant dense<0.000000e+00> : vector<64x32xf32>
    %169 = tpu.matmul %167, %168, %cst_95 {dimension_numbers = #tpu.dot_dimension_numbers<[1], [0], [0], [1], [0, 0, 1, 1], [], []>} : vector<64x3xbf16>, vector<3x32xbf16>, vector<64x32xf32> -> vector<64x32xf32>
    %170 = arith.addf %165, %169 : vector<64x32xf32>
    %171 = vector.extract_strided_slice %146 {offsets = [0, 17, 0], sizes = [8, 8, 3], strides = [1, 1, 1]} : vector<8x25x3xbf16> to vector<8x8x3xbf16>
    %172 = vector.shape_cast %171 : vector<8x8x3xbf16> to vector<64x3xbf16>
    %c72 = arith.constant 72 : index
    %c0_96 = arith.constant 0 : index
    %173 = vector.load %arg3[%c72, %c0_96] : memref<75x32xbf16, #tpu.memory_space<vmem>>, vector<3x32xbf16>
    %cst_97 = arith.constant dense<0.000000e+00> : vector<64x32xf32>
    %174 = tpu.matmul %172, %173, %cst_97 {dimension_numbers = #tpu.dot_dimension_numbers<[1], [0], [0], [1], [0, 0, 1, 1], [], []>} : vector<64x3xbf16>, vector<3x32xbf16>, vector<64x32xf32> -> vector<64x32xf32>
    %175 = arith.addf %170, %174 : vector<64x32xf32>
    %c0_98 = arith.constant 0 : index
    %c0_99 = arith.constant 0 : index
    %176 = vector.load %arg4[%c0_98, %c0_99] : memref<1x32xf32, #tpu.memory_space<vmem>>, vector<1x32xf32>
    %177 = vector.broadcast %176 : vector<1x32xf32> to vector<64x32xf32>
    %178 = arith.addf %175, %177 : vector<64x32xf32>
    %179 = vector.shape_cast %178 : vector<64x32xf32> to vector<8x8x32xf32>
    %180 = arith.truncf %179 : vector<8x8x32xf32> to vector<8x8x32xbf16>
    %c0_100 = arith.constant 0 : index
    %c0_101 = arith.constant 0 : index
    %c0_102 = arith.constant 0 : index
    %c0_103 = arith.constant 0 : index
    %181 = vector.load %arg5[%c0_100, %c0_101, %c0_102, %c0_103] : memref<1x8x8x32xbf16, #tpu.memory_space<vmem>>, vector<1x8x8x32xbf16>
    %182 = vector.shape_cast %181 : vector<1x8x8x32xbf16> to vector<8x8x32xbf16>
    %183 = vector.shape_cast %180 : vector<8x8x32xbf16> to vector<1x8x8x32xbf16>
    tpu.vector_store %arg5[%c0_100, %c0_101, %c0_102, %c0_103], %183 {strides = array<i32>} : memref<1x8x8x32xbf16, #tpu.memory_space<vmem>>, vector<1x8x8x32xbf16>,
    return
  }
  func.func @transform_0(%arg0: i32) -> (i32, i32, i32, i32) {
    %c0_i32 = arith.constant 0 : i32
    %c0_i32_0 = arith.constant 0 : i32
    %c0_i32_1 = arith.constant 0 : i32
    %c0_i32_2 = arith.constant 0 : i32
    return %arg0, %c0_i32, %c0_i32_0, %c0_i32_1 : i32, i32, i32, i32
  }
  func.func @transform_1(%arg0: i32) -> (i32, i32, i32, i32) {
    %c0_i32 = arith.constant 0 : i32
    %c0_i32_0 = arith.constant 0 : i32
    %c0_i32_1 = arith.constant 0 : i32
    %c0_i32_2 = arith.constant 0 : i32
    return %arg0, %c0_i32, %c0_i32_0, %c0_i32_1 : i32, i32, i32, i32
  }
  func.func @transform_2(%arg0: i32) -> (i32, i32) {
    %c0_i32 = arith.constant 0 : i32
    %c0_i32_0 = arith.constant 0 : i32
    %c0_i32_1 = arith.constant 0 : i32
    return %c0_i32, %c0_i32_0 : i32, i32
  }
  func.func @transform_3(%arg0: i32) -> (i32, i32) {
    %c0_i32 = arith.constant 0 : i32
    %c0_i32_0 = arith.constant 0 : i32
    %c0_i32_1 = arith.constant 0 : i32
    return %c0_i32, %c0_i32_0 : i32, i32
  }
  func.func @transform_4(%arg0: i32) -> (i32, i32, i32, i32) {
    %c0_i32 = arith.constant 0 : i32
    %c0_i32_0 = arith.constant 0 : i32
    %c0_i32_1 = arith.constant 0 : i32
    %c0_i32_2 = arith.constant 0 : i32
    return %arg0, %c0_i32, %c0_i32_0, %c0_i32_1 : i32, i32, i32, i32
  }
}

module attributes {stable_mosaic.version = 11 : i64} {
  func.func @kernel(%arg0: i32, %arg1: memref<1x8x8x32xbf16, #tpu.memory_space<vmem>>, %arg2: memref<288x32xbf16, #tpu.memory_space<vmem>>, %arg3: memref<1x32xf32, #tpu.memory_space<vmem>>, %arg4: memref<288x32xbf16, #tpu.memory_space<vmem>>, %arg5: memref<1x32xf32, #tpu.memory_space<vmem>>, %arg6: memref<1x8x8x32xbf16, #tpu.memory_space<vmem>>, %arg7: memref<10x25x32xbf16, #tpu.memory_space<vmem>>, %arg8: memref<64x288xbf16, #tpu.memory_space<vmem>>) attributes {dimension_semantics = [#tpu.dimension_semantics<parallel>], iteration_bounds = array<i64: 2>, scalar_prefetch = 0 : i64, scratch_operands = 2 : i64, tpu.core_type = #tpu.core_type<tc>, window_params = [{transform_indices = @transform_0, window_bounds = array<i64: 1, 8, 8, 32>}, {pipeline_mode = #tpu.pipeline_mode<synchronous>, transform_indices = @transform_1, window_bounds = array<i64: 288, 32>}, {pipeline_mode = #tpu.pipeline_mode<synchronous>, transform_indices = @transform_2, window_bounds = array<i64: 1, 32>}, {pipeline_mode = #tpu.pipeline_mode<synchronous>, transform_indices = @transform_3, window_bounds = array<i64: 288, 32>}, {pipeline_mode = #tpu.pipeline_mode<synchronous>, transform_indices = @transform_4, window_bounds = array<i64: 1, 32>}, {transform_indices = @transform_5, window_bounds = array<i64: 1, 8, 8, 32>}]} {
    %c0 = arith.constant 0 : index
    %c0_0 = arith.constant 0 : index
    %c0_1 = arith.constant 0 : index
    %c0_2 = arith.constant 0 : index
    %0 = vector.load %arg1[%c0, %c0_0, %c0_1, %c0_2] : memref<1x8x8x32xbf16, #tpu.memory_space<vmem>>, vector<1x8x8x32xbf16>
    %1 = vector.shape_cast %0 : vector<1x8x8x32xbf16> to vector<8x8x32xbf16>
    %cst = arith.constant 0.000000e+00 : bf16
    %2 = vector.broadcast %cst : bf16 to vector<10x25x32xbf16>
    %c0_3 = arith.constant 0 : index
    %c0_4 = arith.constant 0 : index
    %c0_5 = arith.constant 0 : index
    %3 = vector.load %arg7[%c0_3, %c0_4, %c0_5] : memref<10x25x32xbf16, #tpu.memory_space<vmem>>, vector<10x25x32xbf16>
    tpu.vector_store %arg7[%c0_3, %c0_4, %c0_5], %2 {strides = array<i32>} : memref<10x25x32xbf16, #tpu.memory_space<vmem>>, vector<10x25x32xbf16>,
    %c1 = arith.constant 1 : index
    %c16 = arith.constant 16 : index
    %c0_6 = arith.constant 0 : index
    %4 = vector.load %arg7[%c1, %c16, %c0_6] : memref<10x25x32xbf16, #tpu.memory_space<vmem>>, vector<8x8x32xbf16>
    tpu.vector_store %arg7[%c1, %c16, %c0_6], %1 {strides = array<i32>} : memref<10x25x32xbf16, #tpu.memory_space<vmem>>, vector<8x8x32xbf16>,
    %c0_7 = arith.constant 0 : index
    %c15 = arith.constant 15 : index
    %c0_8 = arith.constant 0 : index
    %5 = vector.load %arg7[%c0_7, %c15, %c0_8] : memref<10x25x32xbf16, #tpu.memory_space<vmem>>, vector<8x8x32xbf16>
    %6 = vector.shape_cast %5 : vector<8x8x32xbf16> to vector<64x32xbf16>
    %c0_9 = arith.constant 0 : index
    %c0_10 = arith.constant 0 : index
    %7 = vector.load %arg8[%c0_9, %c0_10] : memref<64x288xbf16, #tpu.memory_space<vmem>>, vector<64x32xbf16>
    tpu.vector_store %arg8[%c0_9, %c0_10], %6 {strides = array<i32>} : memref<64x288xbf16, #tpu.memory_space<vmem>>, vector<64x32xbf16>,
    %c0_11 = arith.constant 0 : index
    %c16_12 = arith.constant 16 : index
    %c0_13 = arith.constant 0 : index
    %8 = vector.load %arg7[%c0_11, %c16_12, %c0_13] : memref<10x25x32xbf16, #tpu.memory_space<vmem>>, vector<8x8x32xbf16>
    %9 = vector.shape_cast %8 : vector<8x8x32xbf16> to vector<64x32xbf16>
    %c0_14 = arith.constant 0 : index
    %c32 = arith.constant 32 : index
    %10 = vector.load %arg8[%c0_14, %c32] : memref<64x288xbf16, #tpu.memory_space<vmem>>, vector<64x32xbf16>
    tpu.vector_store %arg8[%c0_14, %c32], %9 {strides = array<i32>} : memref<64x288xbf16, #tpu.memory_space<vmem>>, vector<64x32xbf16>,
    %c0_15 = arith.constant 0 : index
    %c17 = arith.constant 17 : index
    %c0_16 = arith.constant 0 : index
    %11 = vector.load %arg7[%c0_15, %c17, %c0_16] : memref<10x25x32xbf16, #tpu.memory_space<vmem>>, vector<8x8x32xbf16>
    %12 = vector.shape_cast %11 : vector<8x8x32xbf16> to vector<64x32xbf16>
    %c0_17 = arith.constant 0 : index
    %c64 = arith.constant 64 : index
    %13 = vector.load %arg8[%c0_17, %c64] : memref<64x288xbf16, #tpu.memory_space<vmem>>, vector<64x32xbf16>
    tpu.vector_store %arg8[%c0_17, %c64], %12 {strides = array<i32>} : memref<64x288xbf16, #tpu.memory_space<vmem>>, vector<64x32xbf16>,
    %c1_18 = arith.constant 1 : index
    %c15_19 = arith.constant 15 : index
    %c0_20 = arith.constant 0 : index
    %14 = vector.load %arg7[%c1_18, %c15_19, %c0_20] : memref<10x25x32xbf16, #tpu.memory_space<vmem>>, vector<8x8x32xbf16>
    %15 = vector.shape_cast %14 : vector<8x8x32xbf16> to vector<64x32xbf16>
    %c0_21 = arith.constant 0 : index
    %c96 = arith.constant 96 : index
    %16 = vector.load %arg8[%c0_21, %c96] : memref<64x288xbf16, #tpu.memory_space<vmem>>, vector<64x32xbf16>
    tpu.vector_store %arg8[%c0_21, %c96], %15 {strides = array<i32>} : memref<64x288xbf16, #tpu.memory_space<vmem>>, vector<64x32xbf16>,
    %c1_22 = arith.constant 1 : index
    %c16_23 = arith.constant 16 : index
    %c0_24 = arith.constant 0 : index
    %17 = vector.load %arg7[%c1_22, %c16_23, %c0_24] : memref<10x25x32xbf16, #tpu.memory_space<vmem>>, vector<8x8x32xbf16>
    %18 = vector.shape_cast %17 : vector<8x8x32xbf16> to vector<64x32xbf16>
    %c0_25 = arith.constant 0 : index
    %c128 = arith.constant 128 : index
    %19 = vector.load %arg8[%c0_25, %c128] : memref<64x288xbf16, #tpu.memory_space<vmem>>, vector<64x32xbf16>
    tpu.vector_store %arg8[%c0_25, %c128], %18 {strides = array<i32>} : memref<64x288xbf16, #tpu.memory_space<vmem>>, vector<64x32xbf16>,
    %c1_26 = arith.constant 1 : index
    %c17_27 = arith.constant 17 : index
    %c0_28 = arith.constant 0 : index
    %20 = vector.load %arg7[%c1_26, %c17_27, %c0_28] : memref<10x25x32xbf16, #tpu.memory_space<vmem>>, vector<8x8x32xbf16>
    %21 = vector.shape_cast %20 : vector<8x8x32xbf16> to vector<64x32xbf16>
    %c0_29 = arith.constant 0 : index
    %c160 = arith.constant 160 : index
    %22 = vector.load %arg8[%c0_29, %c160] : memref<64x288xbf16, #tpu.memory_space<vmem>>, vector<64x32xbf16>
    tpu.vector_store %arg8[%c0_29, %c160], %21 {strides = array<i32>} : memref<64x288xbf16, #tpu.memory_space<vmem>>, vector<64x32xbf16>,
    %c2 = arith.constant 2 : index
    %c15_30 = arith.constant 15 : index
    %c0_31 = arith.constant 0 : index
    %23 = vector.load %arg7[%c2, %c15_30, %c0_31] : memref<10x25x32xbf16, #tpu.memory_space<vmem>>, vector<8x8x32xbf16>
    %24 = vector.shape_cast %23 : vector<8x8x32xbf16> to vector<64x32xbf16>
    %c0_32 = arith.constant 0 : index
    %c192 = arith.constant 192 : index
    %25 = vector.load %arg8[%c0_32, %c192] : memref<64x288xbf16, #tpu.memory_space<vmem>>, vector<64x32xbf16>
    tpu.vector_store %arg8[%c0_32, %c192], %24 {strides = array<i32>} : memref<64x288xbf16, #tpu.memory_space<vmem>>, vector<64x32xbf16>,
    %c2_33 = arith.constant 2 : index
    %c16_34 = arith.constant 16 : index
    %c0_35 = arith.constant 0 : index
    %26 = vector.load %arg7[%c2_33, %c16_34, %c0_35] : memref<10x25x32xbf16, #tpu.memory_space<vmem>>, vector<8x8x32xbf16>
    %27 = vector.shape_cast %26 : vector<8x8x32xbf16> to vector<64x32xbf16>
    %c0_36 = arith.constant 0 : index
    %c224 = arith.constant 224 : index
    %28 = vector.load %arg8[%c0_36, %c224] : memref<64x288xbf16, #tpu.memory_space<vmem>>, vector<64x32xbf16>
    tpu.vector_store %arg8[%c0_36, %c224], %27 {strides = array<i32>} : memref<64x288xbf16, #tpu.memory_space<vmem>>, vector<64x32xbf16>,
    %c2_37 = arith.constant 2 : index
    %c17_38 = arith.constant 17 : index
    %c0_39 = arith.constant 0 : index
    %29 = vector.load %arg7[%c2_37, %c17_38, %c0_39] : memref<10x25x32xbf16, #tpu.memory_space<vmem>>, vector<8x8x32xbf16>
    %30 = vector.shape_cast %29 : vector<8x8x32xbf16> to vector<64x32xbf16>
    %c0_40 = arith.constant 0 : index
    %c256 = arith.constant 256 : index
    %31 = vector.load %arg8[%c0_40, %c256] : memref<64x288xbf16, #tpu.memory_space<vmem>>, vector<64x32xbf16>
    tpu.vector_store %arg8[%c0_40, %c256], %30 {strides = array<i32>} : memref<64x288xbf16, #tpu.memory_space<vmem>>, vector<64x32xbf16>,
    %c0_41 = arith.constant 0 : index
    %c0_42 = arith.constant 0 : index
    %32 = vector.load %arg8[%c0_41, %c0_42] : memref<64x288xbf16, #tpu.memory_space<vmem>>, vector<64x288xbf16>
    %c0_43 = arith.constant 0 : index
    %c0_44 = arith.constant 0 : index
    %33 = vector.load %arg2[%c0_43, %c0_44] : memref<288x32xbf16, #tpu.memory_space<vmem>>, vector<288x32xbf16>
    %cst_45 = arith.constant dense<0.000000e+00> : vector<64x32xf32>
    %34 = tpu.matmul %32, %33, %cst_45 {dimension_numbers = #tpu.dot_dimension_numbers<[1], [0], [0], [1], [0, 0, 1, 1], [], []>} : vector<64x288xbf16>, vector<288x32xbf16>, vector<64x32xf32> -> vector<64x32xf32>
    %c0_46 = arith.constant 0 : index
    %c0_47 = arith.constant 0 : index
    %35 = vector.load %arg3[%c0_46, %c0_47] : memref<1x32xf32, #tpu.memory_space<vmem>>, vector<1x32xf32>
    %36 = vector.broadcast %35 : vector<1x32xf32> to vector<64x32xf32>
    %37 = arith.addf %34, %36 : vector<64x32xf32>
    %cst_48 = arith.constant 0.000000e+00 : f32
    %38 = vector.broadcast %cst_48 : f32 to vector<64x32xf32>
    %39 = arith.cmpf oge, %37, %38 : vector<64x32xf32>
    %cst_49 = arith.constant 2.000000e-01 : f32
    %40 = vector.broadcast %cst_49 : f32 to vector<64x32xf32>
    %41 = arith.mulf %40, %37 : vector<64x32xf32>
    %42 = arith.select %39, %37, %41 : vector<64x32xi1>, vector<64x32xf32>
    %43 = vector.shape_cast %42 : vector<64x32xf32> to vector<8x8x32xf32>
    %44 = arith.truncf %43 : vector<8x8x32xf32> to vector<8x8x32xbf16>
    %cst_50 = arith.constant 0.000000e+00 : bf16
    %45 = vector.broadcast %cst_50 : bf16 to vector<10x25x32xbf16>
    %c0_51 = arith.constant 0 : index
    %c0_52 = arith.constant 0 : index
    %c0_53 = arith.constant 0 : index
    %46 = vector.load %arg7[%c0_51, %c0_52, %c0_53] : memref<10x25x32xbf16, #tpu.memory_space<vmem>>, vector<10x25x32xbf16>
    tpu.vector_store %arg7[%c0_51, %c0_52, %c0_53], %45 {strides = array<i32>} : memref<10x25x32xbf16, #tpu.memory_space<vmem>>, vector<10x25x32xbf16>,
    %c1_54 = arith.constant 1 : index
    %c16_55 = arith.constant 16 : index
    %c0_56 = arith.constant 0 : index
    %47 = vector.load %arg7[%c1_54, %c16_55, %c0_56] : memref<10x25x32xbf16, #tpu.memory_space<vmem>>, vector<8x8x32xbf16>
    tpu.vector_store %arg7[%c1_54, %c16_55, %c0_56], %44 {strides = array<i32>} : memref<10x25x32xbf16, #tpu.memory_space<vmem>>, vector<8x8x32xbf16>,
    %c0_57 = arith.constant 0 : index
    %c15_58 = arith.constant 15 : index
    %c0_59 = arith.constant 0 : index
    %48 = vector.load %arg7[%c0_57, %c15_58, %c0_59] : memref<10x25x32xbf16, #tpu.memory_space<vmem>>, vector<8x8x32xbf16>
    %49 = vector.shape_cast %48 : vector<8x8x32xbf16> to vector<64x32xbf16>
    %c0_60 = arith.constant 0 : index
    %c0_61 = arith.constant 0 : index
    %50 = vector.load %arg8[%c0_60, %c0_61] : memref<64x288xbf16, #tpu.memory_space<vmem>>, vector<64x32xbf16>
    tpu.vector_store %arg8[%c0_60, %c0_61], %49 {strides = array<i32>} : memref<64x288xbf16, #tpu.memory_space<vmem>>, vector<64x32xbf16>,
    %c0_62 = arith.constant 0 : index
    %c16_63 = arith.constant 16 : index
    %c0_64 = arith.constant 0 : index
    %51 = vector.load %arg7[%c0_62, %c16_63, %c0_64] : memref<10x25x32xbf16, #tpu.memory_space<vmem>>, vector<8x8x32xbf16>
    %52 = vector.shape_cast %51 : vector<8x8x32xbf16> to vector<64x32xbf16>
    %c0_65 = arith.constant 0 : index
    %c32_66 = arith.constant 32 : index
    %53 = vector.load %arg8[%c0_65, %c32_66] : memref<64x288xbf16, #tpu.memory_space<vmem>>, vector<64x32xbf16>
    tpu.vector_store %arg8[%c0_65, %c32_66], %52 {strides = array<i32>} : memref<64x288xbf16, #tpu.memory_space<vmem>>, vector<64x32xbf16>,
    %c0_67 = arith.constant 0 : index
    %c17_68 = arith.constant 17 : index
    %c0_69 = arith.constant 0 : index
    %54 = vector.load %arg7[%c0_67, %c17_68, %c0_69] : memref<10x25x32xbf16, #tpu.memory_space<vmem>>, vector<8x8x32xbf16>
    %55 = vector.shape_cast %54 : vector<8x8x32xbf16> to vector<64x32xbf16>
    %c0_70 = arith.constant 0 : index
    %c64_71 = arith.constant 64 : index
    %56 = vector.load %arg8[%c0_70, %c64_71] : memref<64x288xbf16, #tpu.memory_space<vmem>>, vector<64x32xbf16>
    tpu.vector_store %arg8[%c0_70, %c64_71], %55 {strides = array<i32>} : memref<64x288xbf16, #tpu.memory_space<vmem>>, vector<64x32xbf16>,
    %c1_72 = arith.constant 1 : index
    %c15_73 = arith.constant 15 : index
    %c0_74 = arith.constant 0 : index
    %57 = vector.load %arg7[%c1_72, %c15_73, %c0_74] : memref<10x25x32xbf16, #tpu.memory_space<vmem>>, vector<8x8x32xbf16>
    %58 = vector.shape_cast %57 : vector<8x8x32xbf16> to vector<64x32xbf16>
    %c0_75 = arith.constant 0 : index
    %c96_76 = arith.constant 96 : index
    %59 = vector.load %arg8[%c0_75, %c96_76] : memref<64x288xbf16, #tpu.memory_space<vmem>>, vector<64x32xbf16>
    tpu.vector_store %arg8[%c0_75, %c96_76], %58 {strides = array<i32>} : memref<64x288xbf16, #tpu.memory_space<vmem>>, vector<64x32xbf16>,
    %c1_77 = arith.constant 1 : index
    %c16_78 = arith.constant 16 : index
    %c0_79 = arith.constant 0 : index
    %60 = vector.load %arg7[%c1_77, %c16_78, %c0_79] : memref<10x25x32xbf16, #tpu.memory_space<vmem>>, vector<8x8x32xbf16>
    %61 = vector.shape_cast %60 : vector<8x8x32xbf16> to vector<64x32xbf16>
    %c0_80 = arith.constant 0 : index
    %c128_81 = arith.constant 128 : index
    %62 = vector.load %arg8[%c0_80, %c128_81] : memref<64x288xbf16, #tpu.memory_space<vmem>>, vector<64x32xbf16>
    tpu.vector_store %arg8[%c0_80, %c128_81], %61 {strides = array<i32>} : memref<64x288xbf16, #tpu.memory_space<vmem>>, vector<64x32xbf16>,
    %c1_82 = arith.constant 1 : index
    %c17_83 = arith.constant 17 : index
    %c0_84 = arith.constant 0 : index
    %63 = vector.load %arg7[%c1_82, %c17_83, %c0_84] : memref<10x25x32xbf16, #tpu.memory_space<vmem>>, vector<8x8x32xbf16>
    %64 = vector.shape_cast %63 : vector<8x8x32xbf16> to vector<64x32xbf16>
    %c0_85 = arith.constant 0 : index
    %c160_86 = arith.constant 160 : index
    %65 = vector.load %arg8[%c0_85, %c160_86] : memref<64x288xbf16, #tpu.memory_space<vmem>>, vector<64x32xbf16>
    tpu.vector_store %arg8[%c0_85, %c160_86], %64 {strides = array<i32>} : memref<64x288xbf16, #tpu.memory_space<vmem>>, vector<64x32xbf16>,
    %c2_87 = arith.constant 2 : index
    %c15_88 = arith.constant 15 : index
    %c0_89 = arith.constant 0 : index
    %66 = vector.load %arg7[%c2_87, %c15_88, %c0_89] : memref<10x25x32xbf16, #tpu.memory_space<vmem>>, vector<8x8x32xbf16>
    %67 = vector.shape_cast %66 : vector<8x8x32xbf16> to vector<64x32xbf16>
    %c0_90 = arith.constant 0 : index
    %c192_91 = arith.constant 192 : index
    %68 = vector.load %arg8[%c0_90, %c192_91] : memref<64x288xbf16, #tpu.memory_space<vmem>>, vector<64x32xbf16>
    tpu.vector_store %arg8[%c0_90, %c192_91], %67 {strides = array<i32>} : memref<64x288xbf16, #tpu.memory_space<vmem>>, vector<64x32xbf16>,
    %c2_92 = arith.constant 2 : index
    %c16_93 = arith.constant 16 : index
    %c0_94 = arith.constant 0 : index
    %69 = vector.load %arg7[%c2_92, %c16_93, %c0_94] : memref<10x25x32xbf16, #tpu.memory_space<vmem>>, vector<8x8x32xbf16>
    %70 = vector.shape_cast %69 : vector<8x8x32xbf16> to vector<64x32xbf16>
    %c0_95 = arith.constant 0 : index
    %c224_96 = arith.constant 224 : index
    %71 = vector.load %arg8[%c0_95, %c224_96] : memref<64x288xbf16, #tpu.memory_space<vmem>>, vector<64x32xbf16>
    tpu.vector_store %arg8[%c0_95, %c224_96], %70 {strides = array<i32>} : memref<64x288xbf16, #tpu.memory_space<vmem>>, vector<64x32xbf16>,
    %c2_97 = arith.constant 2 : index
    %c17_98 = arith.constant 17 : index
    %c0_99 = arith.constant 0 : index
    %72 = vector.load %arg7[%c2_97, %c17_98, %c0_99] : memref<10x25x32xbf16, #tpu.memory_space<vmem>>, vector<8x8x32xbf16>
    %73 = vector.shape_cast %72 : vector<8x8x32xbf16> to vector<64x32xbf16>
    %c0_100 = arith.constant 0 : index
    %c256_101 = arith.constant 256 : index
    %74 = vector.load %arg8[%c0_100, %c256_101] : memref<64x288xbf16, #tpu.memory_space<vmem>>, vector<64x32xbf16>
    tpu.vector_store %arg8[%c0_100, %c256_101], %73 {strides = array<i32>} : memref<64x288xbf16, #tpu.memory_space<vmem>>, vector<64x32xbf16>,
    %c0_102 = arith.constant 0 : index
    %c0_103 = arith.constant 0 : index
    %75 = vector.load %arg8[%c0_102, %c0_103] : memref<64x288xbf16, #tpu.memory_space<vmem>>, vector<64x288xbf16>
    %c0_104 = arith.constant 0 : index
    %c0_105 = arith.constant 0 : index
    %76 = vector.load %arg4[%c0_104, %c0_105] : memref<288x32xbf16, #tpu.memory_space<vmem>>, vector<288x32xbf16>
    %cst_106 = arith.constant dense<0.000000e+00> : vector<64x32xf32>
    %77 = tpu.matmul %75, %76, %cst_106 {dimension_numbers = #tpu.dot_dimension_numbers<[1], [0], [0], [1], [0, 0, 1, 1], [], []>} : vector<64x288xbf16>, vector<288x32xbf16>, vector<64x32xf32> -> vector<64x32xf32>
    %c0_107 = arith.constant 0 : index
    %c0_108 = arith.constant 0 : index
    %78 = vector.load %arg5[%c0_107, %c0_108] : memref<1x32xf32, #tpu.memory_space<vmem>>, vector<1x32xf32>
    %79 = vector.broadcast %78 : vector<1x32xf32> to vector<64x32xf32>
    %80 = arith.addf %77, %79 : vector<64x32xf32>
    %81 = vector.shape_cast %80 : vector<64x32xf32> to vector<8x8x32xf32>
    %82 = arith.extf %1 : vector<8x8x32xbf16> to vector<8x8x32xf32>
    %83 = arith.addf %81, %82 : vector<8x8x32xf32>
    %84 = arith.truncf %83 : vector<8x8x32xf32> to vector<8x8x32xbf16>
    %c0_109 = arith.constant 0 : index
    %c0_110 = arith.constant 0 : index
    %c0_111 = arith.constant 0 : index
    %c0_112 = arith.constant 0 : index
    %85 = vector.load %arg6[%c0_109, %c0_110, %c0_111, %c0_112] : memref<1x8x8x32xbf16, #tpu.memory_space<vmem>>, vector<1x8x8x32xbf16>
    %86 = vector.shape_cast %85 : vector<1x8x8x32xbf16> to vector<8x8x32xbf16>
    %87 = vector.shape_cast %84 : vector<8x8x32xbf16> to vector<1x8x8x32xbf16>
    tpu.vector_store %arg6[%c0_109, %c0_110, %c0_111, %c0_112], %87 {strides = array<i32>} : memref<1x8x8x32xbf16, #tpu.memory_space<vmem>>, vector<1x8x8x32xbf16>,
    return
  }
  func.func @transform_0(%arg0: i32) -> (i32, i32, i32, i32) {
    %c0_i32 = arith.constant 0 : i32
    %c0_i32_0 = arith.constant 0 : i32
    %c0_i32_1 = arith.constant 0 : i32
    %c0_i32_2 = arith.constant 0 : i32
    return %arg0, %c0_i32, %c0_i32_0, %c0_i32_1 : i32, i32, i32, i32
  }
  func.func @transform_1(%arg0: i32) -> (i32, i32) {
    %c0_i32 = arith.constant 0 : i32
    %c0_i32_0 = arith.constant 0 : i32
    %c0_i32_1 = arith.constant 0 : i32
    return %c0_i32, %c0_i32_0 : i32, i32
  }
  func.func @transform_2(%arg0: i32) -> (i32, i32) {
    %c0_i32 = arith.constant 0 : i32
    %c0_i32_0 = arith.constant 0 : i32
    %c0_i32_1 = arith.constant 0 : i32
    return %c0_i32, %c0_i32_0 : i32, i32
  }
  func.func @transform_3(%arg0: i32) -> (i32, i32) {
    %c0_i32 = arith.constant 0 : i32
    %c0_i32_0 = arith.constant 0 : i32
    %c0_i32_1 = arith.constant 0 : i32
    return %c0_i32, %c0_i32_0 : i32, i32
  }
  func.func @transform_4(%arg0: i32) -> (i32, i32) {
    %c0_i32 = arith.constant 0 : i32
    %c0_i32_0 = arith.constant 0 : i32
    %c0_i32_1 = arith.constant 0 : i32
    return %c0_i32, %c0_i32_0 : i32, i32
  }
  func.func @transform_5(%arg0: i32) -> (i32, i32, i32, i32) {
    %c0_i32 = arith.constant 0 : i32
    %c0_i32_0 = arith.constant 0 : i32
    %c0_i32_1 = arith.constant 0 : i32
    %c0_i32_2 = arith.constant 0 : i32
    return %arg0, %c0_i32, %c0_i32_0, %c0_i32_1 : i32, i32, i32, i32
  }
}

module attributes {stable_mosaic.version = 11 : i64} {
  func.func @kernel(%arg0: i32, %arg1: memref<1x8x8x32xbf16, #tpu.memory_space<vmem>>, %arg2: memref<288x32xbf16, #tpu.memory_space<vmem>>, %arg3: memref<1x32xf32, #tpu.memory_space<vmem>>, %arg4: memref<1x8x8x32xf32, #tpu.memory_space<vmem>>, %arg5: memref<10x25x32xbf16, #tpu.memory_space<vmem>>, %arg6: memref<64x288xbf16, #tpu.memory_space<vmem>>) attributes {dimension_semantics = [#tpu.dimension_semantics<parallel>], iteration_bounds = array<i64: 2>, scalar_prefetch = 0 : i64, scratch_operands = 2 : i64, tpu.core_type = #tpu.core_type<tc>, window_params = [{transform_indices = @transform_0, window_bounds = array<i64: 1, 8, 8, 32>}, {pipeline_mode = #tpu.pipeline_mode<synchronous>, transform_indices = @transform_1, window_bounds = array<i64: 288, 32>}, {pipeline_mode = #tpu.pipeline_mode<synchronous>, transform_indices = @transform_2, window_bounds = array<i64: 1, 32>}, {transform_indices = @transform_3, window_bounds = array<i64: 1, 8, 8, 32>}]} {
    %c0 = arith.constant 0 : index
    %c0_0 = arith.constant 0 : index
    %c0_1 = arith.constant 0 : index
    %c0_2 = arith.constant 0 : index
    %0 = vector.load %arg1[%c0, %c0_0, %c0_1, %c0_2] : memref<1x8x8x32xbf16, #tpu.memory_space<vmem>>, vector<1x8x8x32xbf16>
    %1 = vector.shape_cast %0 : vector<1x8x8x32xbf16> to vector<8x8x32xbf16>
    %cst = arith.constant 0.000000e+00 : bf16
    %2 = vector.broadcast %cst : bf16 to vector<10x25x32xbf16>
    %c0_3 = arith.constant 0 : index
    %c0_4 = arith.constant 0 : index
    %c0_5 = arith.constant 0 : index
    %3 = vector.load %arg5[%c0_3, %c0_4, %c0_5] : memref<10x25x32xbf16, #tpu.memory_space<vmem>>, vector<10x25x32xbf16>
    tpu.vector_store %arg5[%c0_3, %c0_4, %c0_5], %2 {strides = array<i32>} : memref<10x25x32xbf16, #tpu.memory_space<vmem>>, vector<10x25x32xbf16>,
    %c1 = arith.constant 1 : index
    %c16 = arith.constant 16 : index
    %c0_6 = arith.constant 0 : index
    %4 = vector.load %arg5[%c1, %c16, %c0_6] : memref<10x25x32xbf16, #tpu.memory_space<vmem>>, vector<8x8x32xbf16>
    tpu.vector_store %arg5[%c1, %c16, %c0_6], %1 {strides = array<i32>} : memref<10x25x32xbf16, #tpu.memory_space<vmem>>, vector<8x8x32xbf16>,
    %c0_7 = arith.constant 0 : index
    %c15 = arith.constant 15 : index
    %c0_8 = arith.constant 0 : index
    %5 = vector.load %arg5[%c0_7, %c15, %c0_8] : memref<10x25x32xbf16, #tpu.memory_space<vmem>>, vector<8x8x32xbf16>
    %6 = vector.shape_cast %5 : vector<8x8x32xbf16> to vector<64x32xbf16>
    %c0_9 = arith.constant 0 : index
    %c0_10 = arith.constant 0 : index
    %7 = vector.load %arg6[%c0_9, %c0_10] : memref<64x288xbf16, #tpu.memory_space<vmem>>, vector<64x32xbf16>
    tpu.vector_store %arg6[%c0_9, %c0_10], %6 {strides = array<i32>} : memref<64x288xbf16, #tpu.memory_space<vmem>>, vector<64x32xbf16>,
    %c0_11 = arith.constant 0 : index
    %c16_12 = arith.constant 16 : index
    %c0_13 = arith.constant 0 : index
    %8 = vector.load %arg5[%c0_11, %c16_12, %c0_13] : memref<10x25x32xbf16, #tpu.memory_space<vmem>>, vector<8x8x32xbf16>
    %9 = vector.shape_cast %8 : vector<8x8x32xbf16> to vector<64x32xbf16>
    %c0_14 = arith.constant 0 : index
    %c32 = arith.constant 32 : index
    %10 = vector.load %arg6[%c0_14, %c32] : memref<64x288xbf16, #tpu.memory_space<vmem>>, vector<64x32xbf16>
    tpu.vector_store %arg6[%c0_14, %c32], %9 {strides = array<i32>} : memref<64x288xbf16, #tpu.memory_space<vmem>>, vector<64x32xbf16>,
    %c0_15 = arith.constant 0 : index
    %c17 = arith.constant 17 : index
    %c0_16 = arith.constant 0 : index
    %11 = vector.load %arg5[%c0_15, %c17, %c0_16] : memref<10x25x32xbf16, #tpu.memory_space<vmem>>, vector<8x8x32xbf16>
    %12 = vector.shape_cast %11 : vector<8x8x32xbf16> to vector<64x32xbf16>
    %c0_17 = arith.constant 0 : index
    %c64 = arith.constant 64 : index
    %13 = vector.load %arg6[%c0_17, %c64] : memref<64x288xbf16, #tpu.memory_space<vmem>>, vector<64x32xbf16>
    tpu.vector_store %arg6[%c0_17, %c64], %12 {strides = array<i32>} : memref<64x288xbf16, #tpu.memory_space<vmem>>, vector<64x32xbf16>,
    %c1_18 = arith.constant 1 : index
    %c15_19 = arith.constant 15 : index
    %c0_20 = arith.constant 0 : index
    %14 = vector.load %arg5[%c1_18, %c15_19, %c0_20] : memref<10x25x32xbf16, #tpu.memory_space<vmem>>, vector<8x8x32xbf16>
    %15 = vector.shape_cast %14 : vector<8x8x32xbf16> to vector<64x32xbf16>
    %c0_21 = arith.constant 0 : index
    %c96 = arith.constant 96 : index
    %16 = vector.load %arg6[%c0_21, %c96] : memref<64x288xbf16, #tpu.memory_space<vmem>>, vector<64x32xbf16>
    tpu.vector_store %arg6[%c0_21, %c96], %15 {strides = array<i32>} : memref<64x288xbf16, #tpu.memory_space<vmem>>, vector<64x32xbf16>,
    %c1_22 = arith.constant 1 : index
    %c16_23 = arith.constant 16 : index
    %c0_24 = arith.constant 0 : index
    %17 = vector.load %arg5[%c1_22, %c16_23, %c0_24] : memref<10x25x32xbf16, #tpu.memory_space<vmem>>, vector<8x8x32xbf16>
    %18 = vector.shape_cast %17 : vector<8x8x32xbf16> to vector<64x32xbf16>
    %c0_25 = arith.constant 0 : index
    %c128 = arith.constant 128 : index
    %19 = vector.load %arg6[%c0_25, %c128] : memref<64x288xbf16, #tpu.memory_space<vmem>>, vector<64x32xbf16>
    tpu.vector_store %arg6[%c0_25, %c128], %18 {strides = array<i32>} : memref<64x288xbf16, #tpu.memory_space<vmem>>, vector<64x32xbf16>,
    %c1_26 = arith.constant 1 : index
    %c17_27 = arith.constant 17 : index
    %c0_28 = arith.constant 0 : index
    %20 = vector.load %arg5[%c1_26, %c17_27, %c0_28] : memref<10x25x32xbf16, #tpu.memory_space<vmem>>, vector<8x8x32xbf16>
    %21 = vector.shape_cast %20 : vector<8x8x32xbf16> to vector<64x32xbf16>
    %c0_29 = arith.constant 0 : index
    %c160 = arith.constant 160 : index
    %22 = vector.load %arg6[%c0_29, %c160] : memref<64x288xbf16, #tpu.memory_space<vmem>>, vector<64x32xbf16>
    tpu.vector_store %arg6[%c0_29, %c160], %21 {strides = array<i32>} : memref<64x288xbf16, #tpu.memory_space<vmem>>, vector<64x32xbf16>,
    %c2 = arith.constant 2 : index
    %c15_30 = arith.constant 15 : index
    %c0_31 = arith.constant 0 : index
    %23 = vector.load %arg5[%c2, %c15_30, %c0_31] : memref<10x25x32xbf16, #tpu.memory_space<vmem>>, vector<8x8x32xbf16>
    %24 = vector.shape_cast %23 : vector<8x8x32xbf16> to vector<64x32xbf16>
    %c0_32 = arith.constant 0 : index
    %c192 = arith.constant 192 : index
    %25 = vector.load %arg6[%c0_32, %c192] : memref<64x288xbf16, #tpu.memory_space<vmem>>, vector<64x32xbf16>
    tpu.vector_store %arg6[%c0_32, %c192], %24 {strides = array<i32>} : memref<64x288xbf16, #tpu.memory_space<vmem>>, vector<64x32xbf16>,
    %c2_33 = arith.constant 2 : index
    %c16_34 = arith.constant 16 : index
    %c0_35 = arith.constant 0 : index
    %26 = vector.load %arg5[%c2_33, %c16_34, %c0_35] : memref<10x25x32xbf16, #tpu.memory_space<vmem>>, vector<8x8x32xbf16>
    %27 = vector.shape_cast %26 : vector<8x8x32xbf16> to vector<64x32xbf16>
    %c0_36 = arith.constant 0 : index
    %c224 = arith.constant 224 : index
    %28 = vector.load %arg6[%c0_36, %c224] : memref<64x288xbf16, #tpu.memory_space<vmem>>, vector<64x32xbf16>
    tpu.vector_store %arg6[%c0_36, %c224], %27 {strides = array<i32>} : memref<64x288xbf16, #tpu.memory_space<vmem>>, vector<64x32xbf16>,
    %c2_37 = arith.constant 2 : index
    %c17_38 = arith.constant 17 : index
    %c0_39 = arith.constant 0 : index
    %29 = vector.load %arg5[%c2_37, %c17_38, %c0_39] : memref<10x25x32xbf16, #tpu.memory_space<vmem>>, vector<8x8x32xbf16>
    %30 = vector.shape_cast %29 : vector<8x8x32xbf16> to vector<64x32xbf16>
    %c0_40 = arith.constant 0 : index
    %c256 = arith.constant 256 : index
    %31 = vector.load %arg6[%c0_40, %c256] : memref<64x288xbf16, #tpu.memory_space<vmem>>, vector<64x32xbf16>
    tpu.vector_store %arg6[%c0_40, %c256], %30 {strides = array<i32>} : memref<64x288xbf16, #tpu.memory_space<vmem>>, vector<64x32xbf16>,
    %c0_41 = arith.constant 0 : index
    %c0_42 = arith.constant 0 : index
    %32 = vector.load %arg6[%c0_41, %c0_42] : memref<64x288xbf16, #tpu.memory_space<vmem>>, vector<64x288xbf16>
    %c0_43 = arith.constant 0 : index
    %c0_44 = arith.constant 0 : index
    %33 = vector.load %arg2[%c0_43, %c0_44] : memref<288x32xbf16, #tpu.memory_space<vmem>>, vector<288x32xbf16>
    %cst_45 = arith.constant dense<0.000000e+00> : vector<64x32xf32>
    %34 = tpu.matmul %32, %33, %cst_45 {dimension_numbers = #tpu.dot_dimension_numbers<[1], [0], [0], [1], [0, 0, 1, 1], [], []>} : vector<64x288xbf16>, vector<288x32xbf16>, vector<64x32xf32> -> vector<64x32xf32>
    %c0_46 = arith.constant 0 : index
    %c0_47 = arith.constant 0 : index
    %35 = vector.load %arg3[%c0_46, %c0_47] : memref<1x32xf32, #tpu.memory_space<vmem>>, vector<1x32xf32>
    %36 = vector.broadcast %35 : vector<1x32xf32> to vector<64x32xf32>
    %37 = arith.addf %34, %36 : vector<64x32xf32>
    %38 = vector.shape_cast %37 : vector<64x32xf32> to vector<8x8x32xf32>
    %c0_48 = arith.constant 0 : index
    %c0_49 = arith.constant 0 : index
    %c0_50 = arith.constant 0 : index
    %c0_51 = arith.constant 0 : index
    %39 = vector.load %arg4[%c0_48, %c0_49, %c0_50, %c0_51] : memref<1x8x8x32xf32, #tpu.memory_space<vmem>>, vector<1x8x8x32xf32>
    %40 = vector.shape_cast %39 : vector<1x8x8x32xf32> to vector<8x8x32xf32>
    %41 = vector.shape_cast %38 : vector<8x8x32xf32> to vector<1x8x8x32xf32>
    tpu.vector_store %arg4[%c0_48, %c0_49, %c0_50, %c0_51], %41 {strides = array<i32>} : memref<1x8x8x32xf32, #tpu.memory_space<vmem>>, vector<1x8x8x32xf32>,
    return
  }
  func.func @transform_0(%arg0: i32) -> (i32, i32, i32, i32) {
    %c0_i32 = arith.constant 0 : i32
    %c0_i32_0 = arith.constant 0 : i32
    %c0_i32_1 = arith.constant 0 : i32
    %c0_i32_2 = arith.constant 0 : i32
    return %arg0, %c0_i32, %c0_i32_0, %c0_i32_1 : i32, i32, i32, i32
  }
  func.func @transform_1(%arg0: i32) -> (i32, i32) {
    %c0_i32 = arith.constant 0 : i32
    %c0_i32_0 = arith.constant 0 : i32
    %c0_i32_1 = arith.constant 0 : i32
    return %c0_i32, %c0_i32_0 : i32, i32
  }
  func.func @transform_2(%arg0: i32) -> (i32, i32) {
    %c0_i32 = arith.constant 0 : i32
    %c0_i32_0 = arith.constant 0 : i32
    %c0_i32_1 = arith.constant 0 : i32
    return %c0_i32, %c0_i32_0 : i32, i32
  }
  func.func @transform_3(%arg0: i32) -> (i32, i32, i32, i32) {
    %c0_i32 = arith.constant 0 : i32
    %c0_i32_0 = arith.constant 0 : i32
    %c0_i32_1 = arith.constant 0 : i32
    %c0_i32_2 = arith.constant 0 : i32
    return %arg0, %c0_i32, %c0_i32_0, %c0_i32_1 : i32, i32, i32, i32
  }
}

</mosaic_0001>

<llo_original>
// kernel: feature_extractor_forward.15
$region0: #{feature_extractor_forward.15}
  #allocation0 [shape = 'u32[]', space=smem, size = 0x4, offset = 0x4, fixed_abs, tag = 'smem constant byte address 0x4 - core index']
  #allocation1 [shape = 'u32[144,128]{1,0:T(1,128)}', space=vmem, size = 0x12000, scoped, tag = 'internal scratch']
  #allocation2 [shape = 'bf16[10,25,32]{2,1,0:T(8,128)(2,1)}', space=vmem, size = 0x14000, scoped, tag = 'scratch operand']
  #allocation3 [shape = 'bf16[64,288]{1,0:T(16,128)(2,1)}', space=vmem, size = 0xc000, scoped, tag = 'scratch operand']
  %s0 = inlined_call_operand.vmem [shape: bf16[2,8,8,32], index: 0, kind: input, shape index: {}]
  %s1 = inlined_call_operand.vmem [shape: bf16[288,32], index: 1, kind: input, shape index: {}]
  %s2 = inlined_call_operand.vmem [shape: f32[1,32], index: 2, kind: input, shape index: {}]
  %s3 = inlined_call_operand.hbm [shape: f32[2,8,8,32], index: 3, kind: output, shape index: {}]
  %s4 = sld [smem:[#allocation0]]
  $region45: #{feature_extractor_forward.15} parent=0
    _
  %s6 = ssub.s32 1, %s4
  %s7 = scalar_select 0, %s6, %s4
  $region1: #{feature_extractor_forward.15} parent=0
    #allocation4 [shape = 'u8[65536]{0}', space=vmem, size = 0x10000, scoped, tag = 'output window, operand 0']
    #allocation5 [shape = 's32[2]{0}', space=sflag, size = 0x8, scoped, tag = 'scoped memory for feature_extractor_forward.15']
    %8 = vsyncpa [#allocation5], 0
    %s9 = scalar_lea.sflag [#allocation5], 1
    %10 = vsyncpa %s9, 0
    loop: start=0, step=1, limit=4
    $region2: #{feature_extractor_forward.15} parent=1 // loop_pre_header
      _
    $region3: #{feature_extractor_forward.15} parent=1 // loop_header
      %s12 = sphi 0, %s16
      %p13 = scmp.ge.s32.totalorder %s12, 4
      %s22 = sphi 0, %s24
      %s25 = sphi 0, %s22
      %s26 = sphi 0, %s25
      %s42 = sphi 0, %s26
      %s46 = sphi 0, %s46
      %s48 = sphi 0, %s46
      %s49 = sphi 0, %s48
      %s63 = sphi 0, %s49
      %s67 = sphi 0, %s67
      %s69 = sphi 0, %s67
      %s70 = sphi 0, %s69
      %s84 = sphi 0, %s70
      %s90 = sphi 0, %s92
      %s93 = sphi 0, %s90
      %s94 = sphi 0, %s93
      %s110 = sphi 0, %s94
    $region4: #{feature_extractor_forward.15} parent=1 // loop_header_branch
      %15 = sbr.rel (%p13) target = $region8
    $region5: #{feature_extractor_forward.15} parent=1 // loop_body
      %s17 = ssub.s32 %s12, 1
      %s18 = ssub.s32 %s12, 2
      %s19 = sadd.s32 %s12, 1
      %s20 = ssub.s32 %s12, %s19
      %p21 = scmp.eq.s32.totalorder %s20, 0
      %s23 = sadd.s32 %s22, 1
      %s24 = scalar_select %p21, %s22, %s23
      %p27 = pneg %p21
      %p28 = scmp.eq.s32.totalorder %s12, 1
      %p29 = por %p27, %p28
      %p30 = scmp.ne.s32.totalorder %s22, %s25
      %p31 = scmp.eq.s32.totalorder %s12, 0
      %p32 = por %p30, %p31
      %p33 = scmp.ne.s32.totalorder %s22, %s25
      %p34 = scmp.eq.s32.totalorder %s17, 1
      %p35 = por %p33, %p34
      %p36 = scmp.ne.s32.totalorder %s25, %s26
      %p37 = scmp.eq.s32.totalorder %s17, 0
      %p38 = por %p36, %p37
      %p39 = scmp.ne.s32.totalorder %s25, %s26
      %p40 = scmp.eq.s32.totalorder %s18, 1
      %p41 = por %p39, %p40
      %p43 = scmp.ne.s32.totalorder %s26, %s42
      %p44 = scmp.eq.s32.totalorder %s18, 0
      %p45 = por %p43, %p44
      %s47 = sadd.s32 %s46, 1
      %p50 = scmp.eq.s32.totalorder %s12, 1
      %p51 = scmp.ne.s32.totalorder %s46, %s48
      %p52 = scmp.eq.s32.totalorder %s12, 0
      %p53 = por %p51, %p52
      %p54 = scmp.ne.s32.totalorder %s46, %s48
      %p55 = scmp.eq.s32.totalorder %s17, 1
      %p56 = por %p54, %p55
      %p57 = scmp.ne.s32.totalorder %s48, %s49
      %p58 = scmp.eq.s32.totalorder %s17, 0
      %p59 = por %p57, %p58
      %p60 = scmp.ne.s32.totalorder %s48, %s49
      %p61 = scmp.eq.s32.totalorder %s18, 1
      %p62 = por %p60, %p61
      %p64 = scmp.ne.s32.totalorder %s49, %s63
      %p65 = scmp.eq.s32.totalorder %s18, 0
      %p66 = por %p64, %p65
      %s68 = sadd.s32 %s67, 1
      %p71 = scmp.eq.s32.totalorder %s12, 1
      %p72 = scmp.ne.s32.totalorder %s67, %s69
      %p73 = scmp.eq.s32.totalorder %s12, 0
      %p74 = por %p72, %p73
      %p75 = scmp.ne.s32.totalorder %s67, %s69
      %p76 = scmp.eq.s32.totalorder %s17, 1
      %p77 = por %p75, %p76
      %p78 = scmp.ne.s32.totalorder %s69, %s70
      %p79 = scmp.eq.s32.totalorder %s17, 0
      %p80 = por %p78, %p79
      %p81 = scmp.ne.s32.totalorder %s69, %s70
      %p82 = scmp.eq.s32.totalorder %s18, 1
      %p83 = por %p81, %p82
      %p85 = scmp.ne.s32.totalorder %s70, %s84
      %p86 = scmp.eq.s32.totalorder %s18, 0
      %p87 = por %p85, %p86
      %s88 = ssub.s32 %s12, %s19
      %p89 = scmp.eq.s32.totalorder %s88, 0
      %s91 = sadd.s32 %s90, 1
      %s92 = scalar_select %p89, %s90, %s91
      %p95 = pneg %p89
      %p96 = scmp.eq.s32.totalorder %s12, 1
      %p97 = por %p95, %p96
      %p98 = scmp.ne.s32.totalorder %s90, %s93
      %p99 = scmp.eq.s32.totalorder %s12, 0
      %p100 = por %p98, %p99
      %p101 = scmp.ne.s32.totalorder %s90, %s93
      %p102 = scmp.eq.s32.totalorder %s17, 1
      %p103 = por %p101, %p102
      %p104 = scmp.ne.s32.totalorder %s93, %s94
      %p105 = scmp.eq.s32.totalorder %s17, 0
      %p106 = por %p104, %p105
      %p107 = scmp.ne.s32.totalorder %s93, %s94
      %p108 = scmp.eq.s32.totalorder %s18, 1
      %p109 = por %p107, %p108
      %p111 = scmp.ne.s32.totalorder %s94, %s110
      %p112 = scmp.eq.s32.totalorder %s18, 0
      %p113 = por %p111, %p112
      %p114 = scmp.le.s32.totalorder 1, %s12
      %p115 = scmp.lt.s32.totalorder %s12, 3
      %p116 = pnand %p114, %p115
      %p117 = pneg %p116
      // Predicated region
      $region9: #{feature_extractor_forward.15} parent=5 // pred_check
        _
      $region10: #{feature_extractor_forward.15} parent=5 // pred_check_branch
        %119 = sbr.rel (%p116) target = $region12
      $region11: #{feature_extractor_forward.15} parent=5 // pred_region
        %s120 = ssub.s32 %s12, 1
        // Predicated region
        $region13: #{feature_extractor_forward.15} parent=11 // pred_check
          %p121 = pneg %p59
        $region14: #{feature_extractor_forward.15} parent=11 // pred_check_branch
          %123 = sbr.rel (%p121) target = $region16
        $region15: #{feature_extractor_forward.15} parent=11 // pred_region
          _
        $region16: #{feature_extractor_forward.15} parent=11 // pred_fallthru
          _
        // Predicated region
        $region17: #{feature_extractor_forward.15} parent=11 // pred_check
          %p124 = pneg %p80
        $region18: #{feature_extractor_forward.15} parent=11 // pred_check_branch
          %126 = sbr.rel (%p124) target = $region20
        $region19: #{feature_extractor_forward.15} parent=11 // pred_region
          _
        $region20: #{feature_extractor_forward.15} parent=11 // pred_fallthru
          _
      $region12: #{feature_extractor_forward.15} parent=5 // pred_fallthru
        _
      %p127 = scmp.lt.s32.totalorder %s12, 2
      // Predicated region
      $region21: #{feature_extractor_forward.15} parent=5 // pred_check
        %p128 = pneg %p127
      $region22: #{feature_extractor_forward.15} parent=5 // pred_check_branch
        %130 = sbr.rel (%p128) target = $region24
      $region23: #{feature_extractor_forward.15} parent=5 // pred_region
        // Predicated region
        $region25: #{feature_extractor_forward.15} parent=23 // pred_check
          %p131 = pneg %p32
        $region26: #{feature_extractor_forward.15} parent=23 // pred_check_branch
          %133 = sbr.rel (%p131) target = $region28
        $region27: #{feature_extractor_forward.15} parent=23 // pred_region
          %p134 = scmp.lt.s32.totalorder %s12, 1
          %s135 = scalar_select %p134, %s12, 1
          %s136 = smul.addr %s135, 8
          %s137 = smul.addr %s136, 4
          %s138 = scalar_lea.vmem %s0, %s137
        $region28: #{feature_extractor_forward.15} parent=23 // pred_fallthru
          _
      $region24: #{feature_extractor_forward.15} parent=5 // pred_fallthru
        _
      %p139 = scmp.le.s32.totalorder 1, %s12
      %p140 = scmp.lt.s32.totalorder %s12, 3
      %p141 = pnand %p139, %p140
      %p142 = pneg %p141
      // Predicated region
      $region29: #{feature_extractor_forward.15} parent=5 // pred_check
        _
      $region30: #{feature_extractor_forward.15} parent=5 // pred_check_branch
        %144 = sbr.rel (%p141) target = $region32
      $region31: #{feature_extractor_forward.15} parent=5 // pred_region
        %s145 = ssub.s32 %s12, 1
        %p146 = scmp.lt.s32.totalorder %s17, 1
        %s147 = scalar_select %p146, %s17, 1
        %s148 = smul.addr %s147, 8
        %s149 = smul.addr %s148, 4
        %s150 = scalar_lea.vmem %s0, %s149
        %p151 = pneg %p38
        %p152 = pneg %p35
        %p153 = pneg %p59
        %p154 = pneg %p56
        %p155 = pneg %p80
        %p156 = pneg %p77
        %p157 = pneg %p106
        %p158 = pneg %p103
        %s159 = sand.u32 %s93, 1
        %s160 = scalar_lea.sflag [#allocation5], %s159
        %s161 = sand.u32 %s93, 1
        %s162 = smul.addr %s161, 64
        %s163 = scalar_lea.vmem [#allocation4], %s162
        %p164 = scmp.lt.s32.totalorder %s17, 1
        %s165 = scalar_select %p164, %s17, 1
        %s166 = smul.addr %s165, 8
        %s167 = smul.addr %s166, 4
        %s168 = scalar_lea.vmem %s0, %s167
        %v170 = vld [vmem:[%s168] sm:$0xf]
        %v171 = vld [vmem:[%s168 + $0x4] sm:$0xf]
        %v172 = vld [vmem:[%s168 + $0x8] sm:$0xf]
        %v173 = vld [vmem:[%s168 + $0xc] sm:$0xf]
        %v174 = vld [vmem:[%s168 + $0x10] sm:$0xf]
        %v175 = vld [vmem:[%s168 + $0x14] sm:$0xf]
        %v176 = vld [vmem:[%s168 + $0x18] sm:$0xf]
        %v177 = vld [vmem:[%s168 + $0x1c] sm:$0xf]
        %vm178 = vcmask 257024
        %179 = vst.msk [vmem:[#allocation2] sm:$0xf] %vm178, 0
        %180 = vst.msk [vmem:[#allocation2 + $0x4] sm:$0xf] %vm178, 0
        %181 = vst.msk [vmem:[#allocation2 + $0x8] sm:$0xf] %vm178, 0
        %vm182 = vcmask 253952
        %vm183 = vsmask.f32 256
        %vm184 = vmand %vm182, %vm183
        %v185 = vld [vmem:[#allocation2 + $0xc] sm:$0x1]
        %v186 = vsel %vm184, 0, %v185
        %187 = vst [vmem:[#allocation2 + $0xc] sm:$0x1] %v186
        %188 = vst.msk [vmem:[#allocation2 + $0x10] sm:$0xf] %vm178, 0
        %189 = vst.msk [vmem:[#allocation2 + $0x14] sm:$0xf] %vm178, 0
        %190 = vst.msk [vmem:[#allocation2 + $0x18] sm:$0xf] %vm178, 0
        %v191 = vld [vmem:[#allocation2 + $0x1c] sm:$0x1]
        %v192 = vsel %vm184, 0, %v191
        %193 = vst [vmem:[#allocation2 + $0x1c] sm:$0x1] %v192
        %194 = vst.msk [vmem:[#allocation2 + $0x20] sm:$0xf] %vm178, 0
        %195 = vst.msk [vmem:[#allocation2 + $0x24] sm:$0xf] %vm178, 0
        %196 = vst.msk [vmem:[#allocation2 + $0x28] sm:$0xf] %vm178, 0
        %v197 = vld [vmem:[#allocation2 + $0x2c] sm:$0x1]
        %v198 = vsel %vm184, 0, %v197
        %199 = vst [vmem:[#allocation2 + $0x2c] sm:$0x1] %v198
        %200 = vst.msk [vmem:[#allocation2 + $0x30] sm:$0xf] %vm178, 0
        %201 = vst.msk [vmem:[#allocation2 + $0x34] sm:$0xf] %vm178, 0
        %202 = vst.msk [vmem:[#allocation2 + $0x38] sm:$0xf] %vm178, 0
        %v203 = vld [vmem:[#allocation2 + $0x3c] sm:$0x1]
        %v204 = vsel %vm184, 0, %v203
        %205 = vst [vmem:[#allocation2 + $0x3c] sm:$0x1] %v204
        %206 = vst.msk [vmem:[#allocation2 + $0x40] sm:$0xf] %vm178, 0
        %207 = vst.msk [vmem:[#allocation2 + $0x44] sm:$0xf] %vm178, 0
        %208 = vst.msk [vmem:[#allocation2 + $0x48] sm:$0xf] %vm178, 0
        %v209 = vld [vmem:[#allocation2 + $0x4c] sm:$0x1]
        %v210 = vsel %vm184, 0, %v209
        %211 = vst [vmem:[#allocation2 + $0x4c] sm:$0x1] %v210
        %212 = vst.msk [vmem:[#allocation2 + $0x50] sm:$0xf] %vm178, 0
        %213 = vst.msk [vmem:[#allocation2 + $0x54] sm:$0xf] %vm178, 0
        %214 = vst.msk [vmem:[#allocation2 + $0x58] sm:$0xf] %vm178, 0
        %v215 = vld [vmem:[#allocation2 + $0x5c] sm:$0x1]
        %v216 = vsel %vm184, 0, %v215
        %217 = vst [vmem:[#allocation2 + $0x5c] sm:$0x1] %v216
        %218 = vst.msk [vmem:[#allocation2 + $0x60] sm:$0xf] %vm178, 0
        %219 = vst.msk [vmem:[#allocation2 + $0x64] sm:$0xf] %vm178, 0
        %220 = vst.msk [vmem:[#allocation2 + $0x68] sm:$0xf] %vm178, 0
        %v221 = vld [vmem:[#allocation2 + $0x6c] sm:$0x1]
        %v222 = vsel %vm184, 0, %v221
        %223 = vst [vmem:[#allocation2 + $0x6c] sm:$0x1] %v222
        %224 = vst.msk [vmem:[#allocation2 + $0x70] sm:$0xf] %vm178, 0
        %225 = vst.msk [vmem:[#allocation2 + $0x74] sm:$0xf] %vm178, 0
        %226 = vst.msk [vmem:[#allocation2 + $0x78] sm:$0xf] %vm178, 0
        %v227 = vld [vmem:[#allocation2 + $0x7c] sm:$0x1]
        %v228 = vsel %vm184, 0, %v227
        %229 = vst [vmem:[#allocation2 + $0x7c] sm:$0x1] %v228
        %230 = vst.msk [vmem:[#allocation2 + $0x80] sm:$0xf] %vm178, 0
        %231 = vst.msk [vmem:[#allocation2 + $0x84] sm:$0xf] %vm178, 0
        %232 = vst.msk [vmem:[#allocation2 + $0x88] sm:$0xf] %vm178, 0
        %v233 = vld [vmem:[#allocation2 + $0x8c] sm:$0x1]
        %v234 = vsel %vm184, 0, %v233
        %235 = vst [vmem:[#allocation2 + $0x8c] sm:$0x1] %v234
        %236 = vst.msk [vmem:[#allocation2 + $0x90] sm:$0xf] %vm178, 0
        %237 = vst.msk [vmem:[#allocation2 + $0x94] sm:$0xf] %vm178, 0
        %238 = vst.msk [vmem:[#allocation2 + $0x98] sm:$0xf] %vm178, 0
        %v239 = vld [vmem:[#allocation2 + $0x9c] sm:$0x1]
        %v240 = vsel %vm184, 0, %v239
        %241 = vst [vmem:[#allocation2 + $0x9c] sm:$0x1] %v240
        %s242 = scalar_lea.vmem [#allocation2], 16
        %243 = vst.msk [vmem:[%s242 + $0x8] sm:$0xf] %vm178, %v170
        %244 = vst.msk [vmem:[%s242 + $0x18] sm:$0xf] %vm178, %v171
        %245 = vst.msk [vmem:[%s242 + $0x28] sm:$0xf] %vm178, %v172
        %246 = vst.msk [vmem:[%s242 + $0x38] sm:$0xf] %vm178, %v173
        %247 = vst.msk [vmem:[%s242 + $0x48] sm:$0xf] %vm178, %v174
        %248 = vst.msk [vmem:[%s242 + $0x58] sm:$0xf] %vm178, %v175
        %249 = vst.msk [vmem:[%s242 + $0x68] sm:$0xf] %vm178, %v176
        %250 = vst.msk [vmem:[%s242 + $0x78] sm:$0xf] %vm178, %v177
        %v251 = vld [vmem:[#allocation2 + $0x4] sm:$0x8]
        %v252 = vld [vmem:[#allocation2 + $0x8] sm:$0xf]
        %v253 = vld [vmem:[#allocation2 + $0x14] sm:$0x8]
        %v254 = vld [vmem:[#allocation2 + $0x18] sm:$0xf]
        %v255 = vld [vmem:[#allocation2 + $0x24] sm:$0x8]
        %v256 = vld [vmem:[#allocation2 + $0x28] sm:$0xf]
        %v257 = vld [vmem:[#allocation2 + $0x34] sm:$0x8]
        %v258 = vld [vmem:[#allocation2 + $0x38] sm:$0xf]
        %v259 = vld [vmem:[#allocation2 + $0x44] sm:$0x8]
        %v260 = vld [vmem:[#allocation2 + $0x48] sm:$0xf]
        %v261 = vld [vmem:[#allocation2 + $0x54] sm:$0x8]
        %v262 = vld [vmem:[#allocation2 + $0x58] sm:$0xf]
        %v263 = vld [vmem:[#allocation2 + $0x64] sm:$0x8]
        %v264 = vld [vmem:[#allocation2 + $0x68] sm:$0xf]
        %v265 = vld [vmem:[#allocation2 + $0x74] sm:$0x8]
        %v266 = vld [vmem:[#allocation2 + $0x78] sm:$0xf]
        %vm267 = vsmask.f32 4368
        %vm268 = vmor %vm183, %vm267
        %v270 = vshrl.u32 %v251, 16
        %v272 = vrot.slane %v270, 7
        %v273 = vrot.slane %v272, 4
        %v275 = vshrl.u32 %v252, 16
        %v277 = vrot.slane %v275, 7
        %v278 = vshll.u32 %v252, 16
        %v280 = vor.u32 %v277, %v278
        %v281 = vsel %vm268, %v273, %v280
        %v283 = vshrl.u32 %v253, 16
        %v285 = vrot.slane %v283, 7
        %v286 = vrot.slane %v285, 4
        %v288 = vshrl.u32 %v254, 16
        %v290 = vrot.slane %v288, 7
        %v291 = vshll.u32 %v254, 16
        %v293 = vor.u32 %v290, %v291
        %v294 = vsel %vm268, %v286, %v293
        %v296 = vshrl.u32 %v255, 16
        %v298 = vrot.slane %v296, 7
        %v299 = vrot.slane %v298, 4
        %v301 = vshrl.u32 %v256, 16
        %v303 = vrot.slane %v301, 7
        %v304 = vshll.u32 %v256, 16
        %v306 = vor.u32 %v303, %v304
        %v307 = vsel %vm268, %v299, %v306
        %v309 = vshrl.u32 %v257, 16
        %v311 = vrot.slane %v309, 7
        %v312 = vrot.slane %v311, 4
        %v314 = vshrl.u32 %v258, 16
        %v316 = vrot.slane %v314, 7
        %v317 = vshll.u32 %v258, 16
        %v319 = vor.u32 %v316, %v317
        %v320 = vsel %vm268, %v312, %v319
        %v322 = vshrl.u32 %v259, 16
        %v324 = vrot.slane %v322, 7
        %v325 = vrot.slane %v324, 4
        %v327 = vshrl.u32 %v260, 16
        %v329 = vrot.slane %v327, 7
        %v330 = vshll.u32 %v260, 16
        %v332 = vor.u32 %v329, %v330
        %v333 = vsel %vm268, %v325, %v332
        %v335 = vshrl.u32 %v261, 16
        %v337 = vrot.slane %v335, 7
        %v338 = vrot.slane %v337, 4
        %v340 = vshrl.u32 %v262, 16
        %v342 = vrot.slane %v340, 7
        %v343 = vshll.u32 %v262, 16
        %v345 = vor.u32 %v342, %v343
        %v346 = vsel %vm268, %v338, %v345
        %v348 = vshrl.u32 %v263, 16
        %v350 = vrot.slane %v348, 7
        %v351 = vrot.slane %v350, 4
        %v353 = vshrl.u32 %v264, 16
        %v355 = vrot.slane %v353, 7
        %v356 = vshll.u32 %v264, 16
        %v358 = vor.u32 %v355, %v356
        %v359 = vsel %vm268, %v351, %v358
        %v361 = vshrl.u32 %v265, 16
        %v363 = vrot.slane %v361, 7
        %v364 = vrot.slane %v363, 4
        %v366 = vshrl.u32 %v266, 16
        %v368 = vrot.slane %v366, 7
        %v369 = vshll.u32 %v266, 16
        %v371 = vor.u32 %v368, %v369
        %v372 = vsel %vm268, %v364, %v371
        %v373 = vunpack.c.l.b16 %v281
        %v374 = vunpack.c.l.b16 %v294
        %v375 = vunpack.c.l.b16 %v307
        %v376 = vunpack.c.l.b16 %v320
        %v377 = vunpack.c.l.b16 %v333
        %v378 = vunpack.c.l.b16 %v346
        %v379 = vunpack.c.l.b16 %v359
        %v380 = vunpack.c.l.b16 %v372
        %v381 = vpack.c.b16 %v374, %v373
        %v382 = vpack.c.b16 %v376, %v375
        %v383 = vpack.c.b16 %v378, %v377
        %v384 = vpack.c.b16 %v380, %v379
        %vm389 = vcmask 261120
        %390 = vst.msk [vmem:[#allocation3] sm:$0xff] %vm389, %v381
        %391 = vst.msk [vmem:[#allocation3 + $0x18] sm:$0xff] %vm389, %v382
        %392 = vst.msk [vmem:[#allocation3 + $0x30] sm:$0xff] %vm389, %v383
        %393 = vst.msk [vmem:[#allocation3 + $0x48] sm:$0xff] %vm389, %v384
        %v394 = vld [vmem:[#allocation2 + $0x8] sm:$0xf]
        %v395 = vld [vmem:[#allocation2 + $0x18] sm:$0xf]
        %v396 = vld [vmem:[#allocation2 + $0x28] sm:$0xf]
        %v397 = vld [vmem:[#allocation2 + $0x38] sm:$0xf]
        %v398 = vld [vmem:[#allocation2 + $0x48] sm:$0xf]
        %v399 = vld [vmem:[#allocation2 + $0x58] sm:$0xf]
        %v400 = vld [vmem:[#allocation2 + $0x68] sm:$0xf]
        %v401 = vld [vmem:[#allocation2 + $0x78] sm:$0xf]
        %v410 = vunpack.c.l.b16 %v394
        %v411 = vunpack.c.l.b16 %v395
        %v412 = vunpack.c.l.b16 %v396
        %v413 = vunpack.c.l.b16 %v397
        %v414 = vunpack.c.l.b16 %v398
        %v415 = vunpack.c.l.b16 %v399
        %v416 = vunpack.c.l.b16 %v400
        %v417 = vunpack.c.l.b16 %v401
        %v418 = vpack.c.b16 %v411, %v410
        %v419 = vpack.c.b16 %v413, %v412
        %v420 = vpack.c.b16 %v415, %v414
        %v421 = vpack.c.b16 %v417, %v416
        %422 = vrot.lane.b32.xlu0 %v418, 32
        %v423 = vpop.permute.xlu0 %422
        %424 = vrot.lane.b32.xlu0 %v419, 32
        %v425 = vpop.permute.xlu0 %424
        %426 = vrot.lane.b32.xlu0 %v420, 32
        %v427 = vpop.permute.xlu0 %426
        %428 = vrot.lane.b32.xlu0 %v421, 32
        %v429 = vpop.permute.xlu0 %428
        %vm434 = vcmask 523520
        %435 = vst.msk [vmem:[#allocation3] sm:$0xff] %vm434, %v423
        %436 = vst.msk [vmem:[#allocation3 + $0x18] sm:$0xff] %vm434, %v425
        %437 = vst.msk [vmem:[#allocation3 + $0x30] sm:$0xff] %vm434, %v427
        %438 = vst.msk [vmem:[#allocation3 + $0x48] sm:$0xff] %vm434, %v429
        %v439 = vld [vmem:[#allocation2 + $0x8] sm:$0xf]
        %v440 = vld [vmem:[#allocation2 + $0xc] sm:$0x1]
        %v441 = vld [vmem:[#allocation2 + $0x18] sm:$0xf]
        %v442 = vld [vmem:[#allocation2 + $0x1c] sm:$0x1]
        %v443 = vld [vmem:[#allocation2 + $0x28] sm:$0xf]
        %v444 = vld [vmem:[#allocation2 + $0x2c] sm:$0x1]
        %v445 = vld [vmem:[#allocation2 + $0x38] sm:$0xf]
        %v446 = vld [vmem:[#allocation2 + $0x3c] sm:$0x1]
        %v447 = vld [vmem:[#allocation2 + $0x48] sm:$0xf]
        %v448 = vld [vmem:[#allocation2 + $0x4c] sm:$0x1]
        %v449 = vld [vmem:[#allocation2 + $0x58] sm:$0xf]
        %v450 = vld [vmem:[#allocation2 + $0x5c] sm:$0x1]
        %v451 = vld [vmem:[#allocation2 + $0x68] sm:$0xf]
        %v452 = vld [vmem:[#allocation2 + $0x6c] sm:$0x1]
        %v453 = vld [vmem:[#allocation2 + $0x78] sm:$0xf]
        %v454 = vld [vmem:[#allocation2 + $0x7c] sm:$0x1]
        %vm455 = vsmask.f32 3328
        %vm456 = vsmask.f32 7440
        %vm457 = vmor %vm455, %vm456
        %v459 = vshrl.u32 %v439, 16
        %v461 = vrot.slane %v459, 4
        %v462 = vshll.u32 %v439, 16
        %v464 = vrot.slane %v462, 5
        %v465 = vor.u32 %v461, %v464
        %v466 = vrot.slane %v465, 4
        %v468 = vshll.u32 %v440, 16
        %v470 = vrot.slane %v468, 5
        %v471 = vsel %vm457, %v466, %v470
        %v473 = vshrl.u32 %v441, 16
        %v475 = vrot.slane %v473, 4
        %v476 = vshll.u32 %v441, 16
        %v478 = vrot.slane %v476, 5
        %v479 = vor.u32 %v475, %v478
        %v480 = vrot.slane %v479, 4
        %v482 = vshll.u32 %v442, 16
        %v484 = vrot.slane %v482, 5
        %v485 = vsel %vm457, %v480, %v484
        %v487 = vshrl.u32 %v443, 16
        %v489 = vrot.slane %v487, 4
        %v490 = vshll.u32 %v443, 16
        %v492 = vrot.slane %v490, 5
        %v493 = vor.u32 %v489, %v492
        %v494 = vrot.slane %v493, 4
        %v496 = vshll.u32 %v444, 16
        %v498 = vrot.slane %v496, 5
        %v499 = vsel %vm457, %v494, %v498
        %v501 = vshrl.u32 %v445, 16
        %v503 = vrot.slane %v501, 4
        %v504 = vshll.u32 %v445, 16
        %v506 = vrot.slane %v504, 5
        %v507 = vor.u32 %v503, %v506
        %v508 = vrot.slane %v507, 4
        %v510 = vshll.u32 %v446, 16
        %v512 = vrot.slane %v510, 5
        %v513 = vsel %vm457, %v508, %v512
        %v515 = vshrl.u32 %v447, 16
        %v517 = vrot.slane %v515, 4
        %v518 = vshll.u32 %v447, 16
        %v520 = vrot.slane %v518, 5
        %v521 = vor.u32 %v517, %v520
        %v522 = vrot.slane %v521, 4
        %v524 = vshll.u32 %v448, 16
        %v526 = vrot.slane %v524, 5
        %v527 = vsel %vm457, %v522, %v526
        %v529 = vshrl.u32 %v449, 16
        %v531 = vrot.slane %v529, 4
        %v532 = vshll.u32 %v449, 16
        %v534 = vrot.slane %v532, 5
        %v535 = vor.u32 %v531, %v534
        %v536 = vrot.slane %v535, 4
        %v538 = vshll.u32 %v450, 16
        %v540 = vrot.slane %v538, 5
        %v541 = vsel %vm457, %v536, %v540
        %v543 = vshrl.u32 %v451, 16
        %v545 = vrot.slane %v543, 4
        %v546 = vshll.u32 %v451, 16
        %v548 = vrot.slane %v546, 5
        %v549 = vor.u32 %v545, %v548
        %v550 = vrot.slane %v549, 4
        %v552 = vshll.u32 %v452, 16
        %v554 = vrot.slane %v552, 5
        %v555 = vsel %vm457, %v550, %v554
        %v557 = vshrl.u32 %v453, 16
        %v559 = vrot.slane %v557, 4
        %v560 = vshll.u32 %v453, 16
        %v562 = vrot.slane %v560, 5
        %v563 = vor.u32 %v559, %v562
        %v564 = vrot.slane %v563, 4
        %v566 = vshll.u32 %v454, 16
        %v568 = vrot.slane %v566, 5
        %v569 = vsel %vm457, %v564, %v568
        %v570 = vunpack.c.l.b16 %v471
        %v571 = vunpack.c.l.b16 %v485
        %v572 = vunpack.c.l.b16 %v499
        %v573 = vunpack.c.l.b16 %v513
        %v574 = vunpack.c.l.b16 %v527
        %v575 = vunpack.c.l.b16 %v541
        %v576 = vunpack.c.l.b16 %v555
        %v577 = vunpack.c.l.b16 %v569
        %v578 = vpack.c.b16 %v571, %v570
        %v579 = vpack.c.b16 %v573, %v572
        %v580 = vpack.c.b16 %v575, %v574
        %v581 = vpack.c.b16 %v577, %v576
        %582 = vrot.lane.b32.xlu0 %v578, 64
        %v583 = vpop.permute.xlu0 %582
        %584 = vrot.lane.b32.xlu0 %v579, 64
        %v585 = vpop.permute.xlu0 %584
        %586 = vrot.lane.b32.xlu0 %v580, 64
        %v587 = vpop.permute.xlu0 %586
        %588 = vrot.lane.b32.xlu0 %v581, 64
        %v589 = vpop.permute.xlu0 %588
        %vm594 = vcmask 785920
        %595 = vst.msk [vmem:[#allocation3] sm:$0xff] %vm594, %v583
        %596 = vst.msk [vmem:[#allocation3 + $0x18] sm:$0xff] %vm594, %v585
        %597 = vst.msk [vmem:[#allocation3 + $0x30] sm:$0xff] %vm594, %v587
        %598 = vst.msk [vmem:[#allocation3 + $0x48] sm:$0xff] %vm594, %v589
        %v599 = vld [vmem:[%s242 + $0x4] sm:$0x8]
        %v600 = vld [vmem:[%s242 + $0x8] sm:$0xf]
        %v601 = vld [vmem:[%s242 + $0x14] sm:$0x8]
        %v602 = vld [vmem:[%s242 + $0x18] sm:$0xf]
        %v603 = vld [vmem:[%s242 + $0x24] sm:$0x8]
        %v604 = vld [vmem:[%s242 + $0x28] sm:$0xf]
        %v605 = vld [vmem:[%s242 + $0x34] sm:$0x8]
        %v606 = vld [vmem:[%s242 + $0x38] sm:$0xf]
        %v607 = vld [vmem:[%s242 + $0x44] sm:$0x8]
        %v608 = vld [vmem:[%s242 + $0x48] sm:$0xf]
        %v609 = vld [vmem:[%s242 + $0x54] sm:$0x8]
        %v610 = vld [vmem:[%s242 + $0x58] sm:$0xf]
        %v611 = vld [vmem:[%s242 + $0x64] sm:$0x8]
        %v612 = vld [vmem:[%s242 + $0x68] sm:$0xf]
        %v613 = vld [vmem:[%s242 + $0x74] sm:$0x8]
        %v614 = vld [vmem:[%s242 + $0x78] sm:$0xf]
        %v616 = vshrl.u32 %v599, 16
        %v618 = vrot.slane %v616, 7
        %v619 = vrot.slane %v618, 4
        %v621 = vshrl.u32 %v600, 16
        %v623 = vrot.slane %v621, 7
        %v624 = vshll.u32 %v600, 16
        %v626 = vor.u32 %v623, %v624
        %v627 = vsel %vm268, %v619, %v626
        %v629 = vshrl.u32 %v601, 16
        %v631 = vrot.slane %v629, 7
        %v632 = vrot.slane %v631, 4
        %v634 = vshrl.u32 %v602, 16
        %v636 = vrot.slane %v634, 7
        %v637 = vshll.u32 %v602, 16
        %v639 = vor.u32 %v636, %v637
        %v640 = vsel %vm268, %v632, %v639
        %v642 = vshrl.u32 %v603, 16
        %v644 = vrot.slane %v642, 7
        %v645 = vrot.slane %v644, 4
        %v647 = vshrl.u32 %v604, 16
        %v649 = vrot.slane %v647, 7
        %v650 = vshll.u32 %v604, 16
        %v652 = vor.u32 %v649, %v650
        %v653 = vsel %vm268, %v645, %v652
        %v655 = vshrl.u32 %v605, 16
        %v657 = vrot.slane %v655, 7
        %v658 = vrot.slane %v657, 4
        %v660 = vshrl.u32 %v606, 16
        %v662 = vrot.slane %v660, 7
        %v663 = vshll.u32 %v606, 16
        %v665 = vor.u32 %v662, %v663
        %v666 = vsel %vm268, %v658, %v665
        %v668 = vshrl.u32 %v607, 16
        %v670 = vrot.slane %v668, 7
        %v671 = vrot.slane %v670, 4
        %v673 = vshrl.u32 %v608, 16
        %v675 = vrot.slane %v673, 7
        %v676 = vshll.u32 %v608, 16
        %v678 = vor.u32 %v675, %v676
        %v679 = vsel %vm268, %v671, %v678
        %v681 = vshrl.u32 %v609, 16
        %v683 = vrot.slane %v681, 7
        %v684 = vrot.slane %v683, 4
        %v686 = vshrl.u32 %v610, 16
        %v688 = vrot.slane %v686, 7
        %v689 = vshll.u32 %v610, 16
        %v691 = vor.u32 %v688, %v689
        %v692 = vsel %vm268, %v684, %v691
        %v694 = vshrl.u32 %v611, 16
        %v696 = vrot.slane %v694, 7
        %v697 = vrot.slane %v696, 4
        %v699 = vshrl.u32 %v612, 16
        %v701 = vrot.slane %v699, 7
        %v702 = vshll.u32 %v612, 16
        %v704 = vor.u32 %v701, %v702
        %v705 = vsel %vm268, %v697, %v704
        %v707 = vshrl.u32 %v613, 16
        %v709 = vrot.slane %v707, 7
        %v710 = vrot.slane %v709, 4
        %v712 = vshrl.u32 %v614, 16
        %v714 = vrot.slane %v712, 7
        %v715 = vshll.u32 %v614, 16
        %v717 = vor.u32 %v714, %v715
        %v718 = vsel %vm268, %v710, %v717
        %v719 = vunpack.c.l.b16 %v627
        %v720 = vunpack.c.l.b16 %v640
        %v721 = vunpack.c.l.b16 %v653
        %v722 = vunpack.c.l.b16 %v666
        %v723 = vunpack.c.l.b16 %v679
        %v724 = vunpack.c.l.b16 %v692
        %v725 = vunpack.c.l.b16 %v705
        %v726 = vunpack.c.l.b16 %v718
        %v727 = vpack.c.b16 %v720, %v719
        %v728 = vpack.c.b16 %v722, %v721
        %v729 = vpack.c.b16 %v724, %v723
        %v730 = vpack.c.b16 %v726, %v725
        %731 = vrot.lane.b32.xlu0 %v727, 96
        %v732 = vpop.permute.xlu0 %731
        %733 = vrot.lane.b32.xlu0 %v728, 96
        %v734 = vpop.permute.xlu0 %733
        %735 = vrot.lane.b32.xlu0 %v729, 96
        %v736 = vpop.permute.xlu0 %735
        %737 = vrot.lane.b32.xlu0 %v730, 96
        %v738 = vpop.permute.xlu0 %737
        %vm743 = vcmask 1048320
        %744 = vst.msk [vmem:[#allocation3] sm:$0xff] %vm743, %v732
        %745 = vst.msk [vmem:[#allocation3 + $0x18] sm:$0xff] %vm743, %v734
        %746 = vst.msk [vmem:[#allocation3 + $0x30] sm:$0xff] %vm743, %v736
        %747 = vst.msk [vmem:[#allocation3 + $0x48] sm:$0xff] %vm743, %v738
        %v748 = vld [vmem:[%s242 + $0x8] sm:$0xf]
        %v749 = vld [vmem:[%s242 + $0x18] sm:$0xf]
        %v750 = vld [vmem:[%s242 + $0x28] sm:$0xf]
        %v751 = vld [vmem:[%s242 + $0x38] sm:$0xf]
        %v752 = vld [vmem:[%s242 + $0x48] sm:$0xf]
        %v753 = vld [vmem:[%s242 + $0x58] sm:$0xf]
        %v754 = vld [vmem:[%s242 + $0x68] sm:$0xf]
        %v755 = vld [vmem:[%s242 + $0x78] sm:$0xf]
        %v764 = vunpack.c.l.b16 %v748
        %v765 = vunpack.c.l.b16 %v749
        %v766 = vunpack.c.l.b16 %v750
        %v767 = vunpack.c.l.b16 %v751
        %v768 = vunpack.c.l.b16 %v752
        %v769 = vunpack.c.l.b16 %v753
        %v770 = vunpack.c.l.b16 %v754
        %v771 = vunpack.c.l.b16 %v755
        %v772 = vpack.c.b16 %v765, %v764
        %v773 = vpack.c.b16 %v767, %v766
        %v774 = vpack.c.b16 %v769, %v768
        %v775 = vpack.c.b16 %v771, %v770
        %780 = vst.msk [vmem:[#allocation3 + $0x8] sm:$0xff] %vm389, %v772
        %781 = vst.msk [vmem:[#allocation3 + $0x20] sm:$0xff] %vm389, %v773
        %782 = vst.msk [vmem:[#allocation3 + $0x38] sm:$0xff] %vm389, %v774
        %783 = vst.msk [vmem:[#allocation3 + $0x50] sm:$0xff] %vm389, %v775
        %v784 = vld [vmem:[%s242 + $0x8] sm:$0xf]
        %v785 = vld [vmem:[%s242 + $0xc] sm:$0x1]
        %v786 = vld [vmem:[%s242 + $0x18] sm:$0xf]
        %v787 = vld [vmem:[%s242 + $0x1c] sm:$0x1]
        %v788 = vld [vmem:[%s242 + $0x28] sm:$0xf]
        %v789 = vld [vmem:[%s242 + $0x2c] sm:$0x1]
        %v790 = vld [vmem:[%s242 + $0x38] sm:$0xf]
        %v791 = vld [vmem:[%s242 + $0x3c] sm:$0x1]
        %v792 = vld [vmem:[%s242 + $0x48] sm:$0xf]
        %v793 = vld [vmem:[%s242 + $0x4c] sm:$0x1]
        %v794 = vld [vmem:[%s242 + $0x58] sm:$0xf]
        %v795 = vld [vmem:[%s242 + $0x5c] sm:$0x1]
        %v796 = vld [vmem:[%s242 + $0x68] sm:$0xf]
        %v797 = vld [vmem:[%s242 + $0x6c] sm:$0x1]
        %v798 = vld [vmem:[%s242 + $0x78] sm:$0xf]
        %v799 = vld [vmem:[%s242 + $0x7c] sm:$0x1]
        %v801 = vshrl.u32 %v784, 16
        %v803 = vrot.slane %v801, 4
        %v804 = vshll.u32 %v784, 16
        %v806 = vrot.slane %v804, 5
        %v807 = vor.u32 %v803, %v806
        %v808 = vrot.slane %v807, 4
        %v810 = vshll.u32 %v785, 16
        %v812 = vrot.slane %v810, 5
        %v813 = vsel %vm457, %v808, %v812
        %v815 = vshrl.u32 %v786, 16
        %v817 = vrot.slane %v815, 4
        %v818 = vshll.u32 %v786, 16
        %v820 = vrot.slane %v818, 5
        %v821 = vor.u32 %v817, %v820
        %v822 = vrot.slane %v821, 4
        %v824 = vshll.u32 %v787, 16
        %v826 = vrot.slane %v824, 5
        %v827 = vsel %vm457, %v822, %v826
        %v829 = vshrl.u32 %v788, 16
        %v831 = vrot.slane %v829, 4
        %v832 = vshll.u32 %v788, 16
        %v834 = vrot.slane %v832, 5
        %v835 = vor.u32 %v831, %v834
        %v836 = vrot.slane %v835, 4
        %v838 = vshll.u32 %v789, 16
        %v840 = vrot.slane %v838, 5
        %v841 = vsel %vm457, %v836, %v840
        %v843 = vshrl.u32 %v790, 16
        %v845 = vrot.slane %v843, 4
        %v846 = vshll.u32 %v790, 16
        %v848 = vrot.slane %v846, 5
        %v849 = vor.u32 %v845, %v848
        %v850 = vrot.slane %v849, 4
        %v852 = vshll.u32 %v791, 16
        %v854 = vrot.slane %v852, 5
        %v855 = vsel %vm457, %v850, %v854
        %v857 = vshrl.u32 %v792, 16
        %v859 = vrot.slane %v857, 4
        %v860 = vshll.u32 %v792, 16
        %v862 = vrot.slane %v860, 5
        %v863 = vor.u32 %v859, %v862
        %v864 = vrot.slane %v863, 4
        %v866 = vshll.u32 %v793, 16
        %v868 = vrot.slane %v866, 5
        %v869 = vsel %vm457, %v864, %v868
        %v871 = vshrl.u32 %v794, 16
        %v873 = vrot.slane %v871, 4
        %v874 = vshll.u32 %v794, 16
        %v876 = vrot.slane %v874, 5
        %v877 = vor.u32 %v873, %v876
        %v878 = vrot.slane %v877, 4
        %v880 = vshll.u32 %v795, 16
        %v882 = vrot.slane %v880, 5
        %v883 = vsel %vm457, %v878, %v882
        %v885 = vshrl.u32 %v796, 16
        %v887 = vrot.slane %v885, 4
        %v888 = vshll.u32 %v796, 16
        %v890 = vrot.slane %v888, 5
        %v891 = vor.u32 %v887, %v890
        %v892 = vrot.slane %v891, 4
        %v894 = vshll.u32 %v797, 16
        %v896 = vrot.slane %v894, 5
        %v897 = vsel %vm457, %v892, %v896
        %v899 = vshrl.u32 %v798, 16
        %v901 = vrot.slane %v899, 4
        %v902 = vshll.u32 %v798, 16
        %v904 = vrot.slane %v902, 5
        %v905 = vor.u32 %v901, %v904
        %v906 = vrot.slane %v905, 4
        %v908 = vshll.u32 %v799, 16
        %v910 = vrot.slane %v908, 5
        %v911 = vsel %vm457, %v906, %v910
        %v912 = vunpack.c.l.b16 %v813
        %v913 = vunpack.c.l.b16 %v827
        %v914 = vunpack.c.l.b16 %v841
        %v915 = vunpack.c.l.b16 %v855
        %v916 = vunpack.c.l.b16 %v869
        %v917 = vunpack.c.l.b16 %v883
        %v918 = vunpack.c.l.b16 %v897
        %v919 = vunpack.c.l.b16 %v911
        %v920 = vpack.c.b16 %v913, %v912
        %v921 = vpack.c.b16 %v915, %v914
        %v922 = vpack.c.b16 %v917, %v916
        %v923 = vpack.c.b16 %v919, %v918
        %924 = vrot.lane.b32.xlu0 %v920, 32
        %v925 = vpop.permute.xlu0 %924
        %926 = vrot.lane.b32.xlu0 %v921, 32
        %v927 = vpop.permute.xlu0 %926
        %928 = vrot.lane.b32.xlu0 %v922, 32
        %v929 = vpop.permute.xlu0 %928
        %930 = vrot.lane.b32.xlu0 %v923, 32
        %v931 = vpop.permute.xlu0 %930
        %936 = vst.msk [vmem:[#allocation3 + $0x8] sm:$0xff] %vm434, %v925
        %937 = vst.msk [vmem:[#allocation3 + $0x20] sm:$0xff] %vm434, %v927
        %938 = vst.msk [vmem:[#allocation3 + $0x38] sm:$0xff] %vm434, %v929
        %939 = vst.msk [vmem:[#allocation3 + $0x50] sm:$0xff] %vm434, %v931
        %s940 = scalar_lea.vmem [#allocation2], 32
        %v941 = vld [vmem:[%s940 + $0x4] sm:$0x8]
        %v942 = vld [vmem:[%s940 + $0x8] sm:$0xf]
        %v943 = vld [vmem:[%s940 + $0x14] sm:$0x8]
        %v944 = vld [vmem:[%s940 + $0x18] sm:$0xf]
        %v945 = vld [vmem:[%s940 + $0x24] sm:$0x8]
        %v946 = vld [vmem:[%s940 + $0x28] sm:$0xf]
        %v947 = vld [vmem:[%s940 + $0x34] sm:$0x8]
        %v948 = vld [vmem:[%s940 + $0x38] sm:$0xf]
        %v949 = vld [vmem:[%s940 + $0x44] sm:$0x8]
        %v950 = vld [vmem:[%s940 + $0x48] sm:$0xf]
        %v951 = vld [vmem:[%s940 + $0x54] sm:$0x8]
        %v952 = vld [vmem:[%s940 + $0x58] sm:$0xf]
        %v953 = vld [vmem:[%s940 + $0x64] sm:$0x8]
        %v954 = vld [vmem:[%s940 + $0x68] sm:$0xf]
        %v955 = vld [vmem:[%s940 + $0x74] sm:$0x8]
        %v956 = vld [vmem:[%s940 + $0x78] sm:$0xf]
        %v958 = vshrl.u32 %v941, 16
        %v960 = vrot.slane %v958, 7
        %v961 = vrot.slane %v960, 4
        %v963 = vshrl.u32 %v942, 16
        %v965 = vrot.slane %v963, 7
        %v966 = vshll.u32 %v942, 16
        %v968 = vor.u32 %v965, %v966
        %v969 = vsel %vm268, %v961, %v968
        %v971 = vshrl.u32 %v943, 16
        %v973 = vrot.slane %v971, 7
        %v974 = vrot.slane %v973, 4
        %v976 = vshrl.u32 %v944, 16
        %v978 = vrot.slane %v976, 7
        %v979 = vshll.u32 %v944, 16
        %v981 = vor.u32 %v978, %v979
        %v982 = vsel %vm268, %v974, %v981
        %v984 = vshrl.u32 %v945, 16
        %v986 = vrot.slane %v984, 7
        %v987 = vrot.slane %v986, 4
        %v989 = vshrl.u32 %v946, 16
        %v991 = vrot.slane %v989, 7
        %v992 = vshll.u32 %v946, 16
        %v994 = vor.u32 %v991, %v992
        %v995 = vsel %vm268, %v987, %v994
        %v997 = vshrl.u32 %v947, 16
        %v999 = vrot.slane %v997, 7
        %v1000 = vrot.slane %v999, 4
        %v1002 = vshrl.u32 %v948, 16
        %v1004 = vrot.slane %v1002, 7
        %v1005 = vshll.u32 %v948, 16
        %v1007 = vor.u32 %v1004, %v1005
        %v1008 = vsel %vm268, %v1000, %v1007
        %v1010 = vshrl.u32 %v949, 16
        %v1012 = vrot.slane %v1010, 7
        %v1013 = vrot.slane %v1012, 4
        %v1015 = vshrl.u32 %v950, 16
        %v1017 = vrot.slane %v1015, 7
        %v1018 = vshll.u32 %v950, 16
        %v1020 = vor.u32 %v1017, %v1018
        %v1021 = vsel %vm268, %v1013, %v1020
        %v1023 = vshrl.u32 %v951, 16
        %v1025 = vrot.slane %v1023, 7
        %v1026 = vrot.slane %v1025, 4
        %v1028 = vshrl.u32 %v952, 16
        %v1030 = vrot.slane %v1028, 7
        %v1031 = vshll.u32 %v952, 16
        %v1033 = vor.u32 %v1030, %v1031
        %v1034 = vsel %vm268, %v1026, %v1033
        %v1036 = vshrl.u32 %v953, 16
        %v1038 = vrot.slane %v1036, 7
        %v1039 = vrot.slane %v1038, 4
        %v1041 = vshrl.u32 %v954, 16
        %v1043 = vrot.slane %v1041, 7
        %v1044 = vshll.u32 %v954, 16
        %v1046 = vor.u32 %v1043, %v1044
        %v1047 = vsel %vm268, %v1039, %v1046
        %v1049 = vshrl.u32 %v955, 16
        %v1051 = vrot.slane %v1049, 7
        %v1052 = vrot.slane %v1051, 4
        %v1054 = vshrl.u32 %v956, 16
        %v1056 = vrot.slane %v1054, 7
        %v1057 = vshll.u32 %v956, 16
        %v1059 = vor.u32 %v1056, %v1057
        %v1060 = vsel %vm268, %v1052, %v1059
        %v1061 = vunpack.c.l.b16 %v969
        %v1062 = vunpack.c.l.b16 %v982
        %v1063 = vunpack.c.l.b16 %v995
        %v1064 = vunpack.c.l.b16 %v1008
        %v1065 = vunpack.c.l.b16 %v1021
        %v1066 = vunpack.c.l.b16 %v1034
        %v1067 = vunpack.c.l.b16 %v1047
        %v1068 = vunpack.c.l.b16 %v1060
        %v1069 = vpack.c.b16 %v1062, %v1061
        %v1070 = vpack.c.b16 %v1064, %v1063
        %v1071 = vpack.c.b16 %v1066, %v1065
        %v1072 = vpack.c.b16 %v1068, %v1067
        %1073 = vrot.lane.b32.xlu0 %v1069, 64
        %v1074 = vpop.permute.xlu0 %1073
        %1075 = vrot.lane.b32.xlu0 %v1070, 64
        %v1076 = vpop.permute.xlu0 %1075
        %1077 = vrot.lane.b32.xlu0 %v1071, 64
        %v1078 = vpop.permute.xlu0 %1077
        %1079 = vrot.lane.b32.xlu0 %v1072, 64
        %v1080 = vpop.permute.xlu0 %1079
        %1085 = vst.msk [vmem:[#allocation3 + $0x8] sm:$0xff] %vm594, %v1074
        %1086 = vst.msk [vmem:[#allocation3 + $0x20] sm:$0xff] %vm594, %v1076
        %1087 = vst.msk [vmem:[#allocation3 + $0x38] sm:$0xff] %vm594, %v1078
        %1088 = vst.msk [vmem:[#allocation3 + $0x50] sm:$0xff] %vm594, %v1080
        %v1089 = vld [vmem:[%s940 + $0x8] sm:$0xf]
        %v1090 = vld [vmem:[%s940 + $0x18] sm:$0xf]
        %v1091 = vld [vmem:[%s940 + $0x28] sm:$0xf]
        %v1092 = vld [vmem:[%s940 + $0x38] sm:$0xf]
        %v1093 = vld [vmem:[%s940 + $0x48] sm:$0xf]
        %v1094 = vld [vmem:[%s940 + $0x58] sm:$0xf]
        %v1095 = vld [vmem:[%s940 + $0x68] sm:$0xf]
        %v1096 = vld [vmem:[%s940 + $0x78] sm:$0xf]
        %v1105 = vunpack.c.l.b16 %v1089
        %v1106 = vunpack.c.l.b16 %v1090
        %v1107 = vunpack.c.l.b16 %v1091
        %v1108 = vunpack.c.l.b16 %v1092
        %v1109 = vunpack.c.l.b16 %v1093
        %v1110 = vunpack.c.l.b16 %v1094
        %v1111 = vunpack.c.l.b16 %v1095
        %v1112 = vunpack.c.l.b16 %v1096
        %v1113 = vpack.c.b16 %v1106, %v1105
        %v1114 = vpack.c.b16 %v1108, %v1107
        %v1115 = vpack.c.b16 %v1110, %v1109
        %v1116 = vpack.c.b16 %v1112, %v1111
        %1117 = vrot.lane.b32.xlu0 %v1113, 96
        %v1118 = vpop.permute.xlu0 %1117
        %1119 = vrot.lane.b32.xlu0 %v1114, 96
        %v1120 = vpop.permute.xlu0 %1119
        %1121 = vrot.lane.b32.xlu0 %v1115, 96
        %v1122 = vpop.permute.xlu0 %1121
        %1123 = vrot.lane.b32.xlu0 %v1116, 96
        %v1124 = vpop.permute.xlu0 %1123
        %1129 = vst.msk [vmem:[#allocation3 + $0x8] sm:$0xff] %vm743, %v1118
        %1130 = vst.msk [vmem:[#allocation3 + $0x20] sm:$0xff] %vm743, %v1120
        %1131 = vst.msk [vmem:[#allocation3 + $0x38] sm:$0xff] %vm743, %v1122
        %1132 = vst.msk [vmem:[#allocation3 + $0x50] sm:$0xff] %vm743, %v1124
        %v1133 = vld [vmem:[%s940 + $0x8] sm:$0xf]
        %v1134 = vld [vmem:[%s940 + $0xc] sm:$0x1]
        %v1135 = vld [vmem:[%s940 + $0x18] sm:$0xf]
        %v1136 = vld [vmem:[%s940 + $0x1c] sm:$0x1]
        %v1137 = vld [vmem:[%s940 + $0x28] sm:$0xf]
        %v1138 = vld [vmem:[%s940 + $0x2c] sm:$0x1]
        %v1139 = vld [vmem:[%s940 + $0x38] sm:$0xf]
        %v1140 = vld [vmem:[%s940 + $0x3c] sm:$0x1]
        %v1141 = vld [vmem:[%s940 + $0x48] sm:$0xf]
        %v1142 = vld [vmem:[%s940 + $0x4c] sm:$0x1]
        %v1143 = vld [vmem:[%s940 + $0x58] sm:$0xf]
        %v1144 = vld [vmem:[%s940 + $0x5c] sm:$0x1]
        %v1145 = vld [vmem:[%s940 + $0x68] sm:$0xf]
        %v1146 = vld [vmem:[%s940 + $0x6c] sm:$0x1]
        %v1147 = vld [vmem:[%s940 + $0x78] sm:$0xf]
        %v1148 = vld [vmem:[%s940 + $0x7c] sm:$0x1]
        %v1150 = vshrl.u32 %v1133, 16
        %v1152 = vrot.slane %v1150, 4
        %v1153 = vshll.u32 %v1133, 16
        %v1155 = vrot.slane %v1153, 5
        %v1156 = vor.u32 %v1152, %v1155
        %v1157 = vrot.slane %v1156, 4
        %v1159 = vshll.u32 %v1134, 16
        %v1161 = vrot.slane %v1159, 5
        %v1162 = vsel %vm457, %v1157, %v1161
        %v1164 = vshrl.u32 %v1135, 16
        %v1166 = vrot.slane %v1164, 4
        %v1167 = vshll.u32 %v1135, 16
        %v1169 = vrot.slane %v1167, 5
        %v1170 = vor.u32 %v1166, %v1169
        %v1171 = vrot.slane %v1170, 4
        %v1173 = vshll.u32 %v1136, 16
        %v1175 = vrot.slane %v1173, 5
        %v1176 = vsel %vm457, %v1171, %v1175
        %v1178 = vshrl.u32 %v1137, 16
        %v1180 = vrot.slane %v1178, 4
        %v1181 = vshll.u32 %v1137, 16
        %v1183 = vrot.slane %v1181, 5
        %v1184 = vor.u32 %v1180, %v1183
        %v1185 = vrot.slane %v1184, 4
        %v1187 = vshll.u32 %v1138, 16
        %v1189 = vrot.slane %v1187, 5
        %v1190 = vsel %vm457, %v1185, %v1189
        %v1192 = vshrl.u32 %v1139, 16
        %v1194 = vrot.slane %v1192, 4
        %v1195 = vshll.u32 %v1139, 16
        %v1197 = vrot.slane %v1195, 5
        %v1198 = vor.u32 %v1194, %v1197
        %v1199 = vrot.slane %v1198, 4
        %v1201 = vshll.u32 %v1140, 16
        %v1203 = vrot.slane %v1201, 5
        %v1204 = vsel %vm457, %v1199, %v1203
        %v1206 = vshrl.u32 %v1141, 16
        %v1208 = vrot.slane %v1206, 4
        %v1209 = vshll.u32 %v1141, 16
        %v1211 = vrot.slane %v1209, 5
        %v1212 = vor.u32 %v1208, %v1211
        %v1213 = vrot.slane %v1212, 4
        %v1215 = vshll.u32 %v1142, 16
        %v1217 = vrot.slane %v1215, 5
        %v1218 = vsel %vm457, %v1213, %v1217
        %v1220 = vshrl.u32 %v1143, 16
        %v1222 = vrot.slane %v1220, 4
        %v1223 = vshll.u32 %v1143, 16
        %v1225 = vrot.slane %v1223, 5
        %v1226 = vor.u32 %v1222, %v1225
        %v1227 = vrot.slane %v1226, 4
        %v1229 = vshll.u32 %v1144, 16
        %v1231 = vrot.slane %v1229, 5
        %v1232 = vsel %vm457, %v1227, %v1231
        %v1234 = vshrl.u32 %v1145, 16
        %v1236 = vrot.slane %v1234, 4
        %v1237 = vshll.u32 %v1145, 16
        %v1239 = vrot.slane %v1237, 5
        %v1240 = vor.u32 %v1236, %v1239
        %v1241 = vrot.slane %v1240, 4
        %v1243 = vshll.u32 %v1146, 16
        %v1245 = vrot.slane %v1243, 5
        %v1246 = vsel %vm457, %v1241, %v1245
        %v1248 = vshrl.u32 %v1147, 16
        %v1250 = vrot.slane %v1248, 4
        %v1251 = vshll.u32 %v1147, 16
        %v1253 = vrot.slane %v1251, 5
        %v1254 = vor.u32 %v1250, %v1253
        %v1255 = vrot.slane %v1254, 4
        %v1257 = vshll.u32 %v1148, 16
        %v1259 = vrot.slane %v1257, 5
        %v1260 = vsel %vm457, %v1255, %v1259
        %v1261 = vunpack.c.l.b16 %v1162
        %v1262 = vunpack.c.l.b16 %v1176
        %v1263 = vunpack.c.l.b16 %v1190
        %v1264 = vunpack.c.l.b16 %v1204
        %v1265 = vunpack.c.l.b16 %v1218
        %v1266 = vunpack.c.l.b16 %v1232
        %v1267 = vunpack.c.l.b16 %v1246
        %v1268 = vunpack.c.l.b16 %v1260
        %v1269 = vpack.c.b16 %v1262, %v1261
        %v1270 = vpack.c.b16 %v1264, %v1263
        %v1271 = vpack.c.b16 %v1266, %v1265
        %v1272 = vpack.c.b16 %v1268, %v1267
        %1277 = vst.msk [vmem:[#allocation3 + $0x10] sm:$0xff] %vm389, %v1269
        %1278 = vst.msk [vmem:[#allocation3 + $0x28] sm:$0xff] %vm389, %v1270
        %1279 = vst.msk [vmem:[#allocation3 + $0x40] sm:$0xff] %vm389, %v1271
        %1280 = vst.msk [vmem:[#allocation3 + $0x58] sm:$0xff] %vm389, %v1272
        %v1281 = vld [vmem:[#allocation3] sm:$0xff]
        %v1282 = vld [vmem:[#allocation3 + $0x8] sm:$0xff]
        %v1283 = vld [vmem:[#allocation3 + $0x10] sm:$0xff]
        %v1284 = vld [vmem:[#allocation3 + $0x18] sm:$0xff]
        %v1285 = vld [vmem:[#allocation3 + $0x20] sm:$0xff]
        %v1286 = vld [vmem:[#allocation3 + $0x28] sm:$0xff]
        %v1287 = vld [vmem:[#allocation3 + $0x30] sm:$0xff]
        %v1288 = vld [vmem:[#allocation3 + $0x38] sm:$0xff]
        %v1289 = vld [vmem:[#allocation3 + $0x40] sm:$0xff]
        %v1290 = vld [vmem:[#allocation3 + $0x48] sm:$0xff]
        %v1291 = vld [vmem:[#allocation3 + $0x50] sm:$0xff]
        %v1292 = vld [vmem:[#allocation3 + $0x58] sm:$0xff]
        %v1293 = vld [vmem:[%s1] sm:$0xf]
        %v1294 = vld [vmem:[%s1 + $0x4] sm:$0xf]
        %v1295 = vld [vmem:[%s1 + $0x8] sm:$0xf]
        %v1296 = vld [vmem:[%s1 + $0xc] sm:$0xf]
        %v1297 = vld [vmem:[%s1 + $0x10] sm:$0xf]
        %v1298 = vld [vmem:[%s1 + $0x14] sm:$0xf]
        %v1299 = vld [vmem:[%s1 + $0x18] sm:$0xf]
        %v1300 = vld [vmem:[%s1 + $0x1c] sm:$0xf]
        %v1301 = vld [vmem:[%s1 + $0x20] sm:$0xf]
        %v1302 = vld [vmem:[%s1 + $0x24] sm:$0xf]
        %v1303 = vld [vmem:[%s1 + $0x28] sm:$0xf]
        %v1304 = vld [vmem:[%s1 + $0x2c] sm:$0xf]
        %v1305 = vld [vmem:[%s1 + $0x30] sm:$0xf]
        %v1306 = vld [vmem:[%s1 + $0x34] sm:$0xf]
        %v1307 = vld [vmem:[%s1 + $0x38] sm:$0xf]
        %v1308 = vld [vmem:[%s1 + $0x3c] sm:$0xf]
        %v1309 = vld [vmem:[%s1 + $0x40] sm:$0xf]
        %v1310 = vld [vmem:[%s1 + $0x44] sm:$0xf]
        %v1311 = vld [vmem:[%s1 + $0x48] sm:$0xf]
        %v1312 = vld [vmem:[%s1 + $0x4c] sm:$0xf]
        %v1313 = vld [vmem:[%s1 + $0x50] sm:$0xf]
        %v1314 = vld [vmem:[%s1 + $0x54] sm:$0xf]
        %v1315 = vld [vmem:[%s1 + $0x58] sm:$0xf]
        %v1316 = vld [vmem:[%s1 + $0x5c] sm:$0xf]
        %v1317 = vld [vmem:[%s1 + $0x60] sm:$0xf]
        %v1318 = vld [vmem:[%s1 + $0x64] sm:$0xf]
        %v1319 = vld [vmem:[%s1 + $0x68] sm:$0xf]
        %v1320 = vld [vmem:[%s1 + $0x6c] sm:$0xf]
        %v1321 = vld [vmem:[%s1 + $0x70] sm:$0xf]
        %v1322 = vld [vmem:[%s1 + $0x74] sm:$0xf]
        %v1323 = vld [vmem:[%s1 + $0x78] sm:$0xf]
        %v1324 = vld [vmem:[%s1 + $0x7c] sm:$0xf]
        %v1325 = vld [vmem:[%s1 + $0x80] sm:$0xf]
        %v1326 = vld [vmem:[%s1 + $0x84] sm:$0xf]
        %v1327 = vld [vmem:[%s1 + $0x88] sm:$0xf]
        %v1328 = vld [vmem:[%s1 + $0x8c] sm:$0xf]
        %v1329 = vld [vmem:[%s2] sm:$0x1]
        %v1331 = vlaneseq
        %v1332 = vshrl.u32 %v1331, 7
        %v1333 = vsub.s32 0, %v1332
        %v1334 = vrot.slane %v1329, %v1333
        %v1372 = vunpack.c.l.b16 %v1293
        %v1373 = vunpack.c.l.b16 %v1294
        %v1374 = vunpack.c.l.b16 %v1295
        %v1375 = vunpack.c.l.b16 %v1296
        %v1376 = vunpack.c.l.b16 %v1297
        %v1377 = vunpack.c.l.b16 %v1298
        %v1378 = vunpack.c.l.b16 %v1299
        %v1379 = vunpack.c.l.b16 %v1300
        %v1380 = vunpack.c.l.b16 %v1301
        %v1381 = vunpack.c.l.b16 %v1302
        %v1382 = vunpack.c.l.b16 %v1303
        %v1383 = vunpack.c.l.b16 %v1304
        %v1384 = vunpack.c.l.b16 %v1305
        %v1385 = vunpack.c.l.b16 %v1306
        %v1386 = vunpack.c.l.b16 %v1307
        %v1387 = vunpack.c.l.b16 %v1308
        %v1388 = vunpack.c.l.b16 %v1309
        %v1389 = vunpack.c.l.b16 %v1310
        %v1390 = vunpack.c.l.b16 %v1311
        %v1391 = vunpack.c.l.b16 %v1312
        %v1392 = vunpack.c.l.b16 %v1313
        %v1393 = vunpack.c.l.b16 %v1314
        %v1394 = vunpack.c.l.b16 %v1315
        %v1395 = vunpack.c.l.b16 %v1316
        %v1396 = vunpack.c.l.b16 %v1317
        %v1397 = vunpack.c.l.b16 %v1318
        %v1398 = vunpack.c.l.b16 %v1319
        %v1399 = vunpack.c.l.b16 %v1320
        %v1400 = vunpack.c.l.b16 %v1321
        %v1401 = vunpack.c.l.b16 %v1322
        %v1402 = vunpack.c.l.b16 %v1323
        %v1403 = vunpack.c.l.b16 %v1324
        %v1404 = vunpack.c.l.b16 %v1325
        %v1405 = vunpack.c.l.b16 %v1326
        %v1406 = vunpack.c.l.b16 %v1327
        %v1407 = vunpack.c.l.b16 %v1328
        %v1408 = vpack.c.b16 %v1373, %v1372
        %v1409 = vpack.c.b16 %v1375, %v1374
        %v1410 = vpack.c.b16 %v1377, %v1376
        %v1411 = vpack.c.b16 %v1379, %v1378
        %v1412 = vpack.c.b16 %v1381, %v1380
        %v1413 = vpack.c.b16 %v1383, %v1382
        %v1414 = vpack.c.b16 %v1385, %v1384
        %v1415 = vpack.c.b16 %v1387, %v1386
        %v1416 = vpack.c.b16 %v1389, %v1388
        %v1417 = vpack.c.b16 %v1391, %v1390
        %v1418 = vpack.c.b16 %v1393, %v1392
        %v1419 = vpack.c.b16 %v1395, %v1394
        %v1420 = vpack.c.b16 %v1397, %v1396
        %v1421 = vpack.c.b16 %v1399, %v1398
        %v1422 = vpack.c.b16 %v1401, %v1400
        %v1423 = vpack.c.b16 %v1403, %v1402
        %v1424 = vpack.c.b16 %v1405, %v1404
        %v1425 = vpack.c.b16 %v1407, %v1406
        %v1445 = vsel %vm389, %v1283, 0
        %v1448 = vsel %vm389, %v1286, 0
        %v1451 = vsel %vm389, %v1289, 0
        %v1454 = vsel %vm389, %v1292, 0
        %1456 = vmatprep.subr.bf16.mxu0 0
        %1457 = vmatpush1.bf16.msra.mxu0 %v1408
        %1458 = vmatprep.subr.bf16.mxu0 0
        %1459 = vmatpush1.bf16.msra.mxu0 %v1409
        %1460 = vmatprep.subr.bf16.mxu0 0
        %1461 = vmatpush1.bf16.msra.mxu0 %v1410
        %1462 = vmatprep.subr.bf16.mxu0 0
        %1463 = vmatpush1.bf16.msra.mxu0 %v1411
        %1464 = vmatprep.subr.bf16.mxu0 0
        %1465 = vmatpush1.bf16.msra.mxu0 %v1412
        %1466 = vmatprep.subr.bf16.mxu0 0
        %1467 = vmatpush1.bf16.msra.mxu0 %v1413
        %1468 = vmatprep.subr.bf16.mxu0 0
        %1469 = vmatpush1.bf16.msra.mxu0 %v1414
        %1470 = vmatprep.subr.bf16.mxu0 0
        %1471 = vmatpush1.bf16.msra.mxu0 %v1415
        %1472 = vmatprep.subr.bf16.mxu0 0
        %1473 = vmatpush1.bf16.msra.mxu0 %v1416
        %1474 = vmatprep.subr.bf16.mxu0 0
        %1475 = vmatpush1.bf16.msra.mxu0 %v1417
        %1476 = vmatprep.subr.bf16.mxu0 0
        %1477 = vmatpush1.bf16.msra.mxu0 %v1418
        %1478 = vmatprep.subr.bf16.mxu0 0
        %1479 = vmatpush1.bf16.msra.mxu0 %v1419
        %1480 = vmatprep.subr.bf16.mxu0 0
        %1481 = vmatpush1.bf16.msra.mxu0 %v1420
        %1482 = vmatprep.subr.bf16.mxu0 0
        %1483 = vmatpush1.bf16.msra.mxu0 %v1421
        %1484 = vmatprep.subr.bf16.mxu0 0
        %1485 = vmatpush1.bf16.msra.mxu0 %v1422
        %1486 = vmatprep.subr.bf16.mxu0 0
        %1487 = vmatpush1.bf16.msra.mxu0 %v1423
        %1488 = vmatprep.mubr.bf16.mxu0 %v1282
        %1489 = vmatmul.mubr.bf16.gmra.mrb[0].mxu0 %v1281
        %v1490 = vpop.f32.mrb[0].mxu0
        %v1491 = vadd.f32 %v1334, %v1490
        %v1492 = vpop.f32.mrb[0].mxu0
        %v1493 = vpop.f32.mrb[0].mxu0
        %v1494 = vadd.f32 %v1334, %v1493
        %v1495 = vpop.f32.mrb[0].mxu0
        %1496 = vmatprep.mubr.bf16.mxu0 %v1285
        %1497 = vmatmul.mubr.bf16.gmra.mrb[0].mxu0 %v1284
        %v1498 = vpop.f32.mrb[0].mxu0
        %v1499 = vadd.f32 %v1334, %v1498
        %v1500 = vpop.f32.mrb[0].mxu0
        %v1501 = vpop.f32.mrb[0].mxu0
        %v1502 = vadd.f32 %v1334, %v1501
        %v1503 = vpop.f32.mrb[0].mxu0
        %1504 = vmatprep.mubr.bf16.mxu0 %v1288
        %1505 = vmatmul.mubr.bf16.gmra.mrb[0].mxu0 %v1287
        %v1506 = vpop.f32.mrb[0].mxu0
        %v1507 = vadd.f32 %v1334, %v1506
        %v1508 = vpop.f32.mrb[0].mxu0
        %v1509 = vpop.f32.mrb[0].mxu0
        %v1510 = vadd.f32 %v1334, %v1509
        %v1511 = vpop.f32.mrb[0].mxu0
        %1512 = vmatprep.mubr.bf16.mxu0 %v1291
        %1513 = vmatmul.mubr.bf16.gmra.mrb[0].mxu0 %v1290
        %v1514 = vpop.f32.mrb[0].mxu0
        %v1515 = vadd.f32 %v1334, %v1514
        %v1516 = vpop.f32.mrb[0].mxu0
        %v1517 = vpop.f32.mrb[0].mxu0
        %v1518 = vadd.f32 %v1334, %v1517
        %v1519 = vpop.f32.mrb[0].mxu0
        %1520 = vdwg.mxu0
        %1521 = vmatprep.subr.bf16.mxu0 0
        %1522 = vmatpush1.bf16.msra.mxu0 %v1424
        %1523 = vmatprep.subr.bf16.mxu0 0
        %1524 = vmatpush1.bf16.msra.mxu0 %v1425
        %1525 = vmatprep.subr.bf16.mxu0 0
        %1526 = vmatpush1.bf16.msra.mxu0 0
        %1527 = vmatprep.subr.bf16.mxu0 0
        %1528 = vmatpush1.bf16.msra.mxu0 0
        %1529 = vmatprep.subr.bf16.mxu0 0
        %1530 = vmatpush1.bf16.msra.mxu0 0
        %1531 = vmatprep.subr.bf16.mxu0 0
        %1532 = vmatpush1.bf16.msra.mxu0 0
        %1533 = vmatprep.subr.bf16.mxu0 0
        %1534 = vmatpush1.bf16.msra.mxu0 0
        %1535 = vmatprep.subr.bf16.mxu0 0
        %1536 = vmatpush1.bf16.msra.mxu0 0
        %1537 = vmatprep.subr.bf16.mxu0 0
        %1538 = vmatpush1.bf16.msra.mxu0 0
        %1539 = vmatprep.subr.bf16.mxu0 0
        %1540 = vmatpush1.bf16.msra.mxu0 0
        %1541 = vmatprep.subr.bf16.mxu0 0
        %1542 = vmatpush1.bf16.msra.mxu0 0
        %1543 = vmatprep.subr.bf16.mxu0 0
        %1544 = vmatpush1.bf16.msra.mxu0 0
        %1545 = vmatprep.subr.bf16.mxu0 0
        %1546 = vmatpush1.bf16.msra.mxu0 0
        %1547 = vmatprep.subr.bf16.mxu0 0
        %1548 = vmatpush1.bf16.msra.mxu0 0
        %1549 = vmatprep.subr.bf16.mxu0 0
        %1550 = vmatpush1.bf16.msra.mxu0 0
        %1551 = vmatprep.subr.bf16.mxu0 0
        %1552 = vmatpush1.bf16.msra.mxu0 0
        %1553 = vmatprep.mubr.bf16.mxu0 0
        %1554 = vmatmul.mubr.bf16.gmra.mrb[0].mxu0 %v1445
        %v1555 = vpop.f32.mrb[0].mxu0
        %v1556 = vadd.f32 %v1491, %v1555
        %v1557 = vpop.f32.mrb[0].mxu0
        %v1558 = vpop.f32.mrb[0].mxu0
        %v1559 = vadd.f32 %v1494, %v1558
        %v1560 = vpop.f32.mrb[0].mxu0
        %1561 = vmatprep.mubr.bf16.mxu0 0
        %1562 = vmatmul.mubr.bf16.gmra.mrb[0].mxu0 %v1448
        %v1563 = vpop.f32.mrb[0].mxu0
        %v1564 = vadd.f32 %v1499, %v1563
        %v1565 = vpop.f32.mrb[0].mxu0
        %v1566 = vpop.f32.mrb[0].mxu0
        %v1567 = vadd.f32 %v1502, %v1566
        %v1568 = vpop.f32.mrb[0].mxu0
        %1569 = vmatprep.mubr.bf16.mxu0 0
        %1570 = vmatmul.mubr.bf16.gmra.mrb[0].mxu0 %v1451
        %v1571 = vpop.f32.mrb[0].mxu0
        %v1572 = vadd.f32 %v1507, %v1571
        %v1573 = vpop.f32.mrb[0].mxu0
        %v1574 = vpop.f32.mrb[0].mxu0
        %v1575 = vadd.f32 %v1510, %v1574
        %v1576 = vpop.f32.mrb[0].mxu0
        %1577 = vmatprep.mubr.bf16.mxu0 0
        %1578 = vmatmul.mubr.bf16.gmra.mrb[0].mxu0 %v1454
        %v1579 = vpop.f32.mrb[0].mxu0
        %v1580 = vadd.f32 %v1515, %v1579
        %v1581 = vpop.f32.mrb[0].mxu0
        %v1582 = vpop.f32.mrb[0].mxu0
        %v1583 = vadd.f32 %v1518, %v1582
        %v1584 = vpop.f32.mrb[0].mxu0
        %1585 = vdwg.mxu0
        %1586 = vst.msk [vmem:[%s163] sm:$0xff] %vm389, %v1556
        %1587 = vst.msk [vmem:[%s163 + $0x8] sm:$0xff] %vm389, %v1559
        %1588 = vst.msk [vmem:[%s163 + $0x10] sm:$0xff] %vm389, %v1564
        %1589 = vst.msk [vmem:[%s163 + $0x18] sm:$0xff] %vm389, %v1567
        %1590 = vst.msk [vmem:[%s163 + $0x20] sm:$0xff] %vm389, %v1572
        %1591 = vst.msk [vmem:[%s163 + $0x28] sm:$0xff] %vm389, %v1575
        %1592 = vst.msk [vmem:[%s163 + $0x30] sm:$0xff] %vm389, %v1580
        %1593 = vst.msk [vmem:[%s163 + $0x38] sm:$0xff] %vm389, %v1583
        %s1594 = sand.u32 %s93, 1
        %s1595 = scalar_lea.sflag [#allocation5], %s1594
        %s1596 = sand.u32 %s93, 1
        %s1597 = smul.addr %s1596, 64
        %s1598 = scalar_lea.vmem [#allocation4], %s1597
        // Predicated region
        $region33: #{feature_extractor_forward.15} parent=31 // pred_check
          %p1599 = pneg %p103
        $region34: #{feature_extractor_forward.15} parent=31 // pred_check_branch
          %1601 = sbr.rel (%p1599) target = $region36
        $region35: #{feature_extractor_forward.15} parent=31 // pred_region
          %s1603 = ssub.s32 1024, 1024
          %1604 = vsyncadd %s1595, %s1603
          %s1605 = smul.addr %s17, 8
          %s1606 = smul.addr %s1605, 128
          %s1607 = scalar_lea.hbm %s3, %s1606
          %s1608 = sshll.u32 %s1598, 4
          %s1609 = int_to_ptr.vmem [resolvable:$true] %s1608
          %1614 = dma.vmem_to_hbm [thread:$0]  %s1609, 1024, %s1607, %s1595, 128, 128, 8
        $region36: #{feature_extractor_forward.15} parent=31 // pred_fallthru
          _
      $region32: #{feature_extractor_forward.15} parent=5 // pred_fallthru
        _
      %p1615 = scmp.le.s32.totalorder 2, %s12
      // Predicated region
      $region37: #{feature_extractor_forward.15} parent=5 // pred_check
        %p1616 = pneg %p1615
      $region38: #{feature_extractor_forward.15} parent=5 // pred_check_branch
        %1618 = sbr.rel (%p1616) target = $region40
      $region39: #{feature_extractor_forward.15} parent=5 // pred_region
        %s1619 = ssub.s32 %s12, 2
        // Predicated region
        $region41: #{feature_extractor_forward.15} parent=39 // pred_check
          %p1620 = pneg %p109
        $region42: #{feature_extractor_forward.15} parent=39 // pred_check_branch
          %1622 = sbr.rel (%p1620) target = $region44
        $region43: #{feature_extractor_forward.15} parent=39 // pred_region
          %s1623 = sand.u32 %s94, 1
          %s1624 = scalar_lea.sflag [#allocation5], %s1623
          %s1625 = sand.u32 %s94, 1
          %s1626 = smul.addr %s1625, 64
          %s1627 = scalar_lea.vmem [#allocation4], %s1626
          %1628 = dma.done %s1624, 1024
        $region44: #{feature_extractor_forward.15} parent=39 // pred_fallthru
          _
      $region40: #{feature_extractor_forward.15} parent=5 // pred_fallthru
        _
    $region6: #{feature_extractor_forward.15} parent=1 // loop_footer
      %s16 = sadd.s32 1, %s12
    $region7: #{feature_extractor_forward.15} parent=1 // loop_footer_branch
      %11 = sbr.rel target = $region3
    $region8: #{feature_extractor_forward.15} parent=1 // loop_exit
      _
    %1629 = vsyncpa [#allocation5], 1
    %s1630 = scalar_lea.sflag [#allocation5], 1
    %1631 = vsyncpa %s1630, 1

// kernel: feature_extractor_forward.9
$region0: #{feature_extractor_forward.9}
  #allocation0 [shape = 'u32[]', space=smem, size = 0x4, offset = 0x4, fixed_abs, tag = 'smem constant byte address 0x4 - core index']
  #allocation1 [shape = 'u32[144,128]{1,0:T(1,128)}', space=vmem, size = 0x12000, scoped, tag = 'internal scratch']
  #allocation2 [shape = 'bf16[10,25,32]{2,1,0:T(8,128)(2,1)}', space=vmem, size = 0x14000, scoped, tag = 'scratch operand']
  #allocation3 [shape = 'bf16[64,288]{1,0:T(16,128)(2,1)}', space=vmem, size = 0xc000, scoped, tag = 'scratch operand']
  %s0 = inlined_call_operand.vmem [shape: bf16[2,8,8,32], index: 0, kind: input, shape index: {}]
  %s1 = inlined_call_operand.vmem [shape: bf16[288,32], index: 1, kind: input, shape index: {}]
  %s2 = inlined_call_operand.vmem [shape: f32[1,32], index: 2, kind: input, shape index: {}]
  %s3 = inlined_call_operand.vmem [shape: bf16[288,32], index: 3, kind: input, shape index: {}]
  %s4 = inlined_call_operand.vmem [shape: f32[1,32], index: 4, kind: input, shape index: {}]
  %s5 = inlined_call_operand.vmem [shape: bf16[2,8,8,32], index: 5, kind: output, shape index: {}]
  %s6 = sld [smem:[#allocation0]]
  $region53: #{feature_extractor_forward.9} parent=0
    _
  %s8 = ssub.s32 1, %s6
  %s9 = scalar_select 0, %s8, %s6
  loop: start=0, step=1, limit=4
  $region2: #{feature_extractor_forward.9} parent=0 // loop_pre_header
    _
  $region3: #{feature_extractor_forward.9} parent=0 // loop_header
    %s11 = sphi 0, %s15
    %p12 = scmp.ge.s32.totalorder %s11, 4
    %s21 = sphi 0, %s23
    %s24 = sphi 0, %s21
    %s25 = sphi 0, %s24
    %s41 = sphi 0, %s25
    %s45 = sphi 0, %s45
    %s47 = sphi 0, %s45
    %s48 = sphi 0, %s47
    %s62 = sphi 0, %s48
    %s66 = sphi 0, %s66
    %s68 = sphi 0, %s66
    %s69 = sphi 0, %s68
    %s83 = sphi 0, %s69
    %s87 = sphi 0, %s87
    %s89 = sphi 0, %s87
    %s90 = sphi 0, %s89
    %s104 = sphi 0, %s90
    %s108 = sphi 0, %s108
    %s110 = sphi 0, %s108
    %s111 = sphi 0, %s110
    %s125 = sphi 0, %s111
    %s131 = sphi 0, %s133
    %s134 = sphi 0, %s131
    %s135 = sphi 0, %s134
    %s151 = sphi 0, %s135
  $region4: #{feature_extractor_forward.9} parent=0 // loop_header_branch
    %14 = sbr.rel (%p12) target = $region8
  $region5: #{feature_extractor_forward.9} parent=0 // loop_body
    %s16 = ssub.s32 %s11, 1
    %s17 = ssub.s32 %s11, 2
    %s18 = sadd.s32 %s11, 1
    %s19 = ssub.s32 %s11, %s18
    %p20 = scmp.eq.s32.totalorder %s19, 0
    %s22 = sadd.s32 %s21, 1
    %s23 = scalar_select %p20, %s21, %s22
    %p26 = pneg %p20
    %p27 = scmp.eq.s32.totalorder %s11, 1
    %p28 = por %p26, %p27
    %p29 = scmp.ne.s32.totalorder %s21, %s24
    %p30 = scmp.eq.s32.totalorder %s11, 0
    %p31 = por %p29, %p30
    %p32 = scmp.ne.s32.totalorder %s21, %s24
    %p33 = scmp.eq.s32.totalorder %s16, 1
    %p34 = por %p32, %p33
    %p35 = scmp.ne.s32.totalorder %s24, %s25
    %p36 = scmp.eq.s32.totalorder %s16, 0
    %p37 = por %p35, %p36
    %p38 = scmp.ne.s32.totalorder %s24, %s25
    %p39 = scmp.eq.s32.totalorder %s17, 1
    %p40 = por %p38, %p39
    %p42 = scmp.ne.s32.totalorder %s25, %s41
    %p43 = scmp.eq.s32.totalorder %s17, 0
    %p44 = por %p42, %p43
    %s46 = sadd.s32 %s45, 1
    %p49 = scmp.eq.s32.totalorder %s11, 1
    %p50 = scmp.ne.s32.totalorder %s45, %s47
    %p51 = scmp.eq.s32.totalorder %s11, 0
    %p52 = por %p50, %p51
    %p53 = scmp.ne.s32.totalorder %s45, %s47
    %p54 = scmp.eq.s32.totalorder %s16, 1
    %p55 = por %p53, %p54
    %p56 = scmp.ne.s32.totalorder %s47, %s48
    %p57 = scmp.eq.s32.totalorder %s16, 0
    %p58 = por %p56, %p57
    %p59 = scmp.ne.s32.totalorder %s47, %s48
    %p60 = scmp.eq.s32.totalorder %s17, 1
    %p61 = por %p59, %p60
    %p63 = scmp.ne.s32.totalorder %s48, %s62
    %p64 = scmp.eq.s32.totalorder %s17, 0
    %p65 = por %p63, %p64
    %s67 = sadd.s32 %s66, 1
    %p70 = scmp.eq.s32.totalorder %s11, 1
    %p71 = scmp.ne.s32.totalorder %s66, %s68
    %p72 = scmp.eq.s32.totalorder %s11, 0
    %p73 = por %p71, %p72
    %p74 = scmp.ne.s32.totalorder %s66, %s68
    %p75 = scmp.eq.s32.totalorder %s16, 1
    %p76 = por %p74, %p75
    %p77 = scmp.ne.s32.totalorder %s68, %s69
    %p78 = scmp.eq.s32.totalorder %s16, 0
    %p79 = por %p77, %p78
    %p80 = scmp.ne.s32.totalorder %s68, %s69
    %p81 = scmp.eq.s32.totalorder %s17, 1
    %p82 = por %p80, %p81
    %p84 = scmp.ne.s32.totalorder %s69, %s83
    %p85 = scmp.eq.s32.totalorder %s17, 0
    %p86 = por %p84, %p85
    %s88 = sadd.s32 %s87, 1
    %p91 = scmp.eq.s32.totalorder %s11, 1
    %p92 = scmp.ne.s32.totalorder %s87, %s89
    %p93 = scmp.eq.s32.totalorder %s11, 0
    %p94 = por %p92, %p93
    %p95 = scmp.ne.s32.totalorder %s87, %s89
    %p96 = scmp.eq.s32.totalorder %s16, 1
    %p97 = por %p95, %p96
    %p98 = scmp.ne.s32.totalorder %s89, %s90
    %p99 = scmp.eq.s32.totalorder %s16, 0
    %p100 = por %p98, %p99
    %p101 = scmp.ne.s32.totalorder %s89, %s90
    %p102 = scmp.eq.s32.totalorder %s17, 1
    %p103 = por %p101, %p102
    %p105 = scmp.ne.s32.totalorder %s90, %s104
    %p106 = scmp.eq.s32.totalorder %s17, 0
    %p107 = por %p105, %p106
    %s109 = sadd.s32 %s108, 1
    %p112 = scmp.eq.s32.totalorder %s11, 1
    %p113 = scmp.ne.s32.totalorder %s108, %s110
    %p114 = scmp.eq.s32.totalorder %s11, 0
    %p115 = por %p113, %p114
    %p116 = scmp.ne.s32.totalorder %s108, %s110
    %p117 = scmp.eq.s32.totalorder %s16, 1
    %p118 = por %p116, %p117
    %p119 = scmp.ne.s32.totalorder %s110, %s111
    %p120 = scmp.eq.s32.totalorder %s16, 0
    %p121 = por %p119, %p120
    %p122 = scmp.ne.s32.totalorder %s110, %s111
    %p123 = scmp.eq.s32.totalorder %s17, 1
    %p124 = por %p122, %p123
    %p126 = scmp.ne.s32.totalorder %s111, %s125
    %p127 = scmp.eq.s32.totalorder %s17, 0
    %p128 = por %p126, %p127
    %s129 = ssub.s32 %s11, %s18
    %p130 = scmp.eq.s32.totalorder %s129, 0
    %s132 = sadd.s32 %s131, 1
    %s133 = scalar_select %p130, %s131, %s132
    %p136 = pneg %p130
    %p137 = scmp.eq.s32.totalorder %s11, 1
    %p138 = por %p136, %p137
    %p139 = scmp.ne.s32.totalorder %s131, %s134
    %p140 = scmp.eq.s32.totalorder %s11, 0
    %p141 = por %p139, %p140
    %p142 = scmp.ne.s32.totalorder %s131, %s134
    %p143 = scmp.eq.s32.totalorder %s16, 1
    %p144 = por %p142, %p143
    %p145 = scmp.ne.s32.totalorder %s134, %s135
    %p146 = scmp.eq.s32.totalorder %s16, 0
    %p147 = por %p145, %p146
    %p148 = scmp.ne.s32.totalorder %s134, %s135
    %p149 = scmp.eq.s32.totalorder %s17, 1
    %p150 = por %p148, %p149
    %p152 = scmp.ne.s32.totalorder %s135, %s151
    %p153 = scmp.eq.s32.totalorder %s17, 0
    %p154 = por %p152, %p153
    %p155 = scmp.le.s32.totalorder 1, %s11
    %p156 = scmp.lt.s32.totalorder %s11, 3
    %p157 = pnand %p155, %p156
    %p158 = pneg %p157
    // Predicated region
    $region9: #{feature_extractor_forward.9} parent=5 // pred_check
      _
    $region10: #{feature_extractor_forward.9} parent=5 // pred_check_branch
      %160 = sbr.rel (%p157) target = $region12
    $region11: #{feature_extractor_forward.9} parent=5 // pred_region
      %s161 = ssub.s32 %s11, 1
      // Predicated region
      $region13: #{feature_extractor_forward.9} parent=11 // pred_check
        %p162 = pneg %p58
      $region14: #{feature_extractor_forward.9} parent=11 // pred_check_branch
        %164 = sbr.rel (%p162) target = $region16
      $region15: #{feature_extractor_forward.9} parent=11 // pred_region
        _
      $region16: #{feature_extractor_forward.9} parent=11 // pred_fallthru
        _
      // Predicated region
      $region17: #{feature_extractor_forward.9} parent=11 // pred_check
        %p165 = pneg %p79
      $region18: #{feature_extractor_forward.9} parent=11 // pred_check_branch
        %167 = sbr.rel (%p165) target = $region20
      $region19: #{feature_extractor_forward.9} parent=11 // pred_region
        _
      $region20: #{feature_extractor_forward.9} parent=11 // pred_fallthru
        _
      // Predicated region
      $region21: #{feature_extractor_forward.9} parent=11 // pred_check
        %p168 = pneg %p100
      $region22: #{feature_extractor_forward.9} parent=11 // pred_check_branch
        %170 = sbr.rel (%p168) target = $region24
      $region23: #{feature_extractor_forward.9} parent=11 // pred_region
        _
      $region24: #{feature_extractor_forward.9} parent=11 // pred_fallthru
        _
      // Predicated region
      $region25: #{feature_extractor_forward.9} parent=11 // pred_check
        %p171 = pneg %p121
      $region26: #{feature_extractor_forward.9} parent=11 // pred_check_branch
        %173 = sbr.rel (%p171) target = $region28
      $region27: #{feature_extractor_forward.9} parent=11 // pred_region
        _
      $region28: #{feature_extractor_forward.9} parent=11 // pred_fallthru
        _
    $region12: #{feature_extractor_forward.9} parent=5 // pred_fallthru
      _
    %p174 = scmp.lt.s32.totalorder %s11, 2
    // Predicated region
    $region29: #{feature_extractor_forward.9} parent=5 // pred_check
      %p175 = pneg %p174
    $region30: #{feature_extractor_forward.9} parent=5 // pred_check_branch
      %177 = sbr.rel (%p175) target = $region32
    $region31: #{feature_extractor_forward.9} parent=5 // pred_region
      // Predicated region
      $region33: #{feature_extractor_forward.9} parent=31 // pred_check
        %p178 = pneg %p31
      $region34: #{feature_extractor_forward.9} parent=31 // pred_check_branch
        %180 = sbr.rel (%p178) target = $region36
      $region35: #{feature_extractor_forward.9} parent=31 // pred_region
        %p181 = scmp.lt.s32.totalorder %s11, 1
        %s182 = scalar_select %p181, %s11, 1
        %s183 = smul.addr %s182, 8
        %s184 = smul.addr %s183, 4
        %s185 = scalar_lea.vmem %s0, %s184
      $region36: #{feature_extractor_forward.9} parent=31 // pred_fallthru
        _
    $region32: #{feature_extractor_forward.9} parent=5 // pred_fallthru
      _
    %p186 = scmp.le.s32.totalorder 1, %s11
    %p187 = scmp.lt.s32.totalorder %s11, 3
    %p188 = pnand %p186, %p187
    %p189 = pneg %p188
    // Predicated region
    $region37: #{feature_extractor_forward.9} parent=5 // pred_check
      _
    $region38: #{feature_extractor_forward.9} parent=5 // pred_check_branch
      %191 = sbr.rel (%p188) target = $region40
    $region39: #{feature_extractor_forward.9} parent=5 // pred_region
      %s192 = ssub.s32 %s11, 1
      %p193 = scmp.lt.s32.totalorder %s16, 1
      %s194 = scalar_select %p193, %s16, 1
      %s195 = smul.addr %s194, 8
      %s196 = smul.addr %s195, 4
      %s197 = scalar_lea.vmem %s0, %s196
      %p198 = pneg %p37
      %p199 = pneg %p34
      %p200 = pneg %p58
      %p201 = pneg %p55
      %p202 = pneg %p79
      %p203 = pneg %p76
      %p204 = pneg %p100
      %p205 = pneg %p97
      %p206 = pneg %p121
      %p207 = pneg %p118
      %p208 = pneg %p147
      %p209 = pneg %p144
      %p210 = scmp.lt.s32.totalorder %s16, 1
      %s211 = scalar_select %p210, %s16, 1
      %s212 = smul.addr %s211, 8
      %s213 = smul.addr %s212, 4
      %s214 = scalar_lea.vmem %s5, %s213
      %p215 = scmp.lt.s32.totalorder %s16, 1
      %s216 = scalar_select %p215, %s16, 1
      %s217 = smul.addr %s216, 8
      %s218 = smul.addr %s217, 4
      %s219 = scalar_lea.vmem %s0, %s218
      %p220 = scmp.lt.s32.totalorder %s16, 1
      %s221 = scalar_select %p220, %s16, 1
      %s222 = smul.addr %s221, 8
      %s223 = smul.addr %s222, 4
      %s224 = scalar_lea.vmem %s5, %s223
      %v226 = vld [vmem:[%s219] sm:$0xf]
      %v227 = vld [vmem:[%s219 + $0x4] sm:$0xf]
      %v228 = vld [vmem:[%s219 + $0x8] sm:$0xf]
      %v229 = vld [vmem:[%s219 + $0xc] sm:$0xf]
      %v230 = vld [vmem:[%s219 + $0x10] sm:$0xf]
      %v231 = vld [vmem:[%s219 + $0x14] sm:$0xf]
      %v232 = vld [vmem:[%s219 + $0x18] sm:$0xf]
      %v233 = vld [vmem:[%s219 + $0x1c] sm:$0xf]
      %vm234 = vcmask 257024
      %235 = vst.msk [vmem:[#allocation2] sm:$0xf] %vm234, 0
      %236 = vst.msk [vmem:[#allocation2 + $0x4] sm:$0xf] %vm234, 0
      %237 = vst.msk [vmem:[#allocation2 + $0x8] sm:$0xf] %vm234, 0
      %vm238 = vcmask 253952
      %vm239 = vsmask.f32 256
      %vm240 = vmand %vm238, %vm239
      %v241 = vld [vmem:[#allocation2 + $0xc] sm:$0x1]
      %v242 = vsel %vm240, 0, %v241
      %243 = vst [vmem:[#allocation2 + $0xc] sm:$0x1] %v242
      %244 = vst.msk [vmem:[#allocation2 + $0x10] sm:$0xf] %vm234, 0
      %245 = vst.msk [vmem:[#allocation2 + $0x14] sm:$0xf] %vm234, 0
      %246 = vst.msk [vmem:[#allocation2 + $0x18] sm:$0xf] %vm234, 0
      %v247 = vld [vmem:[#allocation2 + $0x1c] sm:$0x1]
      %v248 = vsel %vm240, 0, %v247
      %249 = vst [vmem:[#allocation2 + $0x1c] sm:$0x1] %v248
      %250 = vst.msk [vmem:[#allocation2 + $0x20] sm:$0xf] %vm234, 0
      %251 = vst.msk [vmem:[#allocation2 + $0x24] sm:$0xf] %vm234, 0
      %252 = vst.msk [vmem:[#allocation2 + $0x28] sm:$0xf] %vm234, 0
      %v253 = vld [vmem:[#allocation2 + $0x2c] sm:$0x1]
      %v254 = vsel %vm240, 0, %v253
      %255 = vst [vmem:[#allocation2 + $0x2c] sm:$0x1] %v254
      %256 = vst.msk [vmem:[#allocation2 + $0x30] sm:$0xf] %vm234, 0
      %257 = vst.msk [vmem:[#allocation2 + $0x34] sm:$0xf] %vm234, 0
      %258 = vst.msk [vmem:[#allocation2 + $0x38] sm:$0xf] %vm234, 0
      %v259 = vld [vmem:[#allocation2 + $0x3c] sm:$0x1]
      %v260 = vsel %vm240, 0, %v259
      %261 = vst [vmem:[#allocation2 + $0x3c] sm:$0x1] %v260
      %262 = vst.msk [vmem:[#allocation2 + $0x40] sm:$0xf] %vm234, 0
      %263 = vst.msk [vmem:[#allocation2 + $0x44] sm:$0xf] %vm234, 0
      %264 = vst.msk [vmem:[#allocation2 + $0x48] sm:$0xf] %vm234, 0
      %v265 = vld [vmem:[#allocation2 + $0x4c] sm:$0x1]
      %v266 = vsel %vm240, 0, %v265
      %267 = vst [vmem:[#allocation2 + $0x4c] sm:$0x1] %v266
      %268 = vst.msk [vmem:[#allocation2 + $0x50] sm:$0xf] %vm234, 0
      %269 = vst.msk [vmem:[#allocation2 + $0x54] sm:$0xf] %vm234, 0
      %270 = vst.msk [vmem:[#allocation2 + $0x58] sm:$0xf] %vm234, 0
      %v271 = vld [vmem:[#allocation2 + $0x5c] sm:$0x1]
      %v272 = vsel %vm240, 0, %v271
      %273 = vst [vmem:[#allocation2 + $0x5c] sm:$0x1] %v272
      %274 = vst.msk [vmem:[#allocation2 + $0x60] sm:$0xf] %vm234, 0
      %275 = vst.msk [vmem:[#allocation2 + $0x64] sm:$0xf] %vm234, 0
      %276 = vst.msk [vmem:[#allocation2 + $0x68] sm:$0xf] %vm234, 0
      %v277 = vld [vmem:[#allocation2 + $0x6c] sm:$0x1]
      %v278 = vsel %vm240, 0, %v277
      %279 = vst [vmem:[#allocation2 + $0x6c] sm:$0x1] %v278
      %280 = vst.msk [vmem:[#allocation2 + $0x70] sm:$0xf] %vm234, 0
      %281 = vst.msk [vmem:[#allocation2 + $0x74] sm:$0xf] %vm234, 0
      %282 = vst.msk [vmem:[#allocation2 + $0x78] sm:$0xf] %vm234, 0
      %v283 = vld [vmem:[#allocation2 + $0x7c] sm:$0x1]
      %v284 = vsel %vm240, 0, %v283
      %285 = vst [vmem:[#allocation2 + $0x7c] sm:$0x1] %v284
      %286 = vst.msk [vmem:[#allocation2 + $0x80] sm:$0xf] %vm234, 0
      %287 = vst.msk [vmem:[#allocation2 + $0x84] sm:$0xf] %vm234, 0
      %288 = vst.msk [vmem:[#allocation2 + $0x88] sm:$0xf] %vm234, 0
      %v289 = vld [vmem:[#allocation2 + $0x8c] sm:$0x1]
      %v290 = vsel %vm240, 0, %v289
      %291 = vst [vmem:[#allocation2 + $0x8c] sm:$0x1] %v290
      %292 = vst.msk [vmem:[#allocation2 + $0x90] sm:$0xf] %vm234, 0
      %293 = vst.msk [vmem:[#allocation2 + $0x94] sm:$0xf] %vm234, 0
      %294 = vst.msk [vmem:[#allocation2 + $0x98] sm:$0xf] %vm234, 0
      %v295 = vld [vmem:[#allocation2 + $0x9c] sm:$0x1]
      %v296 = vsel %vm240, 0, %v295
      %297 = vst [vmem:[#allocation2 + $0x9c] sm:$0x1] %v296
      %s298 = scalar_lea.vmem [#allocation2], 16
      %299 = vst.msk [vmem:[%s298 + $0x8] sm:$0xf] %vm234, %v226
      %300 = vst.msk [vmem:[%s298 + $0x18] sm:$0xf] %vm234, %v227
      %301 = vst.msk [vmem:[%s298 + $0x28] sm:$0xf] %vm234, %v228
      %302 = vst.msk [vmem:[%s298 + $0x38] sm:$0xf] %vm234, %v229
      %303 = vst.msk [vmem:[%s298 + $0x48] sm:$0xf] %vm234, %v230
      %304 = vst.msk [vmem:[%s298 + $0x58] sm:$0xf] %vm234, %v231
      %305 = vst.msk [vmem:[%s298 + $0x68] sm:$0xf] %vm234, %v232
      %306 = vst.msk [vmem:[%s298 + $0x78] sm:$0xf] %vm234, %v233
      %v307 = vld [vmem:[#allocation2 + $0x4] sm:$0x8]
      %v308 = vld [vmem:[#allocation2 + $0x8] sm:$0xf]
      %v309 = vld [vmem:[#allocation2 + $0x14] sm:$0x8]
      %v310 = vld [vmem:[#allocation2 + $0x18] sm:$0xf]
      %v311 = vld [vmem:[#allocation2 + $0x24] sm:$0x8]
      %v312 = vld [vmem:[#allocation2 + $0x28] sm:$0xf]
      %v313 = vld [vmem:[#allocation2 + $0x34] sm:$0x8]
      %v314 = vld [vmem:[#allocation2 + $0x38] sm:$0xf]
      %v315 = vld [vmem:[#allocation2 + $0x44] sm:$0x8]
      %v316 = vld [vmem:[#allocation2 + $0x48] sm:$0xf]
      %v317 = vld [vmem:[#allocation2 + $0x54] sm:$0x8]
      %v318 = vld [vmem:[#allocation2 + $0x58] sm:$0xf]
      %v319 = vld [vmem:[#allocation2 + $0x64] sm:$0x8]
      %v320 = vld [vmem:[#allocation2 + $0x68] sm:$0xf]
      %v321 = vld [vmem:[#allocation2 + $0x74] sm:$0x8]
      %v322 = vld [vmem:[#allocation2 + $0x78] sm:$0xf]
      %vm323 = vsmask.f32 4368
      %vm324 = vmor %vm239, %vm323
      %v326 = vshrl.u32 %v307, 16
      %v328 = vrot.slane %v326, 7
      %v329 = vrot.slane %v328, 4
      %v331 = vshrl.u32 %v308, 16
      %v333 = vrot.slane %v331, 7
      %v334 = vshll.u32 %v308, 16
      %v336 = vor.u32 %v333, %v334
      %v337 = vsel %vm324, %v329, %v336
      %v339 = vshrl.u32 %v309, 16
      %v341 = vrot.slane %v339, 7
      %v342 = vrot.slane %v341, 4
      %v344 = vshrl.u32 %v310, 16
      %v346 = vrot.slane %v344, 7
      %v347 = vshll.u32 %v310, 16
      %v349 = vor.u32 %v346, %v347
      %v350 = vsel %vm324, %v342, %v349
      %v352 = vshrl.u32 %v311, 16
      %v354 = vrot.slane %v352, 7
      %v355 = vrot.slane %v354, 4
      %v357 = vshrl.u32 %v312, 16
      %v359 = vrot.slane %v357, 7
      %v360 = vshll.u32 %v312, 16
      %v362 = vor.u32 %v359, %v360
      %v363 = vsel %vm324, %v355, %v362
      %v365 = vshrl.u32 %v313, 16
      %v367 = vrot.slane %v365, 7
      %v368 = vrot.slane %v367, 4
      %v370 = vshrl.u32 %v314, 16
      %v372 = vrot.slane %v370, 7
      %v373 = vshll.u32 %v314, 16
      %v375 = vor.u32 %v372, %v373
      %v376 = vsel %vm324, %v368, %v375
      %v378 = vshrl.u32 %v315, 16
      %v380 = vrot.slane %v378, 7
      %v381 = vrot.slane %v380, 4
      %v383 = vshrl.u32 %v316, 16
      %v385 = vrot.slane %v383, 7
      %v386 = vshll.u32 %v316, 16
      %v388 = vor.u32 %v385, %v386
      %v389 = vsel %vm324, %v381, %v388
      %v391 = vshrl.u32 %v317, 16
      %v393 = vrot.slane %v391, 7
      %v394 = vrot.slane %v393, 4
      %v396 = vshrl.u32 %v318, 16
      %v398 = vrot.slane %v396, 7
      %v399 = vshll.u32 %v318, 16
      %v401 = vor.u32 %v398, %v399
      %v402 = vsel %vm324, %v394, %v401
      %v404 = vshrl.u32 %v319, 16
      %v406 = vrot.slane %v404, 7
      %v407 = vrot.slane %v406, 4
      %v409 = vshrl.u32 %v320, 16
      %v411 = vrot.slane %v409, 7
      %v412 = vshll.u32 %v320, 16
      %v414 = vor.u32 %v411, %v412
      %v415 = vsel %vm324, %v407, %v414
      %v417 = vshrl.u32 %v321, 16
      %v419 = vrot.slane %v417, 7
      %v420 = vrot.slane %v419, 4
      %v422 = vshrl.u32 %v322, 16
      %v424 = vrot.slane %v422, 7
      %v425 = vshll.u32 %v322, 16
      %v427 = vor.u32 %v424, %v425
      %v428 = vsel %vm324, %v420, %v427
      %v429 = vunpack.c.l.b16 %v337
      %v430 = vunpack.c.l.b16 %v350
      %v431 = vunpack.c.l.b16 %v363
      %v432 = vunpack.c.l.b16 %v376
      %v433 = vunpack.c.l.b16 %v389
      %v434 = vunpack.c.l.b16 %v402
      %v435 = vunpack.c.l.b16 %v415
      %v436 = vunpack.c.l.b16 %v428
      %v437 = vpack.c.b16 %v430, %v429
      %v438 = vpack.c.b16 %v432, %v431
      %v439 = vpack.c.b16 %v434, %v433
      %v440 = vpack.c.b16 %v436, %v435
      %vm445 = vcmask 261120
      %446 = vst.msk [vmem:[#allocation3] sm:$0xff] %vm445, %v437
      %447 = vst.msk [vmem:[#allocation3 + $0x18] sm:$0xff] %vm445, %v438
      %448 = vst.msk [vmem:[#allocation3 + $0x30] sm:$0xff] %vm445, %v439
      %449 = vst.msk [vmem:[#allocation3 + $0x48] sm:$0xff] %vm445, %v440
      %v450 = vld [vmem:[#allocation2 + $0x8] sm:$0xf]
      %v451 = vld [vmem:[#allocation2 + $0x18] sm:$0xf]
      %v452 = vld [vmem:[#allocation2 + $0x28] sm:$0xf]
      %v453 = vld [vmem:[#allocation2 + $0x38] sm:$0xf]
      %v454 = vld [vmem:[#allocation2 + $0x48] sm:$0xf]
      %v455 = vld [vmem:[#allocation2 + $0x58] sm:$0xf]
      %v456 = vld [vmem:[#allocation2 + $0x68] sm:$0xf]
      %v457 = vld [vmem:[#allocation2 + $0x78] sm:$0xf]
      %v466 = vunpack.c.l.b16 %v450
      %v467 = vunpack.c.l.b16 %v451
      %v468 = vunpack.c.l.b16 %v452
      %v469 = vunpack.c.l.b16 %v453
      %v470 = vunpack.c.l.b16 %v454
      %v471 = vunpack.c.l.b16 %v455
      %v472 = vunpack.c.l.b16 %v456
      %v473 = vunpack.c.l.b16 %v457
      %v474 = vpack.c.b16 %v467, %v466
      %v475 = vpack.c.b16 %v469, %v468
      %v476 = vpack.c.b16 %v471, %v470
      %v477 = vpack.c.b16 %v473, %v472
      %478 = vrot.lane.b32.xlu0 %v474, 32
      %v479 = vpop.permute.xlu0 %478
      %480 = vrot.lane.b32.xlu0 %v475, 32
      %v481 = vpop.permute.xlu0 %480
      %482 = vrot.lane.b32.xlu0 %v476, 32
      %v483 = vpop.permute.xlu0 %482
      %484 = vrot.lane.b32.xlu0 %v477, 32
      %v485 = vpop.permute.xlu0 %484
      %vm490 = vcmask 523520
      %491 = vst.msk [vmem:[#allocation3] sm:$0xff] %vm490, %v479
      %492 = vst.msk [vmem:[#allocation3 + $0x18] sm:$0xff] %vm490, %v481
      %493 = vst.msk [vmem:[#allocation3 + $0x30] sm:$0xff] %vm490, %v483
      %494 = vst.msk [vmem:[#allocation3 + $0x48] sm:$0xff] %vm490, %v485
      %v495 = vld [vmem:[#allocation2 + $0x8] sm:$0xf]
      %v496 = vld [vmem:[#allocation2 + $0xc] sm:$0x1]
      %v497 = vld [vmem:[#allocation2 + $0x18] sm:$0xf]
      %v498 = vld [vmem:[#allocation2 + $0x1c] sm:$0x1]
      %v499 = vld [vmem:[#allocation2 + $0x28] sm:$0xf]
      %v500 = vld [vmem:[#allocation2 + $0x2c] sm:$0x1]
      %v501 = vld [vmem:[#allocation2 + $0x38] sm:$0xf]
      %v502 = vld [vmem:[#allocation2 + $0x3c] sm:$0x1]
      %v503 = vld [vmem:[#allocation2 + $0x48] sm:$0xf]
      %v504 = vld [vmem:[#allocation2 + $0x4c] sm:$0x1]
      %v505 = vld [vmem:[#allocation2 + $0x58] sm:$0xf]
      %v506 = vld [vmem:[#allocation2 + $0x5c] sm:$0x1]
      %v507 = vld [vmem:[#allocation2 + $0x68] sm:$0xf]
      %v508 = vld [vmem:[#allocation2 + $0x6c] sm:$0x1]
      %v509 = vld [vmem:[#allocation2 + $0x78] sm:$0xf]
      %v510 = vld [vmem:[#allocation2 + $0x7c] sm:$0x1]
      %vm511 = vsmask.f32 3328
      %vm512 = vsmask.f32 7440
      %vm513 = vmor %vm511, %vm512
      %v515 = vshrl.u32 %v495, 16
      %v517 = vrot.slane %v515, 4
      %v518 = vshll.u32 %v495, 16
      %v520 = vrot.slane %v518, 5
      %v521 = vor.u32 %v517, %v520
      %v522 = vrot.slane %v521, 4
      %v524 = vshll.u32 %v496, 16
      %v526 = vrot.slane %v524, 5
      %v527 = vsel %vm513, %v522, %v526
      %v529 = vshrl.u32 %v497, 16
      %v531 = vrot.slane %v529, 4
      %v532 = vshll.u32 %v497, 16
      %v534 = vrot.slane %v532, 5
      %v535 = vor.u32 %v531, %v534
      %v536 = vrot.slane %v535, 4
      %v538 = vshll.u32 %v498, 16
      %v540 = vrot.slane %v538, 5
      %v541 = vsel %vm513, %v536, %v540
      %v543 = vshrl.u32 %v499, 16
      %v545 = vrot.slane %v543, 4
      %v546 = vshll.u32 %v499, 16
      %v548 = vrot.slane %v546, 5
      %v549 = vor.u32 %v545, %v548
      %v550 = vrot.slane %v549, 4
      %v552 = vshll.u32 %v500, 16
      %v554 = vrot.slane %v552, 5
      %v555 = vsel %vm513, %v550, %v554
      %v557 = vshrl.u32 %v501, 16
      %v559 = vrot.slane %v557, 4
      %v560 = vshll.u32 %v501, 16
      %v562 = vrot.slane %v560, 5
      %v563 = vor.u32 %v559, %v562
      %v564 = vrot.slane %v563, 4
      %v566 = vshll.u32 %v502, 16
      %v568 = vrot.slane %v566, 5
      %v569 = vsel %vm513, %v564, %v568
      %v571 = vshrl.u32 %v503, 16
      %v573 = vrot.slane %v571, 4
      %v574 = vshll.u32 %v503, 16
      %v576 = vrot.slane %v574, 5
      %v577 = vor.u32 %v573, %v576
      %v578 = vrot.slane %v577, 4
      %v580 = vshll.u32 %v504, 16
      %v582 = vrot.slane %v580, 5
      %v583 = vsel %vm513, %v578, %v582
      %v585 = vshrl.u32 %v505, 16
      %v587 = vrot.slane %v585, 4
      %v588 = vshll.u32 %v505, 16
      %v590 = vrot.slane %v588, 5
      %v591 = vor.u32 %v587, %v590
      %v592 = vrot.slane %v591, 4
      %v594 = vshll.u32 %v506, 16
      %v596 = vrot.slane %v594, 5
      %v597 = vsel %vm513, %v592, %v596
      %v599 = vshrl.u32 %v507, 16
      %v601 = vrot.slane %v599, 4
      %v602 = vshll.u32 %v507, 16
      %v604 = vrot.slane %v602, 5
      %v605 = vor.u32 %v601, %v604
      %v606 = vrot.slane %v605, 4
      %v608 = vshll.u32 %v508, 16
      %v610 = vrot.slane %v608, 5
      %v611 = vsel %vm513, %v606, %v610
      %v613 = vshrl.u32 %v509, 16
      %v615 = vrot.slane %v613, 4
      %v616 = vshll.u32 %v509, 16
      %v618 = vrot.slane %v616, 5
      %v619 = vor.u32 %v615, %v618
      %v620 = vrot.slane %v619, 4
      %v622 = vshll.u32 %v510, 16
      %v624 = vrot.slane %v622, 5
      %v625 = vsel %vm513, %v620, %v624
      %v626 = vunpack.c.l.b16 %v527
      %v627 = vunpack.c.l.b16 %v541
      %v628 = vunpack.c.l.b16 %v555
      %v629 = vunpack.c.l.b16 %v569
      %v630 = vunpack.c.l.b16 %v583
      %v631 = vunpack.c.l.b16 %v597
      %v632 = vunpack.c.l.b16 %v611
      %v633 = vunpack.c.l.b16 %v625
      %v634 = vpack.c.b16 %v627, %v626
      %v635 = vpack.c.b16 %v629, %v628
      %v636 = vpack.c.b16 %v631, %v630
      %v637 = vpack.c.b16 %v633, %v632
      %638 = vrot.lane.b32.xlu0 %v634, 64
      %v639 = vpop.permute.xlu0 %638
      %640 = vrot.lane.b32.xlu0 %v635, 64
      %v641 = vpop.permute.xlu0 %640
      %642 = vrot.lane.b32.xlu0 %v636, 64
      %v643 = vpop.permute.xlu0 %642
      %644 = vrot.lane.b32.xlu0 %v637, 64
      %v645 = vpop.permute.xlu0 %644
      %vm650 = vcmask 785920
      %651 = vst.msk [vmem:[#allocation3] sm:$0xff] %vm650, %v639
      %652 = vst.msk [vmem:[#allocation3 + $0x18] sm:$0xff] %vm650, %v641
      %653 = vst.msk [vmem:[#allocation3 + $0x30] sm:$0xff] %vm650, %v643
      %654 = vst.msk [vmem:[#allocation3 + $0x48] sm:$0xff] %vm650, %v645
      %v655 = vld [vmem:[%s298 + $0x4] sm:$0x8]
      %v656 = vld [vmem:[%s298 + $0x8] sm:$0xf]
      %v657 = vld [vmem:[%s298 + $0x14] sm:$0x8]
      %v658 = vld [vmem:[%s298 + $0x18] sm:$0xf]
      %v659 = vld [vmem:[%s298 + $0x24] sm:$0x8]
      %v660 = vld [vmem:[%s298 + $0x28] sm:$0xf]
      %v661 = vld [vmem:[%s298 + $0x34] sm:$0x8]
      %v662 = vld [vmem:[%s298 + $0x38] sm:$0xf]
      %v663 = vld [vmem:[%s298 + $0x44] sm:$0x8]
      %v664 = vld [vmem:[%s298 + $0x48] sm:$0xf]
      %v665 = vld [vmem:[%s298 + $0x54] sm:$0x8]
      %v666 = vld [vmem:[%s298 + $0x58] sm:$0xf]
      %v667 = vld [vmem:[%s298 + $0x64] sm:$0x8]
      %v668 = vld [vmem:[%s298 + $0x68] sm:$0xf]
      %v669 = vld [vmem:[%s298 + $0x74] sm:$0x8]
      %v670 = vld [vmem:[%s298 + $0x78] sm:$0xf]
      %v672 = vshrl.u32 %v655, 16
      %v674 = vrot.slane %v672, 7
      %v675 = vrot.slane %v674, 4
      %v677 = vshrl.u32 %v656, 16
      %v679 = vrot.slane %v677, 7
      %v680 = vshll.u32 %v656, 16
      %v682 = vor.u32 %v679, %v680
      %v683 = vsel %vm324, %v675, %v682
      %v685 = vshrl.u32 %v657, 16
      %v687 = vrot.slane %v685, 7
      %v688 = vrot.slane %v687, 4
      %v690 = vshrl.u32 %v658, 16
      %v692 = vrot.slane %v690, 7
      %v693 = vshll.u32 %v658, 16
      %v695 = vor.u32 %v692, %v693
      %v696 = vsel %vm324, %v688, %v695
      %v698 = vshrl.u32 %v659, 16
      %v700 = vrot.slane %v698, 7
      %v701 = vrot.slane %v700, 4
      %v703 = vshrl.u32 %v660, 16
      %v705 = vrot.slane %v703, 7
      %v706 = vshll.u32 %v660, 16
      %v708 = vor.u32 %v705, %v706
      %v709 = vsel %vm324, %v701, %v708
      %v711 = vshrl.u32 %v661, 16
      %v713 = vrot.slane %v711, 7
      %v714 = vrot.slane %v713, 4
      %v716 = vshrl.u32 %v662, 16
      %v718 = vrot.slane %v716, 7
      %v719 = vshll.u32 %v662, 16
      %v721 = vor.u32 %v718, %v719
      %v722 = vsel %vm324, %v714, %v721
      %v724 = vshrl.u32 %v663, 16
      %v726 = vrot.slane %v724, 7
      %v727 = vrot.slane %v726, 4
      %v729 = vshrl.u32 %v664, 16
      %v731 = vrot.slane %v729, 7
      %v732 = vshll.u32 %v664, 16
      %v734 = vor.u32 %v731, %v732
      %v735 = vsel %vm324, %v727, %v734
      %v737 = vshrl.u32 %v665, 16
      %v739 = vrot.slane %v737, 7
      %v740 = vrot.slane %v739, 4
      %v742 = vshrl.u32 %v666, 16
      %v744 = vrot.slane %v742, 7
      %v745 = vshll.u32 %v666, 16
      %v747 = vor.u32 %v744, %v745
      %v748 = vsel %vm324, %v740, %v747
      %v750 = vshrl.u32 %v667, 16
      %v752 = vrot.slane %v750, 7
      %v753 = vrot.slane %v752, 4
      %v755 = vshrl.u32 %v668, 16
      %v757 = vrot.slane %v755, 7
      %v758 = vshll.u32 %v668, 16
      %v760 = vor.u32 %v757, %v758
      %v761 = vsel %vm324, %v753, %v760
      %v763 = vshrl.u32 %v669, 16
      %v765 = vrot.slane %v763, 7
      %v766 = vrot.slane %v765, 4
      %v768 = vshrl.u32 %v670, 16
      %v770 = vrot.slane %v768, 7
      %v771 = vshll.u32 %v670, 16
      %v773 = vor.u32 %v770, %v771
      %v774 = vsel %vm324, %v766, %v773
      %v775 = vunpack.c.l.b16 %v683
      %v776 = vunpack.c.l.b16 %v696
      %v777 = vunpack.c.l.b16 %v709
      %v778 = vunpack.c.l.b16 %v722
      %v779 = vunpack.c.l.b16 %v735
      %v780 = vunpack.c.l.b16 %v748
      %v781 = vunpack.c.l.b16 %v761
      %v782 = vunpack.c.l.b16 %v774
      %v783 = vpack.c.b16 %v776, %v775
      %v784 = vpack.c.b16 %v778, %v777
      %v785 = vpack.c.b16 %v780, %v779
      %v786 = vpack.c.b16 %v782, %v781
      %787 = vrot.lane.b32.xlu0 %v783, 96
      %v788 = vpop.permute.xlu0 %787
      %789 = vrot.lane.b32.xlu0 %v784, 96
      %v790 = vpop.permute.xlu0 %789
      %791 = vrot.lane.b32.xlu0 %v785, 96
      %v792 = vpop.permute.xlu0 %791
      %793 = vrot.lane.b32.xlu0 %v786, 96
      %v794 = vpop.permute.xlu0 %793
      %vm799 = vcmask 1048320
      %800 = vst.msk [vmem:[#allocation3] sm:$0xff] %vm799, %v788
      %801 = vst.msk [vmem:[#allocation3 + $0x18] sm:$0xff] %vm799, %v790
      %802 = vst.msk [vmem:[#allocation3 + $0x30] sm:$0xff] %vm799, %v792
      %803 = vst.msk [vmem:[#allocation3 + $0x48] sm:$0xff] %vm799, %v794
      %v804 = vld [vmem:[%s298 + $0x8] sm:$0xf]
      %v805 = vld [vmem:[%s298 + $0x18] sm:$0xf]
      %v806 = vld [vmem:[%s298 + $0x28] sm:$0xf]
      %v807 = vld [vmem:[%s298 + $0x38] sm:$0xf]
      %v808 = vld [vmem:[%s298 + $0x48] sm:$0xf]
      %v809 = vld [vmem:[%s298 + $0x58] sm:$0xf]
      %v810 = vld [vmem:[%s298 + $0x68] sm:$0xf]
      %v811 = vld [vmem:[%s298 + $0x78] sm:$0xf]
      %v820 = vunpack.c.l.b16 %v804
      %v821 = vunpack.c.l.b16 %v805
      %v822 = vunpack.c.l.b16 %v806
      %v823 = vunpack.c.l.b16 %v807
      %v824 = vunpack.c.l.b16 %v808
      %v825 = vunpack.c.l.b16 %v809
      %v826 = vunpack.c.l.b16 %v810
      %v827 = vunpack.c.l.b16 %v811
      %v828 = vpack.c.b16 %v821, %v820
      %v829 = vpack.c.b16 %v823, %v822
      %v830 = vpack.c.b16 %v825, %v824
      %v831 = vpack.c.b16 %v827, %v826
      %836 = vst.msk [vmem:[#allocation3 + $0x8] sm:$0xff] %vm445, %v828
      %837 = vst.msk [vmem:[#allocation3 + $0x20] sm:$0xff] %vm445, %v829
      %838 = vst.msk [vmem:[#allocation3 + $0x38] sm:$0xff] %vm445, %v830
      %839 = vst.msk [vmem:[#allocation3 + $0x50] sm:$0xff] %vm445, %v831
      %v840 = vld [vmem:[%s298 + $0x8] sm:$0xf]
      %v841 = vld [vmem:[%s298 + $0xc] sm:$0x1]
      %v842 = vld [vmem:[%s298 + $0x18] sm:$0xf]
      %v843 = vld [vmem:[%s298 + $0x1c] sm:$0x1]
      %v844 = vld [vmem:[%s298 + $0x28] sm:$0xf]
      %v845 = vld [vmem:[%s298 + $0x2c] sm:$0x1]
      %v846 = vld [vmem:[%s298 + $0x38] sm:$0xf]
      %v847 = vld [vmem:[%s298 + $0x3c] sm:$0x1]
      %v848 = vld [vmem:[%s298 + $0x48] sm:$0xf]
      %v849 = vld [vmem:[%s298 + $0x4c] sm:$0x1]
      %v850 = vld [vmem:[%s298 + $0x58] sm:$0xf]
      %v851 = vld [vmem:[%s298 + $0x5c] sm:$0x1]
      %v852 = vld [vmem:[%s298 + $0x68] sm:$0xf]
      %v853 = vld [vmem:[%s298 + $0x6c] sm:$0x1]
      %v854 = vld [vmem:[%s298 + $0x78] sm:$0xf]
      %v855 = vld [vmem:[%s298 + $0x7c] sm:$0x1]
      %v857 = vshrl.u32 %v840, 16
      %v859 = vrot.slane %v857, 4
      %v860 = vshll.u32 %v840, 16
      %v862 = vrot.slane %v860, 5
      %v863 = vor.u32 %v859, %v862
      %v864 = vrot.slane %v863, 4
      %v866 = vshll.u32 %v841, 16
      %v868 = vrot.slane %v866, 5
      %v869 = vsel %vm513, %v864, %v868
      %v871 = vshrl.u32 %v842, 16
      %v873 = vrot.slane %v871, 4
      %v874 = vshll.u32 %v842, 16
      %v876 = vrot.slane %v874, 5
      %v877 = vor.u32 %v873, %v876
      %v878 = vrot.slane %v877, 4
      %v880 = vshll.u32 %v843, 16
      %v882 = vrot.slane %v880, 5
      %v883 = vsel %vm513, %v878, %v882
      %v885 = vshrl.u32 %v844, 16
      %v887 = vrot.slane %v885, 4
      %v888 = vshll.u32 %v844, 16
      %v890 = vrot.slane %v888, 5
      %v891 = vor.u32 %v887, %v890
      %v892 = vrot.slane %v891, 4
      %v894 = vshll.u32 %v845, 16
      %v896 = vrot.slane %v894, 5
      %v897 = vsel %vm513, %v892, %v896
      %v899 = vshrl.u32 %v846, 16
      %v901 = vrot.slane %v899, 4
      %v902 = vshll.u32 %v846, 16
      %v904 = vrot.slane %v902, 5
      %v905 = vor.u32 %v901, %v904
      %v906 = vrot.slane %v905, 4
      %v908 = vshll.u32 %v847, 16
      %v910 = vrot.slane %v908, 5
      %v911 = vsel %vm513, %v906, %v910
      %v913 = vshrl.u32 %v848, 16
      %v915 = vrot.slane %v913, 4
      %v916 = vshll.u32 %v848, 16
      %v918 = vrot.slane %v916, 5
      %v919 = vor.u32 %v915, %v918
      %v920 = vrot.slane %v919, 4
      %v922 = vshll.u32 %v849, 16
      %v924 = vrot.slane %v922, 5
      %v925 = vsel %vm513, %v920, %v924
      %v927 = vshrl.u32 %v850, 16
      %v929 = vrot.slane %v927, 4
      %v930 = vshll.u32 %v850, 16
      %v932 = vrot.slane %v930, 5
      %v933 = vor.u32 %v929, %v932
      %v934 = vrot.slane %v933, 4
      %v936 = vshll.u32 %v851, 16
      %v938 = vrot.slane %v936, 5
      %v939 = vsel %vm513, %v934, %v938
      %v941 = vshrl.u32 %v852, 16
      %v943 = vrot.slane %v941, 4
      %v944 = vshll.u32 %v852, 16
      %v946 = vrot.slane %v944, 5
      %v947 = vor.u32 %v943, %v946
      %v948 = vrot.slane %v947, 4
      %v950 = vshll.u32 %v853, 16
      %v952 = vrot.slane %v950, 5
      %v953 = vsel %vm513, %v948, %v952
      %v955 = vshrl.u32 %v854, 16
      %v957 = vrot.slane %v955, 4
      %v958 = vshll.u32 %v854, 16
      %v960 = vrot.slane %v958, 5
      %v961 = vor.u32 %v957, %v960
      %v962 = vrot.slane %v961, 4
      %v964 = vshll.u32 %v855, 16
      %v966 = vrot.slane %v964, 5
      %v967 = vsel %vm513, %v962, %v966
      %v968 = vunpack.c.l.b16 %v869
      %v969 = vunpack.c.l.b16 %v883
      %v970 = vunpack.c.l.b16 %v897
      %v971 = vunpack.c.l.b16 %v911
      %v972 = vunpack.c.l.b16 %v925
      %v973 = vunpack.c.l.b16 %v939
      %v974 = vunpack.c.l.b16 %v953
      %v975 = vunpack.c.l.b16 %v967
      %v976 = vpack.c.b16 %v969, %v968
      %v977 = vpack.c.b16 %v971, %v970
      %v978 = vpack.c.b16 %v973, %v972
      %v979 = vpack.c.b16 %v975, %v974
      %980 = vrot.lane.b32.xlu0 %v976, 32
      %v981 = vpop.permute.xlu0 %980
      %982 = vrot.lane.b32.xlu0 %v977, 32
      %v983 = vpop.permute.xlu0 %982
      %984 = vrot.lane.b32.xlu0 %v978, 32
      %v985 = vpop.permute.xlu0 %984
      %986 = vrot.lane.b32.xlu0 %v979, 32
      %v987 = vpop.permute.xlu0 %986
      %992 = vst.msk [vmem:[#allocation3 + $0x8] sm:$0xff] %vm490, %v981
      %993 = vst.msk [vmem:[#allocation3 + $0x20] sm:$0xff] %vm490, %v983
      %994 = vst.msk [vmem:[#allocation3 + $0x38] sm:$0xff] %vm490, %v985
      %995 = vst.msk [vmem:[#allocation3 + $0x50] sm:$0xff] %vm490, %v987
      %s996 = scalar_lea.vmem [#allocation2], 32
      %v997 = vld [vmem:[%s996 + $0x4] sm:$0x8]
      %v998 = vld [vmem:[%s996 + $0x8] sm:$0xf]
      %v999 = vld [vmem:[%s996 + $0x14] sm:$0x8]
      %v1000 = vld [vmem:[%s996 + $0x18] sm:$0xf]
      %v1001 = vld [vmem:[%s996 + $0x24] sm:$0x8]
      %v1002 = vld [vmem:[%s996 + $0x28] sm:$0xf]
      %v1003 = vld [vmem:[%s996 + $0x34] sm:$0x8]
      %v1004 = vld [vmem:[%s996 + $0x38] sm:$0xf]
      %v1005 = vld [vmem:[%s996 + $0x44] sm:$0x8]
      %v1006 = vld [vmem:[%s996 + $0x48] sm:$0xf]
      %v1007 = vld [vmem:[%s996 + $0x54] sm:$0x8]
      %v1008 = vld [vmem:[%s996 + $0x58] sm:$0xf]
      %v1009 = vld [vmem:[%s996 + $0x64] sm:$0x8]
      %v1010 = vld [vmem:[%s996 + $0x68] sm:$0xf]
      %v1011 = vld [vmem:[%s996 + $0x74] sm:$0x8]
      %v1012 = vld [vmem:[%s996 + $0x78] sm:$0xf]
      %v1014 = vshrl.u32 %v997, 16
      %v1016 = vrot.slane %v1014, 7
      %v1017 = vrot.slane %v1016, 4
      %v1019 = vshrl.u32 %v998, 16
      %v1021 = vrot.slane %v1019, 7
      %v1022 = vshll.u32 %v998, 16
      %v1024 = vor.u32 %v1021, %v1022
      %v1025 = vsel %vm324, %v1017, %v1024
      %v1027 = vshrl.u32 %v999, 16
      %v1029 = vrot.slane %v1027, 7
      %v1030 = vrot.slane %v1029, 4
      %v1032 = vshrl.u32 %v1000, 16
      %v1034 = vrot.slane %v1032, 7
      %v1035 = vshll.u32 %v1000, 16
      %v1037 = vor.u32 %v1034, %v1035
      %v1038 = vsel %vm324, %v1030, %v1037
      %v1040 = vshrl.u32 %v1001, 16
      %v1042 = vrot.slane %v1040, 7
      %v1043 = vrot.slane %v1042, 4
      %v1045 = vshrl.u32 %v1002, 16
      %v1047 = vrot.slane %v1045, 7
      %v1048 = vshll.u32 %v1002, 16
      %v1050 = vor.u32 %v1047, %v1048
      %v1051 = vsel %vm324, %v1043, %v1050
      %v1053 = vshrl.u32 %v1003, 16
      %v1055 = vrot.slane %v1053, 7
      %v1056 = vrot.slane %v1055, 4
      %v1058 = vshrl.u32 %v1004, 16
      %v1060 = vrot.slane %v1058, 7
      %v1061 = vshll.u32 %v1004, 16
      %v1063 = vor.u32 %v1060, %v1061
      %v1064 = vsel %vm324, %v1056, %v1063
      %v1066 = vshrl.u32 %v1005, 16
      %v1068 = vrot.slane %v1066, 7
      %v1069 = vrot.slane %v1068, 4
      %v1071 = vshrl.u32 %v1006, 16
      %v1073 = vrot.slane %v1071, 7
      %v1074 = vshll.u32 %v1006, 16
      %v1076 = vor.u32 %v1073, %v1074
      %v1077 = vsel %vm324, %v1069, %v1076
      %v1079 = vshrl.u32 %v1007, 16
      %v1081 = vrot.slane %v1079, 7
      %v1082 = vrot.slane %v1081, 4
      %v1084 = vshrl.u32 %v1008, 16
      %v1086 = vrot.slane %v1084, 7
      %v1087 = vshll.u32 %v1008, 16
      %v1089 = vor.u32 %v1086, %v1087
      %v1090 = vsel %vm324, %v1082, %v1089
      %v1092 = vshrl.u32 %v1009, 16
      %v1094 = vrot.slane %v1092, 7
      %v1095 = vrot.slane %v1094, 4
      %v1097 = vshrl.u32 %v1010, 16
      %v1099 = vrot.slane %v1097, 7
      %v1100 = vshll.u32 %v1010, 16
      %v1102 = vor.u32 %v1099, %v1100
      %v1103 = vsel %vm324, %v1095, %v1102
      %v1105 = vshrl.u32 %v1011, 16
      %v1107 = vrot.slane %v1105, 7
      %v1108 = vrot.slane %v1107, 4
      %v1110 = vshrl.u32 %v1012, 16
      %v1112 = vrot.slane %v1110, 7
      %v1113 = vshll.u32 %v1012, 16
      %v1115 = vor.u32 %v1112, %v1113
      %v1116 = vsel %vm324, %v1108, %v1115
      %v1117 = vunpack.c.l.b16 %v1025
      %v1118 = vunpack.c.l.b16 %v1038
      %v1119 = vunpack.c.l.b16 %v1051
      %v1120 = vunpack.c.l.b16 %v1064
      %v1121 = vunpack.c.l.b16 %v1077
      %v1122 = vunpack.c.l.b16 %v1090
      %v1123 = vunpack.c.l.b16 %v1103
      %v1124 = vunpack.c.l.b16 %v1116
      %v1125 = vpack.c.b16 %v1118, %v1117
      %v1126 = vpack.c.b16 %v1120, %v1119
      %v1127 = vpack.c.b16 %v1122, %v1121
      %v1128 = vpack.c.b16 %v1124, %v1123
      %1129 = vrot.lane.b32.xlu0 %v1125, 64
      %v1130 = vpop.permute.xlu0 %1129
      %1131 = vrot.lane.b32.xlu0 %v1126, 64
      %v1132 = vpop.permute.xlu0 %1131
      %1133 = vrot.lane.b32.xlu0 %v1127, 64
      %v1134 = vpop.permute.xlu0 %1133
      %1135 = vrot.lane.b32.xlu0 %v1128, 64
      %v1136 = vpop.permute.xlu0 %1135
      %1141 = vst.msk [vmem:[#allocation3 + $0x8] sm:$0xff] %vm650, %v1130
      %1142 = vst.msk [vmem:[#allocation3 + $0x20] sm:$0xff] %vm650, %v1132
      %1143 = vst.msk [vmem:[#allocation3 + $0x38] sm:$0xff] %vm650, %v1134
      %1144 = vst.msk [vmem:[#allocation3 + $0x50] sm:$0xff] %vm650, %v1136
      %v1145 = vld [vmem:[%s996 + $0x8] sm:$0xf]
      %v1146 = vld [vmem:[%s996 + $0x18] sm:$0xf]
      %v1147 = vld [vmem:[%s996 + $0x28] sm:$0xf]
      %v1148 = vld [vmem:[%s996 + $0x38] sm:$0xf]
      %v1149 = vld [vmem:[%s996 + $0x48] sm:$0xf]
      %v1150 = vld [vmem:[%s996 + $0x58] sm:$0xf]
      %v1151 = vld [vmem:[%s996 + $0x68] sm:$0xf]
      %v1152 = vld [vmem:[%s996 + $0x78] sm:$0xf]
      %v1161 = vunpack.c.l.b16 %v1145
      %v1162 = vunpack.c.l.b16 %v1146
      %v1163 = vunpack.c.l.b16 %v1147
      %v1164 = vunpack.c.l.b16 %v1148
      %v1165 = vunpack.c.l.b16 %v1149
      %v1166 = vunpack.c.l.b16 %v1150
      %v1167 = vunpack.c.l.b16 %v1151
      %v1168 = vunpack.c.l.b16 %v1152
      %v1169 = vpack.c.b16 %v1162, %v1161
      %v1170 = vpack.c.b16 %v1164, %v1163
      %v1171 = vpack.c.b16 %v1166, %v1165
      %v1172 = vpack.c.b16 %v1168, %v1167
      %1173 = vrot.lane.b32.xlu0 %v1169, 96
      %v1174 = vpop.permute.xlu0 %1173
      %1175 = vrot.lane.b32.xlu0 %v1170, 96
      %v1176 = vpop.permute.xlu0 %1175
      %1177 = vrot.lane.b32.xlu0 %v1171, 96
      %v1178 = vpop.permute.xlu0 %1177
      %1179 = vrot.lane.b32.xlu0 %v1172, 96
      %v1180 = vpop.permute.xlu0 %1179
      %1185 = vst.msk [vmem:[#allocation3 + $0x8] sm:$0xff] %vm799, %v1174
      %1186 = vst.msk [vmem:[#allocation3 + $0x20] sm:$0xff] %vm799, %v1176
      %1187 = vst.msk [vmem:[#allocation3 + $0x38] sm:$0xff] %vm799, %v1178
      %1188 = vst.msk [vmem:[#allocation3 + $0x50] sm:$0xff] %vm799, %v1180
      %v1189 = vld [vmem:[%s996 + $0x8] sm:$0xf]
      %v1190 = vld [vmem:[%s996 + $0xc] sm:$0x1]
      %v1191 = vld [vmem:[%s996 + $0x18] sm:$0xf]
      %v1192 = vld [vmem:[%s996 + $0x1c] sm:$0x1]
      %v1193 = vld [vmem:[%s996 + $0x28] sm:$0xf]
      %v1194 = vld [vmem:[%s996 + $0x2c] sm:$0x1]
      %v1195 = vld [vmem:[%s996 + $0x38] sm:$0xf]
      %v1196 = vld [vmem:[%s996 + $0x3c] sm:$0x1]
      %v1197 = vld [vmem:[%s996 + $0x48] sm:$0xf]
      %v1198 = vld [vmem:[%s996 + $0x4c] sm:$0x1]
      %v1199 = vld [vmem:[%s996 + $0x58] sm:$0xf]
      %v1200 = vld [vmem:[%s996 + $0x5c] sm:$0x1]
      %v1201 = vld [vmem:[%s996 + $0x68] sm:$0xf]
      %v1202 = vld [vmem:[%s996 + $0x6c] sm:$0x1]
      %v1203 = vld [vmem:[%s996 + $0x78] sm:$0xf]
      %v1204 = vld [vmem:[%s996 + $0x7c] sm:$0x1]
      %v1206 = vshrl.u32 %v1189, 16
      %v1208 = vrot.slane %v1206, 4
      %v1209 = vshll.u32 %v1189, 16
      %v1211 = vrot.slane %v1209, 5
      %v1212 = vor.u32 %v1208, %v1211
      %v1213 = vrot.slane %v1212, 4
      %v1215 = vshll.u32 %v1190, 16
      %v1217 = vrot.slane %v1215, 5
      %v1218 = vsel %vm513, %v1213, %v1217
      %v1220 = vshrl.u32 %v1191, 16
      %v1222 = vrot.slane %v1220, 4
      %v1223 = vshll.u32 %v1191, 16
      %v1225 = vrot.slane %v1223, 5
      %v1226 = vor.u32 %v1222, %v1225
      %v1227 = vrot.slane %v1226, 4
      %v1229 = vshll.u32 %v1192, 16
      %v1231 = vrot.slane %v1229, 5
      %v1232 = vsel %vm513, %v1227, %v1231
      %v1234 = vshrl.u32 %v1193, 16
      %v1236 = vrot.slane %v1234, 4
      %v1237 = vshll.u32 %v1193, 16
      %v1239 = vrot.slane %v1237, 5
      %v1240 = vor.u32 %v1236, %v1239
      %v1241 = vrot.slane %v1240, 4
      %v1243 = vshll.u32 %v1194, 16
      %v1245 = vrot.slane %v1243, 5
      %v1246 = vsel %vm513, %v1241, %v1245
      %v1248 = vshrl.u32 %v1195, 16
      %v1250 = vrot.slane %v1248, 4
      %v1251 = vshll.u32 %v1195, 16
      %v1253 = vrot.slane %v1251, 5
      %v1254 = vor.u32 %v1250, %v1253
      %v1255 = vrot.slane %v1254, 4
      %v1257 = vshll.u32 %v1196, 16
      %v1259 = vrot.slane %v1257, 5
      %v1260 = vsel %vm513, %v1255, %v1259
      %v1262 = vshrl.u32 %v1197, 16
      %v1264 = vrot.slane %v1262, 4
      %v1265 = vshll.u32 %v1197, 16
      %v1267 = vrot.slane %v1265, 5
      %v1268 = vor.u32 %v1264, %v1267
      %v1269 = vrot.slane %v1268, 4
      %v1271 = vshll.u32 %v1198, 16
      %v1273 = vrot.slane %v1271, 5
      %v1274 = vsel %vm513, %v1269, %v1273
      %v1276 = vshrl.u32 %v1199, 16
      %v1278 = vrot.slane %v1276, 4
      %v1279 = vshll.u32 %v1199, 16
      %v1281 = vrot.slane %v1279, 5
      %v1282 = vor.u32 %v1278, %v1281
      %v1283 = vrot.slane %v1282, 4
      %v1285 = vshll.u32 %v1200, 16
      %v1287 = vrot.slane %v1285, 5
      %v1288 = vsel %vm513, %v1283, %v1287
      %v1290 = vshrl.u32 %v1201, 16
      %v1292 = vrot.slane %v1290, 4
      %v1293 = vshll.u32 %v1201, 16
      %v1295 = vrot.slane %v1293, 5
      %v1296 = vor.u32 %v1292, %v1295
      %v1297 = vrot.slane %v1296, 4
      %v1299 = vshll.u32 %v1202, 16
      %v1301 = vrot.slane %v1299, 5
      %v1302 = vsel %vm513, %v1297, %v1301
      %v1304 = vshrl.u32 %v1203, 16
      %v1306 = vrot.slane %v1304, 4
      %v1307 = vshll.u32 %v1203, 16
      %v1309 = vrot.slane %v1307, 5
      %v1310 = vor.u32 %v1306, %v1309
      %v1311 = vrot.slane %v1310, 4
      %v1313 = vshll.u32 %v1204, 16
      %v1315 = vrot.slane %v1313, 5
      %v1316 = vsel %vm513, %v1311, %v1315
      %v1317 = vunpack.c.l.b16 %v1218
      %v1318 = vunpack.c.l.b16 %v1232
      %v1319 = vunpack.c.l.b16 %v1246
      %v1320 = vunpack.c.l.b16 %v1260
      %v1321 = vunpack.c.l.b16 %v1274
      %v1322 = vunpack.c.l.b16 %v1288
      %v1323 = vunpack.c.l.b16 %v1302
      %v1324 = vunpack.c.l.b16 %v1316
      %v1325 = vpack.c.b16 %v1318, %v1317
      %v1326 = vpack.c.b16 %v1320, %v1319
      %v1327 = vpack.c.b16 %v1322, %v1321
      %v1328 = vpack.c.b16 %v1324, %v1323
      %1333 = vst.msk [vmem:[#allocation3 + $0x10] sm:$0xff] %vm445, %v1325
      %1334 = vst.msk [vmem:[#allocation3 + $0x28] sm:$0xff] %vm445, %v1326
      %1335 = vst.msk [vmem:[#allocation3 + $0x40] sm:$0xff] %vm445, %v1327
      %1336 = vst.msk [vmem:[#allocation3 + $0x58] sm:$0xff] %vm445, %v1328
      %v1337 = vld [vmem:[#allocation3] sm:$0xff]
      %v1338 = vld [vmem:[#allocation3 + $0x8] sm:$0xff]
      %v1339 = vld [vmem:[#allocation3 + $0x10] sm:$0xff]
      %v1340 = vld [vmem:[#allocation3 + $0x18] sm:$0xff]
      %v1341 = vld [vmem:[#allocation3 + $0x20] sm:$0xff]
      %v1342 = vld [vmem:[#allocation3 + $0x28] sm:$0xff]
      %v1343 = vld [vmem:[#allocation3 + $0x30] sm:$0xff]
      %v1344 = vld [vmem:[#allocation3 + $0x38] sm:$0xff]
      %v1345 = vld [vmem:[#allocation3 + $0x40] sm:$0xff]
      %v1346 = vld [vmem:[#allocation3 + $0x48] sm:$0xff]
      %v1347 = vld [vmem:[#allocation3 + $0x50] sm:$0xff]
      %v1348 = vld [vmem:[#allocation3 + $0x58] sm:$0xff]
      %v1349 = vld [vmem:[%s1] sm:$0xf]
      %v1350 = vld [vmem:[%s1 + $0x4] sm:$0xf]
      %v1351 = vld [vmem:[%s1 + $0x8] sm:$0xf]
      %v1352 = vld [vmem:[%s1 + $0xc] sm:$0xf]
      %v1353 = vld [vmem:[%s1 + $0x10] sm:$0xf]
      %v1354 = vld [vmem:[%s1 + $0x14] sm:$0xf]
      %v1355 = vld [vmem:[%s1 + $0x18] sm:$0xf]
      %v1356 = vld [vmem:[%s1 + $0x1c] sm:$0xf]
      %v1357 = vld [vmem:[%s1 + $0x20] sm:$0xf]
      %v1358 = vld [vmem:[%s1 + $0x24] sm:$0xf]
      %v1359 = vld [vmem:[%s1 + $0x28] sm:$0xf]
      %v1360 = vld [vmem:[%s1 + $0x2c] sm:$0xf]
      %v1361 = vld [vmem:[%s1 + $0x30] sm:$0xf]
      %v1362 = vld [vmem:[%s1 + $0x34] sm:$0xf]
      %v1363 = vld [vmem:[%s1 + $0x38] sm:$0xf]
      %v1364 = vld [vmem:[%s1 + $0x3c] sm:$0xf]
      %v1365 = vld [vmem:[%s1 + $0x40] sm:$0xf]
      %v1366 = vld [vmem:[%s1 + $0x44] sm:$0xf]
      %v1367 = vld [vmem:[%s1 + $0x48] sm:$0xf]
      %v1368 = vld [vmem:[%s1 + $0x4c] sm:$0xf]
      %v1369 = vld [vmem:[%s1 + $0x50] sm:$0xf]
      %v1370 = vld [vmem:[%s1 + $0x54] sm:$0xf]
      %v1371 = vld [vmem:[%s1 + $0x58] sm:$0xf]
      %v1372 = vld [vmem:[%s1 + $0x5c] sm:$0xf]
      %v1373 = vld [vmem:[%s1 + $0x60] sm:$0xf]
      %v1374 = vld [vmem:[%s1 + $0x64] sm:$0xf]
      %v1375 = vld [vmem:[%s1 + $0x68] sm:$0xf]
      %v1376 = vld [vmem:[%s1 + $0x6c] sm:$0xf]
      %v1377 = vld [vmem:[%s1 + $0x70] sm:$0xf]
      %v1378 = vld [vmem:[%s1 + $0x74] sm:$0xf]
      %v1379 = vld [vmem:[%s1 + $0x78] sm:$0xf]
      %v1380 = vld [vmem:[%s1 + $0x7c] sm:$0xf]
      %v1381 = vld [vmem:[%s1 + $0x80] sm:$0xf]
      %v1382 = vld [vmem:[%s1 + $0x84] sm:$0xf]
      %v1383 = vld [vmem:[%s1 + $0x88] sm:$0xf]
      %v1384 = vld [vmem:[%s1 + $0x8c] sm:$0xf]
      %v1385 = vld [vmem:[%s2] sm:$0x1]
      %v1387 = vlaneseq
      %v1388 = vshrl.u32 %v1387, 7
      %v1389 = vsub.s32 0, %v1388
      %v1390 = vrot.slane %v1385, %v1389
      %v1428 = vunpack.c.l.b16 %v1349
      %v1429 = vunpack.c.l.b16 %v1350
      %v1430 = vunpack.c.l.b16 %v1351
      %v1431 = vunpack.c.l.b16 %v1352
      %v1432 = vunpack.c.l.b16 %v1353
      %v1433 = vunpack.c.l.b16 %v1354
      %v1434 = vunpack.c.l.b16 %v1355
      %v1435 = vunpack.c.l.b16 %v1356
      %v1436 = vunpack.c.l.b16 %v1357
      %v1437 = vunpack.c.l.b16 %v1358
      %v1438 = vunpack.c.l.b16 %v1359
      %v1439 = vunpack.c.l.b16 %v1360
      %v1440 = vunpack.c.l.b16 %v1361
      %v1441 = vunpack.c.l.b16 %v1362
      %v1442 = vunpack.c.l.b16 %v1363
      %v1443 = vunpack.c.l.b16 %v1364
      %v1444 = vunpack.c.l.b16 %v1365
      %v1445 = vunpack.c.l.b16 %v1366
      %v1446 = vunpack.c.l.b16 %v1367
      %v1447 = vunpack.c.l.b16 %v1368
      %v1448 = vunpack.c.l.b16 %v1369
      %v1449 = vunpack.c.l.b16 %v1370
      %v1450 = vunpack.c.l.b16 %v1371
      %v1451 = vunpack.c.l.b16 %v1372
      %v1452 = vunpack.c.l.b16 %v1373
      %v1453 = vunpack.c.l.b16 %v1374
      %v1454 = vunpack.c.l.b16 %v1375
      %v1455 = vunpack.c.l.b16 %v1376
      %v1456 = vunpack.c.l.b16 %v1377
      %v1457 = vunpack.c.l.b16 %v1378
      %v1458 = vunpack.c.l.b16 %v1379
      %v1459 = vunpack.c.l.b16 %v1380
      %v1460 = vunpack.c.l.b16 %v1381
      %v1461 = vunpack.c.l.b16 %v1382
      %v1462 = vunpack.c.l.b16 %v1383
      %v1463 = vunpack.c.l.b16 %v1384
      %v1464 = vpack.c.b16 %v1429, %v1428
      %v1465 = vpack.c.b16 %v1431, %v1430
      %v1466 = vpack.c.b16 %v1433, %v1432
      %v1467 = vpack.c.b16 %v1435, %v1434
      %v1468 = vpack.c.b16 %v1437, %v1436
      %v1469 = vpack.c.b16 %v1439, %v1438
      %v1470 = vpack.c.b16 %v1441, %v1440
      %v1471 = vpack.c.b16 %v1443, %v1442
      %v1472 = vpack.c.b16 %v1445, %v1444
      %v1473 = vpack.c.b16 %v1447, %v1446
      %v1474 = vpack.c.b16 %v1449, %v1448
      %v1475 = vpack.c.b16 %v1451, %v1450
      %v1476 = vpack.c.b16 %v1453, %v1452
      %v1477 = vpack.c.b16 %v1455, %v1454
      %v1478 = vpack.c.b16 %v1457, %v1456
      %v1479 = vpack.c.b16 %v1459, %v1458
      %v1480 = vpack.c.b16 %v1461, %v1460
      %v1481 = vpack.c.b16 %v1463, %v1462
      %v1501 = vsel %vm445, %v1339, 0
      %v1504 = vsel %vm445, %v1342, 0
      %v1507 = vsel %vm445, %v1345, 0
      %v1510 = vsel %vm445, %v1348, 0
      %1512 = vmatprep.subr.bf16.mxu0 0
      %1513 = vmatpush1.bf16.msra.mxu0 %v1464
      %1514 = vmatprep.subr.bf16.mxu0 0
      %1515 = vmatpush1.bf16.msra.mxu0 %v1465
      %1516 = vmatprep.subr.bf16.mxu0 0
      %1517 = vmatpush1.bf16.msra.mxu0 %v1466
      %1518 = vmatprep.subr.bf16.mxu0 0
      %1519 = vmatpush1.bf16.msra.mxu0 %v1467
      %1520 = vmatprep.subr.bf16.mxu0 0
      %1521 = vmatpush1.bf16.msra.mxu0 %v1468
      %1522 = vmatprep.subr.bf16.mxu0 0
      %1523 = vmatpush1.bf16.msra.mxu0 %v1469
      %1524 = vmatprep.subr.bf16.mxu0 0
      %1525 = vmatpush1.bf16.msra.mxu0 %v1470
      %1526 = vmatprep.subr.bf16.mxu0 0
      %1527 = vmatpush1.bf16.msra.mxu0 %v1471
      %1528 = vmatprep.subr.bf16.mxu0 0
      %1529 = vmatpush1.bf16.msra.mxu0 %v1472
      %1530 = vmatprep.subr.bf16.mxu0 0
      %1531 = vmatpush1.bf16.msra.mxu0 %v1473
      %1532 = vmatprep.subr.bf16.mxu0 0
      %1533 = vmatpush1.bf16.msra.mxu0 %v1474
      %1534 = vmatprep.subr.bf16.mxu0 0
      %1535 = vmatpush1.bf16.msra.mxu0 %v1475
      %1536 = vmatprep.subr.bf16.mxu0 0
      %1537 = vmatpush1.bf16.msra.mxu0 %v1476
      %1538 = vmatprep.subr.bf16.mxu0 0
      %1539 = vmatpush1.bf16.msra.mxu0 %v1477
      %1540 = vmatprep.subr.bf16.mxu0 0
      %1541 = vmatpush1.bf16.msra.mxu0 %v1478
      %1542 = vmatprep.subr.bf16.mxu0 0
      %1543 = vmatpush1.bf16.msra.mxu0 %v1479
      %1544 = vmatprep.mubr.bf16.mxu0 %v1338
      %1545 = vmatmul.mubr.bf16.gmra.mrb[0].mxu0 %v1337
      %v1546 = vpop.f32.mrb[0].mxu0
      %v1547 = vadd.f32 %v1390, %v1546
      %v1548 = vpop.f32.mrb[0].mxu0
      %v1549 = vpop.f32.mrb[0].mxu0
      %v1550 = vadd.f32 %v1390, %v1549
      %v1551 = vpop.f32.mrb[0].mxu0
      %1552 = vmatprep.mubr.bf16.mxu0 %v1341
      %1553 = vmatmul.mubr.bf16.gmra.mrb[0].mxu0 %v1340
      %v1554 = vpop.f32.mrb[0].mxu0
      %v1555 = vadd.f32 %v1390, %v1554
      %v1556 = vpop.f32.mrb[0].mxu0
      %v1557 = vpop.f32.mrb[0].mxu0
      %v1558 = vadd.f32 %v1390, %v1557
      %v1559 = vpop.f32.mrb[0].mxu0
      %1560 = vmatprep.mubr.bf16.mxu0 %v1344
      %1561 = vmatmul.mubr.bf16.gmra.mrb[0].mxu0 %v1343
      %v1562 = vpop.f32.mrb[0].mxu0
      %v1563 = vadd.f32 %v1390, %v1562
      %v1564 = vpop.f32.mrb[0].mxu0
      %v1565 = vpop.f32.mrb[0].mxu0
      %v1566 = vadd.f32 %v1390, %v1565
      %v1567 = vpop.f32.mrb[0].mxu0
      %1568 = vmatprep.mubr.bf16.mxu0 %v1347
      %1569 = vmatmul.mubr.bf16.gmra.mrb[0].mxu0 %v1346
      %v1570 = vpop.f32.mrb[0].mxu0
      %v1571 = vadd.f32 %v1390, %v1570
      %v1572 = vpop.f32.mrb[0].mxu0
      %v1573 = vpop.f32.mrb[0].mxu0
      %v1574 = vadd.f32 %v1390, %v1573
      %v1575 = vpop.f32.mrb[0].mxu0
      %1576 = vdwg.mxu0
      %1577 = vmatprep.subr.bf16.mxu0 0
      %1578 = vmatpush1.bf16.msra.mxu0 %v1480
      %1579 = vmatprep.subr.bf16.mxu0 0
      %1580 = vmatpush1.bf16.msra.mxu0 %v1481
      %1581 = vmatprep.subr.bf16.mxu0 0
      %1582 = vmatpush1.bf16.msra.mxu0 0
      %1583 = vmatprep.subr.bf16.mxu0 0
      %1584 = vmatpush1.bf16.msra.mxu0 0
      %1585 = vmatprep.subr.bf16.mxu0 0
      %1586 = vmatpush1.bf16.msra.mxu0 0
      %1587 = vmatprep.subr.bf16.mxu0 0
      %1588 = vmatpush1.bf16.msra.mxu0 0
      %1589 = vmatprep.subr.bf16.mxu0 0
      %1590 = vmatpush1.bf16.msra.mxu0 0
      %1591 = vmatprep.subr.bf16.mxu0 0
      %1592 = vmatpush1.bf16.msra.mxu0 0
      %1593 = vmatprep.subr.bf16.mxu0 0
      %1594 = vmatpush1.bf16.msra.mxu0 0
      %1595 = vmatprep.subr.bf16.mxu0 0
      %1596 = vmatpush1.bf16.msra.mxu0 0
      %1597 = vmatprep.subr.bf16.mxu0 0
      %1598 = vmatpush1.bf16.msra.mxu0 0
      %1599 = vmatprep.subr.bf16.mxu0 0
      %1600 = vmatpush1.bf16.msra.mxu0 0
      %1601 = vmatprep.subr.bf16.mxu0 0
      %1602 = vmatpush1.bf16.msra.mxu0 0
      %1603 = vmatprep.subr.bf16.mxu0 0
      %1604 = vmatpush1.bf16.msra.mxu0 0
      %1605 = vmatprep.subr.bf16.mxu0 0
      %1606 = vmatpush1.bf16.msra.mxu0 0
      %1607 = vmatprep.subr.bf16.mxu0 0
      %1608 = vmatpush1.bf16.msra.mxu0 0
      %1609 = vmatprep.mubr.bf16.mxu0 0
      %1610 = vmatmul.mubr.bf16.gmra.mrb[0].mxu0 %v1501
      %v1611 = vpop.f32.mrb[0].mxu0
      %v1612 = vadd.f32 %v1547, %v1611
      %v1613 = vpop.f32.mrb[0].mxu0
      %v1614 = vpop.f32.mrb[0].mxu0
      %v1615 = vadd.f32 %v1550, %v1614
      %v1616 = vpop.f32.mrb[0].mxu0
      %1617 = vmatprep.mubr.bf16.mxu0 0
      %1618 = vmatmul.mubr.bf16.gmra.mrb[0].mxu0 %v1504
      %v1619 = vpop.f32.mrb[0].mxu0
      %v1620 = vadd.f32 %v1555, %v1619
      %v1621 = vpop.f32.mrb[0].mxu0
      %v1622 = vpop.f32.mrb[0].mxu0
      %v1623 = vadd.f32 %v1558, %v1622
      %v1624 = vpop.f32.mrb[0].mxu0
      %1625 = vmatprep.mubr.bf16.mxu0 0
      %1626 = vmatmul.mubr.bf16.gmra.mrb[0].mxu0 %v1507
      %v1627 = vpop.f32.mrb[0].mxu0
      %v1628 = vadd.f32 %v1563, %v1627
      %v1629 = vpop.f32.mrb[0].mxu0
      %v1630 = vpop.f32.mrb[0].mxu0
      %v1631 = vadd.f32 %v1566, %v1630
      %v1632 = vpop.f32.mrb[0].mxu0
      %1633 = vmatprep.mubr.bf16.mxu0 0
      %1634 = vmatmul.mubr.bf16.gmra.mrb[0].mxu0 %v1510
      %v1635 = vpop.f32.mrb[0].mxu0
      %v1636 = vadd.f32 %v1571, %v1635
      %v1637 = vpop.f32.mrb[0].mxu0
      %v1638 = vpop.f32.mrb[0].mxu0
      %v1639 = vadd.f32 %v1574, %v1638
      %v1640 = vpop.f32.mrb[0].mxu0
      %1641 = vdwg.mxu0
      %vm1642 = vcmp.ge.f32.partialorder %v1612, 0.0
      %vm1643 = vcmp.ge.f32.partialorder %v1615, 0.0
      %vm1644 = vcmp.ge.f32.partialorder %v1620, 0.0
      %vm1645 = vcmp.ge.f32.partialorder %v1623, 0.0
      %vm1646 = vcmp.ge.f32.partialorder %v1628, 0.0
      %vm1647 = vcmp.ge.f32.partialorder %v1631, 0.0
      %vm1648 = vcmp.ge.f32.partialorder %v1636, 0.0
      %vm1649 = vcmp.ge.f32.partialorder %v1639, 0.0
      %v1650 = vmul.f32 %v1612, 0.2
      %v1651 = vmul.f32 %v1615, 0.2
      %v1652 = vmul.f32 %v1620, 0.2
      %v1653 = vmul.f32 %v1623, 0.2
      %v1654 = vmul.f32 %v1628, 0.2
      %v1655 = vmul.f32 %v1631, 0.2
      %v1656 = vmul.f32 %v1636, 0.2
      %v1657 = vmul.f32 %v1639, 0.2
      %v1658 = vsel %vm1642, %v1612, %v1650
      %v1659 = vsel %vm1643, %v1615, %v1651
      %v1660 = vsel %vm1644, %v1620, %v1652
      %v1661 = vsel %vm1645, %v1623, %v1653
      %v1662 = vsel %vm1646, %v1628, %v1654
      %v1663 = vsel %vm1647, %v1631, %v1655
      %v1664 = vsel %vm1648, %v1636, %v1656
      %v1665 = vsel %vm1649, %v1639, %v1657
      %v1666 = vpack.c.bf16 %v1658, %v1658
      %v1667 = vpack.c.bf16 %v1659, %v1659
      %v1668 = vpack.c.bf16 %v1660, %v1660
      %v1669 = vpack.c.bf16 %v1661, %v1661
      %v1670 = vpack.c.bf16 %v1662, %v1662
      %v1671 = vpack.c.bf16 %v1663, %v1663
      %v1672 = vpack.c.bf16 %v1664, %v1664
      %v1673 = vpack.c.bf16 %v1665, %v1665
      %1674 = vst.msk [vmem:[#allocation2] sm:$0xf] %vm234, 0
      %1675 = vst.msk [vmem:[#allocation2 + $0x4] sm:$0xf] %vm234, 0
      %1676 = vst.msk [vmem:[#allocation2 + $0x8] sm:$0xf] %vm234, 0
      %v1677 = vld [vmem:[#allocation2 + $0xc] sm:$0x1]
      %v1678 = vsel %vm240, 0, %v1677
      %1679 = vst [vmem:[#allocation2 + $0xc] sm:$0x1] %v1678
      %1680 = vst.msk [vmem:[#allocation2 + $0x10] sm:$0xf] %vm234, 0
      %1681 = vst.msk [vmem:[#allocation2 + $0x14] sm:$0xf] %vm234, 0
      %1682 = vst.msk [vmem:[#allocation2 + $0x18] sm:$0xf] %vm234, 0
      %v1683 = vld [vmem:[#allocation2 + $0x1c] sm:$0x1]
      %v1684 = vsel %vm240, 0, %v1683
      %1685 = vst [vmem:[#allocation2 + $0x1c] sm:$0x1] %v1684
      %1686 = vst.msk [vmem:[#allocation2 + $0x20] sm:$0xf] %vm234, 0
      %1687 = vst.msk [vmem:[#allocation2 + $0x24] sm:$0xf] %vm234, 0
      %1688 = vst.msk [vmem:[#allocation2 + $0x28] sm:$0xf] %vm234, 0
      %v1689 = vld [vmem:[#allocation2 + $0x2c] sm:$0x1]
      %v1690 = vsel %vm240, 0, %v1689
      %1691 = vst [vmem:[#allocation2 + $0x2c] sm:$0x1] %v1690
      %1692 = vst.msk [vmem:[#allocation2 + $0x30] sm:$0xf] %vm234, 0
      %1693 = vst.msk [vmem:[#allocation2 + $0x34] sm:$0xf] %vm234, 0
      %1694 = vst.msk [vmem:[#allocation2 + $0x38] sm:$0xf] %vm234, 0
      %v1695 = vld [vmem:[#allocation2 + $0x3c] sm:$0x1]
      %v1696 = vsel %vm240, 0, %v1695
      %1697 = vst [vmem:[#allocation2 + $0x3c] sm:$0x1] %v1696
      %1698 = vst.msk [vmem:[#allocation2 + $0x40] sm:$0xf] %vm234, 0
      %1699 = vst.msk [vmem:[#allocation2 + $0x44] sm:$0xf] %vm234, 0
      %1700 = vst.msk [vmem:[#allocation2 + $0x48] sm:$0xf] %vm234, 0
      %v1701 = vld [vmem:[#allocation2 + $0x4c] sm:$0x1]
      %v1702 = vsel %vm240, 0, %v1701
      %1703 = vst [vmem:[#allocation2 + $0x4c] sm:$0x1] %v1702
      %1704 = vst.msk [vmem:[#allocation2 + $0x50] sm:$0xf] %vm234, 0
      %1705 = vst.msk [vmem:[#allocation2 + $0x54] sm:$0xf] %vm234, 0
      %1706 = vst.msk [vmem:[#allocation2 + $0x58] sm:$0xf] %vm234, 0
      %v1707 = vld [vmem:[#allocation2 + $0x5c] sm:$0x1]
      %v1708 = vsel %vm240, 0, %v1707
      %1709 = vst [vmem:[#allocation2 + $0x5c] sm:$0x1] %v1708
      %1710 = vst.msk [vmem:[#allocation2 + $0x60] sm:$0xf] %vm234, 0
      %1711 = vst.msk [vmem:[#allocation2 + $0x64] sm:$0xf] %vm234, 0
      %1712 = vst.msk [vmem:[#allocation2 + $0x68] sm:$0xf] %vm234, 0
      %v1713 = vld [vmem:[#allocation2 + $0x6c] sm:$0x1]
      %v1714 = vsel %vm240, 0, %v1713
      %1715 = vst [vmem:[#allocation2 + $0x6c] sm:$0x1] %v1714
      %1716 = vst.msk [vmem:[#allocation2 + $0x70] sm:$0xf] %vm234, 0
      %1717 = vst.msk [vmem:[#allocation2 + $0x74] sm:$0xf] %vm234, 0
      %1718 = vst.msk [vmem:[#allocation2 + $0x78] sm:$0xf] %vm234, 0
      %v1719 = vld [vmem:[#allocation2 + $0x7c] sm:$0x1]
      %v1720 = vsel %vm240, 0, %v1719
      %1721 = vst [vmem:[#allocation2 + $0x7c] sm:$0x1] %v1720
      %1722 = vst.msk [vmem:[#allocation2 + $0x80] sm:$0xf] %vm234, 0
      %1723 = vst.msk [vmem:[#allocation2 + $0x84] sm:$0xf] %vm234, 0
      %1724 = vst.msk [vmem:[#allocation2 + $0x88] sm:$0xf] %vm234, 0
      %v1725 = vld [vmem:[#allocation2 + $0x8c] sm:$0x1]
      %v1726 = vsel %vm240, 0, %v1725
      %1727 = vst [vmem:[#allocation2 + $0x8c] sm:$0x1] %v1726
      %1728 = vst.msk [vmem:[#allocation2 + $0x90] sm:$0xf] %vm234, 0
      %1729 = vst.msk [vmem:[#allocation2 + $0x94] sm:$0xf] %vm234, 0
      %1730 = vst.msk [vmem:[#allocation2 + $0x98] sm:$0xf] %vm234, 0
      %v1731 = vld [vmem:[#allocation2 + $0x9c] sm:$0x1]
      %v1732 = vsel %vm240, 0, %v1731
      %1733 = vst [vmem:[#allocation2 + $0x9c] sm:$0x1] %v1732
      %1734 = vst.msk [vmem:[%s298 + $0x8] sm:$0xf] %vm234, %v1666
      %1735 = vst.msk [vmem:[%s298 + $0x18] sm:$0xf] %vm234, %v1667
      %1736 = vst.msk [vmem:[%s298 + $0x28] sm:$0xf] %vm234, %v1668
      %1737 = vst.msk [vmem:[%s298 + $0x38] sm:$0xf] %vm234, %v1669
      %1738 = vst.msk [vmem:[%s298 + $0x48] sm:$0xf] %vm234, %v1670
      %1739 = vst.msk [vmem:[%s298 + $0x58] sm:$0xf] %vm234, %v1671
      %1740 = vst.msk [vmem:[%s298 + $0x68] sm:$0xf] %vm234, %v1672
      %1741 = vst.msk [vmem:[%s298 + $0x78] sm:$0xf] %vm234, %v1673
      %v1742 = vld [vmem:[#allocation2 + $0x4] sm:$0x8]
      %v1743 = vld [vmem:[#allocation2 + $0x8] sm:$0xf]
      %v1744 = vld [vmem:[#allocation2 + $0x14] sm:$0x8]
      %v1745 = vld [vmem:[#allocation2 + $0x18] sm:$0xf]
      %v1746 = vld [vmem:[#allocation2 + $0x24] sm:$0x8]
      %v1747 = vld [vmem:[#allocation2 + $0x28] sm:$0xf]
      %v1748 = vld [vmem:[#allocation2 + $0x34] sm:$0x8]
      %v1749 = vld [vmem:[#allocation2 + $0x38] sm:$0xf]
      %v1750 = vld [vmem:[#allocation2 + $0x44] sm:$0x8]
      %v1751 = vld [vmem:[#allocation2 + $0x48] sm:$0xf]
      %v1752 = vld [vmem:[#allocation2 + $0x54] sm:$0x8]
      %v1753 = vld [vmem:[#allocation2 + $0x58] sm:$0xf]
      %v1754 = vld [vmem:[#allocation2 + $0x64] sm:$0x8]
      %v1755 = vld [vmem:[#allocation2 + $0x68] sm:$0xf]
      %v1756 = vld [vmem:[#allocation2 + $0x74] sm:$0x8]
      %v1757 = vld [vmem:[#allocation2 + $0x78] sm:$0xf]
      %v1759 = vshrl.u32 %v1742, 16
      %v1761 = vrot.slane %v1759, 7
      %v1762 = vrot.slane %v1761, 4
      %v1764 = vshrl.u32 %v1743, 16
      %v1766 = vrot.slane %v1764, 7
      %v1767 = vshll.u32 %v1743, 16
      %v1769 = vor.u32 %v1766, %v1767
      %v1770 = vsel %vm324, %v1762, %v1769
      %v1772 = vshrl.u32 %v1744, 16
      %v1774 = vrot.slane %v1772, 7
      %v1775 = vrot.slane %v1774, 4
      %v1777 = vshrl.u32 %v1745, 16
      %v1779 = vrot.slane %v1777, 7
      %v1780 = vshll.u32 %v1745, 16
      %v1782 = vor.u32 %v1779, %v1780
      %v1783 = vsel %vm324, %v1775, %v1782
      %v1785 = vshrl.u32 %v1746, 16
      %v1787 = vrot.slane %v1785, 7
      %v1788 = vrot.slane %v1787, 4
      %v1790 = vshrl.u32 %v1747, 16
      %v1792 = vrot.slane %v1790, 7
      %v1793 = vshll.u32 %v1747, 16
      %v1795 = vor.u32 %v1792, %v1793
      %v1796 = vsel %vm324, %v1788, %v1795
      %v1798 = vshrl.u32 %v1748, 16
      %v1800 = vrot.slane %v1798, 7
      %v1801 = vrot.slane %v1800, 4
      %v1803 = vshrl.u32 %v1749, 16
      %v1805 = vrot.slane %v1803, 7
      %v1806 = vshll.u32 %v1749, 16
      %v1808 = vor.u32 %v1805, %v1806
      %v1809 = vsel %vm324, %v1801, %v1808
      %v1811 = vshrl.u32 %v1750, 16
      %v1813 = vrot.slane %v1811, 7
      %v1814 = vrot.slane %v1813, 4
      %v1816 = vshrl.u32 %v1751, 16
      %v1818 = vrot.slane %v1816, 7
      %v1819 = vshll.u32 %v1751, 16
      %v1821 = vor.u32 %v1818, %v1819
      %v1822 = vsel %vm324, %v1814, %v1821
      %v1824 = vshrl.u32 %v1752, 16
      %v1826 = vrot.slane %v1824, 7
      %v1827 = vrot.slane %v1826, 4
      %v1829 = vshrl.u32 %v1753, 16
      %v1831 = vrot.slane %v1829, 7
      %v1832 = vshll.u32 %v1753, 16
      %v1834 = vor.u32 %v1831, %v1832
      %v1835 = vsel %vm324, %v1827, %v1834
      %v1837 = vshrl.u32 %v1754, 16
      %v1839 = vrot.slane %v1837, 7
      %v1840 = vrot.slane %v1839, 4
      %v1842 = vshrl.u32 %v1755, 16
      %v1844 = vrot.slane %v1842, 7
      %v1845 = vshll.u32 %v1755, 16
      %v1847 = vor.u32 %v1844, %v1845
      %v1848 = vsel %vm324, %v1840, %v1847
      %v1850 = vshrl.u32 %v1756, 16
      %v1852 = vrot.slane %v1850, 7
      %v1853 = vrot.slane %v1852, 4
      %v1855 = vshrl.u32 %v1757, 16
      %v1857 = vrot.slane %v1855, 7
      %v1858 = vshll.u32 %v1757, 16
      %v1860 = vor.u32 %v1857, %v1858
      %v1861 = vsel %vm324, %v1853, %v1860
      %v1862 = vunpack.c.l.b16 %v1770
      %v1863 = vunpack.c.l.b16 %v1783
      %v1864 = vunpack.c.l.b16 %v1796
      %v1865 = vunpack.c.l.b16 %v1809
      %v1866 = vunpack.c.l.b16 %v1822
      %v1867 = vunpack.c.l.b16 %v1835
      %v1868 = vunpack.c.l.b16 %v1848
      %v1869 = vunpack.c.l.b16 %v1861
      %v1870 = vpack.c.b16 %v1863, %v1862
      %v1871 = vpack.c.b16 %v1865, %v1864
      %v1872 = vpack.c.b16 %v1867, %v1866
      %v1873 = vpack.c.b16 %v1869, %v1868
      %1878 = vst.msk [vmem:[#allocation3] sm:$0xff] %vm445, %v1870
      %1879 = vst.msk [vmem:[#allocation3 + $0x18] sm:$0xff] %vm445, %v1871
      %1880 = vst.msk [vmem:[#allocation3 + $0x30] sm:$0xff] %vm445, %v1872
      %1881 = vst.msk [vmem:[#allocation3 + $0x48] sm:$0xff] %vm445, %v1873
      %v1882 = vld [vmem:[#allocation2 + $0x8] sm:$0xf]
      %v1883 = vld [vmem:[#allocation2 + $0x18] sm:$0xf]
      %v1884 = vld [vmem:[#allocation2 + $0x28] sm:$0xf]
      %v1885 = vld [vmem:[#allocation2 + $0x38] sm:$0xf]
      %v1886 = vld [vmem:[#allocation2 + $0x48] sm:$0xf]
      %v1887 = vld [vmem:[#allocation2 + $0x58] sm:$0xf]
      %v1888 = vld [vmem:[#allocation2 + $0x68] sm:$0xf]
      %v1889 = vld [vmem:[#allocation2 + $0x78] sm:$0xf]
      %v1898 = vunpack.c.l.b16 %v1882
      %v1899 = vunpack.c.l.b16 %v1883
      %v1900 = vunpack.c.l.b16 %v1884
      %v1901 = vunpack.c.l.b16 %v1885
      %v1902 = vunpack.c.l.b16 %v1886
      %v1903 = vunpack.c.l.b16 %v1887
      %v1904 = vunpack.c.l.b16 %v1888
      %v1905 = vunpack.c.l.b16 %v1889
      %v1906 = vpack.c.b16 %v1899, %v1898
      %v1907 = vpack.c.b16 %v1901, %v1900
      %v1908 = vpack.c.b16 %v1903, %v1902
      %v1909 = vpack.c.b16 %v1905, %v1904
      %1910 = vrot.lane.b32.xlu0 %v1906, 32
      %v1911 = vpop.permute.xlu0 %1910
      %1912 = vrot.lane.b32.xlu0 %v1907, 32
      %v1913 = vpop.permute.xlu0 %1912
      %1914 = vrot.lane.b32.xlu0 %v1908, 32
      %v1915 = vpop.permute.xlu0 %1914
      %1916 = vrot.lane.b32.xlu0 %v1909, 32
      %v1917 = vpop.permute.xlu0 %1916
      %1922 = vst.msk [vmem:[#allocation3] sm:$0xff] %vm490, %v1911
      %1923 = vst.msk [vmem:[#allocation3 + $0x18] sm:$0xff] %vm490, %v1913
      %1924 = vst.msk [vmem:[#allocation3 + $0x30] sm:$0xff] %vm490, %v1915
      %1925 = vst.msk [vmem:[#allocation3 + $0x48] sm:$0xff] %vm490, %v1917
      %v1926 = vld [vmem:[#allocation2 + $0x8] sm:$0xf]
      %v1927 = vld [vmem:[#allocation2 + $0xc] sm:$0x1]
      %v1928 = vld [vmem:[#allocation2 + $0x18] sm:$0xf]
      %v1929 = vld [vmem:[#allocation2 + $0x1c] sm:$0x1]
      %v1930 = vld [vmem:[#allocation2 + $0x28] sm:$0xf]
      %v1931 = vld [vmem:[#allocation2 + $0x2c] sm:$0x1]
      %v1932 = vld [vmem:[#allocation2 + $0x38] sm:$0xf]
      %v1933 = vld [vmem:[#allocation2 + $0x3c] sm:$0x1]
      %v1934 = vld [vmem:[#allocation2 + $0x48] sm:$0xf]
      %v1935 = vld [vmem:[#allocation2 + $0x4c] sm:$0x1]
      %v1936 = vld [vmem:[#allocation2 + $0x58] sm:$0xf]
      %v1937 = vld [vmem:[#allocation2 + $0x5c] sm:$0x1]
      %v1938 = vld [vmem:[#allocation2 + $0x68] sm:$0xf]
      %v1939 = vld [vmem:[#allocation2 + $0x6c] sm:$0x1]
      %v1940 = vld [vmem:[#allocation2 + $0x78] sm:$0xf]
      %v1941 = vld [vmem:[#allocation2 + $0x7c] sm:$0x1]
      %v1943 = vshrl.u32 %v1926, 16
      %v1945 = vrot.slane %v1943, 4
      %v1946 = vshll.u32 %v1926, 16
      %v1948 = vrot.slane %v1946, 5
      %v1949 = vor.u32 %v1945, %v1948
      %v1950 = vrot.slane %v1949, 4
      %v1952 = vshll.u32 %v1927, 16
      %v1954 = vrot.slane %v1952, 5
      %v1955 = vsel %vm513, %v1950, %v1954
      %v1957 = vshrl.u32 %v1928, 16
      %v1959 = vrot.slane %v1957, 4
      %v1960 = vshll.u32 %v1928, 16
      %v1962 = vrot.slane %v1960, 5
      %v1963 = vor.u32 %v1959, %v1962
      %v1964 = vrot.slane %v1963, 4
      %v1966 = vshll.u32 %v1929, 16
      %v1968 = vrot.slane %v1966, 5
      %v1969 = vsel %vm513, %v1964, %v1968
      %v1971 = vshrl.u32 %v1930, 16
      %v1973 = vrot.slane %v1971, 4
      %v1974 = vshll.u32 %v1930, 16
      %v1976 = vrot.slane %v1974, 5
      %v1977 = vor.u32 %v1973, %v1976
      %v1978 = vrot.slane %v1977, 4
      %v1980 = vshll.u32 %v1931, 16
      %v1982 = vrot.slane %v1980, 5
      %v1983 = vsel %vm513, %v1978, %v1982
      %v1985 = vshrl.u32 %v1932, 16
      %v1987 = vrot.slane %v1985, 4
      %v1988 = vshll.u32 %v1932, 16
      %v1990 = vrot.slane %v1988, 5
      %v1991 = vor.u32 %v1987, %v1990
      %v1992 = vrot.slane %v1991, 4
      %v1994 = vshll.u32 %v1933, 16
      %v1996 = vrot.slane %v1994, 5
      %v1997 = vsel %vm513, %v1992, %v1996
      %v1999 = vshrl.u32 %v1934, 16
      %v2001 = vrot.slane %v1999, 4
      %v2002 = vshll.u32 %v1934, 16
      %v2004 = vrot.slane %v2002, 5
      %v2005 = vor.u32 %v2001, %v2004
      %v2006 = vrot.slane %v2005, 4
      %v2008 = vshll.u32 %v1935, 16
      %v2010 = vrot.slane %v2008, 5
      %v2011 = vsel %vm513, %v2006, %v2010
      %v2013 = vshrl.u32 %v1936, 16
      %v2015 = vrot.slane %v2013, 4
      %v2016 = vshll.u32 %v1936, 16
      %v2018 = vrot.slane %v2016, 5
      %v2019 = vor.u32 %v2015, %v2018
      %v2020 = vrot.slane %v2019, 4
      %v2022 = vshll.u32 %v1937, 16
      %v2024 = vrot.slane %v2022, 5
      %v2025 = vsel %vm513, %v2020, %v2024
      %v2027 = vshrl.u32 %v1938, 16
      %v2029 = vrot.slane %v2027, 4
      %v2030 = vshll.u32 %v1938, 16
      %v2032 = vrot.slane %v2030, 5
      %v2033 = vor.u32 %v2029, %v2032
      %v2034 = vrot.slane %v2033, 4
      %v2036 = vshll.u32 %v1939, 16
      %v2038 = vrot.slane %v2036, 5
      %v2039 = vsel %vm513, %v2034, %v2038
      %v2041 = vshrl.u32 %v1940, 16
      %v2043 = vrot.slane %v2041, 4
      %v2044 = vshll.u32 %v1940, 16
      %v2046 = vrot.slane %v2044, 5
      %v2047 = vor.u32 %v2043, %v2046
      %v2048 = vrot.slane %v2047, 4
      %v2050 = vshll.u32 %v1941, 16
      %v2052 = vrot.slane %v2050, 5
      %v2053 = vsel %vm513, %v2048, %v2052
      %v2054 = vunpack.c.l.b16 %v1955
      %v2055 = vunpack.c.l.b16 %v1969
      %v2056 = vunpack.c.l.b16 %v1983
      %v2057 = vunpack.c.l.b16 %v1997
      %v2058 = vunpack.c.l.b16 %v2011
      %v2059 = vunpack.c.l.b16 %v2025
      %v2060 = vunpack.c.l.b16 %v2039
      %v2061 = vunpack.c.l.b16 %v2053
      %v2062 = vpack.c.b16 %v2055, %v2054
      %v2063 = vpack.c.b16 %v2057, %v2056
      %v2064 = vpack.c.b16 %v2059, %v2058
      %v2065 = vpack.c.b16 %v2061, %v2060
      %2066 = vrot.lane.b32.xlu0 %v2062, 64
      %v2067 = vpop.permute.xlu0 %2066
      %2068 = vrot.lane.b32.xlu0 %v2063, 64
      %v2069 = vpop.permute.xlu0 %2068
      %2070 = vrot.lane.b32.xlu0 %v2064, 64
      %v2071 = vpop.permute.xlu0 %2070
      %2072 = vrot.lane.b32.xlu0 %v2065, 64
      %v2073 = vpop.permute.xlu0 %2072
      %2078 = vst.msk [vmem:[#allocation3] sm:$0xff] %vm650, %v2067
      %2079 = vst.msk [vmem:[#allocation3 + $0x18] sm:$0xff] %vm650, %v2069
      %2080 = vst.msk [vmem:[#allocation3 + $0x30] sm:$0xff] %vm650, %v2071
      %2081 = vst.msk [vmem:[#allocation3 + $0x48] sm:$0xff] %vm650, %v2073
      %v2082 = vld [vmem:[%s298 + $0x4] sm:$0x8]
      %v2083 = vld [vmem:[%s298 + $0x8] sm:$0xf]
      %v2084 = vld [vmem:[%s298 + $0x14] sm:$0x8]
      %v2085 = vld [vmem:[%s298 + $0x18] sm:$0xf]
      %v2086 = vld [vmem:[%s298 + $0x24] sm:$0x8]
      %v2087 = vld [vmem:[%s298 + $0x28] sm:$0xf]
      %v2088 = vld [vmem:[%s298 + $0x34] sm:$0x8]
      %v2089 = vld [vmem:[%s298 + $0x38] sm:$0xf]
      %v2090 = vld [vmem:[%s298 + $0x44] sm:$0x8]
      %v2091 = vld [vmem:[%s298 + $0x48] sm:$0xf]
      %v2092 = vld [vmem:[%s298 + $0x54] sm:$0x8]
      %v2093 = vld [vmem:[%s298 + $0x58] sm:$0xf]
      %v2094 = vld [vmem:[%s298 + $0x64] sm:$0x8]
      %v2095 = vld [vmem:[%s298 + $0x68] sm:$0xf]
      %v2096 = vld [vmem:[%s298 + $0x74] sm:$0x8]
      %v2097 = vld [vmem:[%s298 + $0x78] sm:$0xf]
      %v2099 = vshrl.u32 %v2082, 16
      %v2101 = vrot.slane %v2099, 7
      %v2102 = vrot.slane %v2101, 4
      %v2104 = vshrl.u32 %v2083, 16
      %v2106 = vrot.slane %v2104, 7
      %v2107 = vshll.u32 %v2083, 16
      %v2109 = vor.u32 %v2106, %v2107
      %v2110 = vsel %vm324, %v2102, %v2109
      %v2112 = vshrl.u32 %v2084, 16
      %v2114 = vrot.slane %v2112, 7
      %v2115 = vrot.slane %v2114, 4
      %v2117 = vshrl.u32 %v2085, 16
      %v2119 = vrot.slane %v2117, 7
      %v2120 = vshll.u32 %v2085, 16
      %v2122 = vor.u32 %v2119, %v2120
      %v2123 = vsel %vm324, %v2115, %v2122
      %v2125 = vshrl.u32 %v2086, 16
      %v2127 = vrot.slane %v2125, 7
      %v2128 = vrot.slane %v2127, 4
      %v2130 = vshrl.u32 %v2087, 16
      %v2132 = vrot.slane %v2130, 7
      %v2133 = vshll.u32 %v2087, 16
      %v2135 = vor.u32 %v2132, %v2133
      %v2136 = vsel %vm324, %v2128, %v2135
      %v2138 = vshrl.u32 %v2088, 16
      %v2140 = vrot.slane %v2138, 7
      %v2141 = vrot.slane %v2140, 4
      %v2143 = vshrl.u32 %v2089, 16
      %v2145 = vrot.slane %v2143, 7
      %v2146 = vshll.u32 %v2089, 16
      %v2148 = vor.u32 %v2145, %v2146
      %v2149 = vsel %vm324, %v2141, %v2148
      %v2151 = vshrl.u32 %v2090, 16
      %v2153 = vrot.slane %v2151, 7
      %v2154 = vrot.slane %v2153, 4
      %v2156 = vshrl.u32 %v2091, 16
      %v2158 = vrot.slane %v2156, 7
      %v2159 = vshll.u32 %v2091, 16
      %v2161 = vor.u32 %v2158, %v2159
      %v2162 = vsel %vm324, %v2154, %v2161
      %v2164 = vshrl.u32 %v2092, 16
      %v2166 = vrot.slane %v2164, 7
      %v2167 = vrot.slane %v2166, 4
      %v2169 = vshrl.u32 %v2093, 16
      %v2171 = vrot.slane %v2169, 7
      %v2172 = vshll.u32 %v2093, 16
      %v2174 = vor.u32 %v2171, %v2172
      %v2175 = vsel %vm324, %v2167, %v2174
      %v2177 = vshrl.u32 %v2094, 16
      %v2179 = vrot.slane %v2177, 7
      %v2180 = vrot.slane %v2179, 4
      %v2182 = vshrl.u32 %v2095, 16
      %v2184 = vrot.slane %v2182, 7
      %v2185 = vshll.u32 %v2095, 16
      %v2187 = vor.u32 %v2184, %v2185
      %v2188 = vsel %vm324, %v2180, %v2187
      %v2190 = vshrl.u32 %v2096, 16
      %v2192 = vrot.slane %v2190, 7
      %v2193 = vrot.slane %v2192, 4
      %v2195 = vshrl.u32 %v2097, 16
      %v2197 = vrot.slane %v2195, 7
      %v2198 = vshll.u32 %v2097, 16
      %v2200 = vor.u32 %v2197, %v2198
      %v2201 = vsel %vm324, %v2193, %v2200
      %v2202 = vunpack.c.l.b16 %v2110
      %v2203 = vunpack.c.l.b16 %v2123
      %v2204 = vunpack.c.l.b16 %v2136
      %v2205 = vunpack.c.l.b16 %v2149
      %v2206 = vunpack.c.l.b16 %v2162
      %v2207 = vunpack.c.l.b16 %v2175
      %v2208 = vunpack.c.l.b16 %v2188
      %v2209 = vunpack.c.l.b16 %v2201
      %v2210 = vpack.c.b16 %v2203, %v2202
      %v2211 = vpack.c.b16 %v2205, %v2204
      %v2212 = vpack.c.b16 %v2207, %v2206
      %v2213 = vpack.c.b16 %v2209, %v2208
      %2214 = vrot.lane.b32.xlu0 %v2210, 96
      %v2215 = vpop.permute.xlu0 %2214
      %2216 = vrot.lane.b32.xlu0 %v2211, 96
      %v2217 = vpop.permute.xlu0 %2216
      %2218 = vrot.lane.b32.xlu0 %v2212, 96
      %v2219 = vpop.permute.xlu0 %2218
      %2220 = vrot.lane.b32.xlu0 %v2213, 96
      %v2221 = vpop.permute.xlu0 %2220
      %2226 = vst.msk [vmem:[#allocation3] sm:$0xff] %vm799, %v2215
      %2227 = vst.msk [vmem:[#allocation3 + $0x18] sm:$0xff] %vm799, %v2217
      %2228 = vst.msk [vmem:[#allocation3 + $0x30] sm:$0xff] %vm799, %v2219
      %2229 = vst.msk [vmem:[#allocation3 + $0x48] sm:$0xff] %vm799, %v2221
      %v2230 = vld [vmem:[%s298 + $0x8] sm:$0xf]
      %v2231 = vld [vmem:[%s298 + $0x18] sm:$0xf]
      %v2232 = vld [vmem:[%s298 + $0x28] sm:$0xf]
      %v2233 = vld [vmem:[%s298 + $0x38] sm:$0xf]
      %v2234 = vld [vmem:[%s298 + $0x48] sm:$0xf]
      %v2235 = vld [vmem:[%s298 + $0x58] sm:$0xf]
      %v2236 = vld [vmem:[%s298 + $0x68] sm:$0xf]
      %v2237 = vld [vmem:[%s298 + $0x78] sm:$0xf]
      %v2246 = vunpack.c.l.b16 %v2230
      %v2247 = vunpack.c.l.b16 %v2231
      %v2248 = vunpack.c.l.b16 %v2232
      %v2249 = vunpack.c.l.b16 %v2233
      %v2250 = vunpack.c.l.b16 %v2234
      %v2251 = vunpack.c.l.b16 %v2235
      %v2252 = vunpack.c.l.b16 %v2236
      %v2253 = vunpack.c.l.b16 %v2237
      %v2254 = vpack.c.b16 %v2247, %v2246
      %v2255 = vpack.c.b16 %v2249, %v2248
      %v2256 = vpack.c.b16 %v2251, %v2250
      %v2257 = vpack.c.b16 %v2253, %v2252
      %2262 = vst.msk [vmem:[#allocation3 + $0x8] sm:$0xff] %vm445, %v2254
      %2263 = vst.msk [vmem:[#allocation3 + $0x20] sm:$0xff] %vm445, %v2255
      %2264 = vst.msk [vmem:[#allocation3 + $0x38] sm:$0xff] %vm445, %v2256
      %2265 = vst.msk [vmem:[#allocation3 + $0x50] sm:$0xff] %vm445, %v2257
      %v2266 = vld [vmem:[%s298 + $0x8] sm:$0xf]
      %v2267 = vld [vmem:[%s298 + $0xc] sm:$0x1]
      %v2268 = vld [vmem:[%s298 + $0x18] sm:$0xf]
      %v2269 = vld [vmem:[%s298 + $0x1c] sm:$0x1]
      %v2270 = vld [vmem:[%s298 + $0x28] sm:$0xf]
      %v2271 = vld [vmem:[%s298 + $0x2c] sm:$0x1]
      %v2272 = vld [vmem:[%s298 + $0x38] sm:$0xf]
      %v2273 = vld [vmem:[%s298 + $0x3c] sm:$0x1]
      %v2274 = vld [vmem:[%s298 + $0x48] sm:$0xf]
      %v2275 = vld [vmem:[%s298 + $0x4c] sm:$0x1]
      %v2276 = vld [vmem:[%s298 + $0x58] sm:$0xf]
      %v2277 = vld [vmem:[%s298 + $0x5c] sm:$0x1]
      %v2278 = vld [vmem:[%s298 + $0x68] sm:$0xf]
      %v2279 = vld [vmem:[%s298 + $0x6c] sm:$0x1]
      %v2280 = vld [vmem:[%s298 + $0x78] sm:$0xf]
      %v2281 = vld [vmem:[%s298 + $0x7c] sm:$0x1]
      %v2283 = vshrl.u32 %v2266, 16
      %v2285 = vrot.slane %v2283, 4
      %v2286 = vshll.u32 %v2266, 16
      %v2288 = vrot.slane %v2286, 5
      %v2289 = vor.u32 %v2285, %v2288
      %v2290 = vrot.slane %v2289, 4
      %v2292 = vshll.u32 %v2267, 16
      %v2294 = vrot.slane %v2292, 5
      %v2295 = vsel %vm513, %v2290, %v2294
      %v2297 = vshrl.u32 %v2268, 16
      %v2299 = vrot.slane %v2297, 4
      %v2300 = vshll.u32 %v2268, 16
      %v2302 = vrot.slane %v2300, 5
      %v2303 = vor.u32 %v2299, %v2302
      %v2304 = vrot.slane %v2303, 4
      %v2306 = vshll.u32 %v2269, 16
      %v2308 = vrot.slane %v2306, 5
      %v2309 = vsel %vm513, %v2304, %v2308
      %v2311 = vshrl.u32 %v2270, 16
      %v2313 = vrot.slane %v2311, 4
      %v2314 = vshll.u32 %v2270, 16
      %v2316 = vrot.slane %v2314, 5
      %v2317 = vor.u32 %v2313, %v2316
      %v2318 = vrot.slane %v2317, 4
      %v2320 = vshll.u32 %v2271, 16
      %v2322 = vrot.slane %v2320, 5
      %v2323 = vsel %vm513, %v2318, %v2322
      %v2325 = vshrl.u32 %v2272, 16
      %v2327 = vrot.slane %v2325, 4
      %v2328 = vshll.u32 %v2272, 16
      %v2330 = vrot.slane %v2328, 5
      %v2331 = vor.u32 %v2327, %v2330
      %v2332 = vrot.slane %v2331, 4
      %v2334 = vshll.u32 %v2273, 16
      %v2336 = vrot.slane %v2334, 5
      %v2337 = vsel %vm513, %v2332, %v2336
      %v2339 = vshrl.u32 %v2274, 16
      %v2341 = vrot.slane %v2339, 4
      %v2342 = vshll.u32 %v2274, 16
      %v2344 = vrot.slane %v2342, 5
      %v2345 = vor.u32 %v2341, %v2344
      %v2346 = vrot.slane %v2345, 4
      %v2348 = vshll.u32 %v2275, 16
      %v2350 = vrot.slane %v2348, 5
      %v2351 = vsel %vm513, %v2346, %v2350
      %v2353 = vshrl.u32 %v2276, 16
      %v2355 = vrot.slane %v2353, 4
      %v2356 = vshll.u32 %v2276, 16
      %v2358 = vrot.slane %v2356, 5
      %v2359 = vor.u32 %v2355, %v2358
      %v2360 = vrot.slane %v2359, 4
      %v2362 = vshll.u32 %v2277, 16
      %v2364 = vrot.slane %v2362, 5
      %v2365 = vsel %vm513, %v2360, %v2364
      %v2367 = vshrl.u32 %v2278, 16
      %v2369 = vrot.slane %v2367, 4
      %v2370 = vshll.u32 %v2278, 16
      %v2372 = vrot.slane %v2370, 5
      %v2373 = vor.u32 %v2369, %v2372
      %v2374 = vrot.slane %v2373, 4
      %v2376 = vshll.u32 %v2279, 16
      %v2378 = vrot.slane %v2376, 5
      %v2379 = vsel %vm513, %v2374, %v2378
      %v2381 = vshrl.u32 %v2280, 16
      %v2383 = vrot.slane %v2381, 4
      %v2384 = vshll.u32 %v2280, 16
      %v2386 = vrot.slane %v2384, 5
      %v2387 = vor.u32 %v2383, %v2386
      %v2388 = vrot.slane %v2387, 4
      %v2390 = vshll.u32 %v2281, 16
      %v2392 = vrot.slane %v2390, 5
      %v2393 = vsel %vm513, %v2388, %v2392
      %v2394 = vunpack.c.l.b16 %v2295
      %v2395 = vunpack.c.l.b16 %v2309
      %v2396 = vunpack.c.l.b16 %v2323
      %v2397 = vunpack.c.l.b16 %v2337
      %v2398 = vunpack.c.l.b16 %v2351
      %v2399 = vunpack.c.l.b16 %v2365
      %v2400 = vunpack.c.l.b16 %v2379
      %v2401 = vunpack.c.l.b16 %v2393
      %v2402 = vpack.c.b16 %v2395, %v2394
      %v2403 = vpack.c.b16 %v2397, %v2396
      %v2404 = vpack.c.b16 %v2399, %v2398
      %v2405 = vpack.c.b16 %v2401, %v2400
      %2406 = vrot.lane.b32.xlu0 %v2402, 32
      %v2407 = vpop.permute.xlu0 %2406
      %2408 = vrot.lane.b32.xlu0 %v2403, 32
      %v2409 = vpop.permute.xlu0 %2408
      %2410 = vrot.lane.b32.xlu0 %v2404, 32
      %v2411 = vpop.permute.xlu0 %2410
      %2412 = vrot.lane.b32.xlu0 %v2405, 32
      %v2413 = vpop.permute.xlu0 %2412
      %2418 = vst.msk [vmem:[#allocation3 + $0x8] sm:$0xff] %vm490, %v2407
      %2419 = vst.msk [vmem:[#allocation3 + $0x20] sm:$0xff] %vm490, %v2409
      %2420 = vst.msk [vmem:[#allocation3 + $0x38] sm:$0xff] %vm490, %v2411
      %2421 = vst.msk [vmem:[#allocation3 + $0x50] sm:$0xff] %vm490, %v2413
      %v2422 = vld [vmem:[%s996 + $0x4] sm:$0x8]
      %v2423 = vld [vmem:[%s996 + $0x8] sm:$0xf]
      %v2424 = vld [vmem:[%s996 + $0x14] sm:$0x8]
      %v2425 = vld [vmem:[%s996 + $0x18] sm:$0xf]
      %v2426 = vld [vmem:[%s996 + $0x24] sm:$0x8]
      %v2427 = vld [vmem:[%s996 + $0x28] sm:$0xf]
      %v2428 = vld [vmem:[%s996 + $0x34] sm:$0x8]
      %v2429 = vld [vmem:[%s996 + $0x38] sm:$0xf]
      %v2430 = vld [vmem:[%s996 + $0x44] sm:$0x8]
      %v2431 = vld [vmem:[%s996 + $0x48] sm:$0xf]
      %v2432 = vld [vmem:[%s996 + $0x54] sm:$0x8]
      %v2433 = vld [vmem:[%s996 + $0x58] sm:$0xf]
      %v2434 = vld [vmem:[%s996 + $0x64] sm:$0x8]
      %v2435 = vld [vmem:[%s996 + $0x68] sm:$0xf]
      %v2436 = vld [vmem:[%s996 + $0x74] sm:$0x8]
      %v2437 = vld [vmem:[%s996 + $0x78] sm:$0xf]
      %v2439 = vshrl.u32 %v2422, 16
      %v2441 = vrot.slane %v2439, 7
      %v2442 = vrot.slane %v2441, 4
      %v2444 = vshrl.u32 %v2423, 16
      %v2446 = vrot.slane %v2444, 7
      %v2447 = vshll.u32 %v2423, 16
      %v2449 = vor.u32 %v2446, %v2447
      %v2450 = vsel %vm324, %v2442, %v2449
      %v2452 = vshrl.u32 %v2424, 16
      %v2454 = vrot.slane %v2452, 7
      %v2455 = vrot.slane %v2454, 4
      %v2457 = vshrl.u32 %v2425, 16
      %v2459 = vrot.slane %v2457, 7
      %v2460 = vshll.u32 %v2425, 16
      %v2462 = vor.u32 %v2459, %v2460
      %v2463 = vsel %vm324, %v2455, %v2462
      %v2465 = vshrl.u32 %v2426, 16
      %v2467 = vrot.slane %v2465, 7
      %v2468 = vrot.slane %v2467, 4
      %v2470 = vshrl.u32 %v2427, 16
      %v2472 = vrot.slane %v2470, 7
      %v2473 = vshll.u32 %v2427, 16
      %v2475 = vor.u32 %v2472, %v2473
      %v2476 = vsel %vm324, %v2468, %v2475
      %v2478 = vshrl.u32 %v2428, 16
      %v2480 = vrot.slane %v2478, 7
      %v2481 = vrot.slane %v2480, 4
      %v2483 = vshrl.u32 %v2429, 16
      %v2485 = vrot.slane %v2483, 7
      %v2486 = vshll.u32 %v2429, 16
      %v2488 = vor.u32 %v2485, %v2486
      %v2489 = vsel %vm324, %v2481, %v2488
      %v2491 = vshrl.u32 %v2430, 16
      %v2493 = vrot.slane %v2491, 7
      %v2494 = vrot.slane %v2493, 4
      %v2496 = vshrl.u32 %v2431, 16
      %v2498 = vrot.slane %v2496, 7
      %v2499 = vshll.u32 %v2431, 16
      %v2501 = vor.u32 %v2498, %v2499
      %v2502 = vsel %vm324, %v2494, %v2501
      %v2504 = vshrl.u32 %v2432, 16
      %v2506 = vrot.slane %v2504, 7
      %v2507 = vrot.slane %v2506, 4
      %v2509 = vshrl.u32 %v2433, 16
      %v2511 = vrot.slane %v2509, 7
      %v2512 = vshll.u32 %v2433, 16
      %v2514 = vor.u32 %v2511, %v2512
      %v2515 = vsel %vm324, %v2507, %v2514
      %v2517 = vshrl.u32 %v2434, 16
      %v2519 = vrot.slane %v2517, 7
      %v2520 = vrot.slane %v2519, 4
      %v2522 = vshrl.u32 %v2435, 16
      %v2524 = vrot.slane %v2522, 7
      %v2525 = vshll.u32 %v2435, 16
      %v2527 = vor.u32 %v2524, %v2525
      %v2528 = vsel %vm324, %v2520, %v2527
      %v2530 = vshrl.u32 %v2436, 16
      %v2532 = vrot.slane %v2530, 7
      %v2533 = vrot.slane %v2532, 4
      %v2535 = vshrl.u32 %v2437, 16
      %v2537 = vrot.slane %v2535, 7
      %v2538 = vshll.u32 %v2437, 16
      %v2540 = vor.u32 %v2537, %v2538
      %v2541 = vsel %vm324, %v2533, %v2540
      %v2542 = vunpack.c.l.b16 %v2450
      %v2543 = vunpack.c.l.b16 %v2463
      %v2544 = vunpack.c.l.b16 %v2476
      %v2545 = vunpack.c.l.b16 %v2489
      %v2546 = vunpack.c.l.b16 %v2502
      %v2547 = vunpack.c.l.b16 %v2515
      %v2548 = vunpack.c.l.b16 %v2528
      %v2549 = vunpack.c.l.b16 %v2541
      %v2550 = vpack.c.b16 %v2543, %v2542
      %v2551 = vpack.c.b16 %v2545, %v2544
      %v2552 = vpack.c.b16 %v2547, %v2546
      %v2553 = vpack.c.b16 %v2549, %v2548
      %2554 = vrot.lane.b32.xlu0 %v2550, 64
      %v2555 = vpop.permute.xlu0 %2554
      %2556 = vrot.lane.b32.xlu0 %v2551, 64
      %v2557 = vpop.permute.xlu0 %2556
      %2558 = vrot.lane.b32.xlu0 %v2552, 64
      %v2559 = vpop.permute.xlu0 %2558
      %2560 = vrot.lane.b32.xlu0 %v2553, 64
      %v2561 = vpop.permute.xlu0 %2560
      %2566 = vst.msk [vmem:[#allocation3 + $0x8] sm:$0xff] %vm650, %v2555
      %2567 = vst.msk [vmem:[#allocation3 + $0x20] sm:$0xff] %vm650, %v2557
      %2568 = vst.msk [vmem:[#allocation3 + $0x38] sm:$0xff] %vm650, %v2559
      %2569 = vst.msk [vmem:[#allocation3 + $0x50] sm:$0xff] %vm650, %v2561
      %v2570 = vld [vmem:[%s996 + $0x8] sm:$0xf]
      %v2571 = vld [vmem:[%s996 + $0x18] sm:$0xf]
      %v2572 = vld [vmem:[%s996 + $0x28] sm:$0xf]
      %v2573 = vld [vmem:[%s996 + $0x38] sm:$0xf]
      %v2574 = vld [vmem:[%s996 + $0x48] sm:$0xf]
      %v2575 = vld [vmem:[%s996 + $0x58] sm:$0xf]
      %v2576 = vld [vmem:[%s996 + $0x68] sm:$0xf]
      %v2577 = vld [vmem:[%s996 + $0x78] sm:$0xf]
      %v2586 = vunpack.c.l.b16 %v2570
      %v2587 = vunpack.c.l.b16 %v2571
      %v2588 = vunpack.c.l.b16 %v2572
      %v2589 = vunpack.c.l.b16 %v2573
      %v2590 = vunpack.c.l.b16 %v2574
      %v2591 = vunpack.c.l.b16 %v2575
      %v2592 = vunpack.c.l.b16 %v2576
      %v2593 = vunpack.c.l.b16 %v2577
      %v2594 = vpack.c.b16 %v2587, %v2586
      %v2595 = vpack.c.b16 %v2589, %v2588
      %v2596 = vpack.c.b16 %v2591, %v2590
      %v2597 = vpack.c.b16 %v2593, %v2592
      %2598 = vrot.lane.b32.xlu0 %v2594, 96
      %v2599 = vpop.permute.xlu0 %2598
      %2600 = vrot.lane.b32.xlu0 %v2595, 96
      %v2601 = vpop.permute.xlu0 %2600
      %2602 = vrot.lane.b32.xlu0 %v2596, 96
      %v2603 = vpop.permute.xlu0 %2602
      %2604 = vrot.lane.b32.xlu0 %v2597, 96
      %v2605 = vpop.permute.xlu0 %2604
      %2610 = vst.msk [vmem:[#allocation3 + $0x8] sm:$0xff] %vm799, %v2599
      %2611 = vst.msk [vmem:[#allocation3 + $0x20] sm:$0xff] %vm799, %v2601
      %2612 = vst.msk [vmem:[#allocation3 + $0x38] sm:$0xff] %vm799, %v2603
      %2613 = vst.msk [vmem:[#allocation3 + $0x50] sm:$0xff] %vm799, %v2605
      %v2614 = vld [vmem:[%s996 + $0x8] sm:$0xf]
      %v2615 = vld [vmem:[%s996 + $0xc] sm:$0x1]
      %v2616 = vld [vmem:[%s996 + $0x18] sm:$0xf]
      %v2617 = vld [vmem:[%s996 + $0x1c] sm:$0x1]
      %v2618 = vld [vmem:[%s996 + $0x28] sm:$0xf]
      %v2619 = vld [vmem:[%s996 + $0x2c] sm:$0x1]
      %v2620 = vld [vmem:[%s996 + $0x38] sm:$0xf]
      %v2621 = vld [vmem:[%s996 + $0x3c] sm:$0x1]
      %v2622 = vld [vmem:[%s996 + $0x48] sm:$0xf]
      %v2623 = vld [vmem:[%s996 + $0x4c] sm:$0x1]
      %v2624 = vld [vmem:[%s996 + $0x58] sm:$0xf]
      %v2625 = vld [vmem:[%s996 + $0x5c] sm:$0x1]
      %v2626 = vld [vmem:[%s996 + $0x68] sm:$0xf]
      %v2627 = vld [vmem:[%s996 + $0x6c] sm:$0x1]
      %v2628 = vld [vmem:[%s996 + $0x78] sm:$0xf]
      %v2629 = vld [vmem:[%s996 + $0x7c] sm:$0x1]
      %v2631 = vshrl.u32 %v2614, 16
      %v2633 = vrot.slane %v2631, 4
      %v2634 = vshll.u32 %v2614, 16
      %v2636 = vrot.slane %v2634, 5
      %v2637 = vor.u32 %v2633, %v2636
      %v2638 = vrot.slane %v2637, 4
      %v2640 = vshll.u32 %v2615, 16
      %v2642 = vrot.slane %v2640, 5
      %v2643 = vsel %vm513, %v2638, %v2642
      %v2645 = vshrl.u32 %v2616, 16
      %v2647 = vrot.slane %v2645, 4
      %v2648 = vshll.u32 %v2616, 16
      %v2650 = vrot.slane %v2648, 5
      %v2651 = vor.u32 %v2647, %v2650
      %v2652 = vrot.slane %v2651, 4
      %v2654 = vshll.u32 %v2617, 16
      %v2656 = vrot.slane %v2654, 5
      %v2657 = vsel %vm513, %v2652, %v2656
      %v2659 = vshrl.u32 %v2618, 16
      %v2661 = vrot.slane %v2659, 4
      %v2662 = vshll.u32 %v2618, 16
      %v2664 = vrot.slane %v2662, 5
      %v2665 = vor.u32 %v2661, %v2664
      %v2666 = vrot.slane %v2665, 4
      %v2668 = vshll.u32 %v2619, 16
      %v2670 = vrot.slane %v2668, 5
      %v2671 = vsel %vm513, %v2666, %v2670
      %v2673 = vshrl.u32 %v2620, 16
      %v2675 = vrot.slane %v2673, 4
      %v2676 = vshll.u32 %v2620, 16
      %v2678 = vrot.slane %v2676, 5
      %v2679 = vor.u32 %v2675, %v2678
      %v2680 = vrot.slane %v2679, 4
      %v2682 = vshll.u32 %v2621, 16
      %v2684 = vrot.slane %v2682, 5
      %v2685 = vsel %vm513, %v2680, %v2684
      %v2687 = vshrl.u32 %v2622, 16
      %v2689 = vrot.slane %v2687, 4
      %v2690 = vshll.u32 %v2622, 16
      %v2692 = vrot.slane %v2690, 5
      %v2693 = vor.u32 %v2689, %v2692
      %v2694 = vrot.slane %v2693, 4
      %v2696 = vshll.u32 %v2623, 16
      %v2698 = vrot.slane %v2696, 5
      %v2699 = vsel %vm513, %v2694, %v2698
      %v2701 = vshrl.u32 %v2624, 16
      %v2703 = vrot.slane %v2701, 4
      %v2704 = vshll.u32 %v2624, 16
      %v2706 = vrot.slane %v2704, 5
      %v2707 = vor.u32 %v2703, %v2706
      %v2708 = vrot.slane %v2707, 4
      %v2710 = vshll.u32 %v2625, 16
      %v2712 = vrot.slane %v2710, 5
      %v2713 = vsel %vm513, %v2708, %v2712
      %v2715 = vshrl.u32 %v2626, 16
      %v2717 = vrot.slane %v2715, 4
      %v2718 = vshll.u32 %v2626, 16
      %v2720 = vrot.slane %v2718, 5
      %v2721 = vor.u32 %v2717, %v2720
      %v2722 = vrot.slane %v2721, 4
      %v2724 = vshll.u32 %v2627, 16
      %v2726 = vrot.slane %v2724, 5
      %v2727 = vsel %vm513, %v2722, %v2726
      %v2729 = vshrl.u32 %v2628, 16
      %v2731 = vrot.slane %v2729, 4
      %v2732 = vshll.u32 %v2628, 16
      %v2734 = vrot.slane %v2732, 5
      %v2735 = vor.u32 %v2731, %v2734
      %v2736 = vrot.slane %v2735, 4
      %v2738 = vshll.u32 %v2629, 16
      %v2740 = vrot.slane %v2738, 5
      %v2741 = vsel %vm513, %v2736, %v2740
      %v2742 = vunpack.c.l.b16 %v2643
      %v2743 = vunpack.c.l.b16 %v2657
      %v2744 = vunpack.c.l.b16 %v2671
      %v2745 = vunpack.c.l.b16 %v2685
      %v2746 = vunpack.c.l.b16 %v2699
      %v2747 = vunpack.c.l.b16 %v2713
      %v2748 = vunpack.c.l.b16 %v2727
      %v2749 = vunpack.c.l.b16 %v2741
      %v2750 = vpack.c.b16 %v2743, %v2742
      %v2751 = vpack.c.b16 %v2745, %v2744
      %v2752 = vpack.c.b16 %v2747, %v2746
      %v2753 = vpack.c.b16 %v2749, %v2748
      %2758 = vst.msk [vmem:[#allocation3 + $0x10] sm:$0xff] %vm445, %v2750
      %2759 = vst.msk [vmem:[#allocation3 + $0x28] sm:$0xff] %vm445, %v2751
      %2760 = vst.msk [vmem:[#allocation3 + $0x40] sm:$0xff] %vm445, %v2752
      %2761 = vst.msk [vmem:[#allocation3 + $0x58] sm:$0xff] %vm445, %v2753
      %v2762 = vld [vmem:[#allocation3] sm:$0xff]
      %v2763 = vld [vmem:[#allocation3 + $0x8] sm:$0xff]
      %v2764 = vld [vmem:[#allocation3 + $0x10] sm:$0xff]
      %v2765 = vld [vmem:[#allocation3 + $0x18] sm:$0xff]
      %v2766 = vld [vmem:[#allocation3 + $0x20] sm:$0xff]
      %v2767 = vld [vmem:[#allocation3 + $0x28] sm:$0xff]
      %v2768 = vld [vmem:[#allocation3 + $0x30] sm:$0xff]
      %v2769 = vld [vmem:[#allocation3 + $0x38] sm:$0xff]
      %v2770 = vld [vmem:[#allocation3 + $0x40] sm:$0xff]
      %v2771 = vld [vmem:[#allocation3 + $0x48] sm:$0xff]
      %v2772 = vld [vmem:[#allocation3 + $0x50] sm:$0xff]
      %v2773 = vld [vmem:[#allocation3 + $0x58] sm:$0xff]
      %v2774 = vld [vmem:[%s3] sm:$0xf]
      %v2775 = vld [vmem:[%s3 + $0x4] sm:$0xf]
      %v2776 = vld [vmem:[%s3 + $0x8] sm:$0xf]
      %v2777 = vld [vmem:[%s3 + $0xc] sm:$0xf]
      %v2778 = vld [vmem:[%s3 + $0x10] sm:$0xf]
      %v2779 = vld [vmem:[%s3 + $0x14] sm:$0xf]
      %v2780 = vld [vmem:[%s3 + $0x18] sm:$0xf]
      %v2781 = vld [vmem:[%s3 + $0x1c] sm:$0xf]
      %v2782 = vld [vmem:[%s3 + $0x20] sm:$0xf]
      %v2783 = vld [vmem:[%s3 + $0x24] sm:$0xf]
      %v2784 = vld [vmem:[%s3 + $0x28] sm:$0xf]
      %v2785 = vld [vmem:[%s3 + $0x2c] sm:$0xf]
      %v2786 = vld [vmem:[%s3 + $0x30] sm:$0xf]
      %v2787 = vld [vmem:[%s3 + $0x34] sm:$0xf]
      %v2788 = vld [vmem:[%s3 + $0x38] sm:$0xf]
      %v2789 = vld [vmem:[%s3 + $0x3c] sm:$0xf]
      %v2790 = vld [vmem:[%s3 + $0x40] sm:$0xf]
      %v2791 = vld [vmem:[%s3 + $0x44] sm:$0xf]
      %v2792 = vld [vmem:[%s3 + $0x48] sm:$0xf]
      %v2793 = vld [vmem:[%s3 + $0x4c] sm:$0xf]
      %v2794 = vld [vmem:[%s3 + $0x50] sm:$0xf]
      %v2795 = vld [vmem:[%s3 + $0x54] sm:$0xf]
      %v2796 = vld [vmem:[%s3 + $0x58] sm:$0xf]
      %v2797 = vld [vmem:[%s3 + $0x5c] sm:$0xf]
      %v2798 = vld [vmem:[%s3 + $0x60] sm:$0xf]
      %v2799 = vld [vmem:[%s3 + $0x64] sm:$0xf]
      %v2800 = vld [vmem:[%s3 + $0x68] sm:$0xf]
      %v2801 = vld [vmem:[%s3 + $0x6c] sm:$0xf]
      %v2802 = vld [vmem:[%s3 + $0x70] sm:$0xf]
      %v2803 = vld [vmem:[%s3 + $0x74] sm:$0xf]
      %v2804 = vld [vmem:[%s3 + $0x78] sm:$0xf]
      %v2805 = vld [vmem:[%s3 + $0x7c] sm:$0xf]
      %v2806 = vld [vmem:[%s3 + $0x80] sm:$0xf]
      %v2807 = vld [vmem:[%s3 + $0x84] sm:$0xf]
      %v2808 = vld [vmem:[%s3 + $0x88] sm:$0xf]
      %v2809 = vld [vmem:[%s3 + $0x8c] sm:$0xf]
      %v2810 = vld [vmem:[%s4] sm:$0x1]
      %v2812 = vlaneseq
      %v2813 = vshrl.u32 %v2812, 7
      %v2814 = vsub.s32 0, %v2813
      %v2815 = vrot.slane %v2810, %v2814
      %v2853 = vunpack.c.l.b16 %v2774
      %v2854 = vunpack.c.l.b16 %v2775
      %v2855 = vunpack.c.l.b16 %v2776
      %v2856 = vunpack.c.l.b16 %v2777
      %v2857 = vunpack.c.l.b16 %v2778
      %v2858 = vunpack.c.l.b16 %v2779
      %v2859 = vunpack.c.l.b16 %v2780
      %v2860 = vunpack.c.l.b16 %v2781
      %v2861 = vunpack.c.l.b16 %v2782
      %v2862 = vunpack.c.l.b16 %v2783
      %v2863 = vunpack.c.l.b16 %v2784
      %v2864 = vunpack.c.l.b16 %v2785
      %v2865 = vunpack.c.l.b16 %v2786
      %v2866 = vunpack.c.l.b16 %v2787
      %v2867 = vunpack.c.l.b16 %v2788
      %v2868 = vunpack.c.l.b16 %v2789
      %v2869 = vunpack.c.l.b16 %v2790
      %v2870 = vunpack.c.l.b16 %v2791
      %v2871 = vunpack.c.l.b16 %v2792
      %v2872 = vunpack.c.l.b16 %v2793
      %v2873 = vunpack.c.l.b16 %v2794
      %v2874 = vunpack.c.l.b16 %v2795
      %v2875 = vunpack.c.l.b16 %v2796
      %v2876 = vunpack.c.l.b16 %v2797
      %v2877 = vunpack.c.l.b16 %v2798
      %v2878 = vunpack.c.l.b16 %v2799
      %v2879 = vunpack.c.l.b16 %v2800
      %v2880 = vunpack.c.l.b16 %v2801
      %v2881 = vunpack.c.l.b16 %v2802
      %v2882 = vunpack.c.l.b16 %v2803
      %v2883 = vunpack.c.l.b16 %v2804
      %v2884 = vunpack.c.l.b16 %v2805
      %v2885 = vunpack.c.l.b16 %v2806
      %v2886 = vunpack.c.l.b16 %v2807
      %v2887 = vunpack.c.l.b16 %v2808
      %v2888 = vunpack.c.l.b16 %v2809
      %v2889 = vpack.c.b16 %v2854, %v2853
      %v2890 = vpack.c.b16 %v2856, %v2855
      %v2891 = vpack.c.b16 %v2858, %v2857
      %v2892 = vpack.c.b16 %v2860, %v2859
      %v2893 = vpack.c.b16 %v2862, %v2861
      %v2894 = vpack.c.b16 %v2864, %v2863
      %v2895 = vpack.c.b16 %v2866, %v2865
      %v2896 = vpack.c.b16 %v2868, %v2867
      %v2897 = vpack.c.b16 %v2870, %v2869
      %v2898 = vpack.c.b16 %v2872, %v2871
      %v2899 = vpack.c.b16 %v2874, %v2873
      %v2900 = vpack.c.b16 %v2876, %v2875
      %v2901 = vpack.c.b16 %v2878, %v2877
      %v2902 = vpack.c.b16 %v2880, %v2879
      %v2903 = vpack.c.b16 %v2882, %v2881
      %v2904 = vpack.c.b16 %v2884, %v2883
      %v2905 = vpack.c.b16 %v2886, %v2885
      %v2906 = vpack.c.b16 %v2888, %v2887
      %v2926 = vsel %vm445, %v2764, 0
      %v2929 = vsel %vm445, %v2767, 0
      %v2932 = vsel %vm445, %v2770, 0
      %v2935 = vsel %vm445, %v2773, 0
      %2937 = vmatprep.subr.bf16.mxu0 0
      %2938 = vmatpush1.bf16.msra.mxu0 %v2889
      %2939 = vmatprep.subr.bf16.mxu0 0
      %2940 = vmatpush1.bf16.msra.mxu0 %v2890
      %2941 = vmatprep.subr.bf16.mxu0 0
      %2942 = vmatpush1.bf16.msra.mxu0 %v2891
      %2943 = vmatprep.subr.bf16.mxu0 0
      %2944 = vmatpush1.bf16.msra.mxu0 %v2892
      %2945 = vmatprep.subr.bf16.mxu0 0
      %2946 = vmatpush1.bf16.msra.mxu0 %v2893
      %2947 = vmatprep.subr.bf16.mxu0 0
      %2948 = vmatpush1.bf16.msra.mxu0 %v2894
      %2949 = vmatprep.subr.bf16.mxu0 0
      %2950 = vmatpush1.bf16.msra.mxu0 %v2895
      %2951 = vmatprep.subr.bf16.mxu0 0
      %2952 = vmatpush1.bf16.msra.mxu0 %v2896
      %2953 = vmatprep.subr.bf16.mxu0 0
      %2954 = vmatpush1.bf16.msra.mxu0 %v2897
      %2955 = vmatprep.subr.bf16.mxu0 0
      %2956 = vmatpush1.bf16.msra.mxu0 %v2898
      %2957 = vmatprep.subr.bf16.mxu0 0
      %2958 = vmatpush1.bf16.msra.mxu0 %v2899
      %2959 = vmatprep.subr.bf16.mxu0 0
      %2960 = vmatpush1.bf16.msra.mxu0 %v2900
      %2961 = vmatprep.subr.bf16.mxu0 0
      %2962 = vmatpush1.bf16.msra.mxu0 %v2901
      %2963 = vmatprep.subr.bf16.mxu0 0
      %2964 = vmatpush1.bf16.msra.mxu0 %v2902
      %2965 = vmatprep.subr.bf16.mxu0 0
      %2966 = vmatpush1.bf16.msra.mxu0 %v2903
      %2967 = vmatprep.subr.bf16.mxu0 0
      %2968 = vmatpush1.bf16.msra.mxu0 %v2904
      %2969 = vmatprep.mubr.bf16.mxu0 %v2763
      %2970 = vmatmul.mubr.bf16.gmra.mrb[0].mxu0 %v2762
      %v2971 = vpop.f32.mrb[0].mxu0
      %v2972 = vadd.f32 %v2815, %v2971
      %v2973 = vpop.f32.mrb[0].mxu0
      %v2974 = vpop.f32.mrb[0].mxu0
      %v2975 = vadd.f32 %v2815, %v2974
      %v2976 = vpop.f32.mrb[0].mxu0
      %2977 = vmatprep.mubr.bf16.mxu0 %v2766
      %2978 = vmatmul.mubr.bf16.gmra.mrb[0].mxu0 %v2765
      %v2979 = vpop.f32.mrb[0].mxu0
      %v2980 = vadd.f32 %v2815, %v2979
      %v2981 = vpop.f32.mrb[0].mxu0
      %v2982 = vpop.f32.mrb[0].mxu0
      %v2983 = vadd.f32 %v2815, %v2982
      %v2984 = vpop.f32.mrb[0].mxu0
      %2985 = vmatprep.mubr.bf16.mxu0 %v2769
      %2986 = vmatmul.mubr.bf16.gmra.mrb[0].mxu0 %v2768
      %v2987 = vpop.f32.mrb[0].mxu0
      %v2988 = vadd.f32 %v2815, %v2987
      %v2989 = vpop.f32.mrb[0].mxu0
      %v2990 = vpop.f32.mrb[0].mxu0
      %v2991 = vadd.f32 %v2815, %v2990
      %v2992 = vpop.f32.mrb[0].mxu0
      %2993 = vmatprep.mubr.bf16.mxu0 %v2772
      %2994 = vmatmul.mubr.bf16.gmra.mrb[0].mxu0 %v2771
      %v2995 = vpop.f32.mrb[0].mxu0
      %v2996 = vadd.f32 %v2815, %v2995
      %v2997 = vpop.f32.mrb[0].mxu0
      %v2998 = vpop.f32.mrb[0].mxu0
      %v2999 = vadd.f32 %v2815, %v2998
      %v3000 = vpop.f32.mrb[0].mxu0
      %3001 = vdwg.mxu0
      %3002 = vmatprep.subr.bf16.mxu0 0
      %3003 = vmatpush1.bf16.msra.mxu0 %v2905
      %3004 = vmatprep.subr.bf16.mxu0 0
      %3005 = vmatpush1.bf16.msra.mxu0 %v2906
      %3006 = vmatprep.subr.bf16.mxu0 0
      %3007 = vmatpush1.bf16.msra.mxu0 0
      %3008 = vmatprep.subr.bf16.mxu0 0
      %3009 = vmatpush1.bf16.msra.mxu0 0
      %3010 = vmatprep.subr.bf16.mxu0 0
      %3011 = vmatpush1.bf16.msra.mxu0 0
      %3012 = vmatprep.subr.bf16.mxu0 0
      %3013 = vmatpush1.bf16.msra.mxu0 0
      %3014 = vmatprep.subr.bf16.mxu0 0
      %3015 = vmatpush1.bf16.msra.mxu0 0
      %3016 = vmatprep.subr.bf16.mxu0 0
      %3017 = vmatpush1.bf16.msra.mxu0 0
      %3018 = vmatprep.subr.bf16.mxu0 0
      %3019 = vmatpush1.bf16.msra.mxu0 0
      %3020 = vmatprep.subr.bf16.mxu0 0
      %3021 = vmatpush1.bf16.msra.mxu0 0
      %3022 = vmatprep.subr.bf16.mxu0 0
      %3023 = vmatpush1.bf16.msra.mxu0 0
      %3024 = vmatprep.subr.bf16.mxu0 0
      %3025 = vmatpush1.bf16.msra.mxu0 0
      %3026 = vmatprep.subr.bf16.mxu0 0
      %3027 = vmatpush1.bf16.msra.mxu0 0
      %3028 = vmatprep.subr.bf16.mxu0 0
      %3029 = vmatpush1.bf16.msra.mxu0 0
      %3030 = vmatprep.subr.bf16.mxu0 0
      %3031 = vmatpush1.bf16.msra.mxu0 0
      %3032 = vmatprep.subr.bf16.mxu0 0
      %3033 = vmatpush1.bf16.msra.mxu0 0
      %3034 = vmatprep.mubr.bf16.mxu0 0
      %3035 = vmatmul.mubr.bf16.gmra.mrb[0].mxu0 %v2926
      %v3036 = vpop.f32.mrb[0].mxu0
      %v3037 = vadd.f32 %v2972, %v3036
      %v3038 = vpop.f32.mrb[0].mxu0
      %v3039 = vpop.f32.mrb[0].mxu0
      %v3040 = vadd.f32 %v2975, %v3039
      %v3041 = vpop.f32.mrb[0].mxu0
      %3042 = vmatprep.mubr.bf16.mxu0 0
      %3043 = vmatmul.mubr.bf16.gmra.mrb[0].mxu0 %v2929
      %v3044 = vpop.f32.mrb[0].mxu0
      %v3045 = vadd.f32 %v2980, %v3044
      %v3046 = vpop.f32.mrb[0].mxu0
      %v3047 = vpop.f32.mrb[0].mxu0
      %v3048 = vadd.f32 %v2983, %v3047
      %v3049 = vpop.f32.mrb[0].mxu0
      %3050 = vmatprep.mubr.bf16.mxu0 0
      %3051 = vmatmul.mubr.bf16.gmra.mrb[0].mxu0 %v2932
      %v3052 = vpop.f32.mrb[0].mxu0
      %v3053 = vadd.f32 %v2988, %v3052
      %v3054 = vpop.f32.mrb[0].mxu0
      %v3055 = vpop.f32.mrb[0].mxu0
      %v3056 = vadd.f32 %v2991, %v3055
      %v3057 = vpop.f32.mrb[0].mxu0
      %3058 = vmatprep.mubr.bf16.mxu0 0
      %3059 = vmatmul.mubr.bf16.gmra.mrb[0].mxu0 %v2935
      %v3060 = vpop.f32.mrb[0].mxu0
      %v3061 = vadd.f32 %v2996, %v3060
      %v3062 = vpop.f32.mrb[0].mxu0
      %v3063 = vpop.f32.mrb[0].mxu0
      %v3064 = vadd.f32 %v2999, %v3063
      %v3065 = vpop.f32.mrb[0].mxu0
      %3066 = vdwg.mxu0
      %v3067 = vunpack.c.l.bf16 %v226
      %v3068 = vunpack.c.l.bf16 %v227
      %v3069 = vunpack.c.l.bf16 %v228
      %v3070 = vunpack.c.l.bf16 %v229
      %v3071 = vunpack.c.l.bf16 %v230
      %v3072 = vunpack.c.l.bf16 %v231
      %v3073 = vunpack.c.l.bf16 %v232
      %v3074 = vunpack.c.l.bf16 %v233
      %v3075 = vadd.f32 %v3037, %v3067
      %v3076 = vadd.f32 %v3040, %v3068
      %v3077 = vadd.f32 %v3045, %v3069
      %v3078 = vadd.f32 %v3048, %v3070
      %v3079 = vadd.f32 %v3053, %v3071
      %v3080 = vadd.f32 %v3056, %v3072
      %v3081 = vadd.f32 %v3061, %v3073
      %v3082 = vadd.f32 %v3064, %v3074
      %v3083 = vpack.c.bf16 %v3075, %v3075
      %v3084 = vpack.c.bf16 %v3076, %v3076
      %v3085 = vpack.c.bf16 %v3077, %v3077
      %v3086 = vpack.c.bf16 %v3078, %v3078
      %v3087 = vpack.c.bf16 %v3079, %v3079
      %v3088 = vpack.c.bf16 %v3080, %v3080
      %v3089 = vpack.c.bf16 %v3081, %v3081
      %v3090 = vpack.c.bf16 %v3082, %v3082
      %3091 = vst.msk [vmem:[%s224] sm:$0xf] %vm234, %v3083
      %3092 = vst.msk [vmem:[%s224 + $0x4] sm:$0xf] %vm234, %v3084
      %3093 = vst.msk [vmem:[%s224 + $0x8] sm:$0xf] %vm234, %v3085
      %3094 = vst.msk [vmem:[%s224 + $0xc] sm:$0xf] %vm234, %v3086
      %3095 = vst.msk [vmem:[%s224 + $0x10] sm:$0xf] %vm234, %v3087
      %3096 = vst.msk [vmem:[%s224 + $0x14] sm:$0xf] %vm234, %v3088
      %3097 = vst.msk [vmem:[%s224 + $0x18] sm:$0xf] %vm234, %v3089
      %3098 = vst.msk [vmem:[%s224 + $0x1c] sm:$0xf] %vm234, %v3090
      %p3099 = scmp.lt.s32.totalorder %s16, 1
      %s3100 = scalar_select %p3099, %s16, 1
      %s3101 = smul.addr %s3100, 8
      %s3102 = smul.addr %s3101, 4
      %s3103 = scalar_lea.vmem %s5, %s3102
      // Predicated region
      $region41: #{feature_extractor_forward.9} parent=39 // pred_check
        %p3104 = pneg %p144
      $region42: #{feature_extractor_forward.9} parent=39 // pred_check_branch
        %3106 = sbr.rel (%p3104) target = $region44
      $region43: #{feature_extractor_forward.9} parent=39 // pred_region
        _
      $region44: #{feature_extractor_forward.9} parent=39 // pred_fallthru
        _
    $region40: #{feature_extractor_forward.9} parent=5 // pred_fallthru
      _
    %p3107 = scmp.le.s32.totalorder 2, %s11
    // Predicated region
    $region45: #{feature_extractor_forward.9} parent=5 // pred_check
      %p3108 = pneg %p3107
    $region46: #{feature_extractor_forward.9} parent=5 // pred_check_branch
      %3110 = sbr.rel (%p3108) target = $region48
    $region47: #{feature_extractor_forward.9} parent=5 // pred_region
      %s3111 = ssub.s32 %s11, 2
      // Predicated region
      $region49: #{feature_extractor_forward.9} parent=47 // pred_check
        %p3112 = pneg %p150
      $region50: #{feature_extractor_forward.9} parent=47 // pred_check_branch
        %3114 = sbr.rel (%p3112) target = $region52
      $region51: #{feature_extractor_forward.9} parent=47 // pred_region
        %p3115 = scmp.lt.s32.totalorder %s17, 1
        %s3116 = scalar_select %p3115, %s17, 1
        %s3117 = smul.addr %s3116, 8
        %s3118 = smul.addr %s3117, 4
        %s3119 = scalar_lea.vmem %s5, %s3118
      $region52: #{feature_extractor_forward.9} parent=47 // pred_fallthru
        _
    $region48: #{feature_extractor_forward.9} parent=5 // pred_fallthru
      _
  $region6: #{feature_extractor_forward.9} parent=0 // loop_footer
    %s15 = sadd.s32 1, %s11
  $region7: #{feature_extractor_forward.9} parent=0 // loop_footer_branch
    %10 = sbr.rel target = $region3
  $region8: #{feature_extractor_forward.9} parent=0 // loop_exit
    _

// kernel: feature_extractor_forward.8
$region0: #{feature_extractor_forward.8}
  #allocation0 [shape = 'u32[]', space=smem, size = 0x4, offset = 0x4, fixed_abs, tag = 'smem constant byte address 0x4 - core index']
  #allocation1 [shape = 'u32[144,128]{1,0:T(1,128)}', space=vmem, size = 0x12000, scoped, tag = 'internal scratch']
  #allocation2 [shape = 'bf16[20,25,3]{2,1,0:T(8,128)(2,1)}', space=vmem, size = 0x28000, scoped, tag = 'scratch operand']
  #allocation3 [shape = 'bf16[20,25,3]{2,1,0:T(8,128)(2,1)}', space=vmem, size = 0x28000, scoped, tag = 'scratch operand']
  %s0 = inlined_call_operand.vmem [shape: bf16[2,16,8,3], index: 0, kind: input, shape index: {}]
  %s1 = inlined_call_operand.vmem [shape: bf16[2,16,8,3], index: 1, kind: input, shape index: {}]
  %s2 = inlined_call_operand.vmem [shape: bf16[75,32], index: 2, kind: input, shape index: {}]
  %s3 = inlined_call_operand.vmem [shape: f32[1,32], index: 3, kind: input, shape index: {}]
  %s4 = inlined_call_operand.vmem [shape: bf16[2,8,8,32], index: 4, kind: output, shape index: {}]
  %s5 = sld [smem:[#allocation0]]
  $region49: #{feature_extractor_forward.8} parent=0
    _
  %s7 = ssub.s32 1, %s5
  %s8 = scalar_select 0, %s7, %s5
  loop: start=0, step=1, limit=4
  $region2: #{feature_extractor_forward.8} parent=0 // loop_pre_header
    _
  $region3: #{feature_extractor_forward.8} parent=0 // loop_header
    %s10 = sphi 0, %s14
    %p11 = scmp.ge.s32.totalorder %s10, 4
    %s20 = sphi 0, %s22
    %s23 = sphi 0, %s20
    %s24 = sphi 0, %s23
    %s40 = sphi 0, %s24
    %s46 = sphi 0, %s48
    %s49 = sphi 0, %s46
    %s50 = sphi 0, %s49
    %s66 = sphi 0, %s50
    %s70 = sphi 0, %s70
    %s72 = sphi 0, %s70
    %s73 = sphi 0, %s72
    %s87 = sphi 0, %s73
    %s91 = sphi 0, %s91
    %s93 = sphi 0, %s91
    %s94 = sphi 0, %s93
    %s108 = sphi 0, %s94
    %s114 = sphi 0, %s116
    %s117 = sphi 0, %s114
    %s118 = sphi 0, %s117
    %s134 = sphi 0, %s118
  $region4: #{feature_extractor_forward.8} parent=0 // loop_header_branch
    %13 = sbr.rel (%p11) target = $region8
  $region5: #{feature_extractor_forward.8} parent=0 // loop_body
    %s15 = ssub.s32 %s10, 1
    %s16 = ssub.s32 %s10, 2
    %s17 = sadd.s32 %s10, 1
    %s18 = ssub.s32 %s10, %s17
    %p19 = scmp.eq.s32.totalorder %s18, 0
    %s21 = sadd.s32 %s20, 1
    %s22 = scalar_select %p19, %s20, %s21
    %p25 = pneg %p19
    %p26 = scmp.eq.s32.totalorder %s10, 1
    %p27 = por %p25, %p26
    %p28 = scmp.ne.s32.totalorder %s20, %s23
    %p29 = scmp.eq.s32.totalorder %s10, 0
    %p30 = por %p28, %p29
    %p31 = scmp.ne.s32.totalorder %s20, %s23
    %p32 = scmp.eq.s32.totalorder %s15, 1
    %p33 = por %p31, %p32
    %p34 = scmp.ne.s32.totalorder %s23, %s24
    %p35 = scmp.eq.s32.totalorder %s15, 0
    %p36 = por %p34, %p35
    %p37 = scmp.ne.s32.totalorder %s23, %s24
    %p38 = scmp.eq.s32.totalorder %s16, 1
    %p39 = por %p37, %p38
    %p41 = scmp.ne.s32.totalorder %s24, %s40
    %p42 = scmp.eq.s32.totalorder %s16, 0
    %p43 = por %p41, %p42
    %s44 = ssub.s32 %s10, %s17
    %p45 = scmp.eq.s32.totalorder %s44, 0
    %s47 = sadd.s32 %s46, 1
    %s48 = scalar_select %p45, %s46, %s47
    %p51 = pneg %p45
    %p52 = scmp.eq.s32.totalorder %s10, 1
    %p53 = por %p51, %p52
    %p54 = scmp.ne.s32.totalorder %s46, %s49
    %p55 = scmp.eq.s32.totalorder %s10, 0
    %p56 = por %p54, %p55
    %p57 = scmp.ne.s32.totalorder %s46, %s49
    %p58 = scmp.eq.s32.totalorder %s15, 1
    %p59 = por %p57, %p58
    %p60 = scmp.ne.s32.totalorder %s49, %s50
    %p61 = scmp.eq.s32.totalorder %s15, 0
    %p62 = por %p60, %p61
    %p63 = scmp.ne.s32.totalorder %s49, %s50
    %p64 = scmp.eq.s32.totalorder %s16, 1
    %p65 = por %p63, %p64
    %p67 = scmp.ne.s32.totalorder %s50, %s66
    %p68 = scmp.eq.s32.totalorder %s16, 0
    %p69 = por %p67, %p68
    %s71 = sadd.s32 %s70, 1
    %p74 = scmp.eq.s32.totalorder %s10, 1
    %p75 = scmp.ne.s32.totalorder %s70, %s72
    %p76 = scmp.eq.s32.totalorder %s10, 0
    %p77 = por %p75, %p76
    %p78 = scmp.ne.s32.totalorder %s70, %s72
    %p79 = scmp.eq.s32.totalorder %s15, 1
    %p80 = por %p78, %p79
    %p81 = scmp.ne.s32.totalorder %s72, %s73
    %p82 = scmp.eq.s32.totalorder %s15, 0
    %p83 = por %p81, %p82
    %p84 = scmp.ne.s32.totalorder %s72, %s73
    %p85 = scmp.eq.s32.totalorder %s16, 1
    %p86 = por %p84, %p85
    %p88 = scmp.ne.s32.totalorder %s73, %s87
    %p89 = scmp.eq.s32.totalorder %s16, 0
    %p90 = por %p88, %p89
    %s92 = sadd.s32 %s91, 1
    %p95 = scmp.eq.s32.totalorder %s10, 1
    %p96 = scmp.ne.s32.totalorder %s91, %s93
    %p97 = scmp.eq.s32.totalorder %s10, 0
    %p98 = por %p96, %p97
    %p99 = scmp.ne.s32.totalorder %s91, %s93
    %p100 = scmp.eq.s32.totalorder %s15, 1
    %p101 = por %p99, %p100
    %p102 = scmp.ne.s32.totalorder %s93, %s94
    %p103 = scmp.eq.s32.totalorder %s15, 0
    %p104 = por %p102, %p103
    %p105 = scmp.ne.s32.totalorder %s93, %s94
    %p106 = scmp.eq.s32.totalorder %s16, 1
    %p107 = por %p105, %p106
    %p109 = scmp.ne.s32.totalorder %s94, %s108
    %p110 = scmp.eq.s32.totalorder %s16, 0
    %p111 = por %p109, %p110
    %s112 = ssub.s32 %s10, %s17
    %p113 = scmp.eq.s32.totalorder %s112, 0
    %s115 = sadd.s32 %s114, 1
    %s116 = scalar_select %p113, %s114, %s115
    %p119 = pneg %p113
    %p120 = scmp.eq.s32.totalorder %s10, 1
    %p121 = por %p119, %p120
    %p122 = scmp.ne.s32.totalorder %s114, %s117
    %p123 = scmp.eq.s32.totalorder %s10, 0
    %p124 = por %p122, %p123
    %p125 = scmp.ne.s32.totalorder %s114, %s117
    %p126 = scmp.eq.s32.totalorder %s15, 1
    %p127 = por %p125, %p126
    %p128 = scmp.ne.s32.totalorder %s117, %s118
    %p129 = scmp.eq.s32.totalorder %s15, 0
    %p130 = por %p128, %p129
    %p131 = scmp.ne.s32.totalorder %s117, %s118
    %p132 = scmp.eq.s32.totalorder %s16, 1
    %p133 = por %p131, %p132
    %p135 = scmp.ne.s32.totalorder %s118, %s134
    %p136 = scmp.eq.s32.totalorder %s16, 0
    %p137 = por %p135, %p136
    %p138 = scmp.le.s32.totalorder 1, %s10
    %p139 = scmp.lt.s32.totalorder %s10, 3
    %p140 = pnand %p138, %p139
    %p141 = pneg %p140
    // Predicated region
    $region9: #{feature_extractor_forward.8} parent=5 // pred_check
      _
    $region10: #{feature_extractor_forward.8} parent=5 // pred_check_branch
      %143 = sbr.rel (%p140) target = $region12
    $region11: #{feature_extractor_forward.8} parent=5 // pred_region
      %s144 = ssub.s32 %s10, 1
      // Predicated region
      $region13: #{feature_extractor_forward.8} parent=11 // pred_check
        %p145 = pneg %p83
      $region14: #{feature_extractor_forward.8} parent=11 // pred_check_branch
        %147 = sbr.rel (%p145) target = $region16
      $region15: #{feature_extractor_forward.8} parent=11 // pred_region
        _
      $region16: #{feature_extractor_forward.8} parent=11 // pred_fallthru
        _
      // Predicated region
      $region17: #{feature_extractor_forward.8} parent=11 // pred_check
        %p148 = pneg %p104
      $region18: #{feature_extractor_forward.8} parent=11 // pred_check_branch
        %150 = sbr.rel (%p148) target = $region20
      $region19: #{feature_extractor_forward.8} parent=11 // pred_region
        _
      $region20: #{feature_extractor_forward.8} parent=11 // pred_fallthru
        _
    $region12: #{feature_extractor_forward.8} parent=5 // pred_fallthru
      _
    %p151 = scmp.lt.s32.totalorder %s10, 2
    // Predicated region
    $region21: #{feature_extractor_forward.8} parent=5 // pred_check
      %p152 = pneg %p151
    $region22: #{feature_extractor_forward.8} parent=5 // pred_check_branch
      %154 = sbr.rel (%p152) target = $region24
    $region23: #{feature_extractor_forward.8} parent=5 // pred_region
      // Predicated region
      $region25: #{feature_extractor_forward.8} parent=23 // pred_check
        %p155 = pneg %p30
      $region26: #{feature_extractor_forward.8} parent=23 // pred_check_branch
        %157 = sbr.rel (%p155) target = $region28
      $region27: #{feature_extractor_forward.8} parent=23 // pred_region
        %p158 = scmp.lt.s32.totalorder %s10, 1
        %s159 = scalar_select %p158, %s10, 1
        %s160 = smul.addr %s159, 16
        %s161 = smul.addr %s160, 4
        %s162 = scalar_lea.vmem %s0, %s161
      $region28: #{feature_extractor_forward.8} parent=23 // pred_fallthru
        _
      // Predicated region
      $region29: #{feature_extractor_forward.8} parent=23 // pred_check
        %p163 = pneg %p56
      $region30: #{feature_extractor_forward.8} parent=23 // pred_check_branch
        %165 = sbr.rel (%p163) target = $region32
      $region31: #{feature_extractor_forward.8} parent=23 // pred_region
        %p166 = scmp.lt.s32.totalorder %s10, 1
        %s167 = scalar_select %p166, %s10, 1
        %s168 = smul.addr %s167, 16
        %s169 = smul.addr %s168, 4
        %s170 = scalar_lea.vmem %s1, %s169
      $region32: #{feature_extractor_forward.8} parent=23 // pred_fallthru
        _
    $region24: #{feature_extractor_forward.8} parent=5 // pred_fallthru
      _
    %p171 = scmp.le.s32.totalorder 1, %s10
    %p172 = scmp.lt.s32.totalorder %s10, 3
    %p173 = pnand %p171, %p172
    %p174 = pneg %p173
    // Predicated region
    $region33: #{feature_extractor_forward.8} parent=5 // pred_check
      _
    $region34: #{feature_extractor_forward.8} parent=5 // pred_check_branch
      %176 = sbr.rel (%p173) target = $region36
    $region35: #{feature_extractor_forward.8} parent=5 // pred_region
      %s177 = ssub.s32 %s10, 1
      %p178 = scmp.lt.s32.totalorder %s15, 1
      %s179 = scalar_select %p178, %s15, 1
      %s180 = smul.addr %s179, 16
      %s181 = smul.addr %s180, 4
      %s182 = scalar_lea.vmem %s0, %s181
      %p183 = pneg %p36
      %p184 = pneg %p33
      %p185 = scmp.lt.s32.totalorder %s15, 1
      %s186 = scalar_select %p185, %s15, 1
      %s187 = smul.addr %s186, 16
      %s188 = smul.addr %s187, 4
      %s189 = scalar_lea.vmem %s1, %s188
      %p190 = pneg %p62
      %p191 = pneg %p59
      %p192 = pneg %p83
      %p193 = pneg %p80
      %p194 = pneg %p104
      %p195 = pneg %p101
      %p196 = pneg %p130
      %p197 = pneg %p127
      %p198 = scmp.lt.s32.totalorder %s15, 1
      %s199 = scalar_select %p198, %s15, 1
      %s200 = smul.addr %s199, 8
      %s201 = smul.addr %s200, 4
      %s202 = scalar_lea.vmem %s4, %s201
      %p203 = scmp.lt.s32.totalorder %s15, 1
      %s204 = scalar_select %p203, %s15, 1
      %s205 = smul.addr %s204, 16
      %s206 = smul.addr %s205, 4
      %s207 = scalar_lea.vmem %s0, %s206
      %p208 = scmp.lt.s32.totalorder %s15, 1
      %s209 = scalar_select %p208, %s15, 1
      %s210 = smul.addr %s209, 16
      %s211 = smul.addr %s210, 4
      %s212 = scalar_lea.vmem %s1, %s211
      %p213 = scmp.lt.s32.totalorder %s15, 1
      %s214 = scalar_select %p213, %s15, 1
      %s215 = smul.addr %s214, 8
      %s216 = smul.addr %s215, 4
      %s217 = scalar_lea.vmem %s4, %s216
      %v219 = vld [vmem:[%s207] sm:$0xf]
      %v220 = vld [vmem:[%s207 + $0x4] sm:$0xf]
      %v221 = vld [vmem:[%s207 + $0x8] sm:$0xf]
      %v222 = vld [vmem:[%s207 + $0xc] sm:$0xf]
      %v223 = vld [vmem:[%s207 + $0x10] sm:$0xf]
      %v224 = vld [vmem:[%s207 + $0x14] sm:$0xf]
      %v225 = vld [vmem:[%s207 + $0x18] sm:$0xf]
      %v226 = vld [vmem:[%s207 + $0x1c] sm:$0xf]
      %v227 = vld [vmem:[%s207 + $0x20] sm:$0xf]
      %v228 = vld [vmem:[%s207 + $0x24] sm:$0xf]
      %v229 = vld [vmem:[%s207 + $0x28] sm:$0xf]
      %v230 = vld [vmem:[%s207 + $0x2c] sm:$0xf]
      %v231 = vld [vmem:[%s207 + $0x30] sm:$0xf]
      %v232 = vld [vmem:[%s207 + $0x34] sm:$0xf]
      %v233 = vld [vmem:[%s207 + $0x38] sm:$0xf]
      %v234 = vld [vmem:[%s207 + $0x3c] sm:$0xf]
      %vm235 = vcmask 19456
      %236 = vst.msk [vmem:[#allocation2] sm:$0xf] %vm235, 0
      %237 = vst.msk [vmem:[#allocation2 + $0x4] sm:$0xf] %vm235, 0
      %238 = vst.msk [vmem:[#allocation2 + $0x8] sm:$0xf] %vm235, 0
      %vm239 = vcmask 16384
      %vm240 = vsmask.f32 256
      %vm241 = vmand %vm239, %vm240
      %v242 = vld [vmem:[#allocation2 + $0xc] sm:$0x1]
      %v243 = vsel %vm241, 0, %v242
      %244 = vst [vmem:[#allocation2 + $0xc] sm:$0x1] %v243
      %245 = vst.msk [vmem:[#allocation2 + $0x10] sm:$0xf] %vm235, 0
      %246 = vst.msk [vmem:[#allocation2 + $0x14] sm:$0xf] %vm235, 0
      %247 = vst.msk [vmem:[#allocation2 + $0x18] sm:$0xf] %vm235, 0
      %v248 = vld [vmem:[#allocation2 + $0x1c] sm:$0x1]
      %v249 = vsel %vm241, 0, %v248
      %250 = vst [vmem:[#allocation2 + $0x1c] sm:$0x1] %v249
      %251 = vst.msk [vmem:[#allocation2 + $0x20] sm:$0xf] %vm235, 0
      %252 = vst.msk [vmem:[#allocation2 + $0x24] sm:$0xf] %vm235, 0
      %253 = vst.msk [vmem:[#allocation2 + $0x28] sm:$0xf] %vm235, 0
      %v254 = vld [vmem:[#allocation2 + $0x2c] sm:$0x1]
      %v255 = vsel %vm241, 0, %v254
      %256 = vst [vmem:[#allocation2 + $0x2c] sm:$0x1] %v255
      %257 = vst.msk [vmem:[#allocation2 + $0x30] sm:$0xf] %vm235, 0
      %258 = vst.msk [vmem:[#allocation2 + $0x34] sm:$0xf] %vm235, 0
      %259 = vst.msk [vmem:[#allocation2 + $0x38] sm:$0xf] %vm235, 0
      %v260 = vld [vmem:[#allocation2 + $0x3c] sm:$0x1]
      %v261 = vsel %vm241, 0, %v260
      %262 = vst [vmem:[#allocation2 + $0x3c] sm:$0x1] %v261
      %263 = vst.msk [vmem:[#allocation2 + $0x40] sm:$0xf] %vm235, 0
      %264 = vst.msk [vmem:[#allocation2 + $0x44] sm:$0xf] %vm235, 0
      %265 = vst.msk [vmem:[#allocation2 + $0x48] sm:$0xf] %vm235, 0
      %v266 = vld [vmem:[#allocation2 + $0x4c] sm:$0x1]
      %v267 = vsel %vm241, 0, %v266
      %268 = vst [vmem:[#allocation2 + $0x4c] sm:$0x1] %v267
      %269 = vst.msk [vmem:[#allocation2 + $0x50] sm:$0xf] %vm235, 0
      %270 = vst.msk [vmem:[#allocation2 + $0x54] sm:$0xf] %vm235, 0
      %271 = vst.msk [vmem:[#allocation2 + $0x58] sm:$0xf] %vm235, 0
      %v272 = vld [vmem:[#allocation2 + $0x5c] sm:$0x1]
      %v273 = vsel %vm241, 0, %v272
      %274 = vst [vmem:[#allocation2 + $0x5c] sm:$0x1] %v273
      %275 = vst.msk [vmem:[#allocation2 + $0x60] sm:$0xf] %vm235, 0
      %276 = vst.msk [vmem:[#allocation2 + $0x64] sm:$0xf] %vm235, 0
      %277 = vst.msk [vmem:[#allocation2 + $0x68] sm:$0xf] %vm235, 0
      %v278 = vld [vmem:[#allocation2 + $0x6c] sm:$0x1]
      %v279 = vsel %vm241, 0, %v278
      %280 = vst [vmem:[#allocation2 + $0x6c] sm:$0x1] %v279
      %281 = vst.msk [vmem:[#allocation2 + $0x70] sm:$0xf] %vm235, 0
      %282 = vst.msk [vmem:[#allocation2 + $0x74] sm:$0xf] %vm235, 0
      %283 = vst.msk [vmem:[#allocation2 + $0x78] sm:$0xf] %vm235, 0
      %v284 = vld [vmem:[#allocation2 + $0x7c] sm:$0x1]
      %v285 = vsel %vm241, 0, %v284
      %286 = vst [vmem:[#allocation2 + $0x7c] sm:$0x1] %v285
      %287 = vst.msk [vmem:[#allocation2 + $0x80] sm:$0xf] %vm235, 0
      %288 = vst.msk [vmem:[#allocation2 + $0x84] sm:$0xf] %vm235, 0
      %289 = vst.msk [vmem:[#allocation2 + $0x88] sm:$0xf] %vm235, 0
      %v290 = vld [vmem:[#allocation2 + $0x8c] sm:$0x1]
      %v291 = vsel %vm241, 0, %v290
      %292 = vst [vmem:[#allocation2 + $0x8c] sm:$0x1] %v291
      %293 = vst.msk [vmem:[#allocation2 + $0x90] sm:$0xf] %vm235, 0
      %294 = vst.msk [vmem:[#allocation2 + $0x94] sm:$0xf] %vm235, 0
      %295 = vst.msk [vmem:[#allocation2 + $0x98] sm:$0xf] %vm235, 0
      %v296 = vld [vmem:[#allocation2 + $0x9c] sm:$0x1]
      %v297 = vsel %vm241, 0, %v296
      %298 = vst [vmem:[#allocation2 + $0x9c] sm:$0x1] %v297
      %299 = vst.msk [vmem:[#allocation2 + $0xa0] sm:$0xf] %vm235, 0
      %300 = vst.msk [vmem:[#allocation2 + $0xa4] sm:$0xf] %vm235, 0
      %301 = vst.msk [vmem:[#allocation2 + $0xa8] sm:$0xf] %vm235, 0
      %v302 = vld [vmem:[#allocation2 + $0xac] sm:$0x1]
      %v303 = vsel %vm241, 0, %v302
      %304 = vst [vmem:[#allocation2 + $0xac] sm:$0x1] %v303
      %305 = vst.msk [vmem:[#allocation2 + $0xb0] sm:$0xf] %vm235, 0
      %306 = vst.msk [vmem:[#allocation2 + $0xb4] sm:$0xf] %vm235, 0
      %307 = vst.msk [vmem:[#allocation2 + $0xb8] sm:$0xf] %vm235, 0
      %v308 = vld [vmem:[#allocation2 + $0xbc] sm:$0x1]
      %v309 = vsel %vm241, 0, %v308
      %310 = vst [vmem:[#allocation2 + $0xbc] sm:$0x1] %v309
      %311 = vst.msk [vmem:[#allocation2 + $0xc0] sm:$0xf] %vm235, 0
      %312 = vst.msk [vmem:[#allocation2 + $0xc4] sm:$0xf] %vm235, 0
      %313 = vst.msk [vmem:[#allocation2 + $0xc8] sm:$0xf] %vm235, 0
      %v314 = vld [vmem:[#allocation2 + $0xcc] sm:$0x1]
      %v315 = vsel %vm241, 0, %v314
      %316 = vst [vmem:[#allocation2 + $0xcc] sm:$0x1] %v315
      %317 = vst.msk [vmem:[#allocation2 + $0xd0] sm:$0xf] %vm235, 0
      %318 = vst.msk [vmem:[#allocation2 + $0xd4] sm:$0xf] %vm235, 0
      %319 = vst.msk [vmem:[#allocation2 + $0xd8] sm:$0xf] %vm235, 0
      %v320 = vld [vmem:[#allocation2 + $0xdc] sm:$0x1]
      %v321 = vsel %vm241, 0, %v320
      %322 = vst [vmem:[#allocation2 + $0xdc] sm:$0x1] %v321
      %323 = vst.msk [vmem:[#allocation2 + $0xe0] sm:$0xf] %vm235, 0
      %324 = vst.msk [vmem:[#allocation2 + $0xe4] sm:$0xf] %vm235, 0
      %325 = vst.msk [vmem:[#allocation2 + $0xe8] sm:$0xf] %vm235, 0
      %v326 = vld [vmem:[#allocation2 + $0xec] sm:$0x1]
      %v327 = vsel %vm241, 0, %v326
      %328 = vst [vmem:[#allocation2 + $0xec] sm:$0x1] %v327
      %329 = vst.msk [vmem:[#allocation2 + $0xf0] sm:$0xf] %vm235, 0
      %330 = vst.msk [vmem:[#allocation2 + $0xf4] sm:$0xf] %vm235, 0
      %331 = vst.msk [vmem:[#allocation2 + $0xf8] sm:$0xf] %vm235, 0
      %v332 = vld [vmem:[#allocation2 + $0xfc] sm:$0x1]
      %v333 = vsel %vm241, 0, %v332
      %334 = vst [vmem:[#allocation2 + $0xfc] sm:$0x1] %v333
      %335 = vst.msk [vmem:[#allocation2 + $0x100] sm:$0xf] %vm235, 0
      %336 = vst.msk [vmem:[#allocation2 + $0x104] sm:$0xf] %vm235, 0
      %337 = vst.msk [vmem:[#allocation2 + $0x108] sm:$0xf] %vm235, 0
      %v338 = vld [vmem:[#allocation2 + $0x10c] sm:$0x1]
      %v339 = vsel %vm241, 0, %v338
      %340 = vst [vmem:[#allocation2 + $0x10c] sm:$0x1] %v339
      %341 = vst.msk [vmem:[#allocation2 + $0x110] sm:$0xf] %vm235, 0
      %342 = vst.msk [vmem:[#allocation2 + $0x114] sm:$0xf] %vm235, 0
      %343 = vst.msk [vmem:[#allocation2 + $0x118] sm:$0xf] %vm235, 0
      %v344 = vld [vmem:[#allocation2 + $0x11c] sm:$0x1]
      %v345 = vsel %vm241, 0, %v344
      %346 = vst [vmem:[#allocation2 + $0x11c] sm:$0x1] %v345
      %347 = vst.msk [vmem:[#allocation2 + $0x120] sm:$0xf] %vm235, 0
      %348 = vst.msk [vmem:[#allocation2 + $0x124] sm:$0xf] %vm235, 0
      %349 = vst.msk [vmem:[#allocation2 + $0x128] sm:$0xf] %vm235, 0
      %v350 = vld [vmem:[#allocation2 + $0x12c] sm:$0x1]
      %v351 = vsel %vm241, 0, %v350
      %352 = vst [vmem:[#allocation2 + $0x12c] sm:$0x1] %v351
      %353 = vst.msk [vmem:[#allocation2 + $0x130] sm:$0xf] %vm235, 0
      %354 = vst.msk [vmem:[#allocation2 + $0x134] sm:$0xf] %vm235, 0
      %355 = vst.msk [vmem:[#allocation2 + $0x138] sm:$0xf] %vm235, 0
      %v356 = vld [vmem:[#allocation2 + $0x13c] sm:$0x1]
      %v357 = vsel %vm241, 0, %v356
      %358 = vst [vmem:[#allocation2 + $0x13c] sm:$0x1] %v357
      %s359 = scalar_lea.vmem [#allocation2], 32
      %360 = vst.msk [vmem:[%s359 + $0x8] sm:$0xf] %vm235, %v219
      %361 = vst.msk [vmem:[%s359 + $0x18] sm:$0xf] %vm235, %v220
      %362 = vst.msk [vmem:[%s359 + $0x28] sm:$0xf] %vm235, %v221
      %363 = vst.msk [vmem:[%s359 + $0x38] sm:$0xf] %vm235, %v222
      %364 = vst.msk [vmem:[%s359 + $0x48] sm:$0xf] %vm235, %v223
      %365 = vst.msk [vmem:[%s359 + $0x58] sm:$0xf] %vm235, %v224
      %366 = vst.msk [vmem:[%s359 + $0x68] sm:$0xf] %vm235, %v225
      %367 = vst.msk [vmem:[%s359 + $0x78] sm:$0xf] %vm235, %v226
      %368 = vst.msk [vmem:[%s359 + $0x88] sm:$0xf] %vm235, %v227
      %369 = vst.msk [vmem:[%s359 + $0x98] sm:$0xf] %vm235, %v228
      %370 = vst.msk [vmem:[%s359 + $0xa8] sm:$0xf] %vm235, %v229
      %371 = vst.msk [vmem:[%s359 + $0xb8] sm:$0xf] %vm235, %v230
      %372 = vst.msk [vmem:[%s359 + $0xc8] sm:$0xf] %vm235, %v231
      %373 = vst.msk [vmem:[%s359 + $0xd8] sm:$0xf] %vm235, %v232
      %374 = vst.msk [vmem:[%s359 + $0xe8] sm:$0xf] %vm235, %v233
      %375 = vst.msk [vmem:[%s359 + $0xf8] sm:$0xf] %vm235, %v234
      %v376 = vld [vmem:[%s212] sm:$0xf]
      %v377 = vld [vmem:[%s212 + $0x4] sm:$0xf]
      %v378 = vld [vmem:[%s212 + $0x8] sm:$0xf]
      %v379 = vld [vmem:[%s212 + $0xc] sm:$0xf]
      %v380 = vld [vmem:[%s212 + $0x10] sm:$0xf]
      %v381 = vld [vmem:[%s212 + $0x14] sm:$0xf]
      %v382 = vld [vmem:[%s212 + $0x18] sm:$0xf]
      %v383 = vld [vmem:[%s212 + $0x1c] sm:$0xf]
      %v384 = vld [vmem:[%s212 + $0x20] sm:$0xf]
      %v385 = vld [vmem:[%s212 + $0x24] sm:$0xf]
      %v386 = vld [vmem:[%s212 + $0x28] sm:$0xf]
      %v387 = vld [vmem:[%s212 + $0x2c] sm:$0xf]
      %v388 = vld [vmem:[%s212 + $0x30] sm:$0xf]
      %v389 = vld [vmem:[%s212 + $0x34] sm:$0xf]
      %v390 = vld [vmem:[%s212 + $0x38] sm:$0xf]
      %v391 = vld [vmem:[%s212 + $0x3c] sm:$0xf]
      %392 = vst.msk [vmem:[#allocation3] sm:$0xf] %vm235, 0
      %393 = vst.msk [vmem:[#allocation3 + $0x4] sm:$0xf] %vm235, 0
      %394 = vst.msk [vmem:[#allocation3 + $0x8] sm:$0xf] %vm235, 0
      %v395 = vld [vmem:[#allocation3 + $0xc] sm:$0x1]
      %v396 = vsel %vm241, 0, %v395
      %397 = vst [vmem:[#allocation3 + $0xc] sm:$0x1] %v396
      %398 = vst.msk [vmem:[#allocation3 + $0x10] sm:$0xf] %vm235, 0
      %399 = vst.msk [vmem:[#allocation3 + $0x14] sm:$0xf] %vm235, 0
      %400 = vst.msk [vmem:[#allocation3 + $0x18] sm:$0xf] %vm235, 0
      %v401 = vld [vmem:[#allocation3 + $0x1c] sm:$0x1]
      %v402 = vsel %vm241, 0, %v401
      %403 = vst [vmem:[#allocation3 + $0x1c] sm:$0x1] %v402
      %404 = vst.msk [vmem:[#allocation3 + $0x20] sm:$0xf] %vm235, 0
      %405 = vst.msk [vmem:[#allocation3 + $0x24] sm:$0xf] %vm235, 0
      %406 = vst.msk [vmem:[#allocation3 + $0x28] sm:$0xf] %vm235, 0
      %v407 = vld [vmem:[#allocation3 + $0x2c] sm:$0x1]
      %v408 = vsel %vm241, 0, %v407
      %409 = vst [vmem:[#allocation3 + $0x2c] sm:$0x1] %v408
      %410 = vst.msk [vmem:[#allocation3 + $0x30] sm:$0xf] %vm235, 0
      %411 = vst.msk [vmem:[#allocation3 + $0x34] sm:$0xf] %vm235, 0
      %412 = vst.msk [vmem:[#allocation3 + $0x38] sm:$0xf] %vm235, 0
      %v413 = vld [vmem:[#allocation3 + $0x3c] sm:$0x1]
      %v414 = vsel %vm241, 0, %v413
      %415 = vst [vmem:[#allocation3 + $0x3c] sm:$0x1] %v414
      %416 = vst.msk [vmem:[#allocation3 + $0x40] sm:$0xf] %vm235, 0
      %417 = vst.msk [vmem:[#allocation3 + $0x44] sm:$0xf] %vm235, 0
      %418 = vst.msk [vmem:[#allocation3 + $0x48] sm:$0xf] %vm235, 0
      %v419 = vld [vmem:[#allocation3 + $0x4c] sm:$0x1]
      %v420 = vsel %vm241, 0, %v419
      %421 = vst [vmem:[#allocation3 + $0x4c] sm:$0x1] %v420
      %422 = vst.msk [vmem:[#allocation3 + $0x50] sm:$0xf] %vm235, 0
      %423 = vst.msk [vmem:[#allocation3 + $0x54] sm:$0xf] %vm235, 0
      %424 = vst.msk [vmem:[#allocation3 + $0x58] sm:$0xf] %vm235, 0
      %v425 = vld [vmem:[#allocation3 + $0x5c] sm:$0x1]
      %v426 = vsel %vm241, 0, %v425
      %427 = vst [vmem:[#allocation3 + $0x5c] sm:$0x1] %v426
      %428 = vst.msk [vmem:[#allocation3 + $0x60] sm:$0xf] %vm235, 0
      %429 = vst.msk [vmem:[#allocation3 + $0x64] sm:$0xf] %vm235, 0
      %430 = vst.msk [vmem:[#allocation3 + $0x68] sm:$0xf] %vm235, 0
      %v431 = vld [vmem:[#allocation3 + $0x6c] sm:$0x1]
      %v432 = vsel %vm241, 0, %v431
      %433 = vst [vmem:[#allocation3 + $0x6c] sm:$0x1] %v432
      %434 = vst.msk [vmem:[#allocation3 + $0x70] sm:$0xf] %vm235, 0
      %435 = vst.msk [vmem:[#allocation3 + $0x74] sm:$0xf] %vm235, 0
      %436 = vst.msk [vmem:[#allocation3 + $0x78] sm:$0xf] %vm235, 0
      %v437 = vld [vmem:[#allocation3 + $0x7c] sm:$0x1]
      %v438 = vsel %vm241, 0, %v437
      %439 = vst [vmem:[#allocation3 + $0x7c] sm:$0x1] %v438
      %440 = vst.msk [vmem:[#allocation3 + $0x80] sm:$0xf] %vm235, 0
      %441 = vst.msk [vmem:[#allocation3 + $0x84] sm:$0xf] %vm235, 0
      %442 = vst.msk [vmem:[#allocation3 + $0x88] sm:$0xf] %vm235, 0
      %v443 = vld [vmem:[#allocation3 + $0x8c] sm:$0x1]
      %v444 = vsel %vm241, 0, %v443
      %445 = vst [vmem:[#allocation3 + $0x8c] sm:$0x1] %v444
      %446 = vst.msk [vmem:[#allocation3 + $0x90] sm:$0xf] %vm235, 0
      %447 = vst.msk [vmem:[#allocation3 + $0x94] sm:$0xf] %vm235, 0
      %448 = vst.msk [vmem:[#allocation3 + $0x98] sm:$0xf] %vm235, 0
      %v449 = vld [vmem:[#allocation3 + $0x9c] sm:$0x1]
      %v450 = vsel %vm241, 0, %v449
      %451 = vst [vmem:[#allocation3 + $0x9c] sm:$0x1] %v450
      %452 = vst.msk [vmem:[#allocation3 + $0xa0] sm:$0xf] %vm235, 0
      %453 = vst.msk [vmem:[#allocation3 + $0xa4] sm:$0xf] %vm235, 0
      %454 = vst.msk [vmem:[#allocation3 + $0xa8] sm:$0xf] %vm235, 0
      %v455 = vld [vmem:[#allocation3 + $0xac] sm:$0x1]
      %v456 = vsel %vm241, 0, %v455
      %457 = vst [vmem:[#allocation3 + $0xac] sm:$0x1] %v456
      %458 = vst.msk [vmem:[#allocation3 + $0xb0] sm:$0xf] %vm235, 0
      %459 = vst.msk [vmem:[#allocation3 + $0xb4] sm:$0xf] %vm235, 0
      %460 = vst.msk [vmem:[#allocation3 + $0xb8] sm:$0xf] %vm235, 0
      %v461 = vld [vmem:[#allocation3 + $0xbc] sm:$0x1]
      %v462 = vsel %vm241, 0, %v461
      %463 = vst [vmem:[#allocation3 + $0xbc] sm:$0x1] %v462
      %464 = vst.msk [vmem:[#allocation3 + $0xc0] sm:$0xf] %vm235, 0
      %465 = vst.msk [vmem:[#allocation3 + $0xc4] sm:$0xf] %vm235, 0
      %466 = vst.msk [vmem:[#allocation3 + $0xc8] sm:$0xf] %vm235, 0
      %v467 = vld [vmem:[#allocation3 + $0xcc] sm:$0x1]
      %v468 = vsel %vm241, 0, %v467
      %469 = vst [vmem:[#allocation3 + $0xcc] sm:$0x1] %v468
      %470 = vst.msk [vmem:[#allocation3 + $0xd0] sm:$0xf] %vm235, 0
      %471 = vst.msk [vmem:[#allocation3 + $0xd4] sm:$0xf] %vm235, 0
      %472 = vst.msk [vmem:[#allocation3 + $0xd8] sm:$0xf] %vm235, 0
      %v473 = vld [vmem:[#allocation3 + $0xdc] sm:$0x1]
      %v474 = vsel %vm241, 0, %v473
      %475 = vst [vmem:[#allocation3 + $0xdc] sm:$0x1] %v474
      %476 = vst.msk [vmem:[#allocation3 + $0xe0] sm:$0xf] %vm235, 0
      %477 = vst.msk [vmem:[#allocation3 + $0xe4] sm:$0xf] %vm235, 0
      %478 = vst.msk [vmem:[#allocation3 + $0xe8] sm:$0xf] %vm235, 0
      %v479 = vld [vmem:[#allocation3 + $0xec] sm:$0x1]
      %v480 = vsel %vm241, 0, %v479
      %481 = vst [vmem:[#allocation3 + $0xec] sm:$0x1] %v480
      %482 = vst.msk [vmem:[#allocation3 + $0xf0] sm:$0xf] %vm235, 0
      %483 = vst.msk [vmem:[#allocation3 + $0xf4] sm:$0xf] %vm235, 0
      %484 = vst.msk [vmem:[#allocation3 + $0xf8] sm:$0xf] %vm235, 0
      %v485 = vld [vmem:[#allocation3 + $0xfc] sm:$0x1]
      %v486 = vsel %vm241, 0, %v485
      %487 = vst [vmem:[#allocation3 + $0xfc] sm:$0x1] %v486
      %488 = vst.msk [vmem:[#allocation3 + $0x100] sm:$0xf] %vm235, 0
      %489 = vst.msk [vmem:[#allocation3 + $0x104] sm:$0xf] %vm235, 0
      %490 = vst.msk [vmem:[#allocation3 + $0x108] sm:$0xf] %vm235, 0
      %v491 = vld [vmem:[#allocation3 + $0x10c] sm:$0x1]
      %v492 = vsel %vm241, 0, %v491
      %493 = vst [vmem:[#allocation3 + $0x10c] sm:$0x1] %v492
      %494 = vst.msk [vmem:[#allocation3 + $0x110] sm:$0xf] %vm235, 0
      %495 = vst.msk [vmem:[#allocation3 + $0x114] sm:$0xf] %vm235, 0
      %496 = vst.msk [vmem:[#allocation3 + $0x118] sm:$0xf] %vm235, 0
      %v497 = vld [vmem:[#allocation3 + $0x11c] sm:$0x1]
      %v498 = vsel %vm241, 0, %v497
      %499 = vst [vmem:[#allocation3 + $0x11c] sm:$0x1] %v498
      %500 = vst.msk [vmem:[#allocation3 + $0x120] sm:$0xf] %vm235, 0
      %501 = vst.msk [vmem:[#allocation3 + $0x124] sm:$0xf] %vm235, 0
      %502 = vst.msk [vmem:[#allocation3 + $0x128] sm:$0xf] %vm235, 0
      %v503 = vld [vmem:[#allocation3 + $0x12c] sm:$0x1]
      %v504 = vsel %vm241, 0, %v503
      %505 = vst [vmem:[#allocation3 + $0x12c] sm:$0x1] %v504
      %506 = vst.msk [vmem:[#allocation3 + $0x130] sm:$0xf] %vm235, 0
      %507 = vst.msk [vmem:[#allocation3 + $0x134] sm:$0xf] %vm235, 0
      %508 = vst.msk [vmem:[#allocation3 + $0x138] sm:$0xf] %vm235, 0
      %v509 = vld [vmem:[#allocation3 + $0x13c] sm:$0x1]
      %v510 = vsel %vm241, 0, %v509
      %511 = vst [vmem:[#allocation3 + $0x13c] sm:$0x1] %v510
      %s512 = scalar_lea.vmem [#allocation3], 32
      %513 = vst.msk [vmem:[%s512 + $0x8] sm:$0xf] %vm235, %v376
      %514 = vst.msk [vmem:[%s512 + $0x18] sm:$0xf] %vm235, %v377
      %515 = vst.msk [vmem:[%s512 + $0x28] sm:$0xf] %vm235, %v378
      %516 = vst.msk [vmem:[%s512 + $0x38] sm:$0xf] %vm235, %v379
      %517 = vst.msk [vmem:[%s512 + $0x48] sm:$0xf] %vm235, %v380
      %518 = vst.msk [vmem:[%s512 + $0x58] sm:$0xf] %vm235, %v381
      %519 = vst.msk [vmem:[%s512 + $0x68] sm:$0xf] %vm235, %v382
      %520 = vst.msk [vmem:[%s512 + $0x78] sm:$0xf] %vm235, %v383
      %521 = vst.msk [vmem:[%s512 + $0x88] sm:$0xf] %vm235, %v384
      %522 = vst.msk [vmem:[%s512 + $0x98] sm:$0xf] %vm235, %v385
      %523 = vst.msk [vmem:[%s512 + $0xa8] sm:$0xf] %vm235, %v386
      %524 = vst.msk [vmem:[%s512 + $0xb8] sm:$0xf] %vm235, %v387
      %525 = vst.msk [vmem:[%s512 + $0xc8] sm:$0xf] %vm235, %v388
      %526 = vst.msk [vmem:[%s512 + $0xd8] sm:$0xf] %vm235, %v389
      %527 = vst.msk [vmem:[%s512 + $0xe8] sm:$0xf] %vm235, %v390
      %528 = vst.msk [vmem:[%s512 + $0xf8] sm:$0xf] %vm235, %v391
      %v529 = vld [vmem:[#allocation2 + $0x4] sm:$0xf]
      %v530 = vld [vmem:[#allocation2 + $0x8] sm:$0xf]
      %v531 = vld [vmem:[#allocation2 + $0xc] sm:$0x1]
      %v532 = vld [vmem:[#allocation2 + $0x24] sm:$0xf]
      %v533 = vld [vmem:[#allocation2 + $0x28] sm:$0xf]
      %v534 = vld [vmem:[#allocation2 + $0x2c] sm:$0x1]
      %v535 = vld [vmem:[#allocation2 + $0x44] sm:$0xf]
      %v536 = vld [vmem:[#allocation2 + $0x48] sm:$0xf]
      %v537 = vld [vmem:[#allocation2 + $0x4c] sm:$0x1]
      %v538 = vld [vmem:[#allocation2 + $0x64] sm:$0xf]
      %v539 = vld [vmem:[#allocation2 + $0x68] sm:$0xf]
      %v540 = vld [vmem:[#allocation2 + $0x6c] sm:$0x1]
      %v541 = vld [vmem:[#allocation2 + $0x84] sm:$0xf]
      %v542 = vld [vmem:[#allocation2 + $0x88] sm:$0xf]
      %v543 = vld [vmem:[#allocation2 + $0x8c] sm:$0x1]
      %v544 = vld [vmem:[#allocation2 + $0xa4] sm:$0xf]
      %v545 = vld [vmem:[#allocation2 + $0xa8] sm:$0xf]
      %v546 = vld [vmem:[#allocation2 + $0xac] sm:$0x1]
      %v547 = vld [vmem:[#allocation2 + $0xc4] sm:$0xf]
      %v548 = vld [vmem:[#allocation2 + $0xc8] sm:$0xf]
      %v549 = vld [vmem:[#allocation2 + $0xcc] sm:$0x1]
      %v550 = vld [vmem:[#allocation2 + $0xe4] sm:$0xf]
      %v551 = vld [vmem:[#allocation2 + $0xe8] sm:$0xf]
      %v552 = vld [vmem:[#allocation2 + $0xec] sm:$0x1]
      %v553 = vld [vmem:[#allocation3 + $0x4] sm:$0xf]
      %v554 = vld [vmem:[#allocation3 + $0x8] sm:$0xf]
      %v555 = vld [vmem:[#allocation3 + $0x24] sm:$0xf]
      %v556 = vld [vmem:[#allocation3 + $0x28] sm:$0xf]
      %v557 = vld [vmem:[#allocation3 + $0x44] sm:$0xf]
      %v558 = vld [vmem:[#allocation3 + $0x48] sm:$0xf]
      %v559 = vld [vmem:[#allocation3 + $0x64] sm:$0xf]
      %v560 = vld [vmem:[#allocation3 + $0x68] sm:$0xf]
      %v561 = vld [vmem:[#allocation3 + $0x84] sm:$0xf]
      %v562 = vld [vmem:[#allocation3 + $0x88] sm:$0xf]
      %v563 = vld [vmem:[#allocation3 + $0xa4] sm:$0xf]
      %v564 = vld [vmem:[#allocation3 + $0xa8] sm:$0xf]
      %v565 = vld [vmem:[#allocation3 + $0xc4] sm:$0xf]
      %v566 = vld [vmem:[#allocation3 + $0xc8] sm:$0xf]
      %v567 = vld [vmem:[#allocation3 + $0xe4] sm:$0xf]
      %v568 = vld [vmem:[#allocation3 + $0xe8] sm:$0xf]
      %vm569 = vsmask.f32 4368
      %vm570 = vmor %vm240, %vm569
      %v572 = vshrl.u32 %v529, 16
      %v574 = vrot.slane %v572, 7
      %v575 = vrot.slane %v574, 4
      %v577 = vshrl.u32 %v530, 16
      %v579 = vrot.slane %v577, 7
      %v580 = vshll.u32 %v530, 16
      %v582 = vor.u32 %v579, %v580
      %v583 = vsel %vm570, %v575, %v582
      %v585 = vshrl.u32 %v532, 16
      %v587 = vrot.slane %v585, 7
      %v588 = vrot.slane %v587, 4
      %v590 = vshrl.u32 %v533, 16
      %v592 = vrot.slane %v590, 7
      %v593 = vshll.u32 %v533, 16
      %v595 = vor.u32 %v592, %v593
      %v596 = vsel %vm570, %v588, %v595
      %v598 = vshrl.u32 %v535, 16
      %v600 = vrot.slane %v598, 7
      %v601 = vrot.slane %v600, 4
      %v603 = vshrl.u32 %v536, 16
      %v605 = vrot.slane %v603, 7
      %v606 = vshll.u32 %v536, 16
      %v608 = vor.u32 %v605, %v606
      %v609 = vsel %vm570, %v601, %v608
      %v611 = vshrl.u32 %v538, 16
      %v613 = vrot.slane %v611, 7
      %v614 = vrot.slane %v613, 4
      %v616 = vshrl.u32 %v539, 16
      %v618 = vrot.slane %v616, 7
      %v619 = vshll.u32 %v539, 16
      %v621 = vor.u32 %v618, %v619
      %v622 = vsel %vm570, %v614, %v621
      %v624 = vshrl.u32 %v541, 16
      %v626 = vrot.slane %v624, 7
      %v627 = vrot.slane %v626, 4
      %v629 = vshrl.u32 %v542, 16
      %v631 = vrot.slane %v629, 7
      %v632 = vshll.u32 %v542, 16
      %v634 = vor.u32 %v631, %v632
      %v635 = vsel %vm570, %v627, %v634
      %v637 = vshrl.u32 %v544, 16
      %v639 = vrot.slane %v637, 7
      %v640 = vrot.slane %v639, 4
      %v642 = vshrl.u32 %v545, 16
      %v644 = vrot.slane %v642, 7
      %v645 = vshll.u32 %v545, 16
      %v647 = vor.u32 %v644, %v645
      %v648 = vsel %vm570, %v640, %v647
      %v650 = vshrl.u32 %v547, 16
      %v652 = vrot.slane %v650, 7
      %v653 = vrot.slane %v652, 4
      %v655 = vshrl.u32 %v548, 16
      %v657 = vrot.slane %v655, 7
      %v658 = vshll.u32 %v548, 16
      %v660 = vor.u32 %v657, %v658
      %v661 = vsel %vm570, %v653, %v660
      %v663 = vshrl.u32 %v550, 16
      %v665 = vrot.slane %v663, 7
      %v666 = vrot.slane %v665, 4
      %v668 = vshrl.u32 %v551, 16
      %v670 = vrot.slane %v668, 7
      %v671 = vshll.u32 %v551, 16
      %v673 = vor.u32 %v670, %v671
      %v674 = vsel %vm570, %v666, %v673
      %v675 = vld [vmem:[%s2] sm:$0x3]
      %v677 = vshrl.u32 %v553, 16
      %v679 = vrot.slane %v677, 7
      %v680 = vrot.slane %v679, 4
      %v682 = vshrl.u32 %v554, 16
      %v684 = vrot.slane %v682, 7
      %v685 = vshll.u32 %v554, 16
      %v687 = vor.u32 %v684, %v685
      %v688 = vsel %vm570, %v680, %v687
      %v690 = vshrl.u32 %v555, 16
      %v692 = vrot.slane %v690, 7
      %v693 = vrot.slane %v692, 4
      %v695 = vshrl.u32 %v556, 16
      %v697 = vrot.slane %v695, 7
      %v698 = vshll.u32 %v556, 16
      %v700 = vor.u32 %v697, %v698
      %v701 = vsel %vm570, %v693, %v700
      %v703 = vshrl.u32 %v557, 16
      %v705 = vrot.slane %v703, 7
      %v706 = vrot.slane %v705, 4
      %v708 = vshrl.u32 %v558, 16
      %v710 = vrot.slane %v708, 7
      %v711 = vshll.u32 %v558, 16
      %v713 = vor.u32 %v710, %v711
      %v714 = vsel %vm570, %v706, %v713
      %v716 = vshrl.u32 %v559, 16
      %v718 = vrot.slane %v716, 7
      %v719 = vrot.slane %v718, 4
      %v721 = vshrl.u32 %v560, 16
      %v723 = vrot.slane %v721, 7
      %v724 = vshll.u32 %v560, 16
      %v726 = vor.u32 %v723, %v724
      %v727 = vsel %vm570, %v719, %v726
      %v729 = vshrl.u32 %v561, 16
      %v731 = vrot.slane %v729, 7
      %v732 = vrot.slane %v731, 4
      %v734 = vshrl.u32 %v562, 16
      %v736 = vrot.slane %v734, 7
      %v737 = vshll.u32 %v562, 16
      %v739 = vor.u32 %v736, %v737
      %v740 = vsel %vm570, %v732, %v739
      %v742 = vshrl.u32 %v563, 16
      %v744 = vrot.slane %v742, 7
      %v745 = vrot.slane %v744, 4
      %v747 = vshrl.u32 %v564, 16
      %v749 = vrot.slane %v747, 7
      %v750 = vshll.u32 %v564, 16
      %v752 = vor.u32 %v749, %v750
      %v753 = vsel %vm570, %v745, %v752
      %v755 = vshrl.u32 %v565, 16
      %v757 = vrot.slane %v755, 7
      %v758 = vrot.slane %v757, 4
      %v760 = vshrl.u32 %v566, 16
      %v762 = vrot.slane %v760, 7
      %v763 = vshll.u32 %v566, 16
      %v765 = vor.u32 %v762, %v763
      %v766 = vsel %vm570, %v758, %v765
      %v768 = vshrl.u32 %v567, 16
      %v770 = vrot.slane %v768, 7
      %v771 = vrot.slane %v770, 4
      %v773 = vshrl.u32 %v568, 16
      %v775 = vrot.slane %v773, 7
      %v776 = vshll.u32 %v568, 16
      %v778 = vor.u32 %v775, %v776
      %v779 = vsel %vm570, %v771, %v778
      %v780 = vld [vmem:[%s2] sm:$0x6]
      %v781 = vunpack.c.l.b16 %v688
      %v782 = vunpack.c.l.b16 %v701
      %v783 = vunpack.c.l.b16 %v714
      %v784 = vunpack.c.l.b16 %v727
      %v785 = vunpack.c.l.b16 %v740
      %v786 = vunpack.c.l.b16 %v753
      %v787 = vunpack.c.l.b16 %v766
      %v788 = vunpack.c.l.b16 %v779
      %v789 = vpack.c.b16 %v782, %v781
      %v790 = vpack.c.b16 %v784, %v783
      %v791 = vpack.c.b16 %v786, %v785
      %v792 = vpack.c.b16 %v788, %v787
      %v794 = vunpack.c.l.b16 %v780
      %v795 = vpack.c.b16 %v794, %v794
      %v797 = vshrl.u32 %v795, 16
      %v799 = vrot.slane %v797, 1
      %v800 = vshll.u32 %v795, 16
      %v802 = vrot.slane %v800, 2
      %v803 = vor.u32 %v799, %v802
      %vm804 = vcmask 23552
      %v806 = vsel %vm804, %v789, 0
      %v809 = vsel %vm804, %v790, 0
      %v812 = vsel %vm804, %v791, 0
      %v815 = vsel %vm804, %v792, 0
      %vm817 = vcmask 1040384
      %vm818 = vcmask 1041408
      %v819 = vsel %vm817, 4294967295, 65535
      %v820 = vsel %vm818, %v819, 0
      %v822 = vand.u32 %v803, %v820
      %824 = vmatprep.subr.bf16.mxu0 0
      %825 = vmatpush1.bf16.msra.mxu0 %v822
      %826 = vmatprep.subr.bf16.mxu0 0
      %827 = vmatpush1.bf16.msra.mxu0 0
      %828 = vmatprep.subr.bf16.mxu0 0
      %829 = vmatpush1.bf16.msra.mxu0 0
      %830 = vmatprep.subr.bf16.mxu0 0
      %831 = vmatpush1.bf16.msra.mxu0 0
      %832 = vmatprep.subr.bf16.mxu0 0
      %833 = vmatpush1.bf16.msra.mxu0 0
      %834 = vmatprep.subr.bf16.mxu0 0
      %835 = vmatpush1.bf16.msra.mxu0 0
      %836 = vmatprep.subr.bf16.mxu0 0
      %837 = vmatpush1.bf16.msra.mxu0 0
      %838 = vmatprep.subr.bf16.mxu0 0
      %839 = vmatpush1.bf16.msra.mxu0 0
      %840 = vmatprep.subr.bf16.mxu0 0
      %841 = vmatpush1.bf16.msra.mxu0 0
      %842 = vmatprep.subr.bf16.mxu0 0
      %843 = vmatpush1.bf16.msra.mxu0 0
      %844 = vmatprep.subr.bf16.mxu0 0
      %845 = vmatpush1.bf16.msra.mxu0 0
      %846 = vmatprep.subr.bf16.mxu0 0
      %847 = vmatpush1.bf16.msra.mxu0 0
      %848 = vmatprep.subr.bf16.mxu0 0
      %849 = vmatpush1.bf16.msra.mxu0 0
      %850 = vmatprep.subr.bf16.mxu0 0
      %851 = vmatpush1.bf16.msra.mxu0 0
      %852 = vmatprep.subr.bf16.mxu0 0
      %853 = vmatpush1.bf16.msra.mxu0 0
      %854 = vmatprep.subr.bf16.mxu0 0
      %855 = vmatpush1.bf16.msra.mxu0 0
      %856 = vmatprep.mubr.bf16.mxu0 0
      %857 = vmatmul.mubr.bf16.gmra.mrb[0].mxu0 %v806
      %v858 = vpop.f32.mrb[0].mxu0
      %v859 = vadd.f32 0.0, %v858
      %v860 = vpop.f32.mrb[0].mxu0
      %v861 = vpop.f32.mrb[0].mxu0
      %v862 = vadd.f32 0.0, %v861
      %v863 = vpop.f32.mrb[0].mxu0
      %864 = vmatprep.mubr.bf16.mxu0 0
      %865 = vmatmul.mubr.bf16.gmra.mrb[0].mxu0 %v809
      %v866 = vpop.f32.mrb[0].mxu0
      %v867 = vadd.f32 0.0, %v866
      %v868 = vpop.f32.mrb[0].mxu0
      %v869 = vpop.f32.mrb[0].mxu0
      %v870 = vadd.f32 0.0, %v869
      %v871 = vpop.f32.mrb[0].mxu0
      %872 = vmatprep.mubr.bf16.mxu0 0
      %873 = vmatmul.mubr.bf16.gmra.mrb[0].mxu0 %v812
      %v874 = vpop.f32.mrb[0].mxu0
      %v875 = vadd.f32 0.0, %v874
      %v876 = vpop.f32.mrb[0].mxu0
      %v877 = vpop.f32.mrb[0].mxu0
      %v878 = vadd.f32 0.0, %v877
      %v879 = vpop.f32.mrb[0].mxu0
      %880 = vmatprep.mubr.bf16.mxu0 0
      %881 = vmatmul.mubr.bf16.gmra.mrb[0].mxu0 %v815
      %v882 = vpop.f32.mrb[0].mxu0
      %v883 = vadd.f32 0.0, %v882
      %v884 = vpop.f32.mrb[0].mxu0
      %v885 = vpop.f32.mrb[0].mxu0
      %v886 = vadd.f32 0.0, %v885
      %v887 = vpop.f32.mrb[0].mxu0
      %888 = vdwg.mxu0
      %v889 = vunpack.c.l.b16 %v583
      %v890 = vunpack.c.l.b16 %v596
      %v891 = vunpack.c.l.b16 %v609
      %v892 = vunpack.c.l.b16 %v622
      %v893 = vunpack.c.l.b16 %v635
      %v894 = vunpack.c.l.b16 %v648
      %v895 = vunpack.c.l.b16 %v661
      %v896 = vunpack.c.l.b16 %v674
      %v897 = vpack.c.b16 %v890, %v889
      %v898 = vpack.c.b16 %v892, %v891
      %v899 = vpack.c.b16 %v894, %v893
      %v900 = vpack.c.b16 %v896, %v895
      %v902 = vsel %vm804, %v897, 0
      %v905 = vsel %vm804, %v898, 0
      %v908 = vsel %vm804, %v899, 0
      %v911 = vsel %vm804, %v900, 0
      %v914 = vand.u32 %v675, %v820
      %916 = vmatprep.subr.bf16.mxu0 0
      %917 = vmatpush1.bf16.msra.mxu0 %v914
      %918 = vmatprep.subr.bf16.mxu0 0
      %919 = vmatpush1.bf16.msra.mxu0 0
      %920 = vmatprep.subr.bf16.mxu0 0
      %921 = vmatpush1.bf16.msra.mxu0 0
      %922 = vmatprep.subr.bf16.mxu0 0
      %923 = vmatpush1.bf16.msra.mxu0 0
      %924 = vmatprep.subr.bf16.mxu0 0
      %925 = vmatpush1.bf16.msra.mxu0 0
      %926 = vmatprep.subr.bf16.mxu0 0
      %927 = vmatpush1.bf16.msra.mxu0 0
      %928 = vmatprep.subr.bf16.mxu0 0
      %929 = vmatpush1.bf16.msra.mxu0 0
      %930 = vmatprep.subr.bf16.mxu0 0
      %931 = vmatpush1.bf16.msra.mxu0 0
      %932 = vmatprep.subr.bf16.mxu0 0
      %933 = vmatpush1.bf16.msra.mxu0 0
      %934 = vmatprep.subr.bf16.mxu0 0
      %935 = vmatpush1.bf16.msra.mxu0 0
      %936 = vmatprep.subr.bf16.mxu0 0
      %937 = vmatpush1.bf16.msra.mxu0 0
      %938 = vmatprep.subr.bf16.mxu0 0
      %939 = vmatpush1.bf16.msra.mxu0 0
      %940 = vmatprep.subr.bf16.mxu0 0
      %941 = vmatpush1.bf16.msra.mxu0 0
      %942 = vmatprep.subr.bf16.mxu0 0
      %943 = vmatpush1.bf16.msra.mxu0 0
      %944 = vmatprep.subr.bf16.mxu0 0
      %945 = vmatpush1.bf16.msra.mxu0 0
      %946 = vmatprep.subr.bf16.mxu0 0
      %947 = vmatpush1.bf16.msra.mxu0 0
      %948 = vmatprep.mubr.bf16.mxu0 0
      %949 = vmatmul.mubr.bf16.gmra.mrb[0].mxu0 %v902
      %v950 = vpop.f32.mrb[0].mxu0
      %v951 = vadd.f32 %v859, %v950
      %v952 = vpop.f32.mrb[0].mxu0
      %v953 = vpop.f32.mrb[0].mxu0
      %v954 = vadd.f32 %v862, %v953
      %v955 = vpop.f32.mrb[0].mxu0
      %956 = vmatprep.mubr.bf16.mxu0 0
      %957 = vmatmul.mubr.bf16.gmra.mrb[0].mxu0 %v905
      %v958 = vpop.f32.mrb[0].mxu0
      %v959 = vadd.f32 %v867, %v958
      %v960 = vpop.f32.mrb[0].mxu0
      %v961 = vpop.f32.mrb[0].mxu0
      %v962 = vadd.f32 %v870, %v961
      %v963 = vpop.f32.mrb[0].mxu0
      %964 = vmatprep.mubr.bf16.mxu0 0
      %965 = vmatmul.mubr.bf16.gmra.mrb[0].mxu0 %v908
      %v966 = vpop.f32.mrb[0].mxu0
      %v967 = vadd.f32 %v875, %v966
      %v968 = vpop.f32.mrb[0].mxu0
      %v969 = vpop.f32.mrb[0].mxu0
      %v970 = vadd.f32 %v878, %v969
      %v971 = vpop.f32.mrb[0].mxu0
      %972 = vmatprep.mubr.bf16.mxu0 0
      %973 = vmatmul.mubr.bf16.gmra.mrb[0].mxu0 %v911
      %v974 = vpop.f32.mrb[0].mxu0
      %v975 = vadd.f32 %v883, %v974
      %v976 = vpop.f32.mrb[0].mxu0
      %v977 = vpop.f32.mrb[0].mxu0
      %v978 = vadd.f32 %v886, %v977
      %v979 = vpop.f32.mrb[0].mxu0
      %980 = vdwg.mxu0
      %v981 = vld [vmem:[%s2] sm:$0x8]
      %v982 = vld [vmem:[%s2 + $0x4] sm:$0x1]
      %v991 = vunpack.c.l.b16 %v530
      %v992 = vunpack.c.l.b16 %v533
      %v993 = vunpack.c.l.b16 %v536
      %v994 = vunpack.c.l.b16 %v539
      %v995 = vunpack.c.l.b16 %v542
      %v996 = vunpack.c.l.b16 %v545
      %v997 = vunpack.c.l.b16 %v548
      %v998 = vunpack.c.l.b16 %v551
      %v999 = vpack.c.b16 %v992, %v991
      %v1000 = vpack.c.b16 %v994, %v993
      %v1001 = vpack.c.b16 %v996, %v995
      %v1002 = vpack.c.b16 %v998, %v997
      %v1005 = vunpack.c.l.b16 %v981
      %v1006 = vunpack.c.l.b16 %v982
      %v1007 = vpack.c.b16 %v1006, %v1005
      %v1008 = vrot.slane %v1007, 3
      %v1010 = vsel %vm804, %v999, 0
      %v1013 = vsel %vm804, %v1000, 0
      %v1016 = vsel %vm804, %v1001, 0
      %v1019 = vsel %vm804, %v1002, 0
      %v1022 = vand.u32 %v1008, %v820
      %1024 = vmatprep.subr.bf16.mxu0 0
      %1025 = vmatpush1.bf16.msra.mxu0 %v1022
      %1026 = vmatprep.subr.bf16.mxu0 0
      %1027 = vmatpush1.bf16.msra.mxu0 0
      %1028 = vmatprep.subr.bf16.mxu0 0
      %1029 = vmatpush1.bf16.msra.mxu0 0
      %1030 = vmatprep.subr.bf16.mxu0 0
      %1031 = vmatpush1.bf16.msra.mxu0 0
      %1032 = vmatprep.subr.bf16.mxu0 0
      %1033 = vmatpush1.bf16.msra.mxu0 0
      %1034 = vmatprep.subr.bf16.mxu0 0
      %1035 = vmatpush1.bf16.msra.mxu0 0
      %1036 = vmatprep.subr.bf16.mxu0 0
      %1037 = vmatpush1.bf16.msra.mxu0 0
      %1038 = vmatprep.subr.bf16.mxu0 0
      %1039 = vmatpush1.bf16.msra.mxu0 0
      %1040 = vmatprep.subr.bf16.mxu0 0
      %1041 = vmatpush1.bf16.msra.mxu0 0
      %1042 = vmatprep.subr.bf16.mxu0 0
      %1043 = vmatpush1.bf16.msra.mxu0 0
      %1044 = vmatprep.subr.bf16.mxu0 0
      %1045 = vmatpush1.bf16.msra.mxu0 0
      %1046 = vmatprep.subr.bf16.mxu0 0
      %1047 = vmatpush1.bf16.msra.mxu0 0
      %1048 = vmatprep.subr.bf16.mxu0 0
      %1049 = vmatpush1.bf16.msra.mxu0 0
      %1050 = vmatprep.subr.bf16.mxu0 0
      %1051 = vmatpush1.bf16.msra.mxu0 0
      %1052 = vmatprep.subr.bf16.mxu0 0
      %1053 = vmatpush1.bf16.msra.mxu0 0
      %1054 = vmatprep.subr.bf16.mxu0 0
      %1055 = vmatpush1.bf16.msra.mxu0 0
      %1056 = vmatprep.mubr.bf16.mxu0 0
      %1057 = vmatmul.mubr.bf16.gmra.mrb[0].mxu0 %v1010
      %v1058 = vpop.f32.mrb[0].mxu0
      %v1059 = vadd.f32 0.0, %v1058
      %v1060 = vpop.f32.mrb[0].mxu0
      %v1061 = vpop.f32.mrb[0].mxu0
      %v1062 = vadd.f32 0.0, %v1061
      %v1063 = vpop.f32.mrb[0].mxu0
      %1064 = vmatprep.mubr.bf16.mxu0 0
      %1065 = vmatmul.mubr.bf16.gmra.mrb[0].mxu0 %v1013
      %v1066 = vpop.f32.mrb[0].mxu0
      %v1067 = vadd.f32 0.0, %v1066
      %v1068 = vpop.f32.mrb[0].mxu0
      %v1069 = vpop.f32.mrb[0].mxu0
      %v1070 = vadd.f32 0.0, %v1069
      %v1071 = vpop.f32.mrb[0].mxu0
      %1072 = vmatprep.mubr.bf16.mxu0 0
      %1073 = vmatmul.mubr.bf16.gmra.mrb[0].mxu0 %v1016
      %v1074 = vpop.f32.mrb[0].mxu0
      %v1075 = vadd.f32 0.0, %v1074
      %v1076 = vpop.f32.mrb[0].mxu0
      %v1077 = vpop.f32.mrb[0].mxu0
      %v1078 = vadd.f32 0.0, %v1077
      %v1079 = vpop.f32.mrb[0].mxu0
      %1080 = vmatprep.mubr.bf16.mxu0 0
      %1081 = vmatmul.mubr.bf16.gmra.mrb[0].mxu0 %v1019
      %v1082 = vpop.f32.mrb[0].mxu0
      %v1083 = vadd.f32 0.0, %v1082
      %v1084 = vpop.f32.mrb[0].mxu0
      %v1085 = vpop.f32.mrb[0].mxu0
      %v1086 = vadd.f32 0.0, %v1085
      %v1087 = vpop.f32.mrb[0].mxu0
      %1088 = vdwg.mxu0
      %v1089 = vadd.f32 %v951, %v1059
      %v1090 = vadd.f32 %v954, %v1062
      %v1091 = vadd.f32 %v959, %v1067
      %v1092 = vadd.f32 %v962, %v1070
      %v1093 = vadd.f32 %v967, %v1075
      %v1094 = vadd.f32 %v970, %v1078
      %v1095 = vadd.f32 %v975, %v1083
      %v1096 = vadd.f32 %v978, %v1086
      %v1097 = vld [vmem:[%s2 + $0x4] sm:$0x3]
      %v1106 = vunpack.c.l.b16 %v554
      %v1107 = vunpack.c.l.b16 %v556
      %v1108 = vunpack.c.l.b16 %v558
      %v1109 = vunpack.c.l.b16 %v560
      %v1110 = vunpack.c.l.b16 %v562
      %v1111 = vunpack.c.l.b16 %v564
      %v1112 = vunpack.c.l.b16 %v566
      %v1113 = vunpack.c.l.b16 %v568
      %v1114 = vpack.c.b16 %v1107, %v1106
      %v1115 = vpack.c.b16 %v1109, %v1108
      %v1116 = vpack.c.b16 %v1111, %v1110
      %v1117 = vpack.c.b16 %v1113, %v1112
      %v1119 = vunpack.c.l.b16 %v1097
      %v1120 = vpack.c.b16 %v1119, %v1119
      %v1122 = vshrl.u32 %v1120, 16
      %v1124 = vshll.u32 %v1120, 16
      %v1126 = vrot.slane %v1124, 1
      %v1127 = vor.u32 %v1122, %v1126
      %v1129 = vsel %vm804, %v1114, 0
      %v1132 = vsel %vm804, %v1115, 0
      %v1135 = vsel %vm804, %v1116, 0
      %v1138 = vsel %vm804, %v1117, 0
      %v1141 = vand.u32 %v1127, %v820
      %1143 = vmatprep.subr.bf16.mxu0 0
      %1144 = vmatpush1.bf16.msra.mxu0 %v1141
      %1145 = vmatprep.subr.bf16.mxu0 0
      %1146 = vmatpush1.bf16.msra.mxu0 0
      %1147 = vmatprep.subr.bf16.mxu0 0
      %1148 = vmatpush1.bf16.msra.mxu0 0
      %1149 = vmatprep.subr.bf16.mxu0 0
      %1150 = vmatpush1.bf16.msra.mxu0 0
      %1151 = vmatprep.subr.bf16.mxu0 0
      %1152 = vmatpush1.bf16.msra.mxu0 0
      %1153 = vmatprep.subr.bf16.mxu0 0
      %1154 = vmatpush1.bf16.msra.mxu0 0
      %1155 = vmatprep.subr.bf16.mxu0 0
      %1156 = vmatpush1.bf16.msra.mxu0 0
      %1157 = vmatprep.subr.bf16.mxu0 0
      %1158 = vmatpush1.bf16.msra.mxu0 0
      %1159 = vmatprep.subr.bf16.mxu0 0
      %1160 = vmatpush1.bf16.msra.mxu0 0
      %1161 = vmatprep.subr.bf16.mxu0 0
      %1162 = vmatpush1.bf16.msra.mxu0 0
      %1163 = vmatprep.subr.bf16.mxu0 0
      %1164 = vmatpush1.bf16.msra.mxu0 0
      %1165 = vmatprep.subr.bf16.mxu0 0
      %1166 = vmatpush1.bf16.msra.mxu0 0
      %1167 = vmatprep.subr.bf16.mxu0 0
      %1168 = vmatpush1.bf16.msra.mxu0 0
      %1169 = vmatprep.subr.bf16.mxu0 0
      %1170 = vmatpush1.bf16.msra.mxu0 0
      %1171 = vmatprep.subr.bf16.mxu0 0
      %1172 = vmatpush1.bf16.msra.mxu0 0
      %1173 = vmatprep.subr.bf16.mxu0 0
      %1174 = vmatpush1.bf16.msra.mxu0 0
      %1175 = vmatprep.mubr.bf16.mxu0 0
      %1176 = vmatmul.mubr.bf16.gmra.mrb[0].mxu0 %v1129
      %v1177 = vpop.f32.mrb[0].mxu0
      %v1178 = vadd.f32 0.0, %v1177
      %v1179 = vpop.f32.mrb[0].mxu0
      %v1180 = vpop.f32.mrb[0].mxu0
      %v1181 = vadd.f32 0.0, %v1180
      %v1182 = vpop.f32.mrb[0].mxu0
      %1183 = vmatprep.mubr.bf16.mxu0 0
      %1184 = vmatmul.mubr.bf16.gmra.mrb[0].mxu0 %v1132
      %v1185 = vpop.f32.mrb[0].mxu0
      %v1186 = vadd.f32 0.0, %v1185
      %v1187 = vpop.f32.mrb[0].mxu0
      %v1188 = vpop.f32.mrb[0].mxu0
      %v1189 = vadd.f32 0.0, %v1188
      %v1190 = vpop.f32.mrb[0].mxu0
      %1191 = vmatprep.mubr.bf16.mxu0 0
      %1192 = vmatmul.mubr.bf16.gmra.mrb[0].mxu0 %v1135
      %v1193 = vpop.f32.mrb[0].mxu0
      %v1194 = vadd.f32 0.0, %v1193
      %v1195 = vpop.f32.mrb[0].mxu0
      %v1196 = vpop.f32.mrb[0].mxu0
      %v1197 = vadd.f32 0.0, %v1196
      %v1198 = vpop.f32.mrb[0].mxu0
      %1199 = vmatprep.mubr.bf16.mxu0 0
      %1200 = vmatmul.mubr.bf16.gmra.mrb[0].mxu0 %v1138
      %v1201 = vpop.f32.mrb[0].mxu0
      %v1202 = vadd.f32 0.0, %v1201
      %v1203 = vpop.f32.mrb[0].mxu0
      %v1204 = vpop.f32.mrb[0].mxu0
      %v1205 = vadd.f32 0.0, %v1204
      %v1206 = vpop.f32.mrb[0].mxu0
      %1207 = vdwg.mxu0
      %v1208 = vadd.f32 %v1089, %v1178
      %v1209 = vadd.f32 %v1090, %v1181
      %v1210 = vadd.f32 %v1091, %v1186
      %v1211 = vadd.f32 %v1092, %v1189
      %v1212 = vadd.f32 %v1093, %v1194
      %v1213 = vadd.f32 %v1094, %v1197
      %v1214 = vadd.f32 %v1095, %v1202
      %v1215 = vadd.f32 %v1096, %v1205
      %vm1216 = vsmask.f32 3328
      %vm1217 = vsmask.f32 7440
      %vm1218 = vmor %vm1216, %vm1217
      %v1219 = vrot.slane %v577, 4
      %v1220 = vrot.slane %v580, 5
      %v1221 = vor.u32 %v1219, %v1220
      %v1222 = vrot.slane %v1221, 4
      %v1224 = vshll.u32 %v531, 16
      %v1226 = vrot.slane %v1224, 5
      %v1227 = vsel %vm1218, %v1222, %v1226
      %v1228 = vrot.slane %v590, 4
      %v1229 = vrot.slane %v593, 5
      %v1230 = vor.u32 %v1228, %v1229
      %v1231 = vrot.slane %v1230, 4
      %v1233 = vshll.u32 %v534, 16
      %v1235 = vrot.slane %v1233, 5
      %v1236 = vsel %vm1218, %v1231, %v1235
      %v1237 = vrot.slane %v603, 4
      %v1238 = vrot.slane %v606, 5
      %v1239 = vor.u32 %v1237, %v1238
      %v1240 = vrot.slane %v1239, 4
      %v1242 = vshll.u32 %v537, 16
      %v1244 = vrot.slane %v1242, 5
      %v1245 = vsel %vm1218, %v1240, %v1244
      %v1246 = vrot.slane %v616, 4
      %v1247 = vrot.slane %v619, 5
      %v1248 = vor.u32 %v1246, %v1247
      %v1249 = vrot.slane %v1248, 4
      %v1251 = vshll.u32 %v540, 16
      %v1253 = vrot.slane %v1251, 5
      %v1254 = vsel %vm1218, %v1249, %v1253
      %v1255 = vrot.slane %v629, 4
      %v1256 = vrot.slane %v632, 5
      %v1257 = vor.u32 %v1255, %v1256
      %v1258 = vrot.slane %v1257, 4
      %v1260 = vshll.u32 %v543, 16
      %v1262 = vrot.slane %v1260, 5
      %v1263 = vsel %vm1218, %v1258, %v1262
      %v1264 = vrot.slane %v642, 4
      %v1265 = vrot.slane %v645, 5
      %v1266 = vor.u32 %v1264, %v1265
      %v1267 = vrot.slane %v1266, 4
      %v1269 = vshll.u32 %v546, 16
      %v1271 = vrot.slane %v1269, 5
      %v1272 = vsel %vm1218, %v1267, %v1271
      %v1273 = vrot.slane %v655, 4
      %v1274 = vrot.slane %v658, 5
      %v1275 = vor.u32 %v1273, %v1274
      %v1276 = vrot.slane %v1275, 4
      %v1278 = vshll.u32 %v549, 16
      %v1280 = vrot.slane %v1278, 5
      %v1281 = vsel %vm1218, %v1276, %v1280
      %v1282 = vrot.slane %v668, 4
      %v1283 = vrot.slane %v671, 5
      %v1284 = vor.u32 %v1282, %v1283
      %v1285 = vrot.slane %v1284, 4
      %v1287 = vshll.u32 %v552, 16
      %v1289 = vrot.slane %v1287, 5
      %v1290 = vsel %vm1218, %v1285, %v1289
      %v1291 = vld [vmem:[%s2 + $0x4] sm:$0xc]
      %v1292 = vunpack.c.l.b16 %v1227
      %v1293 = vunpack.c.l.b16 %v1236
      %v1294 = vunpack.c.l.b16 %v1245
      %v1295 = vunpack.c.l.b16 %v1254
      %v1296 = vunpack.c.l.b16 %v1263
      %v1297 = vunpack.c.l.b16 %v1272
      %v1298 = vunpack.c.l.b16 %v1281
      %v1299 = vunpack.c.l.b16 %v1290
      %v1300 = vpack.c.b16 %v1293, %v1292
      %v1301 = vpack.c.b16 %v1295, %v1294
      %v1302 = vpack.c.b16 %v1297, %v1296
      %v1303 = vpack.c.b16 %v1299, %v1298
      %v1305 = vunpack.c.l.b16 %v1291
      %v1306 = vpack.c.b16 %v1305, %v1305
      %v1307 = vrot.slane %v1306, 2
      %v1309 = vsel %vm804, %v1300, 0
      %v1312 = vsel %vm804, %v1301, 0
      %v1315 = vsel %vm804, %v1302, 0
      %v1318 = vsel %vm804, %v1303, 0
      %v1321 = vand.u32 %v1307, %v820
      %1323 = vmatprep.subr.bf16.mxu0 0
      %1324 = vmatpush1.bf16.msra.mxu0 %v1321
      %1325 = vmatprep.subr.bf16.mxu0 0
      %1326 = vmatpush1.bf16.msra.mxu0 0
      %1327 = vmatprep.subr.bf16.mxu0 0
      %1328 = vmatpush1.bf16.msra.mxu0 0
      %1329 = vmatprep.subr.bf16.mxu0 0
      %1330 = vmatpush1.bf16.msra.mxu0 0
      %1331 = vmatprep.subr.bf16.mxu0 0
      %1332 = vmatpush1.bf16.msra.mxu0 0
      %1333 = vmatprep.subr.bf16.mxu0 0
      %1334 = vmatpush1.bf16.msra.mxu0 0
      %1335 = vmatprep.subr.bf16.mxu0 0
      %1336 = vmatpush1.bf16.msra.mxu0 0
      %1337 = vmatprep.subr.bf16.mxu0 0
      %1338 = vmatpush1.bf16.msra.mxu0 0
      %1339 = vmatprep.subr.bf16.mxu0 0
      %1340 = vmatpush1.bf16.msra.mxu0 0
      %1341 = vmatprep.subr.bf16.mxu0 0
      %1342 = vmatpush1.bf16.msra.mxu0 0
      %1343 = vmatprep.subr.bf16.mxu0 0
      %1344 = vmatpush1.bf16.msra.mxu0 0
      %1345 = vmatprep.subr.bf16.mxu0 0
      %1346 = vmatpush1.bf16.msra.mxu0 0
      %1347 = vmatprep.subr.bf16.mxu0 0
      %1348 = vmatpush1.bf16.msra.mxu0 0
      %1349 = vmatprep.subr.bf16.mxu0 0
      %1350 = vmatpush1.bf16.msra.mxu0 0
      %1351 = vmatprep.subr.bf16.mxu0 0
      %1352 = vmatpush1.bf16.msra.mxu0 0
      %1353 = vmatprep.subr.bf16.mxu0 0
      %1354 = vmatpush1.bf16.msra.mxu0 0
      %1355 = vmatprep.mubr.bf16.mxu0 0
      %1356 = vmatmul.mubr.bf16.gmra.mrb[0].mxu0 %v1309
      %v1357 = vpop.f32.mrb[0].mxu0
      %v1358 = vadd.f32 0.0, %v1357
      %v1359 = vpop.f32.mrb[0].mxu0
      %v1360 = vpop.f32.mrb[0].mxu0
      %v1361 = vadd.f32 0.0, %v1360
      %v1362 = vpop.f32.mrb[0].mxu0
      %1363 = vmatprep.mubr.bf16.mxu0 0
      %1364 = vmatmul.mubr.bf16.gmra.mrb[0].mxu0 %v1312
      %v1365 = vpop.f32.mrb[0].mxu0
      %v1366 = vadd.f32 0.0, %v1365
      %v1367 = vpop.f32.mrb[0].mxu0
      %v1368 = vpop.f32.mrb[0].mxu0
      %v1369 = vadd.f32 0.0, %v1368
      %v1370 = vpop.f32.mrb[0].mxu0
      %1371 = vmatprep.mubr.bf16.mxu0 0
      %1372 = vmatmul.mubr.bf16.gmra.mrb[0].mxu0 %v1315
      %v1373 = vpop.f32.mrb[0].mxu0
      %v1374 = vadd.f32 0.0, %v1373
      %v1375 = vpop.f32.mrb[0].mxu0
      %v1376 = vpop.f32.mrb[0].mxu0
      %v1377 = vadd.f32 0.0, %v1376
      %v1378 = vpop.f32.mrb[0].mxu0
      %1379 = vmatprep.mubr.bf16.mxu0 0
      %1380 = vmatmul.mubr.bf16.gmra.mrb[0].mxu0 %v1318
      %v1381 = vpop.f32.mrb[0].mxu0
      %v1382 = vadd.f32 0.0, %v1381
      %v1383 = vpop.f32.mrb[0].mxu0
      %v1384 = vpop.f32.mrb[0].mxu0
      %v1385 = vadd.f32 0.0, %v1384
      %v1386 = vpop.f32.mrb[0].mxu0
      %1387 = vdwg.mxu0
      %v1388 = vadd.f32 %v1208, %v1358
      %v1389 = vadd.f32 %v1209, %v1361
      %v1390 = vadd.f32 %v1210, %v1366
      %v1391 = vadd.f32 %v1211, %v1369
      %v1392 = vadd.f32 %v1212, %v1374
      %v1393 = vadd.f32 %v1213, %v1377
      %v1394 = vadd.f32 %v1214, %v1382
      %v1395 = vadd.f32 %v1215, %v1385
      %s1396 = scalar_lea.vmem [#allocation2], 16
      %v1397 = vld [vmem:[%s1396 + $0x4] sm:$0xf]
      %v1398 = vld [vmem:[%s1396 + $0x8] sm:$0xf]
      %v1399 = vld [vmem:[%s1396 + $0xc] sm:$0x1]
      %v1400 = vld [vmem:[%s1396 + $0x24] sm:$0xf]
      %v1401 = vld [vmem:[%s1396 + $0x28] sm:$0xf]
      %v1402 = vld [vmem:[%s1396 + $0x2c] sm:$0x1]
      %v1403 = vld [vmem:[%s1396 + $0x44] sm:$0xf]
      %v1404 = vld [vmem:[%s1396 + $0x48] sm:$0xf]
      %v1405 = vld [vmem:[%s1396 + $0x4c] sm:$0x1]
      %v1406 = vld [vmem:[%s1396 + $0x64] sm:$0xf]
      %v1407 = vld [vmem:[%s1396 + $0x68] sm:$0xf]
      %v1408 = vld [vmem:[%s1396 + $0x6c] sm:$0x1]
      %v1409 = vld [vmem:[%s1396 + $0x84] sm:$0xf]
      %v1410 = vld [vmem:[%s1396 + $0x88] sm:$0xf]
      %v1411 = vld [vmem:[%s1396 + $0x8c] sm:$0x1]
      %v1412 = vld [vmem:[%s1396 + $0xa4] sm:$0xf]
      %v1413 = vld [vmem:[%s1396 + $0xa8] sm:$0xf]
      %v1414 = vld [vmem:[%s1396 + $0xac] sm:$0x1]
      %v1415 = vld [vmem:[%s1396 + $0xc4] sm:$0xf]
      %v1416 = vld [vmem:[%s1396 + $0xc8] sm:$0xf]
      %v1417 = vld [vmem:[%s1396 + $0xcc] sm:$0x1]
      %v1418 = vld [vmem:[%s1396 + $0xe4] sm:$0xf]
      %v1419 = vld [vmem:[%s1396 + $0xe8] sm:$0xf]
      %v1420 = vld [vmem:[%s1396 + $0xec] sm:$0x1]
      %s1421 = scalar_lea.vmem [#allocation3], 16
      %v1422 = vld [vmem:[%s1421 + $0x4] sm:$0xf]
      %v1423 = vld [vmem:[%s1421 + $0x8] sm:$0xf]
      %v1424 = vld [vmem:[%s1421 + $0x24] sm:$0xf]
      %v1425 = vld [vmem:[%s1421 + $0x28] sm:$0xf]
      %v1426 = vld [vmem:[%s1421 + $0x44] sm:$0xf]
      %v1427 = vld [vmem:[%s1421 + $0x48] sm:$0xf]
      %v1428 = vld [vmem:[%s1421 + $0x64] sm:$0xf]
      %v1429 = vld [vmem:[%s1421 + $0x68] sm:$0xf]
      %v1430 = vld [vmem:[%s1421 + $0x84] sm:$0xf]
      %v1431 = vld [vmem:[%s1421 + $0x88] sm:$0xf]
      %v1432 = vld [vmem:[%s1421 + $0xa4] sm:$0xf]
      %v1433 = vld [vmem:[%s1421 + $0xa8] sm:$0xf]
      %v1434 = vld [vmem:[%s1421 + $0xc4] sm:$0xf]
      %v1435 = vld [vmem:[%s1421 + $0xc8] sm:$0xf]
      %v1436 = vld [vmem:[%s1421 + $0xe4] sm:$0xf]
      %v1437 = vld [vmem:[%s1421 + $0xe8] sm:$0xf]
      %v1439 = vshrl.u32 %v1397, 16
      %v1441 = vrot.slane %v1439, 7
      %v1442 = vrot.slane %v1441, 4
      %v1444 = vshrl.u32 %v1398, 16
      %v1446 = vrot.slane %v1444, 7
      %v1447 = vshll.u32 %v1398, 16
      %v1449 = vor.u32 %v1446, %v1447
      %v1450 = vsel %vm570, %v1442, %v1449
      %v1452 = vshrl.u32 %v1400, 16
      %v1454 = vrot.slane %v1452, 7
      %v1455 = vrot.slane %v1454, 4
      %v1457 = vshrl.u32 %v1401, 16
      %v1459 = vrot.slane %v1457, 7
      %v1460 = vshll.u32 %v1401, 16
      %v1462 = vor.u32 %v1459, %v1460
      %v1463 = vsel %vm570, %v1455, %v1462
      %v1465 = vshrl.u32 %v1403, 16
      %v1467 = vrot.slane %v1465, 7
      %v1468 = vrot.slane %v1467, 4
      %v1470 = vshrl.u32 %v1404, 16
      %v1472 = vrot.slane %v1470, 7
      %v1473 = vshll.u32 %v1404, 16
      %v1475 = vor.u32 %v1472, %v1473
      %v1476 = vsel %vm570, %v1468, %v1475
      %v1478 = vshrl.u32 %v1406, 16
      %v1480 = vrot.slane %v1478, 7
      %v1481 = vrot.slane %v1480, 4
      %v1483 = vshrl.u32 %v1407, 16
      %v1485 = vrot.slane %v1483, 7
      %v1486 = vshll.u32 %v1407, 16
      %v1488 = vor.u32 %v1485, %v1486
      %v1489 = vsel %vm570, %v1481, %v1488
      %v1491 = vshrl.u32 %v1409, 16
      %v1493 = vrot.slane %v1491, 7
      %v1494 = vrot.slane %v1493, 4
      %v1496 = vshrl.u32 %v1410, 16
      %v1498 = vrot.slane %v1496, 7
      %v1499 = vshll.u32 %v1410, 16
      %v1501 = vor.u32 %v1498, %v1499
      %v1502 = vsel %vm570, %v1494, %v1501
      %v1504 = vshrl.u32 %v1412, 16
      %v1506 = vrot.slane %v1504, 7
      %v1507 = vrot.slane %v1506, 4
      %v1509 = vshrl.u32 %v1413, 16
      %v1511 = vrot.slane %v1509, 7
      %v1512 = vshll.u32 %v1413, 16
      %v1514 = vor.u32 %v1511, %v1512
      %v1515 = vsel %vm570, %v1507, %v1514
      %v1517 = vshrl.u32 %v1415, 16
      %v1519 = vrot.slane %v1517, 7
      %v1520 = vrot.slane %v1519, 4
      %v1522 = vshrl.u32 %v1416, 16
      %v1524 = vrot.slane %v1522, 7
      %v1525 = vshll.u32 %v1416, 16
      %v1527 = vor.u32 %v1524, %v1525
      %v1528 = vsel %vm570, %v1520, %v1527
      %v1530 = vshrl.u32 %v1418, 16
      %v1532 = vrot.slane %v1530, 7
      %v1533 = vrot.slane %v1532, 4
      %v1535 = vshrl.u32 %v1419, 16
      %v1537 = vrot.slane %v1535, 7
      %v1538 = vshll.u32 %v1419, 16
      %v1540 = vor.u32 %v1537, %v1538
      %v1541 = vsel %vm570, %v1533, %v1540
      %v1542 = vld [vmem:[%s2 + $0x4] sm:$0x8]
      %v1543 = vld [vmem:[%s2 + $0x8] sm:$0x1]
      %v1544 = vunpack.c.l.b16 %v1450
      %v1545 = vunpack.c.l.b16 %v1463
      %v1546 = vunpack.c.l.b16 %v1476
      %v1547 = vunpack.c.l.b16 %v1489
      %v1548 = vunpack.c.l.b16 %v1502
      %v1549 = vunpack.c.l.b16 %v1515
      %v1550 = vunpack.c.l.b16 %v1528
      %v1551 = vunpack.c.l.b16 %v1541
      %v1552 = vpack.c.b16 %v1545, %v1544
      %v1553 = vpack.c.b16 %v1547, %v1546
      %v1554 = vpack.c.b16 %v1549, %v1548
      %v1555 = vpack.c.b16 %v1551, %v1550
      %v1558 = vunpack.c.l.b16 %v1542
      %v1559 = vunpack.c.l.b16 %v1543
      %v1560 = vpack.c.b16 %v1559, %v1558
      %v1562 = vshrl.u32 %v1560, 16
      %v1564 = vrot.slane %v1562, 3
      %v1565 = vshll.u32 %v1560, 16
      %v1567 = vrot.slane %v1565, 4
      %v1568 = vor.u32 %v1564, %v1567
      %v1570 = vsel %vm804, %v1552, 0
      %v1573 = vsel %vm804, %v1553, 0
      %v1576 = vsel %vm804, %v1554, 0
      %v1579 = vsel %vm804, %v1555, 0
      %v1582 = vand.u32 %v1568, %v820
      %1584 = vmatprep.subr.bf16.mxu0 0
      %1585 = vmatpush1.bf16.msra.mxu0 %v1582
      %1586 = vmatprep.subr.bf16.mxu0 0
      %1587 = vmatpush1.bf16.msra.mxu0 0
      %1588 = vmatprep.subr.bf16.mxu0 0
      %1589 = vmatpush1.bf16.msra.mxu0 0
      %1590 = vmatprep.subr.bf16.mxu0 0
      %1591 = vmatpush1.bf16.msra.mxu0 0
      %1592 = vmatprep.subr.bf16.mxu0 0
      %1593 = vmatpush1.bf16.msra.mxu0 0
      %1594 = vmatprep.subr.bf16.mxu0 0
      %1595 = vmatpush1.bf16.msra.mxu0 0
      %1596 = vmatprep.subr.bf16.mxu0 0
      %1597 = vmatpush1.bf16.msra.mxu0 0
      %1598 = vmatprep.subr.bf16.mxu0 0
      %1599 = vmatpush1.bf16.msra.mxu0 0
      %1600 = vmatprep.subr.bf16.mxu0 0
      %1601 = vmatpush1.bf16.msra.mxu0 0
      %1602 = vmatprep.subr.bf16.mxu0 0
      %1603 = vmatpush1.bf16.msra.mxu0 0
      %1604 = vmatprep.subr.bf16.mxu0 0
      %1605 = vmatpush1.bf16.msra.mxu0 0
      %1606 = vmatprep.subr.bf16.mxu0 0
      %1607 = vmatpush1.bf16.msra.mxu0 0
      %1608 = vmatprep.subr.bf16.mxu0 0
      %1609 = vmatpush1.bf16.msra.mxu0 0
      %1610 = vmatprep.subr.bf16.mxu0 0
      %1611 = vmatpush1.bf16.msra.mxu0 0
      %1612 = vmatprep.subr.bf16.mxu0 0
      %1613 = vmatpush1.bf16.msra.mxu0 0
      %1614 = vmatprep.subr.bf16.mxu0 0
      %1615 = vmatpush1.bf16.msra.mxu0 0
      %1616 = vmatprep.mubr.bf16.mxu0 0
      %1617 = vmatmul.mubr.bf16.gmra.mrb[0].mxu0 %v1570
      %v1618 = vpop.f32.mrb[0].mxu0
      %v1619 = vadd.f32 0.0, %v1618
      %v1620 = vpop.f32.mrb[0].mxu0
      %v1621 = vpop.f32.mrb[0].mxu0
      %v1622 = vadd.f32 0.0, %v1621
      %v1623 = vpop.f32.mrb[0].mxu0
      %1624 = vmatprep.mubr.bf16.mxu0 0
      %1625 = vmatmul.mubr.bf16.gmra.mrb[0].mxu0 %v1573
      %v1626 = vpop.f32.mrb[0].mxu0
      %v1627 = vadd.f32 0.0, %v1626
      %v1628 = vpop.f32.mrb[0].mxu0
      %v1629 = vpop.f32.mrb[0].mxu0
      %v1630 = vadd.f32 0.0, %v1629
      %v1631 = vpop.f32.mrb[0].mxu0
      %1632 = vmatprep.mubr.bf16.mxu0 0
      %1633 = vmatmul.mubr.bf16.gmra.mrb[0].mxu0 %v1576
      %v1634 = vpop.f32.mrb[0].mxu0
      %v1635 = vadd.f32 0.0, %v1634
      %v1636 = vpop.f32.mrb[0].mxu0
      %v1637 = vpop.f32.mrb[0].mxu0
      %v1638 = vadd.f32 0.0, %v1637
      %v1639 = vpop.f32.mrb[0].mxu0
      %1640 = vmatprep.mubr.bf16.mxu0 0
      %1641 = vmatmul.mubr.bf16.gmra.mrb[0].mxu0 %v1579
      %v1642 = vpop.f32.mrb[0].mxu0
      %v1643 = vadd.f32 0.0, %v1642
      %v1644 = vpop.f32.mrb[0].mxu0
      %v1645 = vpop.f32.mrb[0].mxu0
      %v1646 = vadd.f32 0.0, %v1645
      %v1647 = vpop.f32.mrb[0].mxu0
      %1648 = vdwg.mxu0
      %v1649 = vadd.f32 %v1388, %v1619
      %v1650 = vadd.f32 %v1389, %v1622
      %v1651 = vadd.f32 %v1390, %v1627
      %v1652 = vadd.f32 %v1391, %v1630
      %v1653 = vadd.f32 %v1392, %v1635
      %v1654 = vadd.f32 %v1393, %v1638
      %v1655 = vadd.f32 %v1394, %v1643
      %v1656 = vadd.f32 %v1395, %v1646
      %v1658 = vshrl.u32 %v1422, 16
      %v1660 = vrot.slane %v1658, 7
      %v1661 = vrot.slane %v1660, 4
      %v1663 = vshrl.u32 %v1423, 16
      %v1665 = vrot.slane %v1663, 7
      %v1666 = vshll.u32 %v1423, 16
      %v1668 = vor.u32 %v1665, %v1666
      %v1669 = vsel %vm570, %v1661, %v1668
      %v1671 = vshrl.u32 %v1424, 16
      %v1673 = vrot.slane %v1671, 7
      %v1674 = vrot.slane %v1673, 4
      %v1676 = vshrl.u32 %v1425, 16
      %v1678 = vrot.slane %v1676, 7
      %v1679 = vshll.u32 %v1425, 16
      %v1681 = vor.u32 %v1678, %v1679
      %v1682 = vsel %vm570, %v1674, %v1681
      %v1684 = vshrl.u32 %v1426, 16
      %v1686 = vrot.slane %v1684, 7
      %v1687 = vrot.slane %v1686, 4
      %v1689 = vshrl.u32 %v1427, 16
      %v1691 = vrot.slane %v1689, 7
      %v1692 = vshll.u32 %v1427, 16
      %v1694 = vor.u32 %v1691, %v1692
      %v1695 = vsel %vm570, %v1687, %v1694
      %v1697 = vshrl.u32 %v1428, 16
      %v1699 = vrot.slane %v1697, 7
      %v1700 = vrot.slane %v1699, 4
      %v1702 = vshrl.u32 %v1429, 16
      %v1704 = vrot.slane %v1702, 7
      %v1705 = vshll.u32 %v1429, 16
      %v1707 = vor.u32 %v1704, %v1705
      %v1708 = vsel %vm570, %v1700, %v1707
      %v1710 = vshrl.u32 %v1430, 16
      %v1712 = vrot.slane %v1710, 7
      %v1713 = vrot.slane %v1712, 4
      %v1715 = vshrl.u32 %v1431, 16
      %v1717 = vrot.slane %v1715, 7
      %v1718 = vshll.u32 %v1431, 16
      %v1720 = vor.u32 %v1717, %v1718
      %v1721 = vsel %vm570, %v1713, %v1720
      %v1723 = vshrl.u32 %v1432, 16
      %v1725 = vrot.slane %v1723, 7
      %v1726 = vrot.slane %v1725, 4
      %v1728 = vshrl.u32 %v1433, 16
      %v1730 = vrot.slane %v1728, 7
      %v1731 = vshll.u32 %v1433, 16
      %v1733 = vor.u32 %v1730, %v1731
      %v1734 = vsel %vm570, %v1726, %v1733
      %v1736 = vshrl.u32 %v1434, 16
      %v1738 = vrot.slane %v1736, 7
      %v1739 = vrot.slane %v1738, 4
      %v1741 = vshrl.u32 %v1435, 16
      %v1743 = vrot.slane %v1741, 7
      %v1744 = vshll.u32 %v1435, 16
      %v1746 = vor.u32 %v1743, %v1744
      %v1747 = vsel %vm570, %v1739, %v1746
      %v1749 = vshrl.u32 %v1436, 16
      %v1751 = vrot.slane %v1749, 7
      %v1752 = vrot.slane %v1751, 4
      %v1754 = vshrl.u32 %v1437, 16
      %v1756 = vrot.slane %v1754, 7
      %v1757 = vshll.u32 %v1437, 16
      %v1759 = vor.u32 %v1756, %v1757
      %v1760 = vsel %vm570, %v1752, %v1759
      %v1761 = vld [vmem:[%s2 + $0x8] sm:$0x6]
      %v1762 = vunpack.c.l.b16 %v1669
      %v1763 = vunpack.c.l.b16 %v1682
      %v1764 = vunpack.c.l.b16 %v1695
      %v1765 = vunpack.c.l.b16 %v1708
      %v1766 = vunpack.c.l.b16 %v1721
      %v1767 = vunpack.c.l.b16 %v1734
      %v1768 = vunpack.c.l.b16 %v1747
      %v1769 = vunpack.c.l.b16 %v1760
      %v1770 = vpack.c.b16 %v1763, %v1762
      %v1771 = vpack.c.b16 %v1765, %v1764
      %v1772 = vpack.c.b16 %v1767, %v1766
      %v1773 = vpack.c.b16 %v1769, %v1768
      %v1775 = vunpack.c.l.b16 %v1761
      %v1776 = vpack.c.b16 %v1775, %v1775
      %v1777 = vrot.slane %v1776, 1
      %v1779 = vsel %vm804, %v1770, 0
      %v1782 = vsel %vm804, %v1771, 0
      %v1785 = vsel %vm804, %v1772, 0
      %v1788 = vsel %vm804, %v1773, 0
      %v1791 = vand.u32 %v1777, %v820
      %1793 = vmatprep.subr.bf16.mxu0 0
      %1794 = vmatpush1.bf16.msra.mxu0 %v1791
      %1795 = vmatprep.subr.bf16.mxu0 0
      %1796 = vmatpush1.bf16.msra.mxu0 0
      %1797 = vmatprep.subr.bf16.mxu0 0
      %1798 = vmatpush1.bf16.msra.mxu0 0
      %1799 = vmatprep.subr.bf16.mxu0 0
      %1800 = vmatpush1.bf16.msra.mxu0 0
      %1801 = vmatprep.subr.bf16.mxu0 0
      %1802 = vmatpush1.bf16.msra.mxu0 0
      %1803 = vmatprep.subr.bf16.mxu0 0
      %1804 = vmatpush1.bf16.msra.mxu0 0
      %1805 = vmatprep.subr.bf16.mxu0 0
      %1806 = vmatpush1.bf16.msra.mxu0 0
      %1807 = vmatprep.subr.bf16.mxu0 0
      %1808 = vmatpush1.bf16.msra.mxu0 0
      %1809 = vmatprep.subr.bf16.mxu0 0
      %1810 = vmatpush1.bf16.msra.mxu0 0
      %1811 = vmatprep.subr.bf16.mxu0 0
      %1812 = vmatpush1.bf16.msra.mxu0 0
      %1813 = vmatprep.subr.bf16.mxu0 0
      %1814 = vmatpush1.bf16.msra.mxu0 0
      %1815 = vmatprep.subr.bf16.mxu0 0
      %1816 = vmatpush1.bf16.msra.mxu0 0
      %1817 = vmatprep.subr.bf16.mxu0 0
      %1818 = vmatpush1.bf16.msra.mxu0 0
      %1819 = vmatprep.subr.bf16.mxu0 0
      %1820 = vmatpush1.bf16.msra.mxu0 0
      %1821 = vmatprep.subr.bf16.mxu0 0
      %1822 = vmatpush1.bf16.msra.mxu0 0
      %1823 = vmatprep.subr.bf16.mxu0 0
      %1824 = vmatpush1.bf16.msra.mxu0 0
      %1825 = vmatprep.mubr.bf16.mxu0 0
      %1826 = vmatmul.mubr.bf16.gmra.mrb[0].mxu0 %v1779
      %v1827 = vpop.f32.mrb[0].mxu0
      %v1828 = vadd.f32 0.0, %v1827
      %v1829 = vpop.f32.mrb[0].mxu0
      %v1830 = vpop.f32.mrb[0].mxu0
      %v1831 = vadd.f32 0.0, %v1830
      %v1832 = vpop.f32.mrb[0].mxu0
      %1833 = vmatprep.mubr.bf16.mxu0 0
      %1834 = vmatmul.mubr.bf16.gmra.mrb[0].mxu0 %v1782
      %v1835 = vpop.f32.mrb[0].mxu0
      %v1836 = vadd.f32 0.0, %v1835
      %v1837 = vpop.f32.mrb[0].mxu0
      %v1838 = vpop.f32.mrb[0].mxu0
      %v1839 = vadd.f32 0.0, %v1838
      %v1840 = vpop.f32.mrb[0].mxu0
      %1841 = vmatprep.mubr.bf16.mxu0 0
      %1842 = vmatmul.mubr.bf16.gmra.mrb[0].mxu0 %v1785
      %v1843 = vpop.f32.mrb[0].mxu0
      %v1844 = vadd.f32 0.0, %v1843
      %v1845 = vpop.f32.mrb[0].mxu0
      %v1846 = vpop.f32.mrb[0].mxu0
      %v1847 = vadd.f32 0.0, %v1846
      %v1848 = vpop.f32.mrb[0].mxu0
      %1849 = vmatprep.mubr.bf16.mxu0 0
      %1850 = vmatmul.mubr.bf16.gmra.mrb[0].mxu0 %v1788
      %v1851 = vpop.f32.mrb[0].mxu0
      %v1852 = vadd.f32 0.0, %v1851
      %v1853 = vpop.f32.mrb[0].mxu0
      %v1854 = vpop.f32.mrb[0].mxu0
      %v1855 = vadd.f32 0.0, %v1854
      %v1856 = vpop.f32.mrb[0].mxu0
      %1857 = vdwg.mxu0
      %v1858 = vadd.f32 %v1649, %v1828
      %v1859 = vadd.f32 %v1650, %v1831
      %v1860 = vadd.f32 %v1651, %v1836
      %v1861 = vadd.f32 %v1652, %v1839
      %v1862 = vadd.f32 %v1653, %v1844
      %v1863 = vadd.f32 %v1654, %v1847
      %v1864 = vadd.f32 %v1655, %v1852
      %v1865 = vadd.f32 %v1656, %v1855
      %v1866 = vld [vmem:[%s2 + $0x8] sm:$0xc]
      %v1875 = vunpack.c.l.b16 %v1398
      %v1876 = vunpack.c.l.b16 %v1401
      %v1877 = vunpack.c.l.b16 %v1404
      %v1878 = vunpack.c.l.b16 %v1407
      %v1879 = vunpack.c.l.b16 %v1410
      %v1880 = vunpack.c.l.b16 %v1413
      %v1881 = vunpack.c.l.b16 %v1416
      %v1882 = vunpack.c.l.b16 %v1419
      %v1883 = vpack.c.b16 %v1876, %v1875
      %v1884 = vpack.c.b16 %v1878, %v1877
      %v1885 = vpack.c.b16 %v1880, %v1879
      %v1886 = vpack.c.b16 %v1882, %v1881
      %v1888 = vunpack.c.l.b16 %v1866
      %v1889 = vpack.c.b16 %v1888, %v1888
      %v1891 = vshrl.u32 %v1889, 16
      %v1893 = vrot.slane %v1891, 2
      %v1894 = vshll.u32 %v1889, 16
      %v1896 = vrot.slane %v1894, 3
      %v1897 = vor.u32 %v1893, %v1896
      %v1899 = vsel %vm804, %v1883, 0
      %v1902 = vsel %vm804, %v1884, 0
      %v1905 = vsel %vm804, %v1885, 0
      %v1908 = vsel %vm804, %v1886, 0
      %v1911 = vand.u32 %v1897, %v820
      %1913 = vmatprep.subr.bf16.mxu0 0
      %1914 = vmatpush1.bf16.msra.mxu0 %v1911
      %1915 = vmatprep.subr.bf16.mxu0 0
      %1916 = vmatpush1.bf16.msra.mxu0 0
      %1917 = vmatprep.subr.bf16.mxu0 0
      %1918 = vmatpush1.bf16.msra.mxu0 0
      %1919 = vmatprep.subr.bf16.mxu0 0
      %1920 = vmatpush1.bf16.msra.mxu0 0
      %1921 = vmatprep.subr.bf16.mxu0 0
      %1922 = vmatpush1.bf16.msra.mxu0 0
      %1923 = vmatprep.subr.bf16.mxu0 0
      %1924 = vmatpush1.bf16.msra.mxu0 0
      %1925 = vmatprep.subr.bf16.mxu0 0
      %1926 = vmatpush1.bf16.msra.mxu0 0
      %1927 = vmatprep.subr.bf16.mxu0 0
      %1928 = vmatpush1.bf16.msra.mxu0 0
      %1929 = vmatprep.subr.bf16.mxu0 0
      %1930 = vmatpush1.bf16.msra.mxu0 0
      %1931 = vmatprep.subr.bf16.mxu0 0
      %1932 = vmatpush1.bf16.msra.mxu0 0
      %1933 = vmatprep.subr.bf16.mxu0 0
      %1934 = vmatpush1.bf16.msra.mxu0 0
      %1935 = vmatprep.subr.bf16.mxu0 0
      %1936 = vmatpush1.bf16.msra.mxu0 0
      %1937 = vmatprep.subr.bf16.mxu0 0
      %1938 = vmatpush1.bf16.msra.mxu0 0
      %1939 = vmatprep.subr.bf16.mxu0 0
      %1940 = vmatpush1.bf16.msra.mxu0 0
      %1941 = vmatprep.subr.bf16.mxu0 0
      %1942 = vmatpush1.bf16.msra.mxu0 0
      %1943 = vmatprep.subr.bf16.mxu0 0
      %1944 = vmatpush1.bf16.msra.mxu0 0
      %1945 = vmatprep.mubr.bf16.mxu0 0
      %1946 = vmatmul.mubr.bf16.gmra.mrb[0].mxu0 %v1899
      %v1947 = vpop.f32.mrb[0].mxu0
      %v1948 = vadd.f32 0.0, %v1947
      %v1949 = vpop.f32.mrb[0].mxu0
      %v1950 = vpop.f32.mrb[0].mxu0
      %v1951 = vadd.f32 0.0, %v1950
      %v1952 = vpop.f32.mrb[0].mxu0
      %1953 = vmatprep.mubr.bf16.mxu0 0
      %1954 = vmatmul.mubr.bf16.gmra.mrb[0].mxu0 %v1902
      %v1955 = vpop.f32.mrb[0].mxu0
      %v1956 = vadd.f32 0.0, %v1955
      %v1957 = vpop.f32.mrb[0].mxu0
      %v1958 = vpop.f32.mrb[0].mxu0
      %v1959 = vadd.f32 0.0, %v1958
      %v1960 = vpop.f32.mrb[0].mxu0
      %1961 = vmatprep.mubr.bf16.mxu0 0
      %1962 = vmatmul.mubr.bf16.gmra.mrb[0].mxu0 %v1905
      %v1963 = vpop.f32.mrb[0].mxu0
      %v1964 = vadd.f32 0.0, %v1963
      %v1965 = vpop.f32.mrb[0].mxu0
      %v1966 = vpop.f32.mrb[0].mxu0
      %v1967 = vadd.f32 0.0, %v1966
      %v1968 = vpop.f32.mrb[0].mxu0
      %1969 = vmatprep.mubr.bf16.mxu0 0
      %1970 = vmatmul.mubr.bf16.gmra.mrb[0].mxu0 %v1908
      %v1971 = vpop.f32.mrb[0].mxu0
      %v1972 = vadd.f32 0.0, %v1971
      %v1973 = vpop.f32.mrb[0].mxu0
      %v1974 = vpop.f32.mrb[0].mxu0
      %v1975 = vadd.f32 0.0, %v1974
      %v1976 = vpop.f32.mrb[0].mxu0
      %1977 = vdwg.mxu0
      %v1978 = vadd.f32 %v1858, %v1948
      %v1979 = vadd.f32 %v1859, %v1951
      %v1980 = vadd.f32 %v1860, %v1956
      %v1981 = vadd.f32 %v1861, %v1959
      %v1982 = vadd.f32 %v1862, %v1964
      %v1983 = vadd.f32 %v1863, %v1967
      %v1984 = vadd.f32 %v1864, %v1972
      %v1985 = vadd.f32 %v1865, %v1975
      %v1986 = vld [vmem:[%s2 + $0xc] sm:$0x3]
      %v1995 = vunpack.c.l.b16 %v1423
      %v1996 = vunpack.c.l.b16 %v1425
      %v1997 = vunpack.c.l.b16 %v1427
      %v1998 = vunpack.c.l.b16 %v1429
      %v1999 = vunpack.c.l.b16 %v1431
      %v2000 = vunpack.c.l.b16 %v1433
      %v2001 = vunpack.c.l.b16 %v1435
      %v2002 = vunpack.c.l.b16 %v1437
      %v2003 = vpack.c.b16 %v1996, %v1995
      %v2004 = vpack.c.b16 %v1998, %v1997
      %v2005 = vpack.c.b16 %v2000, %v1999
      %v2006 = vpack.c.b16 %v2002, %v2001
      %v2008 = vsel %vm804, %v2003, 0
      %v2011 = vsel %vm804, %v2004, 0
      %v2014 = vsel %vm804, %v2005, 0
      %v2017 = vsel %vm804, %v2006, 0
      %v2020 = vand.u32 %v1986, %v820
      %2022 = vmatprep.subr.bf16.mxu0 0
      %2023 = vmatpush1.bf16.msra.mxu0 %v2020
      %2024 = vmatprep.subr.bf16.mxu0 0
      %2025 = vmatpush1.bf16.msra.mxu0 0
      %2026 = vmatprep.subr.bf16.mxu0 0
      %2027 = vmatpush1.bf16.msra.mxu0 0
      %2028 = vmatprep.subr.bf16.mxu0 0
      %2029 = vmatpush1.bf16.msra.mxu0 0
      %2030 = vmatprep.subr.bf16.mxu0 0
      %2031 = vmatpush1.bf16.msra.mxu0 0
      %2032 = vmatprep.subr.bf16.mxu0 0
      %2033 = vmatpush1.bf16.msra.mxu0 0
      %2034 = vmatprep.subr.bf16.mxu0 0
      %2035 = vmatpush1.bf16.msra.mxu0 0
      %2036 = vmatprep.subr.bf16.mxu0 0
      %2037 = vmatpush1.bf16.msra.mxu0 0
      %2038 = vmatprep.subr.bf16.mxu0 0
      %2039 = vmatpush1.bf16.msra.mxu0 0
      %2040 = vmatprep.subr.bf16.mxu0 0
      %2041 = vmatpush1.bf16.msra.mxu0 0
      %2042 = vmatprep.subr.bf16.mxu0 0
      %2043 = vmatpush1.bf16.msra.mxu0 0
      %2044 = vmatprep.subr.bf16.mxu0 0
      %2045 = vmatpush1.bf16.msra.mxu0 0
      %2046 = vmatprep.subr.bf16.mxu0 0
      %2047 = vmatpush1.bf16.msra.mxu0 0
      %2048 = vmatprep.subr.bf16.mxu0 0
      %2049 = vmatpush1.bf16.msra.mxu0 0
      %2050 = vmatprep.subr.bf16.mxu0 0
      %2051 = vmatpush1.bf16.msra.mxu0 0
      %2052 = vmatprep.subr.bf16.mxu0 0
      %2053 = vmatpush1.bf16.msra.mxu0 0
      %2054 = vmatprep.mubr.bf16.mxu0 0
      %2055 = vmatmul.mubr.bf16.gmra.mrb[0].mxu0 %v2008
      %v2056 = vpop.f32.mrb[0].mxu0
      %v2057 = vadd.f32 0.0, %v2056
      %v2058 = vpop.f32.mrb[0].mxu0
      %v2059 = vpop.f32.mrb[0].mxu0
      %v2060 = vadd.f32 0.0, %v2059
      %v2061 = vpop.f32.mrb[0].mxu0
      %2062 = vmatprep.mubr.bf16.mxu0 0
      %2063 = vmatmul.mubr.bf16.gmra.mrb[0].mxu0 %v2011
      %v2064 = vpop.f32.mrb[0].mxu0
      %v2065 = vadd.f32 0.0, %v2064
      %v2066 = vpop.f32.mrb[0].mxu0
      %v2067 = vpop.f32.mrb[0].mxu0
      %v2068 = vadd.f32 0.0, %v2067
      %v2069 = vpop.f32.mrb[0].mxu0
      %2070 = vmatprep.mubr.bf16.mxu0 0
      %2071 = vmatmul.mubr.bf16.gmra.mrb[0].mxu0 %v2014
      %v2072 = vpop.f32.mrb[0].mxu0
      %v2073 = vadd.f32 0.0, %v2072
      %v2074 = vpop.f32.mrb[0].mxu0
      %v2075 = vpop.f32.mrb[0].mxu0
      %v2076 = vadd.f32 0.0, %v2075
      %v2077 = vpop.f32.mrb[0].mxu0
      %2078 = vmatprep.mubr.bf16.mxu0 0
      %2079 = vmatmul.mubr.bf16.gmra.mrb[0].mxu0 %v2017
      %v2080 = vpop.f32.mrb[0].mxu0
      %v2081 = vadd.f32 0.0, %v2080
      %v2082 = vpop.f32.mrb[0].mxu0
      %v2083 = vpop.f32.mrb[0].mxu0
      %v2084 = vadd.f32 0.0, %v2083
      %v2085 = vpop.f32.mrb[0].mxu0
      %2086 = vdwg.mxu0
      %v2087 = vadd.f32 %v1978, %v2057
      %v2088 = vadd.f32 %v1979, %v2060
      %v2089 = vadd.f32 %v1980, %v2065
      %v2090 = vadd.f32 %v1981, %v2068
      %v2091 = vadd.f32 %v1982, %v2073
      %v2092 = vadd.f32 %v1983, %v2076
      %v2093 = vadd.f32 %v1984, %v2081
      %v2094 = vadd.f32 %v1985, %v2084
      %v2095 = vrot.slane %v1444, 4
      %v2096 = vrot.slane %v1447, 5
      %v2097 = vor.u32 %v2095, %v2096
      %v2098 = vrot.slane %v2097, 4
      %v2100 = vshll.u32 %v1399, 16
      %v2102 = vrot.slane %v2100, 5
      %v2103 = vsel %vm1218, %v2098, %v2102
      %v2104 = vrot.slane %v1457, 4
      %v2105 = vrot.slane %v1460, 5
      %v2106 = vor.u32 %v2104, %v2105
      %v2107 = vrot.slane %v2106, 4
      %v2109 = vshll.u32 %v1402, 16
      %v2111 = vrot.slane %v2109, 5
      %v2112 = vsel %vm1218, %v2107, %v2111
      %v2113 = vrot.slane %v1470, 4
      %v2114 = vrot.slane %v1473, 5
      %v2115 = vor.u32 %v2113, %v2114
      %v2116 = vrot.slane %v2115, 4
      %v2118 = vshll.u32 %v1405, 16
      %v2120 = vrot.slane %v2118, 5
      %v2121 = vsel %vm1218, %v2116, %v2120
      %v2122 = vrot.slane %v1483, 4
      %v2123 = vrot.slane %v1486, 5
      %v2124 = vor.u32 %v2122, %v2123
      %v2125 = vrot.slane %v2124, 4
      %v2127 = vshll.u32 %v1408, 16
      %v2129 = vrot.slane %v2127, 5
      %v2130 = vsel %vm1218, %v2125, %v2129
      %v2131 = vrot.slane %v1496, 4
      %v2132 = vrot.slane %v1499, 5
      %v2133 = vor.u32 %v2131, %v2132
      %v2134 = vrot.slane %v2133, 4
      %v2136 = vshll.u32 %v1411, 16
      %v2138 = vrot.slane %v2136, 5
      %v2139 = vsel %vm1218, %v2134, %v2138
      %v2140 = vrot.slane %v1509, 4
      %v2141 = vrot.slane %v1512, 5
      %v2142 = vor.u32 %v2140, %v2141
      %v2143 = vrot.slane %v2142, 4
      %v2145 = vshll.u32 %v1414, 16
      %v2147 = vrot.slane %v2145, 5
      %v2148 = vsel %vm1218, %v2143, %v2147
      %v2149 = vrot.slane %v1522, 4
      %v2150 = vrot.slane %v1525, 5
      %v2151 = vor.u32 %v2149, %v2150
      %v2152 = vrot.slane %v2151, 4
      %v2154 = vshll.u32 %v1417, 16
      %v2156 = vrot.slane %v2154, 5
      %v2157 = vsel %vm1218, %v2152, %v2156
      %v2158 = vrot.slane %v1535, 4
      %v2159 = vrot.slane %v1538, 5
      %v2160 = vor.u32 %v2158, %v2159
      %v2161 = vrot.slane %v2160, 4
      %v2163 = vshll.u32 %v1420, 16
      %v2165 = vrot.slane %v2163, 5
      %v2166 = vsel %vm1218, %v2161, %v2165
      %v2167 = vld [vmem:[%s2 + $0xc] sm:$0x6]
      %v2168 = vunpack.c.l.b16 %v2103
      %v2169 = vunpack.c.l.b16 %v2112
      %v2170 = vunpack.c.l.b16 %v2121
      %v2171 = vunpack.c.l.b16 %v2130
      %v2172 = vunpack.c.l.b16 %v2139
      %v2173 = vunpack.c.l.b16 %v2148
      %v2174 = vunpack.c.l.b16 %v2157
      %v2175 = vunpack.c.l.b16 %v2166
      %v2176 = vpack.c.b16 %v2169, %v2168
      %v2177 = vpack.c.b16 %v2171, %v2170
      %v2178 = vpack.c.b16 %v2173, %v2172
      %v2179 = vpack.c.b16 %v2175, %v2174
      %v2181 = vunpack.c.l.b16 %v2167
      %v2182 = vpack.c.b16 %v2181, %v2181
      %v2184 = vshrl.u32 %v2182, 16
      %v2186 = vrot.slane %v2184, 1
      %v2187 = vshll.u32 %v2182, 16
      %v2189 = vrot.slane %v2187, 2
      %v2190 = vor.u32 %v2186, %v2189
      %v2192 = vsel %vm804, %v2176, 0
      %v2195 = vsel %vm804, %v2177, 0
      %v2198 = vsel %vm804, %v2178, 0
      %v2201 = vsel %vm804, %v2179, 0
      %v2204 = vand.u32 %v2190, %v820
      %2206 = vmatprep.subr.bf16.mxu0 0
      %2207 = vmatpush1.bf16.msra.mxu0 %v2204
      %2208 = vmatprep.subr.bf16.mxu0 0
      %2209 = vmatpush1.bf16.msra.mxu0 0
      %2210 = vmatprep.subr.bf16.mxu0 0
      %2211 = vmatpush1.bf16.msra.mxu0 0
      %2212 = vmatprep.subr.bf16.mxu0 0
      %2213 = vmatpush1.bf16.msra.mxu0 0
      %2214 = vmatprep.subr.bf16.mxu0 0
      %2215 = vmatpush1.bf16.msra.mxu0 0
      %2216 = vmatprep.subr.bf16.mxu0 0
      %2217 = vmatpush1.bf16.msra.mxu0 0
      %2218 = vmatprep.subr.bf16.mxu0 0
      %2219 = vmatpush1.bf16.msra.mxu0 0
      %2220 = vmatprep.subr.bf16.mxu0 0
      %2221 = vmatpush1.bf16.msra.mxu0 0
      %2222 = vmatprep.subr.bf16.mxu0 0
      %2223 = vmatpush1.bf16.msra.mxu0 0
      %2224 = vmatprep.subr.bf16.mxu0 0
      %2225 = vmatpush1.bf16.msra.mxu0 0
      %2226 = vmatprep.subr.bf16.mxu0 0
      %2227 = vmatpush1.bf16.msra.mxu0 0
      %2228 = vmatprep.subr.bf16.mxu0 0
      %2229 = vmatpush1.bf16.msra.mxu0 0
      %2230 = vmatprep.subr.bf16.mxu0 0
      %2231 = vmatpush1.bf16.msra.mxu0 0
      %2232 = vmatprep.subr.bf16.mxu0 0
      %2233 = vmatpush1.bf16.msra.mxu0 0
      %2234 = vmatprep.subr.bf16.mxu0 0
      %2235 = vmatpush1.bf16.msra.mxu0 0
      %2236 = vmatprep.subr.bf16.mxu0 0
      %2237 = vmatpush1.bf16.msra.mxu0 0
      %2238 = vmatprep.mubr.bf16.mxu0 0
      %2239 = vmatmul.mubr.bf16.gmra.mrb[0].mxu0 %v2192
      %v2240 = vpop.f32.mrb[0].mxu0
      %v2241 = vadd.f32 0.0, %v2240
      %v2242 = vpop.f32.mrb[0].mxu0
      %v2243 = vpop.f32.mrb[0].mxu0
      %v2244 = vadd.f32 0.0, %v2243
      %v2245 = vpop.f32.mrb[0].mxu0
      %2246 = vmatprep.mubr.bf16.mxu0 0
      %2247 = vmatmul.mubr.bf16.gmra.mrb[0].mxu0 %v2195
      %v2248 = vpop.f32.mrb[0].mxu0
      %v2249 = vadd.f32 0.0, %v2248
      %v2250 = vpop.f32.mrb[0].mxu0
      %v2251 = vpop.f32.mrb[0].mxu0
      %v2252 = vadd.f32 0.0, %v2251
      %v2253 = vpop.f32.mrb[0].mxu0
      %2254 = vmatprep.mubr.bf16.mxu0 0
      %2255 = vmatmul.mubr.bf16.gmra.mrb[0].mxu0 %v2198
      %v2256 = vpop.f32.mrb[0].mxu0
      %v2257 = vadd.f32 0.0, %v2256
      %v2258 = vpop.f32.mrb[0].mxu0
      %v2259 = vpop.f32.mrb[0].mxu0
      %v2260 = vadd.f32 0.0, %v2259
      %v2261 = vpop.f32.mrb[0].mxu0
      %2262 = vmatprep.mubr.bf16.mxu0 0
      %2263 = vmatmul.mubr.bf16.gmra.mrb[0].mxu0 %v2201
      %v2264 = vpop.f32.mrb[0].mxu0
      %v2265 = vadd.f32 0.0, %v2264
      %v2266 = vpop.f32.mrb[0].mxu0
      %v2267 = vpop.f32.mrb[0].mxu0
      %v2268 = vadd.f32 0.0, %v2267
      %v2269 = vpop.f32.mrb[0].mxu0
      %2270 = vdwg.mxu0
      %v2271 = vadd.f32 %v2087, %v2241
      %v2272 = vadd.f32 %v2088, %v2244
      %v2273 = vadd.f32 %v2089, %v2249
      %v2274 = vadd.f32 %v2090, %v2252
      %v2275 = vadd.f32 %v2091, %v2257
      %v2276 = vadd.f32 %v2092, %v2260
      %v2277 = vadd.f32 %v2093, %v2265
      %v2278 = vadd.f32 %v2094, %v2268
      %v2279 = vld [vmem:[%s359 + $0x4] sm:$0xf]
      %v2280 = vld [vmem:[%s359 + $0x8] sm:$0xf]
      %v2281 = vld [vmem:[%s359 + $0xc] sm:$0x1]
      %v2282 = vld [vmem:[%s359 + $0x24] sm:$0xf]
      %v2283 = vld [vmem:[%s359 + $0x28] sm:$0xf]
      %v2284 = vld [vmem:[%s359 + $0x2c] sm:$0x1]
      %v2285 = vld [vmem:[%s359 + $0x44] sm:$0xf]
      %v2286 = vld [vmem:[%s359 + $0x48] sm:$0xf]
      %v2287 = vld [vmem:[%s359 + $0x4c] sm:$0x1]
      %v2288 = vld [vmem:[%s359 + $0x64] sm:$0xf]
      %v2289 = vld [vmem:[%s359 + $0x68] sm:$0xf]
      %v2290 = vld [vmem:[%s359 + $0x6c] sm:$0x1]
      %v2291 = vld [vmem:[%s359 + $0x84] sm:$0xf]
      %v2292 = vld [vmem:[%s359 + $0x88] sm:$0xf]
      %v2293 = vld [vmem:[%s359 + $0x8c] sm:$0x1]
      %v2294 = vld [vmem:[%s359 + $0xa4] sm:$0xf]
      %v2295 = vld [vmem:[%s359 + $0xa8] sm:$0xf]
      %v2296 = vld [vmem:[%s359 + $0xac] sm:$0x1]
      %v2297 = vld [vmem:[%s359 + $0xc4] sm:$0xf]
      %v2298 = vld [vmem:[%s359 + $0xc8] sm:$0xf]
      %v2299 = vld [vmem:[%s359 + $0xcc] sm:$0x1]
      %v2300 = vld [vmem:[%s359 + $0xe4] sm:$0xf]
      %v2301 = vld [vmem:[%s359 + $0xe8] sm:$0xf]
      %v2302 = vld [vmem:[%s359 + $0xec] sm:$0x1]
      %v2303 = vld [vmem:[%s512 + $0x4] sm:$0xf]
      %v2304 = vld [vmem:[%s512 + $0x8] sm:$0xf]
      %v2305 = vld [vmem:[%s512 + $0x24] sm:$0xf]
      %v2306 = vld [vmem:[%s512 + $0x28] sm:$0xf]
      %v2307 = vld [vmem:[%s512 + $0x44] sm:$0xf]
      %v2308 = vld [vmem:[%s512 + $0x48] sm:$0xf]
      %v2309 = vld [vmem:[%s512 + $0x64] sm:$0xf]
      %v2310 = vld [vmem:[%s512 + $0x68] sm:$0xf]
      %v2311 = vld [vmem:[%s512 + $0x84] sm:$0xf]
      %v2312 = vld [vmem:[%s512 + $0x88] sm:$0xf]
      %v2313 = vld [vmem:[%s512 + $0xa4] sm:$0xf]
      %v2314 = vld [vmem:[%s512 + $0xa8] sm:$0xf]
      %v2315 = vld [vmem:[%s512 + $0xc4] sm:$0xf]
      %v2316 = vld [vmem:[%s512 + $0xc8] sm:$0xf]
      %v2317 = vld [vmem:[%s512 + $0xe4] sm:$0xf]
      %v2318 = vld [vmem:[%s512 + $0xe8] sm:$0xf]
      %v2320 = vshrl.u32 %v2279, 16
      %v2322 = vrot.slane %v2320, 7
      %v2323 = vrot.slane %v2322, 4
      %v2325 = vshrl.u32 %v2280, 16
      %v2327 = vrot.slane %v2325, 7
      %v2328 = vshll.u32 %v2280, 16
      %v2330 = vor.u32 %v2327, %v2328
      %v2331 = vsel %vm570, %v2323, %v2330
      %v2333 = vshrl.u32 %v2282, 16
      %v2335 = vrot.slane %v2333, 7
      %v2336 = vrot.slane %v2335, 4
      %v2338 = vshrl.u32 %v2283, 16
      %v2340 = vrot.slane %v2338, 7
      %v2341 = vshll.u32 %v2283, 16
      %v2343 = vor.u32 %v2340, %v2341
      %v2344 = vsel %vm570, %v2336, %v2343
      %v2346 = vshrl.u32 %v2285, 16
      %v2348 = vrot.slane %v2346, 7
      %v2349 = vrot.slane %v2348, 4
      %v2351 = vshrl.u32 %v2286, 16
      %v2353 = vrot.slane %v2351, 7
      %v2354 = vshll.u32 %v2286, 16
      %v2356 = vor.u32 %v2353, %v2354
      %v2357 = vsel %vm570, %v2349, %v2356
      %v2359 = vshrl.u32 %v2288, 16
      %v2361 = vrot.slane %v2359, 7
      %v2362 = vrot.slane %v2361, 4
      %v2364 = vshrl.u32 %v2289, 16
      %v2366 = vrot.slane %v2364, 7
      %v2367 = vshll.u32 %v2289, 16
      %v2369 = vor.u32 %v2366, %v2367
      %v2370 = vsel %vm570, %v2362, %v2369
      %v2372 = vshrl.u32 %v2291, 16
      %v2374 = vrot.slane %v2372, 7
      %v2375 = vrot.slane %v2374, 4
      %v2377 = vshrl.u32 %v2292, 16
      %v2379 = vrot.slane %v2377, 7
      %v2380 = vshll.u32 %v2292, 16
      %v2382 = vor.u32 %v2379, %v2380
      %v2383 = vsel %vm570, %v2375, %v2382
      %v2385 = vshrl.u32 %v2294, 16
      %v2387 = vrot.slane %v2385, 7
      %v2388 = vrot.slane %v2387, 4
      %v2390 = vshrl.u32 %v2295, 16
      %v2392 = vrot.slane %v2390, 7
      %v2393 = vshll.u32 %v2295, 16
      %v2395 = vor.u32 %v2392, %v2393
      %v2396 = vsel %vm570, %v2388, %v2395
      %v2398 = vshrl.u32 %v2297, 16
      %v2400 = vrot.slane %v2398, 7
      %v2401 = vrot.slane %v2400, 4
      %v2403 = vshrl.u32 %v2298, 16
      %v2405 = vrot.slane %v2403, 7
      %v2406 = vshll.u32 %v2298, 16
      %v2408 = vor.u32 %v2405, %v2406
      %v2409 = vsel %vm570, %v2401, %v2408
      %v2411 = vshrl.u32 %v2300, 16
      %v2413 = vrot.slane %v2411, 7
      %v2414 = vrot.slane %v2413, 4
      %v2416 = vshrl.u32 %v2301, 16
      %v2418 = vrot.slane %v2416, 7
      %v2419 = vshll.u32 %v2301, 16
      %v2421 = vor.u32 %v2418, %v2419
      %v2422 = vsel %vm570, %v2414, %v2421
      %v2423 = vld [vmem:[%s2 + $0xc] sm:$0x8]
      %v2424 = vld [vmem:[%s2 + $0x10] sm:$0x1]
      %v2425 = vunpack.c.l.b16 %v2331
      %v2426 = vunpack.c.l.b16 %v2344
      %v2427 = vunpack.c.l.b16 %v2357
      %v2428 = vunpack.c.l.b16 %v2370
      %v2429 = vunpack.c.l.b16 %v2383
      %v2430 = vunpack.c.l.b16 %v2396
      %v2431 = vunpack.c.l.b16 %v2409
      %v2432 = vunpack.c.l.b16 %v2422
      %v2433 = vpack.c.b16 %v2426, %v2425
      %v2434 = vpack.c.b16 %v2428, %v2427
      %v2435 = vpack.c.b16 %v2430, %v2429
      %v2436 = vpack.c.b16 %v2432, %v2431
      %v2439 = vunpack.c.l.b16 %v2423
      %v2440 = vunpack.c.l.b16 %v2424
      %v2441 = vpack.c.b16 %v2440, %v2439
      %v2442 = vrot.slane %v2441, 3
      %v2444 = vsel %vm804, %v2433, 0
      %v2447 = vsel %vm804, %v2434, 0
      %v2450 = vsel %vm804, %v2435, 0
      %v2453 = vsel %vm804, %v2436, 0
      %v2456 = vand.u32 %v2442, %v820
      %2458 = vmatprep.subr.bf16.mxu0 0
      %2459 = vmatpush1.bf16.msra.mxu0 %v2456
      %2460 = vmatprep.subr.bf16.mxu0 0
      %2461 = vmatpush1.bf16.msra.mxu0 0
      %2462 = vmatprep.subr.bf16.mxu0 0
      %2463 = vmatpush1.bf16.msra.mxu0 0
      %2464 = vmatprep.subr.bf16.mxu0 0
      %2465 = vmatpush1.bf16.msra.mxu0 0
      %2466 = vmatprep.subr.bf16.mxu0 0
      %2467 = vmatpush1.bf16.msra.mxu0 0
      %2468 = vmatprep.subr.bf16.mxu0 0
      %2469 = vmatpush1.bf16.msra.mxu0 0
      %2470 = vmatprep.subr.bf16.mxu0 0
      %2471 = vmatpush1.bf16.msra.mxu0 0
      %2472 = vmatprep.subr.bf16.mxu0 0
      %2473 = vmatpush1.bf16.msra.mxu0 0
      %2474 = vmatprep.subr.bf16.mxu0 0
      %2475 = vmatpush1.bf16.msra.mxu0 0
      %2476 = vmatprep.subr.bf16.mxu0 0
      %2477 = vmatpush1.bf16.msra.mxu0 0
      %2478 = vmatprep.subr.bf16.mxu0 0
      %2479 = vmatpush1.bf16.msra.mxu0 0
      %2480 = vmatprep.subr.bf16.mxu0 0
      %2481 = vmatpush1.bf16.msra.mxu0 0
      %2482 = vmatprep.subr.bf16.mxu0 0
      %2483 = vmatpush1.bf16.msra.mxu0 0
      %2484 = vmatprep.subr.bf16.mxu0 0
      %2485 = vmatpush1.bf16.msra.mxu0 0
      %2486 = vmatprep.subr.bf16.mxu0 0
      %2487 = vmatpush1.bf16.msra.mxu0 0
      %2488 = vmatprep.subr.bf16.mxu0 0
      %2489 = vmatpush1.bf16.msra.mxu0 0
      %2490 = vmatprep.mubr.bf16.mxu0 0
      %2491 = vmatmul.mubr.bf16.gmra.mrb[0].mxu0 %v2444
      %v2492 = vpop.f32.mrb[0].mxu0
      %v2493 = vadd.f32 0.0, %v2492
      %v2494 = vpop.f32.mrb[0].mxu0
      %v2495 = vpop.f32.mrb[0].mxu0
      %v2496 = vadd.f32 0.0, %v2495
      %v2497 = vpop.f32.mrb[0].mxu0
      %2498 = vmatprep.mubr.bf16.mxu0 0
      %2499 = vmatmul.mubr.bf16.gmra.mrb[0].mxu0 %v2447
      %v2500 = vpop.f32.mrb[0].mxu0
      %v2501 = vadd.f32 0.0, %v2500
      %v2502 = vpop.f32.mrb[0].mxu0
      %v2503 = vpop.f32.mrb[0].mxu0
      %v2504 = vadd.f32 0.0, %v2503
      %v2505 = vpop.f32.mrb[0].mxu0
      %2506 = vmatprep.mubr.bf16.mxu0 0
      %2507 = vmatmul.mubr.bf16.gmra.mrb[0].mxu0 %v2450
      %v2508 = vpop.f32.mrb[0].mxu0
      %v2509 = vadd.f32 0.0, %v2508
      %v2510 = vpop.f32.mrb[0].mxu0
      %v2511 = vpop.f32.mrb[0].mxu0
      %v2512 = vadd.f32 0.0, %v2511
      %v2513 = vpop.f32.mrb[0].mxu0
      %2514 = vmatprep.mubr.bf16.mxu0 0
      %2515 = vmatmul.mubr.bf16.gmra.mrb[0].mxu0 %v2453
      %v2516 = vpop.f32.mrb[0].mxu0
      %v2517 = vadd.f32 0.0, %v2516
      %v2518 = vpop.f32.mrb[0].mxu0
      %v2519 = vpop.f32.mrb[0].mxu0
      %v2520 = vadd.f32 0.0, %v2519
      %v2521 = vpop.f32.mrb[0].mxu0
      %2522 = vdwg.mxu0
      %v2523 = vadd.f32 %v2271, %v2493
      %v2524 = vadd.f32 %v2272, %v2496
      %v2525 = vadd.f32 %v2273, %v2501
      %v2526 = vadd.f32 %v2274, %v2504
      %v2527 = vadd.f32 %v2275, %v2509
      %v2528 = vadd.f32 %v2276, %v2512
      %v2529 = vadd.f32 %v2277, %v2517
      %v2530 = vadd.f32 %v2278, %v2520
      %v2532 = vshrl.u32 %v2303, 16
      %v2534 = vrot.slane %v2532, 7
      %v2535 = vrot.slane %v2534, 4
      %v2537 = vshrl.u32 %v2304, 16
      %v2539 = vrot.slane %v2537, 7
      %v2540 = vshll.u32 %v2304, 16
      %v2542 = vor.u32 %v2539, %v2540
      %v2543 = vsel %vm570, %v2535, %v2542
      %v2545 = vshrl.u32 %v2305, 16
      %v2547 = vrot.slane %v2545, 7
      %v2548 = vrot.slane %v2547, 4
      %v2550 = vshrl.u32 %v2306, 16
      %v2552 = vrot.slane %v2550, 7
      %v2553 = vshll.u32 %v2306, 16
      %v2555 = vor.u32 %v2552, %v2553
      %v2556 = vsel %vm570, %v2548, %v2555
      %v2558 = vshrl.u32 %v2307, 16
      %v2560 = vrot.slane %v2558, 7
      %v2561 = vrot.slane %v2560, 4
      %v2563 = vshrl.u32 %v2308, 16
      %v2565 = vrot.slane %v2563, 7
      %v2566 = vshll.u32 %v2308, 16
      %v2568 = vor.u32 %v2565, %v2566
      %v2569 = vsel %vm570, %v2561, %v2568
      %v2571 = vshrl.u32 %v2309, 16
      %v2573 = vrot.slane %v2571, 7
      %v2574 = vrot.slane %v2573, 4
      %v2576 = vshrl.u32 %v2310, 16
      %v2578 = vrot.slane %v2576, 7
      %v2579 = vshll.u32 %v2310, 16
      %v2581 = vor.u32 %v2578, %v2579
      %v2582 = vsel %vm570, %v2574, %v2581
      %v2584 = vshrl.u32 %v2311, 16
      %v2586 = vrot.slane %v2584, 7
      %v2587 = vrot.slane %v2586, 4
      %v2589 = vshrl.u32 %v2312, 16
      %v2591 = vrot.slane %v2589, 7
      %v2592 = vshll.u32 %v2312, 16
      %v2594 = vor.u32 %v2591, %v2592
      %v2595 = vsel %vm570, %v2587, %v2594
      %v2597 = vshrl.u32 %v2313, 16
      %v2599 = vrot.slane %v2597, 7
      %v2600 = vrot.slane %v2599, 4
      %v2602 = vshrl.u32 %v2314, 16
      %v2604 = vrot.slane %v2602, 7
      %v2605 = vshll.u32 %v2314, 16
      %v2607 = vor.u32 %v2604, %v2605
      %v2608 = vsel %vm570, %v2600, %v2607
      %v2610 = vshrl.u32 %v2315, 16
      %v2612 = vrot.slane %v2610, 7
      %v2613 = vrot.slane %v2612, 4
      %v2615 = vshrl.u32 %v2316, 16
      %v2617 = vrot.slane %v2615, 7
      %v2618 = vshll.u32 %v2316, 16
      %v2620 = vor.u32 %v2617, %v2618
      %v2621 = vsel %vm570, %v2613, %v2620
      %v2623 = vshrl.u32 %v2317, 16
      %v2625 = vrot.slane %v2623, 7
      %v2626 = vrot.slane %v2625, 4
      %v2628 = vshrl.u32 %v2318, 16
      %v2630 = vrot.slane %v2628, 7
      %v2631 = vshll.u32 %v2318, 16
      %v2633 = vor.u32 %v2630, %v2631
      %v2634 = vsel %vm570, %v2626, %v2633
      %v2635 = vld [vmem:[%s2 + $0x10] sm:$0x3]
      %v2636 = vunpack.c.l.b16 %v2543
      %v2637 = vunpack.c.l.b16 %v2556
      %v2638 = vunpack.c.l.b16 %v2569
      %v2639 = vunpack.c.l.b16 %v2582
      %v2640 = vunpack.c.l.b16 %v2595
      %v2641 = vunpack.c.l.b16 %v2608
      %v2642 = vunpack.c.l.b16 %v2621
      %v2643 = vunpack.c.l.b16 %v2634
      %v2644 = vpack.c.b16 %v2637, %v2636
      %v2645 = vpack.c.b16 %v2639, %v2638
      %v2646 = vpack.c.b16 %v2641, %v2640
      %v2647 = vpack.c.b16 %v2643, %v2642
      %v2649 = vunpack.c.l.b16 %v2635
      %v2650 = vpack.c.b16 %v2649, %v2649
      %v2652 = vshrl.u32 %v2650, 16
      %v2654 = vshll.u32 %v2650, 16
      %v2656 = vrot.slane %v2654, 1
      %v2657 = vor.u32 %v2652, %v2656
      %v2659 = vsel %vm804, %v2644, 0
      %v2662 = vsel %vm804, %v2645, 0
      %v2665 = vsel %vm804, %v2646, 0
      %v2668 = vsel %vm804, %v2647, 0
      %v2671 = vand.u32 %v2657, %v820
      %2673 = vmatprep.subr.bf16.mxu0 0
      %2674 = vmatpush1.bf16.msra.mxu0 %v2671
      %2675 = vmatprep.subr.bf16.mxu0 0
      %2676 = vmatpush1.bf16.msra.mxu0 0
      %2677 = vmatprep.subr.bf16.mxu0 0
      %2678 = vmatpush1.bf16.msra.mxu0 0
      %2679 = vmatprep.subr.bf16.mxu0 0
      %2680 = vmatpush1.bf16.msra.mxu0 0
      %2681 = vmatprep.subr.bf16.mxu0 0
      %2682 = vmatpush1.bf16.msra.mxu0 0
      %2683 = vmatprep.subr.bf16.mxu0 0
      %2684 = vmatpush1.bf16.msra.mxu0 0
      %2685 = vmatprep.subr.bf16.mxu0 0
      %2686 = vmatpush1.bf16.msra.mxu0 0
      %2687 = vmatprep.subr.bf16.mxu0 0
      %2688 = vmatpush1.bf16.msra.mxu0 0
      %2689 = vmatprep.subr.bf16.mxu0 0
      %2690 = vmatpush1.bf16.msra.mxu0 0
      %2691 = vmatprep.subr.bf16.mxu0 0
      %2692 = vmatpush1.bf16.msra.mxu0 0
      %2693 = vmatprep.subr.bf16.mxu0 0
      %2694 = vmatpush1.bf16.msra.mxu0 0
      %2695 = vmatprep.subr.bf16.mxu0 0
      %2696 = vmatpush1.bf16.msra.mxu0 0
      %2697 = vmatprep.subr.bf16.mxu0 0
      %2698 = vmatpush1.bf16.msra.mxu0 0
      %2699 = vmatprep.subr.bf16.mxu0 0
      %2700 = vmatpush1.bf16.msra.mxu0 0
      %2701 = vmatprep.subr.bf16.mxu0 0
      %2702 = vmatpush1.bf16.msra.mxu0 0
      %2703 = vmatprep.subr.bf16.mxu0 0
      %2704 = vmatpush1.bf16.msra.mxu0 0
      %2705 = vmatprep.mubr.bf16.mxu0 0
      %2706 = vmatmul.mubr.bf16.gmra.mrb[0].mxu0 %v2659
      %v2707 = vpop.f32.mrb[0].mxu0
      %v2708 = vadd.f32 0.0, %v2707
      %v2709 = vpop.f32.mrb[0].mxu0
      %v2710 = vpop.f32.mrb[0].mxu0
      %v2711 = vadd.f32 0.0, %v2710
      %v2712 = vpop.f32.mrb[0].mxu0
      %2713 = vmatprep.mubr.bf16.mxu0 0
      %2714 = vmatmul.mubr.bf16.gmra.mrb[0].mxu0 %v2662
      %v2715 = vpop.f32.mrb[0].mxu0
      %v2716 = vadd.f32 0.0, %v2715
      %v2717 = vpop.f32.mrb[0].mxu0
      %v2718 = vpop.f32.mrb[0].mxu0
      %v2719 = vadd.f32 0.0, %v2718
      %v2720 = vpop.f32.mrb[0].mxu0
      %2721 = vmatprep.mubr.bf16.mxu0 0
      %2722 = vmatmul.mubr.bf16.gmra.mrb[0].mxu0 %v2665
      %v2723 = vpop.f32.mrb[0].mxu0
      %v2724 = vadd.f32 0.0, %v2723
      %v2725 = vpop.f32.mrb[0].mxu0
      %v2726 = vpop.f32.mrb[0].mxu0
      %v2727 = vadd.f32 0.0, %v2726
      %v2728 = vpop.f32.mrb[0].mxu0
      %2729 = vmatprep.mubr.bf16.mxu0 0
      %2730 = vmatmul.mubr.bf16.gmra.mrb[0].mxu0 %v2668
      %v2731 = vpop.f32.mrb[0].mxu0
      %v2732 = vadd.f32 0.0, %v2731
      %v2733 = vpop.f32.mrb[0].mxu0
      %v2734 = vpop.f32.mrb[0].mxu0
      %v2735 = vadd.f32 0.0, %v2734
      %v2736 = vpop.f32.mrb[0].mxu0
      %2737 = vdwg.mxu0
      %v2738 = vadd.f32 %v2523, %v2708
      %v2739 = vadd.f32 %v2524, %v2711
      %v2740 = vadd.f32 %v2525, %v2716
      %v2741 = vadd.f32 %v2526, %v2719
      %v2742 = vadd.f32 %v2527, %v2724
      %v2743 = vadd.f32 %v2528, %v2727
      %v2744 = vadd.f32 %v2529, %v2732
      %v2745 = vadd.f32 %v2530, %v2735
      %v2746 = vld [vmem:[%s2 + $0x10] sm:$0xc]
      %v2755 = vunpack.c.l.b16 %v2280
      %v2756 = vunpack.c.l.b16 %v2283
      %v2757 = vunpack.c.l.b16 %v2286
      %v2758 = vunpack.c.l.b16 %v2289
      %v2759 = vunpack.c.l.b16 %v2292
      %v2760 = vunpack.c.l.b16 %v2295
      %v2761 = vunpack.c.l.b16 %v2298
      %v2762 = vunpack.c.l.b16 %v2301
      %v2763 = vpack.c.b16 %v2756, %v2755
      %v2764 = vpack.c.b16 %v2758, %v2757
      %v2765 = vpack.c.b16 %v2760, %v2759
      %v2766 = vpack.c.b16 %v2762, %v2761
      %v2768 = vunpack.c.l.b16 %v2746
      %v2769 = vpack.c.b16 %v2768, %v2768
      %v2770 = vrot.slane %v2769, 2
      %v2772 = vsel %vm804, %v2763, 0
      %v2775 = vsel %vm804, %v2764, 0
      %v2778 = vsel %vm804, %v2765, 0
      %v2781 = vsel %vm804, %v2766, 0
      %v2784 = vand.u32 %v2770, %v820
      %2786 = vmatprep.subr.bf16.mxu0 0
      %2787 = vmatpush1.bf16.msra.mxu0 %v2784
      %2788 = vmatprep.subr.bf16.mxu0 0
      %2789 = vmatpush1.bf16.msra.mxu0 0
      %2790 = vmatprep.subr.bf16.mxu0 0
      %2791 = vmatpush1.bf16.msra.mxu0 0
      %2792 = vmatprep.subr.bf16.mxu0 0
      %2793 = vmatpush1.bf16.msra.mxu0 0
      %2794 = vmatprep.subr.bf16.mxu0 0
      %2795 = vmatpush1.bf16.msra.mxu0 0
      %2796 = vmatprep.subr.bf16.mxu0 0
      %2797 = vmatpush1.bf16.msra.mxu0 0
      %2798 = vmatprep.subr.bf16.mxu0 0
      %2799 = vmatpush1.bf16.msra.mxu0 0
      %2800 = vmatprep.subr.bf16.mxu0 0
      %2801 = vmatpush1.bf16.msra.mxu0 0
      %2802 = vmatprep.subr.bf16.mxu0 0
      %2803 = vmatpush1.bf16.msra.mxu0 0
      %2804 = vmatprep.subr.bf16.mxu0 0
      %2805 = vmatpush1.bf16.msra.mxu0 0
      %2806 = vmatprep.subr.bf16.mxu0 0
      %2807 = vmatpush1.bf16.msra.mxu0 0
      %2808 = vmatprep.subr.bf16.mxu0 0
      %2809 = vmatpush1.bf16.msra.mxu0 0
      %2810 = vmatprep.subr.bf16.mxu0 0
      %2811 = vmatpush1.bf16.msra.mxu0 0
      %2812 = vmatprep.subr.bf16.mxu0 0
      %2813 = vmatpush1.bf16.msra.mxu0 0
      %2814 = vmatprep.subr.bf16.mxu0 0
      %2815 = vmatpush1.bf16.msra.mxu0 0
      %2816 = vmatprep.subr.bf16.mxu0 0
      %2817 = vmatpush1.bf16.msra.mxu0 0
      %2818 = vmatprep.mubr.bf16.mxu0 0
      %2819 = vmatmul.mubr.bf16.gmra.mrb[0].mxu0 %v2772
      %v2820 = vpop.f32.mrb[0].mxu0
      %v2821 = vadd.f32 0.0, %v2820
      %v2822 = vpop.f32.mrb[0].mxu0
      %v2823 = vpop.f32.mrb[0].mxu0
      %v2824 = vadd.f32 0.0, %v2823
      %v2825 = vpop.f32.mrb[0].mxu0
      %2826 = vmatprep.mubr.bf16.mxu0 0
      %2827 = vmatmul.mubr.bf16.gmra.mrb[0].mxu0 %v2775
      %v2828 = vpop.f32.mrb[0].mxu0
      %v2829 = vadd.f32 0.0, %v2828
      %v2830 = vpop.f32.mrb[0].mxu0
      %v2831 = vpop.f32.mrb[0].mxu0
      %v2832 = vadd.f32 0.0, %v2831
      %v2833 = vpop.f32.mrb[0].mxu0
      %2834 = vmatprep.mubr.bf16.mxu0 0
      %2835 = vmatmul.mubr.bf16.gmra.mrb[0].mxu0 %v2778
      %v2836 = vpop.f32.mrb[0].mxu0
      %v2837 = vadd.f32 0.0, %v2836
      %v2838 = vpop.f32.mrb[0].mxu0
      %v2839 = vpop.f32.mrb[0].mxu0
      %v2840 = vadd.f32 0.0, %v2839
      %v2841 = vpop.f32.mrb[0].mxu0
      %2842 = vmatprep.mubr.bf16.mxu0 0
      %2843 = vmatmul.mubr.bf16.gmra.mrb[0].mxu0 %v2781
      %v2844 = vpop.f32.mrb[0].mxu0
      %v2845 = vadd.f32 0.0, %v2844
      %v2846 = vpop.f32.mrb[0].mxu0
      %v2847 = vpop.f32.mrb[0].mxu0
      %v2848 = vadd.f32 0.0, %v2847
      %v2849 = vpop.f32.mrb[0].mxu0
      %2850 = vdwg.mxu0
      %v2851 = vadd.f32 %v2738, %v2821
      %v2852 = vadd.f32 %v2739, %v2824
      %v2853 = vadd.f32 %v2740, %v2829
      %v2854 = vadd.f32 %v2741, %v2832
      %v2855 = vadd.f32 %v2742, %v2837
      %v2856 = vadd.f32 %v2743, %v2840
      %v2857 = vadd.f32 %v2744, %v2845
      %v2858 = vadd.f32 %v2745, %v2848
      %v2859 = vld [vmem:[%s2 + $0x10] sm:$0x8]
      %v2860 = vld [vmem:[%s2 + $0x14] sm:$0x1]
      %v2869 = vunpack.c.l.b16 %v2304
      %v2870 = vunpack.c.l.b16 %v2306
      %v2871 = vunpack.c.l.b16 %v2308
      %v2872 = vunpack.c.l.b16 %v2310
      %v2873 = vunpack.c.l.b16 %v2312
      %v2874 = vunpack.c.l.b16 %v2314
      %v2875 = vunpack.c.l.b16 %v2316
      %v2876 = vunpack.c.l.b16 %v2318
      %v2877 = vpack.c.b16 %v2870, %v2869
      %v2878 = vpack.c.b16 %v2872, %v2871
      %v2879 = vpack.c.b16 %v2874, %v2873
      %v2880 = vpack.c.b16 %v2876, %v2875
      %v2883 = vunpack.c.l.b16 %v2859
      %v2884 = vunpack.c.l.b16 %v2860
      %v2885 = vpack.c.b16 %v2884, %v2883
      %v2887 = vshrl.u32 %v2885, 16
      %v2889 = vrot.slane %v2887, 3
      %v2890 = vshll.u32 %v2885, 16
      %v2892 = vrot.slane %v2890, 4
      %v2893 = vor.u32 %v2889, %v2892
      %v2895 = vsel %vm804, %v2877, 0
      %v2898 = vsel %vm804, %v2878, 0
      %v2901 = vsel %vm804, %v2879, 0
      %v2904 = vsel %vm804, %v2880, 0
      %v2907 = vand.u32 %v2893, %v820
      %2909 = vmatprep.subr.bf16.mxu0 0
      %2910 = vmatpush1.bf16.msra.mxu0 %v2907
      %2911 = vmatprep.subr.bf16.mxu0 0
      %2912 = vmatpush1.bf16.msra.mxu0 0
      %2913 = vmatprep.subr.bf16.mxu0 0
      %2914 = vmatpush1.bf16.msra.mxu0 0
      %2915 = vmatprep.subr.bf16.mxu0 0
      %2916 = vmatpush1.bf16.msra.mxu0 0
      %2917 = vmatprep.subr.bf16.mxu0 0
      %2918 = vmatpush1.bf16.msra.mxu0 0
      %2919 = vmatprep.subr.bf16.mxu0 0
      %2920 = vmatpush1.bf16.msra.mxu0 0
      %2921 = vmatprep.subr.bf16.mxu0 0
      %2922 = vmatpush1.bf16.msra.mxu0 0
      %2923 = vmatprep.subr.bf16.mxu0 0
      %2924 = vmatpush1.bf16.msra.mxu0 0
      %2925 = vmatprep.subr.bf16.mxu0 0
      %2926 = vmatpush1.bf16.msra.mxu0 0
      %2927 = vmatprep.subr.bf16.mxu0 0
      %2928 = vmatpush1.bf16.msra.mxu0 0
      %2929 = vmatprep.subr.bf16.mxu0 0
      %2930 = vmatpush1.bf16.msra.mxu0 0
      %2931 = vmatprep.subr.bf16.mxu0 0
      %2932 = vmatpush1.bf16.msra.mxu0 0
      %2933 = vmatprep.subr.bf16.mxu0 0
      %2934 = vmatpush1.bf16.msra.mxu0 0
      %2935 = vmatprep.subr.bf16.mxu0 0
      %2936 = vmatpush1.bf16.msra.mxu0 0
      %2937 = vmatprep.subr.bf16.mxu0 0
      %2938 = vmatpush1.bf16.msra.mxu0 0
      %2939 = vmatprep.subr.bf16.mxu0 0
      %2940 = vmatpush1.bf16.msra.mxu0 0
      %2941 = vmatprep.mubr.bf16.mxu0 0
      %2942 = vmatmul.mubr.bf16.gmra.mrb[0].mxu0 %v2895
      %v2943 = vpop.f32.mrb[0].mxu0
      %v2944 = vadd.f32 0.0, %v2943
      %v2945 = vpop.f32.mrb[0].mxu0
      %v2946 = vpop.f32.mrb[0].mxu0
      %v2947 = vadd.f32 0.0, %v2946
      %v2948 = vpop.f32.mrb[0].mxu0
      %2949 = vmatprep.mubr.bf16.mxu0 0
      %2950 = vmatmul.mubr.bf16.gmra.mrb[0].mxu0 %v2898
      %v2951 = vpop.f32.mrb[0].mxu0
      %v2952 = vadd.f32 0.0, %v2951
      %v2953 = vpop.f32.mrb[0].mxu0
      %v2954 = vpop.f32.mrb[0].mxu0
      %v2955 = vadd.f32 0.0, %v2954
      %v2956 = vpop.f32.mrb[0].mxu0
      %2957 = vmatprep.mubr.bf16.mxu0 0
      %2958 = vmatmul.mubr.bf16.gmra.mrb[0].mxu0 %v2901
      %v2959 = vpop.f32.mrb[0].mxu0
      %v2960 = vadd.f32 0.0, %v2959
      %v2961 = vpop.f32.mrb[0].mxu0
      %v2962 = vpop.f32.mrb[0].mxu0
      %v2963 = vadd.f32 0.0, %v2962
      %v2964 = vpop.f32.mrb[0].mxu0
      %2965 = vmatprep.mubr.bf16.mxu0 0
      %2966 = vmatmul.mubr.bf16.gmra.mrb[0].mxu0 %v2904
      %v2967 = vpop.f32.mrb[0].mxu0
      %v2968 = vadd.f32 0.0, %v2967
      %v2969 = vpop.f32.mrb[0].mxu0
      %v2970 = vpop.f32.mrb[0].mxu0
      %v2971 = vadd.f32 0.0, %v2970
      %v2972 = vpop.f32.mrb[0].mxu0
      %2973 = vdwg.mxu0
      %v2974 = vadd.f32 %v2851, %v2944
      %v2975 = vadd.f32 %v2852, %v2947
      %v2976 = vadd.f32 %v2853, %v2952
      %v2977 = vadd.f32 %v2854, %v2955
      %v2978 = vadd.f32 %v2855, %v2960
      %v2979 = vadd.f32 %v2856, %v2963
      %v2980 = vadd.f32 %v2857, %v2968
      %v2981 = vadd.f32 %v2858, %v2971
      %v2982 = vrot.slane %v2325, 4
      %v2983 = vrot.slane %v2328, 5
      %v2984 = vor.u32 %v2982, %v2983
      %v2985 = vrot.slane %v2984, 4
      %v2987 = vshll.u32 %v2281, 16
      %v2989 = vrot.slane %v2987, 5
      %v2990 = vsel %vm1218, %v2985, %v2989
      %v2991 = vrot.slane %v2338, 4
      %v2992 = vrot.slane %v2341, 5
      %v2993 = vor.u32 %v2991, %v2992
      %v2994 = vrot.slane %v2993, 4
      %v2996 = vshll.u32 %v2284, 16
      %v2998 = vrot.slane %v2996, 5
      %v2999 = vsel %vm1218, %v2994, %v2998
      %v3000 = vrot.slane %v2351, 4
      %v3001 = vrot.slane %v2354, 5
      %v3002 = vor.u32 %v3000, %v3001
      %v3003 = vrot.slane %v3002, 4
      %v3005 = vshll.u32 %v2287, 16
      %v3007 = vrot.slane %v3005, 5
      %v3008 = vsel %vm1218, %v3003, %v3007
      %v3009 = vrot.slane %v2364, 4
      %v3010 = vrot.slane %v2367, 5
      %v3011 = vor.u32 %v3009, %v3010
      %v3012 = vrot.slane %v3011, 4
      %v3014 = vshll.u32 %v2290, 16
      %v3016 = vrot.slane %v3014, 5
      %v3017 = vsel %vm1218, %v3012, %v3016
      %v3018 = vrot.slane %v2377, 4
      %v3019 = vrot.slane %v2380, 5
      %v3020 = vor.u32 %v3018, %v3019
      %v3021 = vrot.slane %v3020, 4
      %v3023 = vshll.u32 %v2293, 16
      %v3025 = vrot.slane %v3023, 5
      %v3026 = vsel %vm1218, %v3021, %v3025
      %v3027 = vrot.slane %v2390, 4
      %v3028 = vrot.slane %v2393, 5
      %v3029 = vor.u32 %v3027, %v3028
      %v3030 = vrot.slane %v3029, 4
      %v3032 = vshll.u32 %v2296, 16
      %v3034 = vrot.slane %v3032, 5
      %v3035 = vsel %vm1218, %v3030, %v3034
      %v3036 = vrot.slane %v2403, 4
      %v3037 = vrot.slane %v2406, 5
      %v3038 = vor.u32 %v3036, %v3037
      %v3039 = vrot.slane %v3038, 4
      %v3041 = vshll.u32 %v2299, 16
      %v3043 = vrot.slane %v3041, 5
      %v3044 = vsel %vm1218, %v3039, %v3043
      %v3045 = vrot.slane %v2416, 4
      %v3046 = vrot.slane %v2419, 5
      %v3047 = vor.u32 %v3045, %v3046
      %v3048 = vrot.slane %v3047, 4
      %v3050 = vshll.u32 %v2302, 16
      %v3052 = vrot.slane %v3050, 5
      %v3053 = vsel %vm1218, %v3048, %v3052
      %v3054 = vld [vmem:[%s2 + $0x14] sm:$0x6]
      %v3055 = vunpack.c.l.b16 %v2990
      %v3056 = vunpack.c.l.b16 %v2999
      %v3057 = vunpack.c.l.b16 %v3008
      %v3058 = vunpack.c.l.b16 %v3017
      %v3059 = vunpack.c.l.b16 %v3026
      %v3060 = vunpack.c.l.b16 %v3035
      %v3061 = vunpack.c.l.b16 %v3044
      %v3062 = vunpack.c.l.b16 %v3053
      %v3063 = vpack.c.b16 %v3056, %v3055
      %v3064 = vpack.c.b16 %v3058, %v3057
      %v3065 = vpack.c.b16 %v3060, %v3059
      %v3066 = vpack.c.b16 %v3062, %v3061
      %v3068 = vunpack.c.l.b16 %v3054
      %v3069 = vpack.c.b16 %v3068, %v3068
      %v3070 = vrot.slane %v3069, 1
      %v3072 = vsel %vm804, %v3063, 0
      %v3075 = vsel %vm804, %v3064, 0
      %v3078 = vsel %vm804, %v3065, 0
      %v3081 = vsel %vm804, %v3066, 0
      %v3084 = vand.u32 %v3070, %v820
      %3086 = vmatprep.subr.bf16.mxu0 0
      %3087 = vmatpush1.bf16.msra.mxu0 %v3084
      %3088 = vmatprep.subr.bf16.mxu0 0
      %3089 = vmatpush1.bf16.msra.mxu0 0
      %3090 = vmatprep.subr.bf16.mxu0 0
      %3091 = vmatpush1.bf16.msra.mxu0 0
      %3092 = vmatprep.subr.bf16.mxu0 0
      %3093 = vmatpush1.bf16.msra.mxu0 0
      %3094 = vmatprep.subr.bf16.mxu0 0
      %3095 = vmatpush1.bf16.msra.mxu0 0
      %3096 = vmatprep.subr.bf16.mxu0 0
      %3097 = vmatpush1.bf16.msra.mxu0 0
      %3098 = vmatprep.subr.bf16.mxu0 0
      %3099 = vmatpush1.bf16.msra.mxu0 0
      %3100 = vmatprep.subr.bf16.mxu0 0
      %3101 = vmatpush1.bf16.msra.mxu0 0
      %3102 = vmatprep.subr.bf16.mxu0 0
      %3103 = vmatpush1.bf16.msra.mxu0 0
      %3104 = vmatprep.subr.bf16.mxu0 0
      %3105 = vmatpush1.bf16.msra.mxu0 0
      %3106 = vmatprep.subr.bf16.mxu0 0
      %3107 = vmatpush1.bf16.msra.mxu0 0
      %3108 = vmatprep.subr.bf16.mxu0 0
      %3109 = vmatpush1.bf16.msra.mxu0 0
      %3110 = vmatprep.subr.bf16.mxu0 0
      %3111 = vmatpush1.bf16.msra.mxu0 0
      %3112 = vmatprep.subr.bf16.mxu0 0
      %3113 = vmatpush1.bf16.msra.mxu0 0
      %3114 = vmatprep.subr.bf16.mxu0 0
      %3115 = vmatpush1.bf16.msra.mxu0 0
      %3116 = vmatprep.subr.bf16.mxu0 0
      %3117 = vmatpush1.bf16.msra.mxu0 0
      %3118 = vmatprep.mubr.bf16.mxu0 0
      %3119 = vmatmul.mubr.bf16.gmra.mrb[0].mxu0 %v3072
      %v3120 = vpop.f32.mrb[0].mxu0
      %v3121 = vadd.f32 0.0, %v3120
      %v3122 = vpop.f32.mrb[0].mxu0
      %v3123 = vpop.f32.mrb[0].mxu0
      %v3124 = vadd.f32 0.0, %v3123
      %v3125 = vpop.f32.mrb[0].mxu0
      %3126 = vmatprep.mubr.bf16.mxu0 0
      %3127 = vmatmul.mubr.bf16.gmra.mrb[0].mxu0 %v3075
      %v3128 = vpop.f32.mrb[0].mxu0
      %v3129 = vadd.f32 0.0, %v3128
      %v3130 = vpop.f32.mrb[0].mxu0
      %v3131 = vpop.f32.mrb[0].mxu0
      %v3132 = vadd.f32 0.0, %v3131
      %v3133 = vpop.f32.mrb[0].mxu0
      %3134 = vmatprep.mubr.bf16.mxu0 0
      %3135 = vmatmul.mubr.bf16.gmra.mrb[0].mxu0 %v3078
      %v3136 = vpop.f32.mrb[0].mxu0
      %v3137 = vadd.f32 0.0, %v3136
      %v3138 = vpop.f32.mrb[0].mxu0
      %v3139 = vpop.f32.mrb[0].mxu0
      %v3140 = vadd.f32 0.0, %v3139
      %v3141 = vpop.f32.mrb[0].mxu0
      %3142 = vmatprep.mubr.bf16.mxu0 0
      %3143 = vmatmul.mubr.bf16.gmra.mrb[0].mxu0 %v3081
      %v3144 = vpop.f32.mrb[0].mxu0
      %v3145 = vadd.f32 0.0, %v3144
      %v3146 = vpop.f32.mrb[0].mxu0
      %v3147 = vpop.f32.mrb[0].mxu0
      %v3148 = vadd.f32 0.0, %v3147
      %v3149 = vpop.f32.mrb[0].mxu0
      %3150 = vdwg.mxu0
      %v3151 = vadd.f32 %v2974, %v3121
      %v3152 = vadd.f32 %v2975, %v3124
      %v3153 = vadd.f32 %v2976, %v3129
      %v3154 = vadd.f32 %v2977, %v3132
      %v3155 = vadd.f32 %v2978, %v3137
      %v3156 = vadd.f32 %v2979, %v3140
      %v3157 = vadd.f32 %v2980, %v3145
      %v3158 = vadd.f32 %v2981, %v3148
      %s3159 = scalar_lea.vmem [#allocation2], 48
      %v3160 = vld [vmem:[%s3159 + $0x4] sm:$0xf]
      %v3161 = vld [vmem:[%s3159 + $0x8] sm:$0xf]
      %v3162 = vld [vmem:[%s3159 + $0xc] sm:$0x1]
      %v3163 = vld [vmem:[%s3159 + $0x24] sm:$0xf]
      %v3164 = vld [vmem:[%s3159 + $0x28] sm:$0xf]
      %v3165 = vld [vmem:[%s3159 + $0x2c] sm:$0x1]
      %v3166 = vld [vmem:[%s3159 + $0x44] sm:$0xf]
      %v3167 = vld [vmem:[%s3159 + $0x48] sm:$0xf]
      %v3168 = vld [vmem:[%s3159 + $0x4c] sm:$0x1]
      %v3169 = vld [vmem:[%s3159 + $0x64] sm:$0xf]
      %v3170 = vld [vmem:[%s3159 + $0x68] sm:$0xf]
      %v3171 = vld [vmem:[%s3159 + $0x6c] sm:$0x1]
      %v3172 = vld [vmem:[%s3159 + $0x84] sm:$0xf]
      %v3173 = vld [vmem:[%s3159 + $0x88] sm:$0xf]
      %v3174 = vld [vmem:[%s3159 + $0x8c] sm:$0x1]
      %v3175 = vld [vmem:[%s3159 + $0xa4] sm:$0xf]
      %v3176 = vld [vmem:[%s3159 + $0xa8] sm:$0xf]
      %v3177 = vld [vmem:[%s3159 + $0xac] sm:$0x1]
      %v3178 = vld [vmem:[%s3159 + $0xc4] sm:$0xf]
      %v3179 = vld [vmem:[%s3159 + $0xc8] sm:$0xf]
      %v3180 = vld [vmem:[%s3159 + $0xcc] sm:$0x1]
      %v3181 = vld [vmem:[%s3159 + $0xe4] sm:$0xf]
      %v3182 = vld [vmem:[%s3159 + $0xe8] sm:$0xf]
      %v3183 = vld [vmem:[%s3159 + $0xec] sm:$0x1]
      %s3184 = scalar_lea.vmem [#allocation3], 48
      %v3185 = vld [vmem:[%s3184 + $0x4] sm:$0xf]
      %v3186 = vld [vmem:[%s3184 + $0x8] sm:$0xf]
      %v3187 = vld [vmem:[%s3184 + $0x24] sm:$0xf]
      %v3188 = vld [vmem:[%s3184 + $0x28] sm:$0xf]
      %v3189 = vld [vmem:[%s3184 + $0x44] sm:$0xf]
      %v3190 = vld [vmem:[%s3184 + $0x48] sm:$0xf]
      %v3191 = vld [vmem:[%s3184 + $0x64] sm:$0xf]
      %v3192 = vld [vmem:[%s3184 + $0x68] sm:$0xf]
      %v3193 = vld [vmem:[%s3184 + $0x84] sm:$0xf]
      %v3194 = vld [vmem:[%s3184 + $0x88] sm:$0xf]
      %v3195 = vld [vmem:[%s3184 + $0xa4] sm:$0xf]
      %v3196 = vld [vmem:[%s3184 + $0xa8] sm:$0xf]
      %v3197 = vld [vmem:[%s3184 + $0xc4] sm:$0xf]
      %v3198 = vld [vmem:[%s3184 + $0xc8] sm:$0xf]
      %v3199 = vld [vmem:[%s3184 + $0xe4] sm:$0xf]
      %v3200 = vld [vmem:[%s3184 + $0xe8] sm:$0xf]
      %v3202 = vshrl.u32 %v3160, 16
      %v3204 = vrot.slane %v3202, 7
      %v3205 = vrot.slane %v3204, 4
      %v3207 = vshrl.u32 %v3161, 16
      %v3209 = vrot.slane %v3207, 7
      %v3210 = vshll.u32 %v3161, 16
      %v3212 = vor.u32 %v3209, %v3210
      %v3213 = vsel %vm570, %v3205, %v3212
      %v3215 = vshrl.u32 %v3163, 16
      %v3217 = vrot.slane %v3215, 7
      %v3218 = vrot.slane %v3217, 4
      %v3220 = vshrl.u32 %v3164, 16
      %v3222 = vrot.slane %v3220, 7
      %v3223 = vshll.u32 %v3164, 16
      %v3225 = vor.u32 %v3222, %v3223
      %v3226 = vsel %vm570, %v3218, %v3225
      %v3228 = vshrl.u32 %v3166, 16
      %v3230 = vrot.slane %v3228, 7
      %v3231 = vrot.slane %v3230, 4
      %v3233 = vshrl.u32 %v3167, 16
      %v3235 = vrot.slane %v3233, 7
      %v3236 = vshll.u32 %v3167, 16
      %v3238 = vor.u32 %v3235, %v3236
      %v3239 = vsel %vm570, %v3231, %v3238
      %v3241 = vshrl.u32 %v3169, 16
      %v3243 = vrot.slane %v3241, 7
      %v3244 = vrot.slane %v3243, 4
      %v3246 = vshrl.u32 %v3170, 16
      %v3248 = vrot.slane %v3246, 7
      %v3249 = vshll.u32 %v3170, 16
      %v3251 = vor.u32 %v3248, %v3249
      %v3252 = vsel %vm570, %v3244, %v3251
      %v3254 = vshrl.u32 %v3172, 16
      %v3256 = vrot.slane %v3254, 7
      %v3257 = vrot.slane %v3256, 4
      %v3259 = vshrl.u32 %v3173, 16
      %v3261 = vrot.slane %v3259, 7
      %v3262 = vshll.u32 %v3173, 16
      %v3264 = vor.u32 %v3261, %v3262
      %v3265 = vsel %vm570, %v3257, %v3264
      %v3267 = vshrl.u32 %v3175, 16
      %v3269 = vrot.slane %v3267, 7
      %v3270 = vrot.slane %v3269, 4
      %v3272 = vshrl.u32 %v3176, 16
      %v3274 = vrot.slane %v3272, 7
      %v3275 = vshll.u32 %v3176, 16
      %v3277 = vor.u32 %v3274, %v3275
      %v3278 = vsel %vm570, %v3270, %v3277
      %v3280 = vshrl.u32 %v3178, 16
      %v3282 = vrot.slane %v3280, 7
      %v3283 = vrot.slane %v3282, 4
      %v3285 = vshrl.u32 %v3179, 16
      %v3287 = vrot.slane %v3285, 7
      %v3288 = vshll.u32 %v3179, 16
      %v3290 = vor.u32 %v3287, %v3288
      %v3291 = vsel %vm570, %v3283, %v3290
      %v3293 = vshrl.u32 %v3181, 16
      %v3295 = vrot.slane %v3293, 7
      %v3296 = vrot.slane %v3295, 4
      %v3298 = vshrl.u32 %v3182, 16
      %v3300 = vrot.slane %v3298, 7
      %v3301 = vshll.u32 %v3182, 16
      %v3303 = vor.u32 %v3300, %v3301
      %v3304 = vsel %vm570, %v3296, %v3303
      %v3305 = vld [vmem:[%s2 + $0x14] sm:$0xc]
      %v3306 = vunpack.c.l.b16 %v3213
      %v3307 = vunpack.c.l.b16 %v3226
      %v3308 = vunpack.c.l.b16 %v3239
      %v3309 = vunpack.c.l.b16 %v3252
      %v3310 = vunpack.c.l.b16 %v3265
      %v3311 = vunpack.c.l.b16 %v3278
      %v3312 = vunpack.c.l.b16 %v3291
      %v3313 = vunpack.c.l.b16 %v3304
      %v3314 = vpack.c.b16 %v3307, %v3306
      %v3315 = vpack.c.b16 %v3309, %v3308
      %v3316 = vpack.c.b16 %v3311, %v3310
      %v3317 = vpack.c.b16 %v3313, %v3312
      %v3319 = vunpack.c.l.b16 %v3305
      %v3320 = vpack.c.b16 %v3319, %v3319
      %v3322 = vshrl.u32 %v3320, 16
      %v3324 = vrot.slane %v3322, 2
      %v3325 = vshll.u32 %v3320, 16
      %v3327 = vrot.slane %v3325, 3
      %v3328 = vor.u32 %v3324, %v3327
      %v3330 = vsel %vm804, %v3314, 0
      %v3333 = vsel %vm804, %v3315, 0
      %v3336 = vsel %vm804, %v3316, 0
      %v3339 = vsel %vm804, %v3317, 0
      %v3342 = vand.u32 %v3328, %v820
      %3344 = vmatprep.subr.bf16.mxu0 0
      %3345 = vmatpush1.bf16.msra.mxu0 %v3342
      %3346 = vmatprep.subr.bf16.mxu0 0
      %3347 = vmatpush1.bf16.msra.mxu0 0
      %3348 = vmatprep.subr.bf16.mxu0 0
      %3349 = vmatpush1.bf16.msra.mxu0 0
      %3350 = vmatprep.subr.bf16.mxu0 0
      %3351 = vmatpush1.bf16.msra.mxu0 0
      %3352 = vmatprep.subr.bf16.mxu0 0
      %3353 = vmatpush1.bf16.msra.mxu0 0
      %3354 = vmatprep.subr.bf16.mxu0 0
      %3355 = vmatpush1.bf16.msra.mxu0 0
      %3356 = vmatprep.subr.bf16.mxu0 0
      %3357 = vmatpush1.bf16.msra.mxu0 0
      %3358 = vmatprep.subr.bf16.mxu0 0
      %3359 = vmatpush1.bf16.msra.mxu0 0
      %3360 = vmatprep.subr.bf16.mxu0 0
      %3361 = vmatpush1.bf16.msra.mxu0 0
      %3362 = vmatprep.subr.bf16.mxu0 0
      %3363 = vmatpush1.bf16.msra.mxu0 0
      %3364 = vmatprep.subr.bf16.mxu0 0
      %3365 = vmatpush1.bf16.msra.mxu0 0
      %3366 = vmatprep.subr.bf16.mxu0 0
      %3367 = vmatpush1.bf16.msra.mxu0 0
      %3368 = vmatprep.subr.bf16.mxu0 0
      %3369 = vmatpush1.bf16.msra.mxu0 0
      %3370 = vmatprep.subr.bf16.mxu0 0
      %3371 = vmatpush1.bf16.msra.mxu0 0
      %3372 = vmatprep.subr.bf16.mxu0 0
      %3373 = vmatpush1.bf16.msra.mxu0 0
      %3374 = vmatprep.subr.bf16.mxu0 0
      %3375 = vmatpush1.bf16.msra.mxu0 0
      %3376 = vmatprep.mubr.bf16.mxu0 0
      %3377 = vmatmul.mubr.bf16.gmra.mrb[0].mxu0 %v3330
      %v3378 = vpop.f32.mrb[0].mxu0
      %v3379 = vadd.f32 0.0, %v3378
      %v3380 = vpop.f32.mrb[0].mxu0
      %v3381 = vpop.f32.mrb[0].mxu0
      %v3382 = vadd.f32 0.0, %v3381
      %v3383 = vpop.f32.mrb[0].mxu0
      %3384 = vmatprep.mubr.bf16.mxu0 0
      %3385 = vmatmul.mubr.bf16.gmra.mrb[0].mxu0 %v3333
      %v3386 = vpop.f32.mrb[0].mxu0
      %v3387 = vadd.f32 0.0, %v3386
      %v3388 = vpop.f32.mrb[0].mxu0
      %v3389 = vpop.f32.mrb[0].mxu0
      %v3390 = vadd.f32 0.0, %v3389
      %v3391 = vpop.f32.mrb[0].mxu0
      %3392 = vmatprep.mubr.bf16.mxu0 0
      %3393 = vmatmul.mubr.bf16.gmra.mrb[0].mxu0 %v3336
      %v3394 = vpop.f32.mrb[0].mxu0
      %v3395 = vadd.f32 0.0, %v3394
      %v3396 = vpop.f32.mrb[0].mxu0
      %v3397 = vpop.f32.mrb[0].mxu0
      %v3398 = vadd.f32 0.0, %v3397
      %v3399 = vpop.f32.mrb[0].mxu0
      %3400 = vmatprep.mubr.bf16.mxu0 0
      %3401 = vmatmul.mubr.bf16.gmra.mrb[0].mxu0 %v3339
      %v3402 = vpop.f32.mrb[0].mxu0
      %v3403 = vadd.f32 0.0, %v3402
      %v3404 = vpop.f32.mrb[0].mxu0
      %v3405 = vpop.f32.mrb[0].mxu0
      %v3406 = vadd.f32 0.0, %v3405
      %v3407 = vpop.f32.mrb[0].mxu0
      %3408 = vdwg.mxu0
      %v3409 = vadd.f32 %v3151, %v3379
      %v3410 = vadd.f32 %v3152, %v3382
      %v3411 = vadd.f32 %v3153, %v3387
      %v3412 = vadd.f32 %v3154, %v3390
      %v3413 = vadd.f32 %v3155, %v3395
      %v3414 = vadd.f32 %v3156, %v3398
      %v3415 = vadd.f32 %v3157, %v3403
      %v3416 = vadd.f32 %v3158, %v3406
      %v3418 = vshrl.u32 %v3185, 16
      %v3420 = vrot.slane %v3418, 7
      %v3421 = vrot.slane %v3420, 4
      %v3423 = vshrl.u32 %v3186, 16
      %v3425 = vrot.slane %v3423, 7
      %v3426 = vshll.u32 %v3186, 16
      %v3428 = vor.u32 %v3425, %v3426
      %v3429 = vsel %vm570, %v3421, %v3428
      %v3431 = vshrl.u32 %v3187, 16
      %v3433 = vrot.slane %v3431, 7
      %v3434 = vrot.slane %v3433, 4
      %v3436 = vshrl.u32 %v3188, 16
      %v3438 = vrot.slane %v3436, 7
      %v3439 = vshll.u32 %v3188, 16
      %v3441 = vor.u32 %v3438, %v3439
      %v3442 = vsel %vm570, %v3434, %v3441
      %v3444 = vshrl.u32 %v3189, 16
      %v3446 = vrot.slane %v3444, 7
      %v3447 = vrot.slane %v3446, 4
      %v3449 = vshrl.u32 %v3190, 16
      %v3451 = vrot.slane %v3449, 7
      %v3452 = vshll.u32 %v3190, 16
      %v3454 = vor.u32 %v3451, %v3452
      %v3455 = vsel %vm570, %v3447, %v3454
      %v3457 = vshrl.u32 %v3191, 16
      %v3459 = vrot.slane %v3457, 7
      %v3460 = vrot.slane %v3459, 4
      %v3462 = vshrl.u32 %v3192, 16
      %v3464 = vrot.slane %v3462, 7
      %v3465 = vshll.u32 %v3192, 16
      %v3467 = vor.u32 %v3464, %v3465
      %v3468 = vsel %vm570, %v3460, %v3467
      %v3470 = vshrl.u32 %v3193, 16
      %v3472 = vrot.slane %v3470, 7
      %v3473 = vrot.slane %v3472, 4
      %v3475 = vshrl.u32 %v3194, 16
      %v3477 = vrot.slane %v3475, 7
      %v3478 = vshll.u32 %v3194, 16
      %v3480 = vor.u32 %v3477, %v3478
      %v3481 = vsel %vm570, %v3473, %v3480
      %v3483 = vshrl.u32 %v3195, 16
      %v3485 = vrot.slane %v3483, 7
      %v3486 = vrot.slane %v3485, 4
      %v3488 = vshrl.u32 %v3196, 16
      %v3490 = vrot.slane %v3488, 7
      %v3491 = vshll.u32 %v3196, 16
      %v3493 = vor.u32 %v3490, %v3491
      %v3494 = vsel %vm570, %v3486, %v3493
      %v3496 = vshrl.u32 %v3197, 16
      %v3498 = vrot.slane %v3496, 7
      %v3499 = vrot.slane %v3498, 4
      %v3501 = vshrl.u32 %v3198, 16
      %v3503 = vrot.slane %v3501, 7
      %v3504 = vshll.u32 %v3198, 16
      %v3506 = vor.u32 %v3503, %v3504
      %v3507 = vsel %vm570, %v3499, %v3506
      %v3509 = vshrl.u32 %v3199, 16
      %v3511 = vrot.slane %v3509, 7
      %v3512 = vrot.slane %v3511, 4
      %v3514 = vshrl.u32 %v3200, 16
      %v3516 = vrot.slane %v3514, 7
      %v3517 = vshll.u32 %v3200, 16
      %v3519 = vor.u32 %v3516, %v3517
      %v3520 = vsel %vm570, %v3512, %v3519
      %v3521 = vld [vmem:[%s2 + $0x18] sm:$0x3]
      %v3522 = vunpack.c.l.b16 %v3429
      %v3523 = vunpack.c.l.b16 %v3442
      %v3524 = vunpack.c.l.b16 %v3455
      %v3525 = vunpack.c.l.b16 %v3468
      %v3526 = vunpack.c.l.b16 %v3481
      %v3527 = vunpack.c.l.b16 %v3494
      %v3528 = vunpack.c.l.b16 %v3507
      %v3529 = vunpack.c.l.b16 %v3520
      %v3530 = vpack.c.b16 %v3523, %v3522
      %v3531 = vpack.c.b16 %v3525, %v3524
      %v3532 = vpack.c.b16 %v3527, %v3526
      %v3533 = vpack.c.b16 %v3529, %v3528
      %v3535 = vsel %vm804, %v3530, 0
      %v3538 = vsel %vm804, %v3531, 0
      %v3541 = vsel %vm804, %v3532, 0
      %v3544 = vsel %vm804, %v3533, 0
      %v3547 = vand.u32 %v3521, %v820
      %3549 = vmatprep.subr.bf16.mxu0 0
      %3550 = vmatpush1.bf16.msra.mxu0 %v3547
      %3551 = vmatprep.subr.bf16.mxu0 0
      %3552 = vmatpush1.bf16.msra.mxu0 0
      %3553 = vmatprep.subr.bf16.mxu0 0
      %3554 = vmatpush1.bf16.msra.mxu0 0
      %3555 = vmatprep.subr.bf16.mxu0 0
      %3556 = vmatpush1.bf16.msra.mxu0 0
      %3557 = vmatprep.subr.bf16.mxu0 0
      %3558 = vmatpush1.bf16.msra.mxu0 0
      %3559 = vmatprep.subr.bf16.mxu0 0
      %3560 = vmatpush1.bf16.msra.mxu0 0
      %3561 = vmatprep.subr.bf16.mxu0 0
      %3562 = vmatpush1.bf16.msra.mxu0 0
      %3563 = vmatprep.subr.bf16.mxu0 0
      %3564 = vmatpush1.bf16.msra.mxu0 0
      %3565 = vmatprep.subr.bf16.mxu0 0
      %3566 = vmatpush1.bf16.msra.mxu0 0
      %3567 = vmatprep.subr.bf16.mxu0 0
      %3568 = vmatpush1.bf16.msra.mxu0 0
      %3569 = vmatprep.subr.bf16.mxu0 0
      %3570 = vmatpush1.bf16.msra.mxu0 0
      %3571 = vmatprep.subr.bf16.mxu0 0
      %3572 = vmatpush1.bf16.msra.mxu0 0
      %3573 = vmatprep.subr.bf16.mxu0 0
      %3574 = vmatpush1.bf16.msra.mxu0 0
      %3575 = vmatprep.subr.bf16.mxu0 0
      %3576 = vmatpush1.bf16.msra.mxu0 0
      %3577 = vmatprep.subr.bf16.mxu0 0
      %3578 = vmatpush1.bf16.msra.mxu0 0
      %3579 = vmatprep.subr.bf16.mxu0 0
      %3580 = vmatpush1.bf16.msra.mxu0 0
      %3581 = vmatprep.mubr.bf16.mxu0 0
      %3582 = vmatmul.mubr.bf16.gmra.mrb[0].mxu0 %v3535
      %v3583 = vpop.f32.mrb[0].mxu0
      %v3584 = vadd.f32 0.0, %v3583
      %v3585 = vpop.f32.mrb[0].mxu0
      %v3586 = vpop.f32.mrb[0].mxu0
      %v3587 = vadd.f32 0.0, %v3586
      %v3588 = vpop.f32.mrb[0].mxu0
      %3589 = vmatprep.mubr.bf16.mxu0 0
      %3590 = vmatmul.mubr.bf16.gmra.mrb[0].mxu0 %v3538
      %v3591 = vpop.f32.mrb[0].mxu0
      %v3592 = vadd.f32 0.0, %v3591
      %v3593 = vpop.f32.mrb[0].mxu0
      %v3594 = vpop.f32.mrb[0].mxu0
      %v3595 = vadd.f32 0.0, %v3594
      %v3596 = vpop.f32.mrb[0].mxu0
      %3597 = vmatprep.mubr.bf16.mxu0 0
      %3598 = vmatmul.mubr.bf16.gmra.mrb[0].mxu0 %v3541
      %v3599 = vpop.f32.mrb[0].mxu0
      %v3600 = vadd.f32 0.0, %v3599
      %v3601 = vpop.f32.mrb[0].mxu0
      %v3602 = vpop.f32.mrb[0].mxu0
      %v3603 = vadd.f32 0.0, %v3602
      %v3604 = vpop.f32.mrb[0].mxu0
      %3605 = vmatprep.mubr.bf16.mxu0 0
      %3606 = vmatmul.mubr.bf16.gmra.mrb[0].mxu0 %v3544
      %v3607 = vpop.f32.mrb[0].mxu0
      %v3608 = vadd.f32 0.0, %v3607
      %v3609 = vpop.f32.mrb[0].mxu0
      %v3610 = vpop.f32.mrb[0].mxu0
      %v3611 = vadd.f32 0.0, %v3610
      %v3612 = vpop.f32.mrb[0].mxu0
      %3613 = vdwg.mxu0
      %v3614 = vadd.f32 %v3409, %v3584
      %v3615 = vadd.f32 %v3410, %v3587
      %v3616 = vadd.f32 %v3411, %v3592
      %v3617 = vadd.f32 %v3412, %v3595
      %v3618 = vadd.f32 %v3413, %v3600
      %v3619 = vadd.f32 %v3414, %v3603
      %v3620 = vadd.f32 %v3415, %v3608
      %v3621 = vadd.f32 %v3416, %v3611
      %v3622 = vld [vmem:[%s2 + $0x18] sm:$0x6]
      %v3631 = vunpack.c.l.b16 %v3161
      %v3632 = vunpack.c.l.b16 %v3164
      %v3633 = vunpack.c.l.b16 %v3167
      %v3634 = vunpack.c.l.b16 %v3170
      %v3635 = vunpack.c.l.b16 %v3173
      %v3636 = vunpack.c.l.b16 %v3176
      %v3637 = vunpack.c.l.b16 %v3179
      %v3638 = vunpack.c.l.b16 %v3182
      %v3639 = vpack.c.b16 %v3632, %v3631
      %v3640 = vpack.c.b16 %v3634, %v3633
      %v3641 = vpack.c.b16 %v3636, %v3635
      %v3642 = vpack.c.b16 %v3638, %v3637
      %v3644 = vunpack.c.l.b16 %v3622
      %v3645 = vpack.c.b16 %v3644, %v3644
      %v3647 = vshrl.u32 %v3645, 16
      %v3649 = vrot.slane %v3647, 1
      %v3650 = vshll.u32 %v3645, 16
      %v3652 = vrot.slane %v3650, 2
      %v3653 = vor.u32 %v3649, %v3652
      %v3655 = vsel %vm804, %v3639, 0
      %v3658 = vsel %vm804, %v3640, 0
      %v3661 = vsel %vm804, %v3641, 0
      %v3664 = vsel %vm804, %v3642, 0
      %v3667 = vand.u32 %v3653, %v820
      %3669 = vmatprep.subr.bf16.mxu0 0
      %3670 = vmatpush1.bf16.msra.mxu0 %v3667
      %3671 = vmatprep.subr.bf16.mxu0 0
      %3672 = vmatpush1.bf16.msra.mxu0 0
      %3673 = vmatprep.subr.bf16.mxu0 0
      %3674 = vmatpush1.bf16.msra.mxu0 0
      %3675 = vmatprep.subr.bf16.mxu0 0
      %3676 = vmatpush1.bf16.msra.mxu0 0
      %3677 = vmatprep.subr.bf16.mxu0 0
      %3678 = vmatpush1.bf16.msra.mxu0 0
      %3679 = vmatprep.subr.bf16.mxu0 0
      %3680 = vmatpush1.bf16.msra.mxu0 0
      %3681 = vmatprep.subr.bf16.mxu0 0
      %3682 = vmatpush1.bf16.msra.mxu0 0
      %3683 = vmatprep.subr.bf16.mxu0 0
      %3684 = vmatpush1.bf16.msra.mxu0 0
      %3685 = vmatprep.subr.bf16.mxu0 0
      %3686 = vmatpush1.bf16.msra.mxu0 0
      %3687 = vmatprep.subr.bf16.mxu0 0
      %3688 = vmatpush1.bf16.msra.mxu0 0
      %3689 = vmatprep.subr.bf16.mxu0 0
      %3690 = vmatpush1.bf16.msra.mxu0 0
      %3691 = vmatprep.subr.bf16.mxu0 0
      %3692 = vmatpush1.bf16.msra.mxu0 0
      %3693 = vmatprep.subr.bf16.mxu0 0
      %3694 = vmatpush1.bf16.msra.mxu0 0
      %3695 = vmatprep.subr.bf16.mxu0 0
      %3696 = vmatpush1.bf16.msra.mxu0 0
      %3697 = vmatprep.subr.bf16.mxu0 0
      %3698 = vmatpush1.bf16.msra.mxu0 0
      %3699 = vmatprep.subr.bf16.mxu0 0
      %3700 = vmatpush1.bf16.msra.mxu0 0
      %3701 = vmatprep.mubr.bf16.mxu0 0
      %3702 = vmatmul.mubr.bf16.gmra.mrb[0].mxu0 %v3655
      %v3703 = vpop.f32.mrb[0].mxu0
      %v3704 = vadd.f32 0.0, %v3703
      %v3705 = vpop.f32.mrb[0].mxu0
      %v3706 = vpop.f32.mrb[0].mxu0
      %v3707 = vadd.f32 0.0, %v3706
      %v3708 = vpop.f32.mrb[0].mxu0
      %3709 = vmatprep.mubr.bf16.mxu0 0
      %3710 = vmatmul.mubr.bf16.gmra.mrb[0].mxu0 %v3658
      %v3711 = vpop.f32.mrb[0].mxu0
      %v3712 = vadd.f32 0.0, %v3711
      %v3713 = vpop.f32.mrb[0].mxu0
      %v3714 = vpop.f32.mrb[0].mxu0
      %v3715 = vadd.f32 0.0, %v3714
      %v3716 = vpop.f32.mrb[0].mxu0
      %3717 = vmatprep.mubr.bf16.mxu0 0
      %3718 = vmatmul.mubr.bf16.gmra.mrb[0].mxu0 %v3661
      %v3719 = vpop.f32.mrb[0].mxu0
      %v3720 = vadd.f32 0.0, %v3719
      %v3721 = vpop.f32.mrb[0].mxu0
      %v3722 = vpop.f32.mrb[0].mxu0
      %v3723 = vadd.f32 0.0, %v3722
      %v3724 = vpop.f32.mrb[0].mxu0
      %3725 = vmatprep.mubr.bf16.mxu0 0
      %3726 = vmatmul.mubr.bf16.gmra.mrb[0].mxu0 %v3664
      %v3727 = vpop.f32.mrb[0].mxu0
      %v3728 = vadd.f32 0.0, %v3727
      %v3729 = vpop.f32.mrb[0].mxu0
      %v3730 = vpop.f32.mrb[0].mxu0
      %v3731 = vadd.f32 0.0, %v3730
      %v3732 = vpop.f32.mrb[0].mxu0
      %3733 = vdwg.mxu0
      %v3734 = vadd.f32 %v3614, %v3704
      %v3735 = vadd.f32 %v3615, %v3707
      %v3736 = vadd.f32 %v3616, %v3712
      %v3737 = vadd.f32 %v3617, %v3715
      %v3738 = vadd.f32 %v3618, %v3720
      %v3739 = vadd.f32 %v3619, %v3723
      %v3740 = vadd.f32 %v3620, %v3728
      %v3741 = vadd.f32 %v3621, %v3731
      %v3742 = vld [vmem:[%s2 + $0x18] sm:$0x8]
      %v3743 = vld [vmem:[%s2 + $0x1c] sm:$0x1]
      %v3752 = vunpack.c.l.b16 %v3186
      %v3753 = vunpack.c.l.b16 %v3188
      %v3754 = vunpack.c.l.b16 %v3190
      %v3755 = vunpack.c.l.b16 %v3192
      %v3756 = vunpack.c.l.b16 %v3194
      %v3757 = vunpack.c.l.b16 %v3196
      %v3758 = vunpack.c.l.b16 %v3198
      %v3759 = vunpack.c.l.b16 %v3200
      %v3760 = vpack.c.b16 %v3753, %v3752
      %v3761 = vpack.c.b16 %v3755, %v3754
      %v3762 = vpack.c.b16 %v3757, %v3756
      %v3763 = vpack.c.b16 %v3759, %v3758
      %v3766 = vunpack.c.l.b16 %v3742
      %v3767 = vunpack.c.l.b16 %v3743
      %v3768 = vpack.c.b16 %v3767, %v3766
      %v3769 = vrot.slane %v3768, 3
      %v3771 = vsel %vm804, %v3760, 0
      %v3774 = vsel %vm804, %v3761, 0
      %v3777 = vsel %vm804, %v3762, 0
      %v3780 = vsel %vm804, %v3763, 0
      %v3783 = vand.u32 %v3769, %v820
      %3785 = vmatprep.subr.bf16.mxu0 0
      %3786 = vmatpush1.bf16.msra.mxu0 %v3783
      %3787 = vmatprep.subr.bf16.mxu0 0
      %3788 = vmatpush1.bf16.msra.mxu0 0
      %3789 = vmatprep.subr.bf16.mxu0 0
      %3790 = vmatpush1.bf16.msra.mxu0 0
      %3791 = vmatprep.subr.bf16.mxu0 0
      %3792 = vmatpush1.bf16.msra.mxu0 0
      %3793 = vmatprep.subr.bf16.mxu0 0
      %3794 = vmatpush1.bf16.msra.mxu0 0
      %3795 = vmatprep.subr.bf16.mxu0 0
      %3796 = vmatpush1.bf16.msra.mxu0 0
      %3797 = vmatprep.subr.bf16.mxu0 0
      %3798 = vmatpush1.bf16.msra.mxu0 0
      %3799 = vmatprep.subr.bf16.mxu0 0
      %3800 = vmatpush1.bf16.msra.mxu0 0
      %3801 = vmatprep.subr.bf16.mxu0 0
      %3802 = vmatpush1.bf16.msra.mxu0 0
      %3803 = vmatprep.subr.bf16.mxu0 0
      %3804 = vmatpush1.bf16.msra.mxu0 0
      %3805 = vmatprep.subr.bf16.mxu0 0
      %3806 = vmatpush1.bf16.msra.mxu0 0
      %3807 = vmatprep.subr.bf16.mxu0 0
      %3808 = vmatpush1.bf16.msra.mxu0 0
      %3809 = vmatprep.subr.bf16.mxu0 0
      %3810 = vmatpush1.bf16.msra.mxu0 0
      %3811 = vmatprep.subr.bf16.mxu0 0
      %3812 = vmatpush1.bf16.msra.mxu0 0
      %3813 = vmatprep.subr.bf16.mxu0 0
      %3814 = vmatpush1.bf16.msra.mxu0 0
      %3815 = vmatprep.subr.bf16.mxu0 0
      %3816 = vmatpush1.bf16.msra.mxu0 0
      %3817 = vmatprep.mubr.bf16.mxu0 0
      %3818 = vmatmul.mubr.bf16.gmra.mrb[0].mxu0 %v3771
      %v3819 = vpop.f32.mrb[0].mxu0
      %v3820 = vadd.f32 0.0, %v3819
      %v3821 = vpop.f32.mrb[0].mxu0
      %v3822 = vpop.f32.mrb[0].mxu0
      %v3823 = vadd.f32 0.0, %v3822
      %v3824 = vpop.f32.mrb[0].mxu0
      %3825 = vmatprep.mubr.bf16.mxu0 0
      %3826 = vmatmul.mubr.bf16.gmra.mrb[0].mxu0 %v3774
      %v3827 = vpop.f32.mrb[0].mxu0
      %v3828 = vadd.f32 0.0, %v3827
      %v3829 = vpop.f32.mrb[0].mxu0
      %v3830 = vpop.f32.mrb[0].mxu0
      %v3831 = vadd.f32 0.0, %v3830
      %v3832 = vpop.f32.mrb[0].mxu0
      %3833 = vmatprep.mubr.bf16.mxu0 0
      %3834 = vmatmul.mubr.bf16.gmra.mrb[0].mxu0 %v3777
      %v3835 = vpop.f32.mrb[0].mxu0
      %v3836 = vadd.f32 0.0, %v3835
      %v3837 = vpop.f32.mrb[0].mxu0
      %v3838 = vpop.f32.mrb[0].mxu0
      %v3839 = vadd.f32 0.0, %v3838
      %v3840 = vpop.f32.mrb[0].mxu0
      %3841 = vmatprep.mubr.bf16.mxu0 0
      %3842 = vmatmul.mubr.bf16.gmra.mrb[0].mxu0 %v3780
      %v3843 = vpop.f32.mrb[0].mxu0
      %v3844 = vadd.f32 0.0, %v3843
      %v3845 = vpop.f32.mrb[0].mxu0
      %v3846 = vpop.f32.mrb[0].mxu0
      %v3847 = vadd.f32 0.0, %v3846
      %v3848 = vpop.f32.mrb[0].mxu0
      %3849 = vdwg.mxu0
      %v3850 = vadd.f32 %v3734, %v3820
      %v3851 = vadd.f32 %v3735, %v3823
      %v3852 = vadd.f32 %v3736, %v3828
      %v3853 = vadd.f32 %v3737, %v3831
      %v3854 = vadd.f32 %v3738, %v3836
      %v3855 = vadd.f32 %v3739, %v3839
      %v3856 = vadd.f32 %v3740, %v3844
      %v3857 = vadd.f32 %v3741, %v3847
      %v3858 = vrot.slane %v3207, 4
      %v3859 = vrot.slane %v3210, 5
      %v3860 = vor.u32 %v3858, %v3859
      %v3861 = vrot.slane %v3860, 4
      %v3863 = vshll.u32 %v3162, 16
      %v3865 = vrot.slane %v3863, 5
      %v3866 = vsel %vm1218, %v3861, %v3865
      %v3867 = vrot.slane %v3220, 4
      %v3868 = vrot.slane %v3223, 5
      %v3869 = vor.u32 %v3867, %v3868
      %v3870 = vrot.slane %v3869, 4
      %v3872 = vshll.u32 %v3165, 16
      %v3874 = vrot.slane %v3872, 5
      %v3875 = vsel %vm1218, %v3870, %v3874
      %v3876 = vrot.slane %v3233, 4
      %v3877 = vrot.slane %v3236, 5
      %v3878 = vor.u32 %v3876, %v3877
      %v3879 = vrot.slane %v3878, 4
      %v3881 = vshll.u32 %v3168, 16
      %v3883 = vrot.slane %v3881, 5
      %v3884 = vsel %vm1218, %v3879, %v3883
      %v3885 = vrot.slane %v3246, 4
      %v3886 = vrot.slane %v3249, 5
      %v3887 = vor.u32 %v3885, %v3886
      %v3888 = vrot.slane %v3887, 4
      %v3890 = vshll.u32 %v3171, 16
      %v3892 = vrot.slane %v3890, 5
      %v3893 = vsel %vm1218, %v3888, %v3892
      %v3894 = vrot.slane %v3259, 4
      %v3895 = vrot.slane %v3262, 5
      %v3896 = vor.u32 %v3894, %v3895
      %v3897 = vrot.slane %v3896, 4
      %v3899 = vshll.u32 %v3174, 16
      %v3901 = vrot.slane %v3899, 5
      %v3902 = vsel %vm1218, %v3897, %v3901
      %v3903 = vrot.slane %v3272, 4
      %v3904 = vrot.slane %v3275, 5
      %v3905 = vor.u32 %v3903, %v3904
      %v3906 = vrot.slane %v3905, 4
      %v3908 = vshll.u32 %v3177, 16
      %v3910 = vrot.slane %v3908, 5
      %v3911 = vsel %vm1218, %v3906, %v3910
      %v3912 = vrot.slane %v3285, 4
      %v3913 = vrot.slane %v3288, 5
      %v3914 = vor.u32 %v3912, %v3913
      %v3915 = vrot.slane %v3914, 4
      %v3917 = vshll.u32 %v3180, 16
      %v3919 = vrot.slane %v3917, 5
      %v3920 = vsel %vm1218, %v3915, %v3919
      %v3921 = vrot.slane %v3298, 4
      %v3922 = vrot.slane %v3301, 5
      %v3923 = vor.u32 %v3921, %v3922
      %v3924 = vrot.slane %v3923, 4
      %v3926 = vshll.u32 %v3183, 16
      %v3928 = vrot.slane %v3926, 5
      %v3929 = vsel %vm1218, %v3924, %v3928
      %v3930 = vld [vmem:[%s2 + $0x1c] sm:$0x3]
      %v3931 = vunpack.c.l.b16 %v3866
      %v3932 = vunpack.c.l.b16 %v3875
      %v3933 = vunpack.c.l.b16 %v3884
      %v3934 = vunpack.c.l.b16 %v3893
      %v3935 = vunpack.c.l.b16 %v3902
      %v3936 = vunpack.c.l.b16 %v3911
      %v3937 = vunpack.c.l.b16 %v3920
      %v3938 = vunpack.c.l.b16 %v3929
      %v3939 = vpack.c.b16 %v3932, %v3931
      %v3940 = vpack.c.b16 %v3934, %v3933
      %v3941 = vpack.c.b16 %v3936, %v3935
      %v3942 = vpack.c.b16 %v3938, %v3937
      %v3944 = vunpack.c.l.b16 %v3930
      %v3945 = vpack.c.b16 %v3944, %v3944
      %v3947 = vshrl.u32 %v3945, 16
      %v3949 = vshll.u32 %v3945, 16
      %v3951 = vrot.slane %v3949, 1
      %v3952 = vor.u32 %v3947, %v3951
      %v3954 = vsel %vm804, %v3939, 0
      %v3957 = vsel %vm804, %v3940, 0
      %v3960 = vsel %vm804, %v3941, 0
      %v3963 = vsel %vm804, %v3942, 0
      %v3966 = vand.u32 %v3952, %v820
      %3968 = vmatprep.subr.bf16.mxu0 0
      %3969 = vmatpush1.bf16.msra.mxu0 %v3966
      %3970 = vmatprep.subr.bf16.mxu0 0
      %3971 = vmatpush1.bf16.msra.mxu0 0
      %3972 = vmatprep.subr.bf16.mxu0 0
      %3973 = vmatpush1.bf16.msra.mxu0 0
      %3974 = vmatprep.subr.bf16.mxu0 0
      %3975 = vmatpush1.bf16.msra.mxu0 0
      %3976 = vmatprep.subr.bf16.mxu0 0
      %3977 = vmatpush1.bf16.msra.mxu0 0
      %3978 = vmatprep.subr.bf16.mxu0 0
      %3979 = vmatpush1.bf16.msra.mxu0 0
      %3980 = vmatprep.subr.bf16.mxu0 0
      %3981 = vmatpush1.bf16.msra.mxu0 0
      %3982 = vmatprep.subr.bf16.mxu0 0
      %3983 = vmatpush1.bf16.msra.mxu0 0
      %3984 = vmatprep.subr.bf16.mxu0 0
      %3985 = vmatpush1.bf16.msra.mxu0 0
      %3986 = vmatprep.subr.bf16.mxu0 0
      %3987 = vmatpush1.bf16.msra.mxu0 0
      %3988 = vmatprep.subr.bf16.mxu0 0
      %3989 = vmatpush1.bf16.msra.mxu0 0
      %3990 = vmatprep.subr.bf16.mxu0 0
      %3991 = vmatpush1.bf16.msra.mxu0 0
      %3992 = vmatprep.subr.bf16.mxu0 0
      %3993 = vmatpush1.bf16.msra.mxu0 0
      %3994 = vmatprep.subr.bf16.mxu0 0
      %3995 = vmatpush1.bf16.msra.mxu0 0
      %3996 = vmatprep.subr.bf16.mxu0 0
      %3997 = vmatpush1.bf16.msra.mxu0 0
      %3998 = vmatprep.subr.bf16.mxu0 0
      %3999 = vmatpush1.bf16.msra.mxu0 0
      %4000 = vmatprep.mubr.bf16.mxu0 0
      %4001 = vmatmul.mubr.bf16.gmra.mrb[0].mxu0 %v3954
      %v4002 = vpop.f32.mrb[0].mxu0
      %v4003 = vadd.f32 0.0, %v4002
      %v4004 = vpop.f32.mrb[0].mxu0
      %v4005 = vpop.f32.mrb[0].mxu0
      %v4006 = vadd.f32 0.0, %v4005
      %v4007 = vpop.f32.mrb[0].mxu0
      %4008 = vmatprep.mubr.bf16.mxu0 0
      %4009 = vmatmul.mubr.bf16.gmra.mrb[0].mxu0 %v3957
      %v4010 = vpop.f32.mrb[0].mxu0
      %v4011 = vadd.f32 0.0, %v4010
      %v4012 = vpop.f32.mrb[0].mxu0
      %v4013 = vpop.f32.mrb[0].mxu0
      %v4014 = vadd.f32 0.0, %v4013
      %v4015 = vpop.f32.mrb[0].mxu0
      %4016 = vmatprep.mubr.bf16.mxu0 0
      %4017 = vmatmul.mubr.bf16.gmra.mrb[0].mxu0 %v3960
      %v4018 = vpop.f32.mrb[0].mxu0
      %v4019 = vadd.f32 0.0, %v4018
      %v4020 = vpop.f32.mrb[0].mxu0
      %v4021 = vpop.f32.mrb[0].mxu0
      %v4022 = vadd.f32 0.0, %v4021
      %v4023 = vpop.f32.mrb[0].mxu0
      %4024 = vmatprep.mubr.bf16.mxu0 0
      %4025 = vmatmul.mubr.bf16.gmra.mrb[0].mxu0 %v3963
      %v4026 = vpop.f32.mrb[0].mxu0
      %v4027 = vadd.f32 0.0, %v4026
      %v4028 = vpop.f32.mrb[0].mxu0
      %v4029 = vpop.f32.mrb[0].mxu0
      %v4030 = vadd.f32 0.0, %v4029
      %v4031 = vpop.f32.mrb[0].mxu0
      %4032 = vdwg.mxu0
      %v4033 = vadd.f32 %v3850, %v4003
      %v4034 = vadd.f32 %v3851, %v4006
      %v4035 = vadd.f32 %v3852, %v4011
      %v4036 = vadd.f32 %v3853, %v4014
      %v4037 = vadd.f32 %v3854, %v4019
      %v4038 = vadd.f32 %v3855, %v4022
      %v4039 = vadd.f32 %v3856, %v4027
      %v4040 = vadd.f32 %v3857, %v4030
      %s4041 = scalar_lea.vmem [#allocation2], 64
      %v4042 = vld [vmem:[%s4041 + $0x4] sm:$0xf]
      %v4043 = vld [vmem:[%s4041 + $0x8] sm:$0xf]
      %v4044 = vld [vmem:[%s4041 + $0xc] sm:$0x1]
      %v4045 = vld [vmem:[%s4041 + $0x24] sm:$0xf]
      %v4046 = vld [vmem:[%s4041 + $0x28] sm:$0xf]
      %v4047 = vld [vmem:[%s4041 + $0x2c] sm:$0x1]
      %v4048 = vld [vmem:[%s4041 + $0x44] sm:$0xf]
      %v4049 = vld [vmem:[%s4041 + $0x48] sm:$0xf]
      %v4050 = vld [vmem:[%s4041 + $0x4c] sm:$0x1]
      %v4051 = vld [vmem:[%s4041 + $0x64] sm:$0xf]
      %v4052 = vld [vmem:[%s4041 + $0x68] sm:$0xf]
      %v4053 = vld [vmem:[%s4041 + $0x6c] sm:$0x1]
      %v4054 = vld [vmem:[%s4041 + $0x84] sm:$0xf]
      %v4055 = vld [vmem:[%s4041 + $0x88] sm:$0xf]
      %v4056 = vld [vmem:[%s4041 + $0x8c] sm:$0x1]
      %v4057 = vld [vmem:[%s4041 + $0xa4] sm:$0xf]
      %v4058 = vld [vmem:[%s4041 + $0xa8] sm:$0xf]
      %v4059 = vld [vmem:[%s4041 + $0xac] sm:$0x1]
      %v4060 = vld [vmem:[%s4041 + $0xc4] sm:$0xf]
      %v4061 = vld [vmem:[%s4041 + $0xc8] sm:$0xf]
      %v4062 = vld [vmem:[%s4041 + $0xcc] sm:$0x1]
      %v4063 = vld [vmem:[%s4041 + $0xe4] sm:$0xf]
      %v4064 = vld [vmem:[%s4041 + $0xe8] sm:$0xf]
      %v4065 = vld [vmem:[%s4041 + $0xec] sm:$0x1]
      %s4066 = scalar_lea.vmem [#allocation3], 64
      %v4067 = vld [vmem:[%s4066 + $0x4] sm:$0xf]
      %v4068 = vld [vmem:[%s4066 + $0x8] sm:$0xf]
      %v4069 = vld [vmem:[%s4066 + $0x24] sm:$0xf]
      %v4070 = vld [vmem:[%s4066 + $0x28] sm:$0xf]
      %v4071 = vld [vmem:[%s4066 + $0x44] sm:$0xf]
      %v4072 = vld [vmem:[%s4066 + $0x48] sm:$0xf]
      %v4073 = vld [vmem:[%s4066 + $0x64] sm:$0xf]
      %v4074 = vld [vmem:[%s4066 + $0x68] sm:$0xf]
      %v4075 = vld [vmem:[%s4066 + $0x84] sm:$0xf]
      %v4076 = vld [vmem:[%s4066 + $0x88] sm:$0xf]
      %v4077 = vld [vmem:[%s4066 + $0xa4] sm:$0xf]
      %v4078 = vld [vmem:[%s4066 + $0xa8] sm:$0xf]
      %v4079 = vld [vmem:[%s4066 + $0xc4] sm:$0xf]
      %v4080 = vld [vmem:[%s4066 + $0xc8] sm:$0xf]
      %v4081 = vld [vmem:[%s4066 + $0xe4] sm:$0xf]
      %v4082 = vld [vmem:[%s4066 + $0xe8] sm:$0xf]
      %v4084 = vshrl.u32 %v4042, 16
      %v4086 = vrot.slane %v4084, 7
      %v4087 = vrot.slane %v4086, 4
      %v4089 = vshrl.u32 %v4043, 16
      %v4091 = vrot.slane %v4089, 7
      %v4092 = vshll.u32 %v4043, 16
      %v4094 = vor.u32 %v4091, %v4092
      %v4095 = vsel %vm570, %v4087, %v4094
      %v4097 = vshrl.u32 %v4045, 16
      %v4099 = vrot.slane %v4097, 7
      %v4100 = vrot.slane %v4099, 4
      %v4102 = vshrl.u32 %v4046, 16
      %v4104 = vrot.slane %v4102, 7
      %v4105 = vshll.u32 %v4046, 16
      %v4107 = vor.u32 %v4104, %v4105
      %v4108 = vsel %vm570, %v4100, %v4107
      %v4110 = vshrl.u32 %v4048, 16
      %v4112 = vrot.slane %v4110, 7
      %v4113 = vrot.slane %v4112, 4
      %v4115 = vshrl.u32 %v4049, 16
      %v4117 = vrot.slane %v4115, 7
      %v4118 = vshll.u32 %v4049, 16
      %v4120 = vor.u32 %v4117, %v4118
      %v4121 = vsel %vm570, %v4113, %v4120
      %v4123 = vshrl.u32 %v4051, 16
      %v4125 = vrot.slane %v4123, 7
      %v4126 = vrot.slane %v4125, 4
      %v4128 = vshrl.u32 %v4052, 16
      %v4130 = vrot.slane %v4128, 7
      %v4131 = vshll.u32 %v4052, 16
      %v4133 = vor.u32 %v4130, %v4131
      %v4134 = vsel %vm570, %v4126, %v4133
      %v4136 = vshrl.u32 %v4054, 16
      %v4138 = vrot.slane %v4136, 7
      %v4139 = vrot.slane %v4138, 4
      %v4141 = vshrl.u32 %v4055, 16
      %v4143 = vrot.slane %v4141, 7
      %v4144 = vshll.u32 %v4055, 16
      %v4146 = vor.u32 %v4143, %v4144
      %v4147 = vsel %vm570, %v4139, %v4146
      %v4149 = vshrl.u32 %v4057, 16
      %v4151 = vrot.slane %v4149, 7
      %v4152 = vrot.slane %v4151, 4
      %v4154 = vshrl.u32 %v4058, 16
      %v4156 = vrot.slane %v4154, 7
      %v4157 = vshll.u32 %v4058, 16
      %v4159 = vor.u32 %v4156, %v4157
      %v4160 = vsel %vm570, %v4152, %v4159
      %v4162 = vshrl.u32 %v4060, 16
      %v4164 = vrot.slane %v4162, 7
      %v4165 = vrot.slane %v4164, 4
      %v4167 = vshrl.u32 %v4061, 16
      %v4169 = vrot.slane %v4167, 7
      %v4170 = vshll.u32 %v4061, 16
      %v4172 = vor.u32 %v4169, %v4170
      %v4173 = vsel %vm570, %v4165, %v4172
      %v4175 = vshrl.u32 %v4063, 16
      %v4177 = vrot.slane %v4175, 7
      %v4178 = vrot.slane %v4177, 4
      %v4180 = vshrl.u32 %v4064, 16
      %v4182 = vrot.slane %v4180, 7
      %v4183 = vshll.u32 %v4064, 16
      %v4185 = vor.u32 %v4182, %v4183
      %v4186 = vsel %vm570, %v4178, %v4185
      %v4187 = vld [vmem:[%s2 + $0x1c] sm:$0xc]
      %v4188 = vunpack.c.l.b16 %v4095
      %v4189 = vunpack.c.l.b16 %v4108
      %v4190 = vunpack.c.l.b16 %v4121
      %v4191 = vunpack.c.l.b16 %v4134
      %v4192 = vunpack.c.l.b16 %v4147
      %v4193 = vunpack.c.l.b16 %v4160
      %v4194 = vunpack.c.l.b16 %v4173
      %v4195 = vunpack.c.l.b16 %v4186
      %v4196 = vpack.c.b16 %v4189, %v4188
      %v4197 = vpack.c.b16 %v4191, %v4190
      %v4198 = vpack.c.b16 %v4193, %v4192
      %v4199 = vpack.c.b16 %v4195, %v4194
      %v4201 = vunpack.c.l.b16 %v4187
      %v4202 = vpack.c.b16 %v4201, %v4201
      %v4203 = vrot.slane %v4202, 2
      %v4205 = vsel %vm804, %v4196, 0
      %v4208 = vsel %vm804, %v4197, 0
      %v4211 = vsel %vm804, %v4198, 0
      %v4214 = vsel %vm804, %v4199, 0
      %v4217 = vand.u32 %v4203, %v820
      %4219 = vmatprep.subr.bf16.mxu0 0
      %4220 = vmatpush1.bf16.msra.mxu0 %v4217
      %4221 = vmatprep.subr.bf16.mxu0 0
      %4222 = vmatpush1.bf16.msra.mxu0 0
      %4223 = vmatprep.subr.bf16.mxu0 0
      %4224 = vmatpush1.bf16.msra.mxu0 0
      %4225 = vmatprep.subr.bf16.mxu0 0
      %4226 = vmatpush1.bf16.msra.mxu0 0
      %4227 = vmatprep.subr.bf16.mxu0 0
      %4228 = vmatpush1.bf16.msra.mxu0 0
      %4229 = vmatprep.subr.bf16.mxu0 0
      %4230 = vmatpush1.bf16.msra.mxu0 0
      %4231 = vmatprep.subr.bf16.mxu0 0
      %4232 = vmatpush1.bf16.msra.mxu0 0
      %4233 = vmatprep.subr.bf16.mxu0 0
      %4234 = vmatpush1.bf16.msra.mxu0 0
      %4235 = vmatprep.subr.bf16.mxu0 0
      %4236 = vmatpush1.bf16.msra.mxu0 0
      %4237 = vmatprep.subr.bf16.mxu0 0
      %4238 = vmatpush1.bf16.msra.mxu0 0
      %4239 = vmatprep.subr.bf16.mxu0 0
      %4240 = vmatpush1.bf16.msra.mxu0 0
      %4241 = vmatprep.subr.bf16.mxu0 0
      %4242 = vmatpush1.bf16.msra.mxu0 0
      %4243 = vmatprep.subr.bf16.mxu0 0
      %4244 = vmatpush1.bf16.msra.mxu0 0
      %4245 = vmatprep.subr.bf16.mxu0 0
      %4246 = vmatpush1.bf16.msra.mxu0 0
      %4247 = vmatprep.subr.bf16.mxu0 0
      %4248 = vmatpush1.bf16.msra.mxu0 0
      %4249 = vmatprep.subr.bf16.mxu0 0
      %4250 = vmatpush1.bf16.msra.mxu0 0
      %4251 = vmatprep.mubr.bf16.mxu0 0
      %4252 = vmatmul.mubr.bf16.gmra.mrb[0].mxu0 %v4205
      %v4253 = vpop.f32.mrb[0].mxu0
      %v4254 = vadd.f32 0.0, %v4253
      %v4255 = vpop.f32.mrb[0].mxu0
      %v4256 = vpop.f32.mrb[0].mxu0
      %v4257 = vadd.f32 0.0, %v4256
      %v4258 = vpop.f32.mrb[0].mxu0
      %4259 = vmatprep.mubr.bf16.mxu0 0
      %4260 = vmatmul.mubr.bf16.gmra.mrb[0].mxu0 %v4208
      %v4261 = vpop.f32.mrb[0].mxu0
      %v4262 = vadd.f32 0.0, %v4261
      %v4263 = vpop.f32.mrb[0].mxu0
      %v4264 = vpop.f32.mrb[0].mxu0
      %v4265 = vadd.f32 0.0, %v4264
      %v4266 = vpop.f32.mrb[0].mxu0
      %4267 = vmatprep.mubr.bf16.mxu0 0
      %4268 = vmatmul.mubr.bf16.gmra.mrb[0].mxu0 %v4211
      %v4269 = vpop.f32.mrb[0].mxu0
      %v4270 = vadd.f32 0.0, %v4269
      %v4271 = vpop.f32.mrb[0].mxu0
      %v4272 = vpop.f32.mrb[0].mxu0
      %v4273 = vadd.f32 0.0, %v4272
      %v4274 = vpop.f32.mrb[0].mxu0
      %4275 = vmatprep.mubr.bf16.mxu0 0
      %4276 = vmatmul.mubr.bf16.gmra.mrb[0].mxu0 %v4214
      %v4277 = vpop.f32.mrb[0].mxu0
      %v4278 = vadd.f32 0.0, %v4277
      %v4279 = vpop.f32.mrb[0].mxu0
      %v4280 = vpop.f32.mrb[0].mxu0
      %v4281 = vadd.f32 0.0, %v4280
      %v4282 = vpop.f32.mrb[0].mxu0
      %4283 = vdwg.mxu0
      %v4284 = vadd.f32 %v4033, %v4254
      %v4285 = vadd.f32 %v4034, %v4257
      %v4286 = vadd.f32 %v4035, %v4262
      %v4287 = vadd.f32 %v4036, %v4265
      %v4288 = vadd.f32 %v4037, %v4270
      %v4289 = vadd.f32 %v4038, %v4273
      %v4290 = vadd.f32 %v4039, %v4278
      %v4291 = vadd.f32 %v4040, %v4281
      %v4293 = vshrl.u32 %v4067, 16
      %v4295 = vrot.slane %v4293, 7
      %v4296 = vrot.slane %v4295, 4
      %v4298 = vshrl.u32 %v4068, 16
      %v4300 = vrot.slane %v4298, 7
      %v4301 = vshll.u32 %v4068, 16
      %v4303 = vor.u32 %v4300, %v4301
      %v4304 = vsel %vm570, %v4296, %v4303
      %v4306 = vshrl.u32 %v4069, 16
      %v4308 = vrot.slane %v4306, 7
      %v4309 = vrot.slane %v4308, 4
      %v4311 = vshrl.u32 %v4070, 16
      %v4313 = vrot.slane %v4311, 7
      %v4314 = vshll.u32 %v4070, 16
      %v4316 = vor.u32 %v4313, %v4314
      %v4317 = vsel %vm570, %v4309, %v4316
      %v4319 = vshrl.u32 %v4071, 16
      %v4321 = vrot.slane %v4319, 7
      %v4322 = vrot.slane %v4321, 4
      %v4324 = vshrl.u32 %v4072, 16
      %v4326 = vrot.slane %v4324, 7
      %v4327 = vshll.u32 %v4072, 16
      %v4329 = vor.u32 %v4326, %v4327
      %v4330 = vsel %vm570, %v4322, %v4329
      %v4332 = vshrl.u32 %v4073, 16
      %v4334 = vrot.slane %v4332, 7
      %v4335 = vrot.slane %v4334, 4
      %v4337 = vshrl.u32 %v4074, 16
      %v4339 = vrot.slane %v4337, 7
      %v4340 = vshll.u32 %v4074, 16
      %v4342 = vor.u32 %v4339, %v4340
      %v4343 = vsel %vm570, %v4335, %v4342
      %v4345 = vshrl.u32 %v4075, 16
      %v4347 = vrot.slane %v4345, 7
      %v4348 = vrot.slane %v4347, 4
      %v4350 = vshrl.u32 %v4076, 16
      %v4352 = vrot.slane %v4350, 7
      %v4353 = vshll.u32 %v4076, 16
      %v4355 = vor.u32 %v4352, %v4353
      %v4356 = vsel %vm570, %v4348, %v4355
      %v4358 = vshrl.u32 %v4077, 16
      %v4360 = vrot.slane %v4358, 7
      %v4361 = vrot.slane %v4360, 4
      %v4363 = vshrl.u32 %v4078, 16
      %v4365 = vrot.slane %v4363, 7
      %v4366 = vshll.u32 %v4078, 16
      %v4368 = vor.u32 %v4365, %v4366
      %v4369 = vsel %vm570, %v4361, %v4368
      %v4371 = vshrl.u32 %v4079, 16
      %v4373 = vrot.slane %v4371, 7
      %v4374 = vrot.slane %v4373, 4
      %v4376 = vshrl.u32 %v4080, 16
      %v4378 = vrot.slane %v4376, 7
      %v4379 = vshll.u32 %v4080, 16
      %v4381 = vor.u32 %v4378, %v4379
      %v4382 = vsel %vm570, %v4374, %v4381
      %v4384 = vshrl.u32 %v4081, 16
      %v4386 = vrot.slane %v4384, 7
      %v4387 = vrot.slane %v4386, 4
      %v4389 = vshrl.u32 %v4082, 16
      %v4391 = vrot.slane %v4389, 7
      %v4392 = vshll.u32 %v4082, 16
      %v4394 = vor.u32 %v4391, %v4392
      %v4395 = vsel %vm570, %v4387, %v4394
      %v4396 = vld [vmem:[%s2 + $0x1c] sm:$0x8]
      %v4397 = vld [vmem:[%s2 + $0x20] sm:$0x1]
      %v4398 = vunpack.c.l.b16 %v4304
      %v4399 = vunpack.c.l.b16 %v4317
      %v4400 = vunpack.c.l.b16 %v4330
      %v4401 = vunpack.c.l.b16 %v4343
      %v4402 = vunpack.c.l.b16 %v4356
      %v4403 = vunpack.c.l.b16 %v4369
      %v4404 = vunpack.c.l.b16 %v4382
      %v4405 = vunpack.c.l.b16 %v4395
      %v4406 = vpack.c.b16 %v4399, %v4398
      %v4407 = vpack.c.b16 %v4401, %v4400
      %v4408 = vpack.c.b16 %v4403, %v4402
      %v4409 = vpack.c.b16 %v4405, %v4404
      %v4412 = vunpack.c.l.b16 %v4396
      %v4413 = vunpack.c.l.b16 %v4397
      %v4414 = vpack.c.b16 %v4413, %v4412
      %v4416 = vshrl.u32 %v4414, 16
      %v4418 = vrot.slane %v4416, 3
      %v4419 = vshll.u32 %v4414, 16
      %v4421 = vrot.slane %v4419, 4
      %v4422 = vor.u32 %v4418, %v4421
      %v4424 = vsel %vm804, %v4406, 0
      %v4427 = vsel %vm804, %v4407, 0
      %v4430 = vsel %vm804, %v4408, 0
      %v4433 = vsel %vm804, %v4409, 0
      %v4436 = vand.u32 %v4422, %v820
      %4438 = vmatprep.subr.bf16.mxu0 0
      %4439 = vmatpush1.bf16.msra.mxu0 %v4436
      %4440 = vmatprep.subr.bf16.mxu0 0
      %4441 = vmatpush1.bf16.msra.mxu0 0
      %4442 = vmatprep.subr.bf16.mxu0 0
      %4443 = vmatpush1.bf16.msra.mxu0 0
      %4444 = vmatprep.subr.bf16.mxu0 0
      %4445 = vmatpush1.bf16.msra.mxu0 0
      %4446 = vmatprep.subr.bf16.mxu0 0
      %4447 = vmatpush1.bf16.msra.mxu0 0
      %4448 = vmatprep.subr.bf16.mxu0 0
      %4449 = vmatpush1.bf16.msra.mxu0 0
      %4450 = vmatprep.subr.bf16.mxu0 0
      %4451 = vmatpush1.bf16.msra.mxu0 0
      %4452 = vmatprep.subr.bf16.mxu0 0
      %4453 = vmatpush1.bf16.msra.mxu0 0
      %4454 = vmatprep.subr.bf16.mxu0 0
      %4455 = vmatpush1.bf16.msra.mxu0 0
      %4456 = vmatprep.subr.bf16.mxu0 0
      %4457 = vmatpush1.bf16.msra.mxu0 0
      %4458 = vmatprep.subr.bf16.mxu0 0
      %4459 = vmatpush1.bf16.msra.mxu0 0
      %4460 = vmatprep.subr.bf16.mxu0 0
      %4461 = vmatpush1.bf16.msra.mxu0 0
      %4462 = vmatprep.subr.bf16.mxu0 0
      %4463 = vmatpush1.bf16.msra.mxu0 0
      %4464 = vmatprep.subr.bf16.mxu0 0
      %4465 = vmatpush1.bf16.msra.mxu0 0
      %4466 = vmatprep.subr.bf16.mxu0 0
      %4467 = vmatpush1.bf16.msra.mxu0 0
      %4468 = vmatprep.subr.bf16.mxu0 0
      %4469 = vmatpush1.bf16.msra.mxu0 0
      %4470 = vmatprep.mubr.bf16.mxu0 0
      %4471 = vmatmul.mubr.bf16.gmra.mrb[0].mxu0 %v4424
      %v4472 = vpop.f32.mrb[0].mxu0
      %v4473 = vadd.f32 0.0, %v4472
      %v4474 = vpop.f32.mrb[0].mxu0
      %v4475 = vpop.f32.mrb[0].mxu0
      %v4476 = vadd.f32 0.0, %v4475
      %v4477 = vpop.f32.mrb[0].mxu0
      %4478 = vmatprep.mubr.bf16.mxu0 0
      %4479 = vmatmul.mubr.bf16.gmra.mrb[0].mxu0 %v4427
      %v4480 = vpop.f32.mrb[0].mxu0
      %v4481 = vadd.f32 0.0, %v4480
      %v4482 = vpop.f32.mrb[0].mxu0
      %v4483 = vpop.f32.mrb[0].mxu0
      %v4484 = vadd.f32 0.0, %v4483
      %v4485 = vpop.f32.mrb[0].mxu0
      %4486 = vmatprep.mubr.bf16.mxu0 0
      %4487 = vmatmul.mubr.bf16.gmra.mrb[0].mxu0 %v4430
      %v4488 = vpop.f32.mrb[0].mxu0
      %v4489 = vadd.f32 0.0, %v4488
      %v4490 = vpop.f32.mrb[0].mxu0
      %v4491 = vpop.f32.mrb[0].mxu0
      %v4492 = vadd.f32 0.0, %v4491
      %v4493 = vpop.f32.mrb[0].mxu0
      %4494 = vmatprep.mubr.bf16.mxu0 0
      %4495 = vmatmul.mubr.bf16.gmra.mrb[0].mxu0 %v4433
      %v4496 = vpop.f32.mrb[0].mxu0
      %v4497 = vadd.f32 0.0, %v4496
      %v4498 = vpop.f32.mrb[0].mxu0
      %v4499 = vpop.f32.mrb[0].mxu0
      %v4500 = vadd.f32 0.0, %v4499
      %v4501 = vpop.f32.mrb[0].mxu0
      %4502 = vdwg.mxu0
      %v4503 = vadd.f32 %v4284, %v4473
      %v4504 = vadd.f32 %v4285, %v4476
      %v4505 = vadd.f32 %v4286, %v4481
      %v4506 = vadd.f32 %v4287, %v4484
      %v4507 = vadd.f32 %v4288, %v4489
      %v4508 = vadd.f32 %v4289, %v4492
      %v4509 = vadd.f32 %v4290, %v4497
      %v4510 = vadd.f32 %v4291, %v4500
      %v4511 = vld [vmem:[%s2 + $0x20] sm:$0x6]
      %v4520 = vunpack.c.l.b16 %v4043
      %v4521 = vunpack.c.l.b16 %v4046
      %v4522 = vunpack.c.l.b16 %v4049
      %v4523 = vunpack.c.l.b16 %v4052
      %v4524 = vunpack.c.l.b16 %v4055
      %v4525 = vunpack.c.l.b16 %v4058
      %v4526 = vunpack.c.l.b16 %v4061
      %v4527 = vunpack.c.l.b16 %v4064
      %v4528 = vpack.c.b16 %v4521, %v4520
      %v4529 = vpack.c.b16 %v4523, %v4522
      %v4530 = vpack.c.b16 %v4525, %v4524
      %v4531 = vpack.c.b16 %v4527, %v4526
      %v4533 = vunpack.c.l.b16 %v4511
      %v4534 = vpack.c.b16 %v4533, %v4533
      %v4535 = vrot.slane %v4534, 1
      %v4537 = vsel %vm804, %v4528, 0
      %v4540 = vsel %vm804, %v4529, 0
      %v4543 = vsel %vm804, %v4530, 0
      %v4546 = vsel %vm804, %v4531, 0
      %v4549 = vand.u32 %v4535, %v820
      %4551 = vmatprep.subr.bf16.mxu0 0
      %4552 = vmatpush1.bf16.msra.mxu0 %v4549
      %4553 = vmatprep.subr.bf16.mxu0 0
      %4554 = vmatpush1.bf16.msra.mxu0 0
      %4555 = vmatprep.subr.bf16.mxu0 0
      %4556 = vmatpush1.bf16.msra.mxu0 0
      %4557 = vmatprep.subr.bf16.mxu0 0
      %4558 = vmatpush1.bf16.msra.mxu0 0
      %4559 = vmatprep.subr.bf16.mxu0 0
      %4560 = vmatpush1.bf16.msra.mxu0 0
      %4561 = vmatprep.subr.bf16.mxu0 0
      %4562 = vmatpush1.bf16.msra.mxu0 0
      %4563 = vmatprep.subr.bf16.mxu0 0
      %4564 = vmatpush1.bf16.msra.mxu0 0
      %4565 = vmatprep.subr.bf16.mxu0 0
      %4566 = vmatpush1.bf16.msra.mxu0 0
      %4567 = vmatprep.subr.bf16.mxu0 0
      %4568 = vmatpush1.bf16.msra.mxu0 0
      %4569 = vmatprep.subr.bf16.mxu0 0
      %4570 = vmatpush1.bf16.msra.mxu0 0
      %4571 = vmatprep.subr.bf16.mxu0 0
      %4572 = vmatpush1.bf16.msra.mxu0 0
      %4573 = vmatprep.subr.bf16.mxu0 0
      %4574 = vmatpush1.bf16.msra.mxu0 0
      %4575 = vmatprep.subr.bf16.mxu0 0
      %4576 = vmatpush1.bf16.msra.mxu0 0
      %4577 = vmatprep.subr.bf16.mxu0 0
      %4578 = vmatpush1.bf16.msra.mxu0 0
      %4579 = vmatprep.subr.bf16.mxu0 0
      %4580 = vmatpush1.bf16.msra.mxu0 0
      %4581 = vmatprep.subr.bf16.mxu0 0
      %4582 = vmatpush1.bf16.msra.mxu0 0
      %4583 = vmatprep.mubr.bf16.mxu0 0
      %4584 = vmatmul.mubr.bf16.gmra.mrb[0].mxu0 %v4537
      %v4585 = vpop.f32.mrb[0].mxu0
      %v4586 = vadd.f32 0.0, %v4585
      %v4587 = vpop.f32.mrb[0].mxu0
      %v4588 = vpop.f32.mrb[0].mxu0
      %v4589 = vadd.f32 0.0, %v4588
      %v4590 = vpop.f32.mrb[0].mxu0
      %4591 = vmatprep.mubr.bf16.mxu0 0
      %4592 = vmatmul.mubr.bf16.gmra.mrb[0].mxu0 %v4540
      %v4593 = vpop.f32.mrb[0].mxu0
      %v4594 = vadd.f32 0.0, %v4593
      %v4595 = vpop.f32.mrb[0].mxu0
      %v4596 = vpop.f32.mrb[0].mxu0
      %v4597 = vadd.f32 0.0, %v4596
      %v4598 = vpop.f32.mrb[0].mxu0
      %4599 = vmatprep.mubr.bf16.mxu0 0
      %4600 = vmatmul.mubr.bf16.gmra.mrb[0].mxu0 %v4543
      %v4601 = vpop.f32.mrb[0].mxu0
      %v4602 = vadd.f32 0.0, %v4601
      %v4603 = vpop.f32.mrb[0].mxu0
      %v4604 = vpop.f32.mrb[0].mxu0
      %v4605 = vadd.f32 0.0, %v4604
      %v4606 = vpop.f32.mrb[0].mxu0
      %4607 = vmatprep.mubr.bf16.mxu0 0
      %4608 = vmatmul.mubr.bf16.gmra.mrb[0].mxu0 %v4546
      %v4609 = vpop.f32.mrb[0].mxu0
      %v4610 = vadd.f32 0.0, %v4609
      %v4611 = vpop.f32.mrb[0].mxu0
      %v4612 = vpop.f32.mrb[0].mxu0
      %v4613 = vadd.f32 0.0, %v4612
      %v4614 = vpop.f32.mrb[0].mxu0
      %4615 = vdwg.mxu0
      %v4616 = vadd.f32 %v4503, %v4586
      %v4617 = vadd.f32 %v4504, %v4589
      %v4618 = vadd.f32 %v4505, %v4594
      %v4619 = vadd.f32 %v4506, %v4597
      %v4620 = vadd.f32 %v4507, %v4602
      %v4621 = vadd.f32 %v4508, %v4605
      %v4622 = vadd.f32 %v4509, %v4610
      %v4623 = vadd.f32 %v4510, %v4613
      %v4624 = vld [vmem:[%s2 + $0x20] sm:$0xc]
      %v4633 = vunpack.c.l.b16 %v4068
      %v4634 = vunpack.c.l.b16 %v4070
      %v4635 = vunpack.c.l.b16 %v4072
      %v4636 = vunpack.c.l.b16 %v4074
      %v4637 = vunpack.c.l.b16 %v4076
      %v4638 = vunpack.c.l.b16 %v4078
      %v4639 = vunpack.c.l.b16 %v4080
      %v4640 = vunpack.c.l.b16 %v4082
      %v4641 = vpack.c.b16 %v4634, %v4633
      %v4642 = vpack.c.b16 %v4636, %v4635
      %v4643 = vpack.c.b16 %v4638, %v4637
      %v4644 = vpack.c.b16 %v4640, %v4639
      %v4646 = vunpack.c.l.b16 %v4624
      %v4647 = vpack.c.b16 %v4646, %v4646
      %v4649 = vshrl.u32 %v4647, 16
      %v4651 = vrot.slane %v4649, 2
      %v4652 = vshll.u32 %v4647, 16
      %v4654 = vrot.slane %v4652, 3
      %v4655 = vor.u32 %v4651, %v4654
      %v4657 = vsel %vm804, %v4641, 0
      %v4660 = vsel %vm804, %v4642, 0
      %v4663 = vsel %vm804, %v4643, 0
      %v4666 = vsel %vm804, %v4644, 0
      %v4669 = vand.u32 %v4655, %v820
      %4671 = vmatprep.subr.bf16.mxu0 0
      %4672 = vmatpush1.bf16.msra.mxu0 %v4669
      %4673 = vmatprep.subr.bf16.mxu0 0
      %4674 = vmatpush1.bf16.msra.mxu0 0
      %4675 = vmatprep.subr.bf16.mxu0 0
      %4676 = vmatpush1.bf16.msra.mxu0 0
      %4677 = vmatprep.subr.bf16.mxu0 0
      %4678 = vmatpush1.bf16.msra.mxu0 0
      %4679 = vmatprep.subr.bf16.mxu0 0
      %4680 = vmatpush1.bf16.msra.mxu0 0
      %4681 = vmatprep.subr.bf16.mxu0 0
      %4682 = vmatpush1.bf16.msra.mxu0 0
      %4683 = vmatprep.subr.bf16.mxu0 0
      %4684 = vmatpush1.bf16.msra.mxu0 0
      %4685 = vmatprep.subr.bf16.mxu0 0
      %4686 = vmatpush1.bf16.msra.mxu0 0
      %4687 = vmatprep.subr.bf16.mxu0 0
      %4688 = vmatpush1.bf16.msra.mxu0 0
      %4689 = vmatprep.subr.bf16.mxu0 0
      %4690 = vmatpush1.bf16.msra.mxu0 0
      %4691 = vmatprep.subr.bf16.mxu0 0
      %4692 = vmatpush1.bf16.msra.mxu0 0
      %4693 = vmatprep.subr.bf16.mxu0 0
      %4694 = vmatpush1.bf16.msra.mxu0 0
      %4695 = vmatprep.subr.bf16.mxu0 0
      %4696 = vmatpush1.bf16.msra.mxu0 0
      %4697 = vmatprep.subr.bf16.mxu0 0
      %4698 = vmatpush1.bf16.msra.mxu0 0
      %4699 = vmatprep.subr.bf16.mxu0 0
      %4700 = vmatpush1.bf16.msra.mxu0 0
      %4701 = vmatprep.subr.bf16.mxu0 0
      %4702 = vmatpush1.bf16.msra.mxu0 0
      %4703 = vmatprep.mubr.bf16.mxu0 0
      %4704 = vmatmul.mubr.bf16.gmra.mrb[0].mxu0 %v4657
      %v4705 = vpop.f32.mrb[0].mxu0
      %v4706 = vadd.f32 0.0, %v4705
      %v4707 = vpop.f32.mrb[0].mxu0
      %v4708 = vpop.f32.mrb[0].mxu0
      %v4709 = vadd.f32 0.0, %v4708
      %v4710 = vpop.f32.mrb[0].mxu0
      %4711 = vmatprep.mubr.bf16.mxu0 0
      %4712 = vmatmul.mubr.bf16.gmra.mrb[0].mxu0 %v4660
      %v4713 = vpop.f32.mrb[0].mxu0
      %v4714 = vadd.f32 0.0, %v4713
      %v4715 = vpop.f32.mrb[0].mxu0
      %v4716 = vpop.f32.mrb[0].mxu0
      %v4717 = vadd.f32 0.0, %v4716
      %v4718 = vpop.f32.mrb[0].mxu0
      %4719 = vmatprep.mubr.bf16.mxu0 0
      %4720 = vmatmul.mubr.bf16.gmra.mrb[0].mxu0 %v4663
      %v4721 = vpop.f32.mrb[0].mxu0
      %v4722 = vadd.f32 0.0, %v4721
      %v4723 = vpop.f32.mrb[0].mxu0
      %v4724 = vpop.f32.mrb[0].mxu0
      %v4725 = vadd.f32 0.0, %v4724
      %v4726 = vpop.f32.mrb[0].mxu0
      %4727 = vmatprep.mubr.bf16.mxu0 0
      %4728 = vmatmul.mubr.bf16.gmra.mrb[0].mxu0 %v4666
      %v4729 = vpop.f32.mrb[0].mxu0
      %v4730 = vadd.f32 0.0, %v4729
      %v4731 = vpop.f32.mrb[0].mxu0
      %v4732 = vpop.f32.mrb[0].mxu0
      %v4733 = vadd.f32 0.0, %v4732
      %v4734 = vpop.f32.mrb[0].mxu0
      %4735 = vdwg.mxu0
      %v4736 = vadd.f32 %v4616, %v4706
      %v4737 = vadd.f32 %v4617, %v4709
      %v4738 = vadd.f32 %v4618, %v4714
      %v4739 = vadd.f32 %v4619, %v4717
      %v4740 = vadd.f32 %v4620, %v4722
      %v4741 = vadd.f32 %v4621, %v4725
      %v4742 = vadd.f32 %v4622, %v4730
      %v4743 = vadd.f32 %v4623, %v4733
      %v4744 = vrot.slane %v4089, 4
      %v4745 = vrot.slane %v4092, 5
      %v4746 = vor.u32 %v4744, %v4745
      %v4747 = vrot.slane %v4746, 4
      %v4749 = vshll.u32 %v4044, 16
      %v4751 = vrot.slane %v4749, 5
      %v4752 = vsel %vm1218, %v4747, %v4751
      %v4753 = vrot.slane %v4102, 4
      %v4754 = vrot.slane %v4105, 5
      %v4755 = vor.u32 %v4753, %v4754
      %v4756 = vrot.slane %v4755, 4
      %v4758 = vshll.u32 %v4047, 16
      %v4760 = vrot.slane %v4758, 5
      %v4761 = vsel %vm1218, %v4756, %v4760
      %v4762 = vrot.slane %v4115, 4
      %v4763 = vrot.slane %v4118, 5
      %v4764 = vor.u32 %v4762, %v4763
      %v4765 = vrot.slane %v4764, 4
      %v4767 = vshll.u32 %v4050, 16
      %v4769 = vrot.slane %v4767, 5
      %v4770 = vsel %vm1218, %v4765, %v4769
      %v4771 = vrot.slane %v4128, 4
      %v4772 = vrot.slane %v4131, 5
      %v4773 = vor.u32 %v4771, %v4772
      %v4774 = vrot.slane %v4773, 4
      %v4776 = vshll.u32 %v4053, 16
      %v4778 = vrot.slane %v4776, 5
      %v4779 = vsel %vm1218, %v4774, %v4778
      %v4780 = vrot.slane %v4141, 4
      %v4781 = vrot.slane %v4144, 5
      %v4782 = vor.u32 %v4780, %v4781
      %v4783 = vrot.slane %v4782, 4
      %v4785 = vshll.u32 %v4056, 16
      %v4787 = vrot.slane %v4785, 5
      %v4788 = vsel %vm1218, %v4783, %v4787
      %v4789 = vrot.slane %v4154, 4
      %v4790 = vrot.slane %v4157, 5
      %v4791 = vor.u32 %v4789, %v4790
      %v4792 = vrot.slane %v4791, 4
      %v4794 = vshll.u32 %v4059, 16
      %v4796 = vrot.slane %v4794, 5
      %v4797 = vsel %vm1218, %v4792, %v4796
      %v4798 = vrot.slane %v4167, 4
      %v4799 = vrot.slane %v4170, 5
      %v4800 = vor.u32 %v4798, %v4799
      %v4801 = vrot.slane %v4800, 4
      %v4803 = vshll.u32 %v4062, 16
      %v4805 = vrot.slane %v4803, 5
      %v4806 = vsel %vm1218, %v4801, %v4805
      %v4807 = vrot.slane %v4180, 4
      %v4808 = vrot.slane %v4183, 5
      %v4809 = vor.u32 %v4807, %v4808
      %v4810 = vrot.slane %v4809, 4
      %v4812 = vshll.u32 %v4065, 16
      %v4814 = vrot.slane %v4812, 5
      %v4815 = vsel %vm1218, %v4810, %v4814
      %v4816 = vld [vmem:[%s2 + $0x24] sm:$0x3]
      %v4817 = vunpack.c.l.b16 %v4752
      %v4818 = vunpack.c.l.b16 %v4761
      %v4819 = vunpack.c.l.b16 %v4770
      %v4820 = vunpack.c.l.b16 %v4779
      %v4821 = vunpack.c.l.b16 %v4788
      %v4822 = vunpack.c.l.b16 %v4797
      %v4823 = vunpack.c.l.b16 %v4806
      %v4824 = vunpack.c.l.b16 %v4815
      %v4825 = vpack.c.b16 %v4818, %v4817
      %v4826 = vpack.c.b16 %v4820, %v4819
      %v4827 = vpack.c.b16 %v4822, %v4821
      %v4828 = vpack.c.b16 %v4824, %v4823
      %v4830 = vsel %vm804, %v4825, 0
      %v4833 = vsel %vm804, %v4826, 0
      %v4836 = vsel %vm804, %v4827, 0
      %v4839 = vsel %vm804, %v4828, 0
      %v4842 = vand.u32 %v4816, %v820
      %4844 = vmatprep.subr.bf16.mxu0 0
      %4845 = vmatpush1.bf16.msra.mxu0 %v4842
      %4846 = vmatprep.subr.bf16.mxu0 0
      %4847 = vmatpush1.bf16.msra.mxu0 0
      %4848 = vmatprep.subr.bf16.mxu0 0
      %4849 = vmatpush1.bf16.msra.mxu0 0
      %4850 = vmatprep.subr.bf16.mxu0 0
      %4851 = vmatpush1.bf16.msra.mxu0 0
      %4852 = vmatprep.subr.bf16.mxu0 0
      %4853 = vmatpush1.bf16.msra.mxu0 0
      %4854 = vmatprep.subr.bf16.mxu0 0
      %4855 = vmatpush1.bf16.msra.mxu0 0
      %4856 = vmatprep.subr.bf16.mxu0 0
      %4857 = vmatpush1.bf16.msra.mxu0 0
      %4858 = vmatprep.subr.bf16.mxu0 0
      %4859 = vmatpush1.bf16.msra.mxu0 0
      %4860 = vmatprep.subr.bf16.mxu0 0
      %4861 = vmatpush1.bf16.msra.mxu0 0
      %4862 = vmatprep.subr.bf16.mxu0 0
      %4863 = vmatpush1.bf16.msra.mxu0 0
      %4864 = vmatprep.subr.bf16.mxu0 0
      %4865 = vmatpush1.bf16.msra.mxu0 0
      %4866 = vmatprep.subr.bf16.mxu0 0
      %4867 = vmatpush1.bf16.msra.mxu0 0
      %4868 = vmatprep.subr.bf16.mxu0 0
      %4869 = vmatpush1.bf16.msra.mxu0 0
      %4870 = vmatprep.subr.bf16.mxu0 0
      %4871 = vmatpush1.bf16.msra.mxu0 0
      %4872 = vmatprep.subr.bf16.mxu0 0
      %4873 = vmatpush1.bf16.msra.mxu0 0
      %4874 = vmatprep.subr.bf16.mxu0 0
      %4875 = vmatpush1.bf16.msra.mxu0 0
      %4876 = vmatprep.mubr.bf16.mxu0 0
      %4877 = vmatmul.mubr.bf16.gmra.mrb[0].mxu0 %v4830
      %v4878 = vpop.f32.mrb[0].mxu0
      %v4879 = vadd.f32 0.0, %v4878
      %v4880 = vpop.f32.mrb[0].mxu0
      %v4881 = vpop.f32.mrb[0].mxu0
      %v4882 = vadd.f32 0.0, %v4881
      %v4883 = vpop.f32.mrb[0].mxu0
      %4884 = vmatprep.mubr.bf16.mxu0 0
      %4885 = vmatmul.mubr.bf16.gmra.mrb[0].mxu0 %v4833
      %v4886 = vpop.f32.mrb[0].mxu0
      %v4887 = vadd.f32 0.0, %v4886
      %v4888 = vpop.f32.mrb[0].mxu0
      %v4889 = vpop.f32.mrb[0].mxu0
      %v4890 = vadd.f32 0.0, %v4889
      %v4891 = vpop.f32.mrb[0].mxu0
      %4892 = vmatprep.mubr.bf16.mxu0 0
      %4893 = vmatmul.mubr.bf16.gmra.mrb[0].mxu0 %v4836
      %v4894 = vpop.f32.mrb[0].mxu0
      %v4895 = vadd.f32 0.0, %v4894
      %v4896 = vpop.f32.mrb[0].mxu0
      %v4897 = vpop.f32.mrb[0].mxu0
      %v4898 = vadd.f32 0.0, %v4897
      %v4899 = vpop.f32.mrb[0].mxu0
      %4900 = vmatprep.mubr.bf16.mxu0 0
      %4901 = vmatmul.mubr.bf16.gmra.mrb[0].mxu0 %v4839
      %v4902 = vpop.f32.mrb[0].mxu0
      %v4903 = vadd.f32 0.0, %v4902
      %v4904 = vpop.f32.mrb[0].mxu0
      %v4905 = vpop.f32.mrb[0].mxu0
      %v4906 = vadd.f32 0.0, %v4905
      %v4907 = vpop.f32.mrb[0].mxu0
      %4908 = vdwg.mxu0
      %v4909 = vadd.f32 %v4736, %v4879
      %v4910 = vadd.f32 %v4737, %v4882
      %v4911 = vadd.f32 %v4738, %v4887
      %v4912 = vadd.f32 %v4739, %v4890
      %v4913 = vadd.f32 %v4740, %v4895
      %v4914 = vadd.f32 %v4741, %v4898
      %v4915 = vadd.f32 %v4742, %v4903
      %v4916 = vadd.f32 %v4743, %v4906
      %v4917 = vld [vmem:[%s3] sm:$0x1]
      %v4919 = vlaneseq
      %v4920 = vshrl.u32 %v4919, 7
      %v4921 = vsub.s32 0, %v4920
      %v4922 = vrot.slane %v4917, %v4921
      %v4924 = vadd.f32 %v4909, %v4922
      %v4925 = vadd.f32 %v4910, %v4922
      %v4926 = vadd.f32 %v4911, %v4922
      %v4927 = vadd.f32 %v4912, %v4922
      %v4928 = vadd.f32 %v4913, %v4922
      %v4929 = vadd.f32 %v4914, %v4922
      %v4930 = vadd.f32 %v4915, %v4922
      %v4931 = vadd.f32 %v4916, %v4922
      %v4932 = vpack.c.bf16 %v4924, %v4924
      %v4933 = vpack.c.bf16 %v4925, %v4925
      %v4934 = vpack.c.bf16 %v4926, %v4926
      %v4935 = vpack.c.bf16 %v4927, %v4927
      %v4936 = vpack.c.bf16 %v4928, %v4928
      %v4937 = vpack.c.bf16 %v4929, %v4929
      %v4938 = vpack.c.bf16 %v4930, %v4930
      %v4939 = vpack.c.bf16 %v4931, %v4931
      %vm4940 = vcmask 257024
      %4941 = vst.msk [vmem:[%s217] sm:$0xf] %vm4940, %v4932
      %4942 = vst.msk [vmem:[%s217 + $0x4] sm:$0xf] %vm4940, %v4933
      %4943 = vst.msk [vmem:[%s217 + $0x8] sm:$0xf] %vm4940, %v4934
      %4944 = vst.msk [vmem:[%s217 + $0xc] sm:$0xf] %vm4940, %v4935
      %4945 = vst.msk [vmem:[%s217 + $0x10] sm:$0xf] %vm4940, %v4936
      %4946 = vst.msk [vmem:[%s217 + $0x14] sm:$0xf] %vm4940, %v4937
      %4947 = vst.msk [vmem:[%s217 + $0x18] sm:$0xf] %vm4940, %v4938
      %4948 = vst.msk [vmem:[%s217 + $0x1c] sm:$0xf] %vm4940, %v4939
      %p4949 = scmp.lt.s32.totalorder %s15, 1
      %s4950 = scalar_select %p4949, %s15, 1
      %s4951 = smul.addr %s4950, 8
      %s4952 = smul.addr %s4951, 4
      %s4953 = scalar_lea.vmem %s4, %s4952
      // Predicated region
      $region37: #{feature_extractor_forward.8} parent=35 // pred_check
        %p4954 = pneg %p127
      $region38: #{feature_extractor_forward.8} parent=35 // pred_check_branch
        %4956 = sbr.rel (%p4954) target = $region40
      $region39: #{feature_extractor_forward.8} parent=35 // pred_region
        _
      $region40: #{feature_extractor_forward.8} parent=35 // pred_fallthru
        _
    $region36: #{feature_extractor_forward.8} parent=5 // pred_fallthru
      _
    %p4957 = scmp.le.s32.totalorder 2, %s10
    // Predicated region
    $region41: #{feature_extractor_forward.8} parent=5 // pred_check
      %p4958 = pneg %p4957
    $region42: #{feature_extractor_forward.8} parent=5 // pred_check_branch
      %4960 = sbr.rel (%p4958) target = $region44
    $region43: #{feature_extractor_forward.8} parent=5 // pred_region
      %s4961 = ssub.s32 %s10, 2
      // Predicated region
      $region45: #{feature_extractor_forward.8} parent=43 // pred_check
        %p4962 = pneg %p133
      $region46: #{feature_extractor_forward.8} parent=43 // pred_check_branch
        %4964 = sbr.rel (%p4962) target = $region48
      $region47: #{feature_extractor_forward.8} parent=43 // pred_region
        %p4965 = scmp.lt.s32.totalorder %s16, 1
        %s4966 = scalar_select %p4965, %s16, 1
        %s4967 = smul.addr %s4966, 8
        %s4968 = smul.addr %s4967, 4
        %s4969 = scalar_lea.vmem %s4, %s4968
      $region48: #{feature_extractor_forward.8} parent=43 // pred_fallthru
        _
    $region44: #{feature_extractor_forward.8} parent=5 // pred_fallthru
      _
  $region6: #{feature_extractor_forward.8} parent=0 // loop_footer
    %s14 = sadd.s32 1, %s10
  $region7: #{feature_extractor_forward.8} parent=0 // loop_footer_branch
    %9 = sbr.rel target = $region3
  $region8: #{feature_extractor_forward.8} parent=0 // loop_exit
    _

</llo_original>
